<compile_context>
chip_gen: v5e
topology: v5e:2x2
jax: 0.10.0
libtpu: 0.0.40
codegen_flags: <defaults>
</compile_context>

<pallas_src>
import jax
import jax.numpy as jnp
from jax.experimental import pallas as pl
from jax.experimental.pallas import tpu as pltpu


_LANE = 128   # lane tile (last dim)
_SUB = 8      # f32 sublane tile (second-to-last dim)
_MIB = 1 << 20


def _round_up(x, m):
    return (x + m - 1) // m * m


def _make_kernel(seq_len, t_blk, tb, hp, mm_dtype, gx_dtype, n_gx_chunks):
    """Builds the Pallas kernel body with static tiling constants closed over."""
    chunk_t = t_blk // n_gx_chunks

    def kernel(x_ref, wih_ref, whh_ref, b_ref, wlin_ref, blin_ref,
               out_ref, h_scr, c_scr, gx_scr):
        t_idx = pl.program_id(1)

        # h0 = c0 = 0 at the start of each batch block's recurrence.
        @pl.when(t_idx == 0)
        def _():
            h_scr[...] = jnp.zeros_like(h_scr)
            c_scr[...] = jnp.zeros_like(c_scr)

        # ---- hoisted input projection for this block of t_blk timesteps ----
        # One MXU-friendly matmul per chunk instead of t_blk tiny matmuls on the
        # serial path; chunked so later chunks can overlap the recurrence.
        x_blk = x_ref[...]                                   # (t_blk, tb, Ip) mm_dtype
        for ch in range(n_gx_chunks):
            t0 = ch * chunk_t
            xc = x_blk[t0:t0 + chunk_t].reshape(chunk_t * tb, x_blk.shape[-1])
            gx_scr[t0 * tb:(t0 + chunk_t) * tb, :] = (
                jnp.dot(xc, wih_ref[...], preferred_element_type=jnp.float32)
                + b_ref[...]).astype(gx_dtype)               # (chunk_t*tb, 4Hp)

        h0 = h_scr[...]
        c0 = c_scr[...]

        def step(i, carry):
            h, c = carry                                     # (tb, Hp) f32
            row0 = pl.multiple_of(i * tb, tb)
            gx_t = gx_scr[pl.ds(row0, tb), :]                # (tb, 4Hp) gx_dtype
            # NOTE: h is re-quantized to mm_dtype every step; for very long
            # sequences / large H pass matmul_dtype=float32 if drift matters.
            h_mm = h.astype(mm_dtype)

            def gate(k):                                     # PyTorch order (i,f,g,o)
                return (gx_t[:, k * hp:(k + 1) * hp].astype(jnp.float32)
                        + jnp.dot(h_mm, whh_ref[:, k * hp:(k + 1) * hp],
                                  preferred_element_type=jnp.float32))

            # Per-gate matmul + activation: i, f, g first so the cell update
            # (VPU/EUP) overlaps the o-gate's MXU push.
            i_g = jax.nn.sigmoid(gate(0))
            f_g = jax.nn.sigmoid(gate(1))
            g_g = jnp.tanh(gate(2))
            c_new = f_g * c + i_g * g_g
            o_g = jax.nn.sigmoid(gate(3))
            h_new = o_g * jnp.tanh(c_new)
            if seq_len % t_blk == 0:
                return h_new, c_new
            # Masked tail (only traced when seq_len is not a multiple of t_blk).
            valid = (t_idx * t_blk + i) < seq_len
            return (jnp.where(valid, h_new, h),
                    jnp.where(valid, c_new, c))

        h_fin, c_fin = jax.lax.fori_loop(0, t_blk, step, (h0, c0), unroll=True)
        h_scr[...] = h_fin
        c_scr[...] = c_fin

        # Final Linear on the last hidden state (== lstm_out[-1]).  Correct only
        # because time is the innermost grid axis, so this output block stays
        # resident across all t for a given batch block.
        @pl.when(t_idx == pl.num_programs(1) - 1)
        def _():
            out = (jnp.dot(h_fin.astype(mm_dtype), wlin_ref[...],
                           preferred_element_type=jnp.float32)
                   + blin_ref[...])
            out_ref[...] = out.astype(out_ref.dtype)

    return kernel


def grid_lstm_forward(sequence, params, *, matmul_dtype=jnp.bfloat16):
    """sequence: (seq_len, batch, input_size) float32.
    params: dict with w_ih (4H,I), w_hh (4H,H), b_ih (4H,), b_hh (4H,),
            w_lin (O,H), b_lin (O,)  -- PyTorch layouts.
    Returns (batch, output_size) float32."""
    sequence = jnp.asarray(sequence, jnp.float32)
    S, B, I = sequence.shape
    w_ih = jnp.asarray(params["w_ih"], jnp.float32)
    w_hh = jnp.asarray(params["w_hh"], jnp.float32)
    bias = jnp.asarray(params["b_ih"] + params["b_hh"], jnp.float32)
    w_lin = jnp.asarray(params["w_lin"], jnp.float32)
    b_lin = jnp.asarray(params["b_lin"], jnp.float32)
    H = w_hh.shape[1]
    O = w_lin.shape[0]

    # ---- pad to TPU tiles: 8 sublanes x 128 lanes ----
    Hp = _round_up(H, _LANE)
    Ip = _round_up(I, _LANE)
    Op = _round_up(O, _LANE)

    # TB: minimize batch padding (any multiple of 8 works); cap at 256 rows per
    # block for good MXU fill on v6e/v7x without forcing huge pads for small B.
    TB_CAP = 256
    B8 = _round_up(B, _SUB)
    if B8 <= TB_CAP:
        n_bblk, TB = 1, B8
    else:
        n_bblk = -(-B8 // TB_CAP)
        TB = _round_up(-(-B8 // n_bblk), _SUB)
    Bp = n_bblk * TB

    mm_bytes = jnp.dtype(matmul_dtype).itemsize
    gx_bytes = mm_bytes                       # gx scratch stored in matmul_dtype

    # VMEM footprint: single-buffered weights + h/c carries + (double-buffered)
    # output block are fixed; x double buffer and gx scratch scale with T_BLK.
    w_vmem = ((Ip + Hp) * 4 * Hp + Hp * Op) * mm_bytes + (4 * Hp + Op) * 4
    fixed_vmem = w_vmem + 2 * TB * Hp * 4 + 2 * TB * Op * 4

    budget = 40 * _MIB                        # conservative: headroom inside v7x's 64 MiB
    T_BLK = 8
    for cand in (32, 16, 8):
        if cand > _round_up(max(S, 1), _SUB):
            continue
        dyn = 2 * cand * TB * Ip * mm_bytes + cand * TB * 4 * Hp * gx_bytes
        if fixed_vmem + dyn <= budget:
            T_BLK = cand
            break
    S_pad = _round_up(S, T_BLK)
    n_gx_chunks = 4 if (T_BLK % 4 == 0) else 1

    dyn_vmem = 2 * T_BLK * TB * Ip * mm_bytes + T_BLK * TB * 4 * Hp * gx_bytes
    vmem_limit = int(min(120 * _MIB,
                         max(32 * _MIB, (fixed_vmem + dyn_vmem) * 3 // 2 + 2 * _MIB)))

    # PyTorch packs gates (i, f, g, o) each of size H along the 4H axis; when
    # padding H -> Hp each gate block must be re-placed at offset k*Hp.
    def pad_gates_mat(w_t, K, Kp):            # w_t: (K, 4H) -> (Kp, 4Hp)
        out = jnp.zeros((Kp, 4 * Hp), jnp.float32)
        for g in range(4):
            out = out.at[:K, g * Hp:g * Hp + H].set(w_t[:, g * H:(g + 1) * H])
        return out

    wih_t = pad_gates_mat(w_ih.T, I, Ip).astype(matmul_dtype)   # (Ip, 4Hp)
    whh_t = pad_gates_mat(w_hh.T, H, Hp).astype(matmul_dtype)   # (Hp, 4Hp)
    bias_p = jnp.zeros((1, 4 * Hp), jnp.float32)
    for g in range(4):
        bias_p = bias_p.at[0, g * Hp:g * Hp + H].set(bias[g * H:(g + 1) * H])

    wlin_t = (jnp.zeros((Hp, Op), jnp.float32)
              .at[:H, :O].set(w_lin.T)).astype(matmul_dtype)    # (Hp, Op)
    blin_p = jnp.zeros((1, Op), jnp.float32).at[0, :O].set(b_lin)

    # Pre-cast x to matmul_dtype: halves the only operand streamed every step.
    x_p = (jnp.zeros((S_pad, Bp, Ip), matmul_dtype)
           .at[:S, :B, :I].set(sequence.astype(matmul_dtype)))

    kernel = _make_kernel(S, T_BLK, TB, Hp, matmul_dtype, matmul_dtype, n_gx_chunks)

    cost = pl.CostEstimate(
        flops=int(2 * S * B * (I + H) * 4 * H + 2 * B * H * O),
        transcendentals=int(5 * S * B * H),
        bytes_accessed=int(x_p.nbytes + wih_t.nbytes + whh_t.nbytes
                           + bias_p.nbytes + wlin_t.nbytes + blin_p.nbytes
                           + Bp * Op * 4))

    def _call(single_buffer_weights):
        # Constant-index_map weights: double-buffering is pure VMEM waste.
        wkw = ({"pipeline_mode": pl.Buffered(1)} if single_buffer_weights else {})
        grid_spec = pltpu.PrefetchScalarGridSpec(
            num_scalar_prefetch=0,
            # Time MUST remain the innermost ("arbitrary") axis -- see kernel.
            grid=(Bp // TB, S_pad // T_BLK),
            in_specs=[
                # One (T_BLK, TB, Ip) block of the sequence per grid step.
                pl.BlockSpec((T_BLK, TB, Ip), lambda b, t: (t, b, 0)),
                # Loop-invariant weights: constant index_map -> no re-DMA.
                pl.BlockSpec((Ip, 4 * Hp), lambda b, t: (0, 0), **wkw),
                pl.BlockSpec((Hp, 4 * Hp), lambda b, t: (0, 0), **wkw),
                pl.BlockSpec((1, 4 * Hp), lambda b, t: (0, 0), **wkw),
                pl.BlockSpec((Hp, Op), lambda b, t: (0, 0), **wkw),
                pl.BlockSpec((1, Op), lambda b, t: (0, 0), **wkw),
            ],
            out_specs=pl.BlockSpec((TB, Op), lambda b, t: (b, 0)),
            scratch_shapes=[
                pltpu.VMEM((TB, Hp), jnp.float32),                 # h carry
                pltpu.VMEM((TB, Hp), jnp.float32),                 # c carry
                pltpu.VMEM((T_BLK * TB, 4 * Hp), matmul_dtype),    # hoisted x-gates
            ],
        )
        out = pl.pallas_call(
            kernel,
            out_shape=jax.ShapeDtypeStruct((Bp, Op), jnp.float32),
            grid_spec=grid_spec,
            compiler_params=pltpu.CompilerParams(
                dimension_semantics=("parallel", "arbitrary"),
                vmem_limit_bytes=vmem_limit),
            cost_estimate=cost,
        )(x_p, wih_t, whh_t, bias_p, wlin_t, blin_p)
        return jax.block_until_ready(out)

    try:
        out_padded = _call(True)
    except Exception:
        # Fallback if this jax build rejects pl.Buffered(1) on a top-level
        # pallas_call BlockSpec; double-buffered weights are still correct.
        out_padded = _call(False)

    return out_padded[:B, :O]


def grid_lstm_reference(sequence, params):
    """Pure-JAX reference mirroring torch.nn.LSTM + Linear."""
    S, B, I = sequence.shape
    H = params["w_hh"].shape[1]
    wih_t = params["w_ih"].T
    whh_t = params["w_hh"].T
    bias = params["b_ih"] + params["b_hh"]

    def step(carry, x_t):
        h, c = carry
        gates = x_t @ wih_t + h @ whh_t + bias
        i_g = jax.nn.sigmoid(gates[:, 0 * H:1 * H])
        f_g = jax.nn.sigmoid(gates[:, 1 * H:2 * H])
        g_g = jnp.tanh(gates[:, 2 * H:3 * H])
        o_g = jax.nn.sigmoid(gates[:, 3 * H:4 * H])
        c_new = f_g * c + i_g * g_g
        h_new = o_g * jnp.tanh(c_new)
        return (h_new, c_new), h_new

    init = (jnp.zeros((B, H), jnp.float32), jnp.zeros((B, H), jnp.float32))
    (h_last, _), _ = jax.lax.scan(step, init, sequence)
    return h_last @ params["w_lin"].T + params["b_lin"]


def make_params(key, input_size, hidden_size, output_size):
    """Deterministic parameter init mimicking PyTorch's U(-1/sqrt(H), 1/sqrt(H))."""
    ks = jax.random.split(key, 6)
    bound = 1.0 / jnp.sqrt(jnp.float32(hidden_size))
    u = lambda k, shp: jax.random.uniform(k, shp, jnp.float32, -bound, bound)
    return {
        "w_ih": u(ks[0], (4 * hidden_size, input_size)),
        "w_hh": u(ks[1], (4 * hidden_size, hidden_size)),
        "b_ih": u(ks[2], (4 * hidden_size,)),
        "b_hh": u(ks[3], (4 * hidden_size,)),
        "w_lin": u(ks[4], (output_size, hidden_size)),
        "b_lin": u(ks[5], (output_size,)),
    }


if __name__ == "__main__":
    SEQ, BATCH, INPUT, HIDDEN, OUTPUT = 8, 2, 16, 32, 8

    key = jax.random.PRNGKey(0)
    k_x, k_p = jax.random.split(key)
    sequence = jax.random.normal(k_x, (SEQ, BATCH, INPUT), jnp.float32)
    params = make_params(k_p, INPUT, HIDDEN, OUTPUT)

    ref = grid_lstm_reference(sequence, params)

    # f32-matmul path: tight numerical check against the pure-JAX reference.
    out_f32 = jax.block_until_ready(
        grid_lstm_forward(sequence, params, matmul_dtype=jnp.float32))
    assert out_f32.shape == (BATCH, OUTPUT)
    assert jnp.allclose(out_f32, ref, atol=1e-4, rtol=1e-4), (out_f32, ref)

    # bf16-matmul path (performance default): looser tolerance.
    out_bf16 = jax.block_until_ready(grid_lstm_forward(sequence, params))
    assert out_bf16.shape == (BATCH, OUTPUT)
    assert jnp.allclose(out_bf16, ref, atol=5e-2, rtol=5e-2), (out_bf16, ref)

    print("KERNEL_OK")
</pallas_src>

<mosaic_0001>
module attributes {stable_mosaic.version = 11 : i64} {
  func.func @kernel(%arg0: i32, %arg1: i32, %arg2: memref<8x8x128xf32, #tpu.memory_space<vmem>>, %arg3: memref<128x512xf32, #tpu.memory_space<vmem>>, %arg4: memref<128x512xf32, #tpu.memory_space<vmem>>, %arg5: memref<1x512xf32, #tpu.memory_space<vmem>>, %arg6: memref<128x128xf32, #tpu.memory_space<vmem>>, %arg7: memref<1x128xf32, #tpu.memory_space<vmem>>, %arg8: memref<8x128xf32, #tpu.memory_space<vmem>>, %arg9: memref<8x128xf32, #tpu.memory_space<vmem>>, %arg10: memref<8x128xf32, #tpu.memory_space<vmem>>, %arg11: memref<64x512xf32, #tpu.memory_space<vmem>>) attributes {dimension_semantics = [#tpu.dimension_semantics<parallel>, #tpu.dimension_semantics<arbitrary>], iteration_bounds = array<i64: 1, 1>, scalar_prefetch = 0 : i64, scratch_operands = 3 : i64, tpu.core_type = #tpu.core_type<tc>, window_params = [{transform_indices = @transform_0, window_bounds = array<i64: 8, 8, 128>}, {pipeline_mode = #tpu.pipeline_mode<synchronous>, transform_indices = @transform_1, window_bounds = array<i64: 128, 512>}, {pipeline_mode = #tpu.pipeline_mode<synchronous>, transform_indices = @transform_2, window_bounds = array<i64: 128, 512>}, {pipeline_mode = #tpu.pipeline_mode<synchronous>, transform_indices = @transform_3, window_bounds = array<i64: 1, 512>}, {pipeline_mode = #tpu.pipeline_mode<synchronous>, transform_indices = @transform_4, window_bounds = array<i64: 128, 128>}, {pipeline_mode = #tpu.pipeline_mode<synchronous>, transform_indices = @transform_5, window_bounds = array<i64: 1, 128>}, {transform_indices = @transform_6, window_bounds = array<i64: 8, 128>}]} {
    %c0_i32 = arith.constant 0 : i32
    %0 = arith.cmpi eq, %arg1, %c0_i32 : i32
    %1 = arith.extui %0 : i1 to i32
    %c0_i32_0 = arith.constant 0 : i32
    %2 = arith.cmpi ne, %1, %c0_i32_0 : i32
    scf.if %2 {
      %cst_171 = arith.constant 0.000000e+00 : f32
      %371 = vector.broadcast %cst_171 : f32 to vector<8x128xf32>
      %c0_172 = arith.constant 0 : index
      %c0_173 = arith.constant 0 : index
      %372 = vector.load %arg9[%c0_172, %c0_173] : memref<8x128xf32, #tpu.memory_space<vmem>>, vector<8x128xf32>
      tpu.vector_store %arg9[%c0_172, %c0_173], %371 {strides = array<i32>} : memref<8x128xf32, #tpu.memory_space<vmem>>, vector<8x128xf32>,
      %cst_174 = arith.constant 0.000000e+00 : f32
      %373 = vector.broadcast %cst_174 : f32 to vector<8x128xf32>
      %c0_175 = arith.constant 0 : index
      %c0_176 = arith.constant 0 : index
      %374 = vector.load %arg10[%c0_175, %c0_176] : memref<8x128xf32, #tpu.memory_space<vmem>>, vector<8x128xf32>
      tpu.vector_store %arg10[%c0_175, %c0_176], %373 {strides = array<i32>} : memref<8x128xf32, #tpu.memory_space<vmem>>, vector<8x128xf32>,
    } else {
    }
    %c0 = arith.constant 0 : index
    %c0_1 = arith.constant 0 : index
    %c0_2 = arith.constant 0 : index
    %3 = vector.load %arg2[%c0, %c0_1, %c0_2] : memref<8x8x128xf32, #tpu.memory_space<vmem>>, vector<8x8x128xf32>
    %4 = vector.extract_strided_slice %3 {offsets = [0, 0, 0], sizes = [2, 8, 128], strides = [1, 1, 1]} : vector<8x8x128xf32> to vector<2x8x128xf32>
    %5 = vector.shape_cast %4 : vector<2x8x128xf32> to vector<16x128xf32>
    %c0_3 = arith.constant 0 : index
    %c0_4 = arith.constant 0 : index
    %6 = vector.load %arg3[%c0_3, %c0_4] : memref<128x512xf32, #tpu.memory_space<vmem>>, vector<128x512xf32>
    %cst = arith.constant dense<0.000000e+00> : vector<16x512xf32>
    %7 = tpu.matmul %5, %6, %cst {dimension_numbers = #tpu.dot_dimension_numbers<[1], [0], [0], [1], [0, 0, 1, 1], [], []>} : vector<16x128xf32>, vector<128x512xf32>, vector<16x512xf32> -> vector<16x512xf32>
    %c0_5 = arith.constant 0 : index
    %c0_6 = arith.constant 0 : index
    %8 = vector.load %arg5[%c0_5, %c0_6] : memref<1x512xf32, #tpu.memory_space<vmem>>, vector<1x512xf32>
    %9 = vector.broadcast %8 : vector<1x512xf32> to vector<16x512xf32>
    %10 = arith.addf %7, %9 : vector<16x512xf32>
    %c0_7 = arith.constant 0 : index
    %c0_8 = arith.constant 0 : index
    %11 = vector.load %arg11[%c0_7, %c0_8] : memref<64x512xf32, #tpu.memory_space<vmem>>, vector<16x512xf32>
    tpu.vector_store %arg11[%c0_7, %c0_8], %10 {strides = array<i32>} : memref<64x512xf32, #tpu.memory_space<vmem>>, vector<16x512xf32>,
    %12 = vector.extract_strided_slice %3 {offsets = [2, 0, 0], sizes = [2, 8, 128], strides = [1, 1, 1]} : vector<8x8x128xf32> to vector<2x8x128xf32>
    %13 = vector.shape_cast %12 : vector<2x8x128xf32> to vector<16x128xf32>
    %c0_9 = arith.constant 0 : index
    %c0_10 = arith.constant 0 : index
    %14 = vector.load %arg3[%c0_9, %c0_10] : memref<128x512xf32, #tpu.memory_space<vmem>>, vector<128x512xf32>
    %cst_11 = arith.constant dense<0.000000e+00> : vector<16x512xf32>
    %15 = tpu.matmul %13, %14, %cst_11 {dimension_numbers = #tpu.dot_dimension_numbers<[1], [0], [0], [1], [0, 0, 1, 1], [], []>} : vector<16x128xf32>, vector<128x512xf32>, vector<16x512xf32> -> vector<16x512xf32>
    %c0_12 = arith.constant 0 : index
    %c0_13 = arith.constant 0 : index
    %16 = vector.load %arg5[%c0_12, %c0_13] : memref<1x512xf32, #tpu.memory_space<vmem>>, vector<1x512xf32>
    %17 = vector.broadcast %16 : vector<1x512xf32> to vector<16x512xf32>
    %18 = arith.addf %15, %17 : vector<16x512xf32>
    %c16 = arith.constant 16 : index
    %c0_14 = arith.constant 0 : index
    %19 = vector.load %arg11[%c16, %c0_14] : memref<64x512xf32, #tpu.memory_space<vmem>>, vector<16x512xf32>
    tpu.vector_store %arg11[%c16, %c0_14], %18 {strides = array<i32>} : memref<64x512xf32, #tpu.memory_space<vmem>>, vector<16x512xf32>,
    %20 = vector.extract_strided_slice %3 {offsets = [4, 0, 0], sizes = [2, 8, 128], strides = [1, 1, 1]} : vector<8x8x128xf32> to vector<2x8x128xf32>
    %21 = vector.shape_cast %20 : vector<2x8x128xf32> to vector<16x128xf32>
    %c0_15 = arith.constant 0 : index
    %c0_16 = arith.constant 0 : index
    %22 = vector.load %arg3[%c0_15, %c0_16] : memref<128x512xf32, #tpu.memory_space<vmem>>, vector<128x512xf32>
    %cst_17 = arith.constant dense<0.000000e+00> : vector<16x512xf32>
    %23 = tpu.matmul %21, %22, %cst_17 {dimension_numbers = #tpu.dot_dimension_numbers<[1], [0], [0], [1], [0, 0, 1, 1], [], []>} : vector<16x128xf32>, vector<128x512xf32>, vector<16x512xf32> -> vector<16x512xf32>
    %c0_18 = arith.constant 0 : index
    %c0_19 = arith.constant 0 : index
    %24 = vector.load %arg5[%c0_18, %c0_19] : memref<1x512xf32, #tpu.memory_space<vmem>>, vector<1x512xf32>
    %25 = vector.broadcast %24 : vector<1x512xf32> to vector<16x512xf32>
    %26 = arith.addf %23, %25 : vector<16x512xf32>
    %c32 = arith.constant 32 : index
    %c0_20 = arith.constant 0 : index
    %27 = vector.load %arg11[%c32, %c0_20] : memref<64x512xf32, #tpu.memory_space<vmem>>, vector<16x512xf32>
    tpu.vector_store %arg11[%c32, %c0_20], %26 {strides = array<i32>} : memref<64x512xf32, #tpu.memory_space<vmem>>, vector<16x512xf32>,
    %28 = vector.extract_strided_slice %3 {offsets = [6, 0, 0], sizes = [2, 8, 128], strides = [1, 1, 1]} : vector<8x8x128xf32> to vector<2x8x128xf32>
    %29 = vector.shape_cast %28 : vector<2x8x128xf32> to vector<16x128xf32>
    %c0_21 = arith.constant 0 : index
    %c0_22 = arith.constant 0 : index
    %30 = vector.load %arg3[%c0_21, %c0_22] : memref<128x512xf32, #tpu.memory_space<vmem>>, vector<128x512xf32>
    %cst_23 = arith.constant dense<0.000000e+00> : vector<16x512xf32>
    %31 = tpu.matmul %29, %30, %cst_23 {dimension_numbers = #tpu.dot_dimension_numbers<[1], [0], [0], [1], [0, 0, 1, 1], [], []>} : vector<16x128xf32>, vector<128x512xf32>, vector<16x512xf32> -> vector<16x512xf32>
    %c0_24 = arith.constant 0 : index
    %c0_25 = arith.constant 0 : index
    %32 = vector.load %arg5[%c0_24, %c0_25] : memref<1x512xf32, #tpu.memory_space<vmem>>, vector<1x512xf32>
    %33 = vector.broadcast %32 : vector<1x512xf32> to vector<16x512xf32>
    %34 = arith.addf %31, %33 : vector<16x512xf32>
    %c48 = arith.constant 48 : index
    %c0_26 = arith.constant 0 : index
    %35 = vector.load %arg11[%c48, %c0_26] : memref<64x512xf32, #tpu.memory_space<vmem>>, vector<16x512xf32>
    tpu.vector_store %arg11[%c48, %c0_26], %34 {strides = array<i32>} : memref<64x512xf32, #tpu.memory_space<vmem>>, vector<16x512xf32>,
    %c0_27 = arith.constant 0 : index
    %c0_28 = arith.constant 0 : index
    %36 = vector.load %arg9[%c0_27, %c0_28] : memref<8x128xf32, #tpu.memory_space<vmem>>, vector<8x128xf32>
    %c0_29 = arith.constant 0 : index
    %c0_30 = arith.constant 0 : index
    %37 = vector.load %arg10[%c0_29, %c0_30] : memref<8x128xf32, #tpu.memory_space<vmem>>, vector<8x128xf32>
    %c0_i32_31 = arith.constant 0 : i32
    %c8_i32 = arith.constant 8 : i32
    %38 = arith.muli %c0_i32_31, %c8_i32 : i32
    %39 = tpu.assume_multiple %38, 8 : i32
    %40 = arith.index_cast %39 : i32 to index
    %c0_32 = arith.constant 0 : index
    %41 = vector.load %arg11[%40, %c0_32] : memref<64x512xf32, #tpu.memory_space<vmem>>, vector<8x512xf32>
    %42 = vector.extract_strided_slice %41 {offsets = [0, 0], sizes = [8, 128], strides = [1, 1]} : vector<8x512xf32> to vector<8x128xf32>
    %c0_33 = arith.constant 0 : index
    %c0_34 = arith.constant 0 : index
    %43 = vector.load %arg4[%c0_33, %c0_34] : memref<128x512xf32, #tpu.memory_space<vmem>>, vector<128x128xf32>
    %cst_35 = arith.constant dense<0.000000e+00> : vector<8x128xf32>
    %44 = tpu.matmul %36, %43, %cst_35 {dimension_numbers = #tpu.dot_dimension_numbers<[1], [0], [0], [1], [0, 0, 1, 1], [], []>} : vector<8x128xf32>, vector<128x128xf32>, vector<8x128xf32> -> vector<8x128xf32>
    %45 = arith.addf %42, %44 : vector<8x128xf32>
    %46 = arith.negf %45 : vector<8x128xf32>
    %47 = math.exp %46 : vector<8x128xf32>
    %cst_36 = arith.constant 1.000000e+00 : f32
    %48 = vector.broadcast %cst_36 : f32 to vector<8x128xf32>
    %49 = arith.addf %48, %47 : vector<8x128xf32>
    %50 = arith.divf %48, %49 : vector<8x128xf32>
    %51 = vector.extract_strided_slice %41 {offsets = [0, 128], sizes = [8, 128], strides = [1, 1]} : vector<8x512xf32> to vector<8x128xf32>
    %c0_37 = arith.constant 0 : index
    %c128 = arith.constant 128 : index
    %52 = vector.load %arg4[%c0_37, %c128] : memref<128x512xf32, #tpu.memory_space<vmem>>, vector<128x128xf32>
    %cst_38 = arith.constant dense<0.000000e+00> : vector<8x128xf32>
    %53 = tpu.matmul %36, %52, %cst_38 {dimension_numbers = #tpu.dot_dimension_numbers<[1], [0], [0], [1], [0, 0, 1, 1], [], []>} : vector<8x128xf32>, vector<128x128xf32>, vector<8x128xf32> -> vector<8x128xf32>
    %54 = arith.addf %51, %53 : vector<8x128xf32>
    %55 = arith.negf %54 : vector<8x128xf32>
    %56 = math.exp %55 : vector<8x128xf32>
    %cst_39 = arith.constant 1.000000e+00 : f32
    %57 = vector.broadcast %cst_39 : f32 to vector<8x128xf32>
    %58 = arith.addf %57, %56 : vector<8x128xf32>
    %59 = arith.divf %57, %58 : vector<8x128xf32>
    %60 = vector.extract_strided_slice %41 {offsets = [0, 256], sizes = [8, 128], strides = [1, 1]} : vector<8x512xf32> to vector<8x128xf32>
    %c0_40 = arith.constant 0 : index
    %c256 = arith.constant 256 : index
    %61 = vector.load %arg4[%c0_40, %c256] : memref<128x512xf32, #tpu.memory_space<vmem>>, vector<128x128xf32>
    %cst_41 = arith.constant dense<0.000000e+00> : vector<8x128xf32>
    %62 = tpu.matmul %36, %61, %cst_41 {dimension_numbers = #tpu.dot_dimension_numbers<[1], [0], [0], [1], [0, 0, 1, 1], [], []>} : vector<8x128xf32>, vector<128x128xf32>, vector<8x128xf32> -> vector<8x128xf32>
    %63 = arith.addf %60, %62 : vector<8x128xf32>
    %64 = math.tanh %63 : vector<8x128xf32>
    %65 = arith.mulf %59, %37 : vector<8x128xf32>
    %66 = arith.mulf %50, %64 : vector<8x128xf32>
    %67 = arith.addf %65, %66 : vector<8x128xf32>
    %68 = vector.extract_strided_slice %41 {offsets = [0, 384], sizes = [8, 128], strides = [1, 1]} : vector<8x512xf32> to vector<8x128xf32>
    %c0_42 = arith.constant 0 : index
    %c384 = arith.constant 384 : index
    %69 = vector.load %arg4[%c0_42, %c384] : memref<128x512xf32, #tpu.memory_space<vmem>>, vector<128x128xf32>
    %cst_43 = arith.constant dense<0.000000e+00> : vector<8x128xf32>
    %70 = tpu.matmul %36, %69, %cst_43 {dimension_numbers = #tpu.dot_dimension_numbers<[1], [0], [0], [1], [0, 0, 1, 1], [], []>} : vector<8x128xf32>, vector<128x128xf32>, vector<8x128xf32> -> vector<8x128xf32>
    %71 = arith.addf %68, %70 : vector<8x128xf32>
    %72 = arith.negf %71 : vector<8x128xf32>
    %73 = math.exp %72 : vector<8x128xf32>
    %cst_44 = arith.constant 1.000000e+00 : f32
    %74 = vector.broadcast %cst_44 : f32 to vector<8x128xf32>
    %75 = arith.addf %74, %73 : vector<8x128xf32>
    %76 = arith.divf %74, %75 : vector<8x128xf32>
    %77 = math.tanh %67 : vector<8x128xf32>
    %78 = arith.mulf %76, %77 : vector<8x128xf32>
    %c1_i32 = arith.constant 1 : i32
    %c8_i32_45 = arith.constant 8 : i32
    %79 = arith.muli %c1_i32, %c8_i32_45 : i32
    %80 = tpu.assume_multiple %79, 8 : i32
    %81 = arith.index_cast %80 : i32 to index
    %c0_46 = arith.constant 0 : index
    %82 = vector.load %arg11[%81, %c0_46] : memref<64x512xf32, #tpu.memory_space<vmem>>, vector<8x512xf32>
    %83 = vector.extract_strided_slice %82 {offsets = [0, 0], sizes = [8, 128], strides = [1, 1]} : vector<8x512xf32> to vector<8x128xf32>
    %c0_47 = arith.constant 0 : index
    %c0_48 = arith.constant 0 : index
    %84 = vector.load %arg4[%c0_47, %c0_48] : memref<128x512xf32, #tpu.memory_space<vmem>>, vector<128x128xf32>
    %cst_49 = arith.constant dense<0.000000e+00> : vector<8x128xf32>
    %85 = tpu.matmul %78, %84, %cst_49 {dimension_numbers = #tpu.dot_dimension_numbers<[1], [0], [0], [1], [0, 0, 1, 1], [], []>} : vector<8x128xf32>, vector<128x128xf32>, vector<8x128xf32> -> vector<8x128xf32>
    %86 = arith.addf %83, %85 : vector<8x128xf32>
    %87 = arith.negf %86 : vector<8x128xf32>
    %88 = math.exp %87 : vector<8x128xf32>
    %cst_50 = arith.constant 1.000000e+00 : f32
    %89 = vector.broadcast %cst_50 : f32 to vector<8x128xf32>
    %90 = arith.addf %89, %88 : vector<8x128xf32>
    %91 = arith.divf %89, %90 : vector<8x128xf32>
    %92 = vector.extract_strided_slice %82 {offsets = [0, 128], sizes = [8, 128], strides = [1, 1]} : vector<8x512xf32> to vector<8x128xf32>
    %c0_51 = arith.constant 0 : index
    %c128_52 = arith.constant 128 : index
    %93 = vector.load %arg4[%c0_51, %c128_52] : memref<128x512xf32, #tpu.memory_space<vmem>>, vector<128x128xf32>
    %cst_53 = arith.constant dense<0.000000e+00> : vector<8x128xf32>
    %94 = tpu.matmul %78, %93, %cst_53 {dimension_numbers = #tpu.dot_dimension_numbers<[1], [0], [0], [1], [0, 0, 1, 1], [], []>} : vector<8x128xf32>, vector<128x128xf32>, vector<8x128xf32> -> vector<8x128xf32>
    %95 = arith.addf %92, %94 : vector<8x128xf32>
    %96 = arith.negf %95 : vector<8x128xf32>
    %97 = math.exp %96 : vector<8x128xf32>
    %cst_54 = arith.constant 1.000000e+00 : f32
    %98 = vector.broadcast %cst_54 : f32 to vector<8x128xf32>
    %99 = arith.addf %98, %97 : vector<8x128xf32>
    %100 = arith.divf %98, %99 : vector<8x128xf32>
    %101 = vector.extract_strided_slice %82 {offsets = [0, 256], sizes = [8, 128], strides = [1, 1]} : vector<8x512xf32> to vector<8x128xf32>
    %c0_55 = arith.constant 0 : index
    %c256_56 = arith.constant 256 : index
    %102 = vector.load %arg4[%c0_55, %c256_56] : memref<128x512xf32, #tpu.memory_space<vmem>>, vector<128x128xf32>
    %cst_57 = arith.constant dense<0.000000e+00> : vector<8x128xf32>
    %103 = tpu.matmul %78, %102, %cst_57 {dimension_numbers = #tpu.dot_dimension_numbers<[1], [0], [0], [1], [0, 0, 1, 1], [], []>} : vector<8x128xf32>, vector<128x128xf32>, vector<8x128xf32> -> vector<8x128xf32>
    %104 = arith.addf %101, %103 : vector<8x128xf32>
    %105 = math.tanh %104 : vector<8x128xf32>
    %106 = arith.mulf %100, %67 : vector<8x128xf32>
    %107 = arith.mulf %91, %105 : vector<8x128xf32>
    %108 = arith.addf %106, %107 : vector<8x128xf32>
    %109 = vector.extract_strided_slice %82 {offsets = [0, 384], sizes = [8, 128], strides = [1, 1]} : vector<8x512xf32> to vector<8x128xf32>
    %c0_58 = arith.constant 0 : index
    %c384_59 = arith.constant 384 : index
    %110 = vector.load %arg4[%c0_58, %c384_59] : memref<128x512xf32, #tpu.memory_space<vmem>>, vector<128x128xf32>
    %cst_60 = arith.constant dense<0.000000e+00> : vector<8x128xf32>
    %111 = tpu.matmul %78, %110, %cst_60 {dimension_numbers = #tpu.dot_dimension_numbers<[1], [0], [0], [1], [0, 0, 1, 1], [], []>} : vector<8x128xf32>, vector<128x128xf32>, vector<8x128xf32> -> vector<8x128xf32>
    %112 = arith.addf %109, %111 : vector<8x128xf32>
    %113 = arith.negf %112 : vector<8x128xf32>
    %114 = math.exp %113 : vector<8x128xf32>
    %cst_61 = arith.constant 1.000000e+00 : f32
    %115 = vector.broadcast %cst_61 : f32 to vector<8x128xf32>
    %116 = arith.addf %115, %114 : vector<8x128xf32>
    %117 = arith.divf %115, %116 : vector<8x128xf32>
    %118 = math.tanh %108 : vector<8x128xf32>
    %119 = arith.mulf %117, %118 : vector<8x128xf32>
    %c2_i32 = arith.constant 2 : i32
    %c8_i32_62 = arith.constant 8 : i32
    %120 = arith.muli %c2_i32, %c8_i32_62 : i32
    %121 = tpu.assume_multiple %120, 8 : i32
    %122 = arith.index_cast %121 : i32 to index
    %c0_63 = arith.constant 0 : index
    %123 = vector.load %arg11[%122, %c0_63] : memref<64x512xf32, #tpu.memory_space<vmem>>, vector<8x512xf32>
    %124 = vector.extract_strided_slice %123 {offsets = [0, 0], sizes = [8, 128], strides = [1, 1]} : vector<8x512xf32> to vector<8x128xf32>
    %c0_64 = arith.constant 0 : index
    %c0_65 = arith.constant 0 : index
    %125 = vector.load %arg4[%c0_64, %c0_65] : memref<128x512xf32, #tpu.memory_space<vmem>>, vector<128x128xf32>
    %cst_66 = arith.constant dense<0.000000e+00> : vector<8x128xf32>
    %126 = tpu.matmul %119, %125, %cst_66 {dimension_numbers = #tpu.dot_dimension_numbers<[1], [0], [0], [1], [0, 0, 1, 1], [], []>} : vector<8x128xf32>, vector<128x128xf32>, vector<8x128xf32> -> vector<8x128xf32>
    %127 = arith.addf %124, %126 : vector<8x128xf32>
    %128 = arith.negf %127 : vector<8x128xf32>
    %129 = math.exp %128 : vector<8x128xf32>
    %cst_67 = arith.constant 1.000000e+00 : f32
    %130 = vector.broadcast %cst_67 : f32 to vector<8x128xf32>
    %131 = arith.addf %130, %129 : vector<8x128xf32>
    %132 = arith.divf %130, %131 : vector<8x128xf32>
    %133 = vector.extract_strided_slice %123 {offsets = [0, 128], sizes = [8, 128], strides = [1, 1]} : vector<8x512xf32> to vector<8x128xf32>
    %c0_68 = arith.constant 0 : index
    %c128_69 = arith.constant 128 : index
    %134 = vector.load %arg4[%c0_68, %c128_69] : memref<128x512xf32, #tpu.memory_space<vmem>>, vector<128x128xf32>
    %cst_70 = arith.constant dense<0.000000e+00> : vector<8x128xf32>
    %135 = tpu.matmul %119, %134, %cst_70 {dimension_numbers = #tpu.dot_dimension_numbers<[1], [0], [0], [1], [0, 0, 1, 1], [], []>} : vector<8x128xf32>, vector<128x128xf32>, vector<8x128xf32> -> vector<8x128xf32>
    %136 = arith.addf %133, %135 : vector<8x128xf32>
    %137 = arith.negf %136 : vector<8x128xf32>
    %138 = math.exp %137 : vector<8x128xf32>
    %cst_71 = arith.constant 1.000000e+00 : f32
    %139 = vector.broadcast %cst_71 : f32 to vector<8x128xf32>
    %140 = arith.addf %139, %138 : vector<8x128xf32>
    %141 = arith.divf %139, %140 : vector<8x128xf32>
    %142 = vector.extract_strided_slice %123 {offsets = [0, 256], sizes = [8, 128], strides = [1, 1]} : vector<8x512xf32> to vector<8x128xf32>
    %c0_72 = arith.constant 0 : index
    %c256_73 = arith.constant 256 : index
    %143 = vector.load %arg4[%c0_72, %c256_73] : memref<128x512xf32, #tpu.memory_space<vmem>>, vector<128x128xf32>
    %cst_74 = arith.constant dense<0.000000e+00> : vector<8x128xf32>
    %144 = tpu.matmul %119, %143, %cst_74 {dimension_numbers = #tpu.dot_dimension_numbers<[1], [0], [0], [1], [0, 0, 1, 1], [], []>} : vector<8x128xf32>, vector<128x128xf32>, vector<8x128xf32> -> vector<8x128xf32>
    %145 = arith.addf %142, %144 : vector<8x128xf32>
    %146 = math.tanh %145 : vector<8x128xf32>
    %147 = arith.mulf %141, %108 : vector<8x128xf32>
    %148 = arith.mulf %132, %146 : vector<8x128xf32>
    %149 = arith.addf %147, %148 : vector<8x128xf32>
    %150 = vector.extract_strided_slice %123 {offsets = [0, 384], sizes = [8, 128], strides = [1, 1]} : vector<8x512xf32> to vector<8x128xf32>
    %c0_75 = arith.constant 0 : index
    %c384_76 = arith.constant 384 : index
    %151 = vector.load %arg4[%c0_75, %c384_76] : memref<128x512xf32, #tpu.memory_space<vmem>>, vector<128x128xf32>
    %cst_77 = arith.constant dense<0.000000e+00> : vector<8x128xf32>
    %152 = tpu.matmul %119, %151, %cst_77 {dimension_numbers = #tpu.dot_dimension_numbers<[1], [0], [0], [1], [0, 0, 1, 1], [], []>} : vector<8x128xf32>, vector<128x128xf32>, vector<8x128xf32> -> vector<8x128xf32>
    %153 = arith.addf %150, %152 : vector<8x128xf32>
    %154 = arith.negf %153 : vector<8x128xf32>
    %155 = math.exp %154 : vector<8x128xf32>
    %cst_78 = arith.constant 1.000000e+00 : f32
    %156 = vector.broadcast %cst_78 : f32 to vector<8x128xf32>
    %157 = arith.addf %156, %155 : vector<8x128xf32>
    %158 = arith.divf %156, %157 : vector<8x128xf32>
    %159 = math.tanh %149 : vector<8x128xf32>
    %160 = arith.mulf %158, %159 : vector<8x128xf32>
    %c3_i32 = arith.constant 3 : i32
    %c8_i32_79 = arith.constant 8 : i32
    %161 = arith.muli %c3_i32, %c8_i32_79 : i32
    %162 = tpu.assume_multiple %161, 8 : i32
    %163 = arith.index_cast %162 : i32 to index
    %c0_80 = arith.constant 0 : index
    %164 = vector.load %arg11[%163, %c0_80] : memref<64x512xf32, #tpu.memory_space<vmem>>, vector<8x512xf32>
    %165 = vector.extract_strided_slice %164 {offsets = [0, 0], sizes = [8, 128], strides = [1, 1]} : vector<8x512xf32> to vector<8x128xf32>
    %c0_81 = arith.constant 0 : index
    %c0_82 = arith.constant 0 : index
    %166 = vector.load %arg4[%c0_81, %c0_82] : memref<128x512xf32, #tpu.memory_space<vmem>>, vector<128x128xf32>
    %cst_83 = arith.constant dense<0.000000e+00> : vector<8x128xf32>
    %167 = tpu.matmul %160, %166, %cst_83 {dimension_numbers = #tpu.dot_dimension_numbers<[1], [0], [0], [1], [0, 0, 1, 1], [], []>} : vector<8x128xf32>, vector<128x128xf32>, vector<8x128xf32> -> vector<8x128xf32>
    %168 = arith.addf %165, %167 : vector<8x128xf32>
    %169 = arith.negf %168 : vector<8x128xf32>
    %170 = math.exp %169 : vector<8x128xf32>
    %cst_84 = arith.constant 1.000000e+00 : f32
    %171 = vector.broadcast %cst_84 : f32 to vector<8x128xf32>
    %172 = arith.addf %171, %170 : vector<8x128xf32>
    %173 = arith.divf %171, %172 : vector<8x128xf32>
    %174 = vector.extract_strided_slice %164 {offsets = [0, 128], sizes = [8, 128], strides = [1, 1]} : vector<8x512xf32> to vector<8x128xf32>
    %c0_85 = arith.constant 0 : index
    %c128_86 = arith.constant 128 : index
    %175 = vector.load %arg4[%c0_85, %c128_86] : memref<128x512xf32, #tpu.memory_space<vmem>>, vector<128x128xf32>
    %cst_87 = arith.constant dense<0.000000e+00> : vector<8x128xf32>
    %176 = tpu.matmul %160, %175, %cst_87 {dimension_numbers = #tpu.dot_dimension_numbers<[1], [0], [0], [1], [0, 0, 1, 1], [], []>} : vector<8x128xf32>, vector<128x128xf32>, vector<8x128xf32> -> vector<8x128xf32>
    %177 = arith.addf %174, %176 : vector<8x128xf32>
    %178 = arith.negf %177 : vector<8x128xf32>
    %179 = math.exp %178 : vector<8x128xf32>
    %cst_88 = arith.constant 1.000000e+00 : f32
    %180 = vector.broadcast %cst_88 : f32 to vector<8x128xf32>
    %181 = arith.addf %180, %179 : vector<8x128xf32>
    %182 = arith.divf %180, %181 : vector<8x128xf32>
    %183 = vector.extract_strided_slice %164 {offsets = [0, 256], sizes = [8, 128], strides = [1, 1]} : vector<8x512xf32> to vector<8x128xf32>
    %c0_89 = arith.constant 0 : index
    %c256_90 = arith.constant 256 : index
    %184 = vector.load %arg4[%c0_89, %c256_90] : memref<128x512xf32, #tpu.memory_space<vmem>>, vector<128x128xf32>
    %cst_91 = arith.constant dense<0.000000e+00> : vector<8x128xf32>
    %185 = tpu.matmul %160, %184, %cst_91 {dimension_numbers = #tpu.dot_dimension_numbers<[1], [0], [0], [1], [0, 0, 1, 1], [], []>} : vector<8x128xf32>, vector<128x128xf32>, vector<8x128xf32> -> vector<8x128xf32>
    %186 = arith.addf %183, %185 : vector<8x128xf32>
    %187 = math.tanh %186 : vector<8x128xf32>
    %188 = arith.mulf %182, %149 : vector<8x128xf32>
    %189 = arith.mulf %173, %187 : vector<8x128xf32>
    %190 = arith.addf %188, %189 : vector<8x128xf32>
    %191 = vector.extract_strided_slice %164 {offsets = [0, 384], sizes = [8, 128], strides = [1, 1]} : vector<8x512xf32> to vector<8x128xf32>
    %c0_92 = arith.constant 0 : index
    %c384_93 = arith.constant 384 : index
    %192 = vector.load %arg4[%c0_92, %c384_93] : memref<128x512xf32, #tpu.memory_space<vmem>>, vector<128x128xf32>
    %cst_94 = arith.constant dense<0.000000e+00> : vector<8x128xf32>
    %193 = tpu.matmul %160, %192, %cst_94 {dimension_numbers = #tpu.dot_dimension_numbers<[1], [0], [0], [1], [0, 0, 1, 1], [], []>} : vector<8x128xf32>, vector<128x128xf32>, vector<8x128xf32> -> vector<8x128xf32>
    %194 = arith.addf %191, %193 : vector<8x128xf32>
    %195 = arith.negf %194 : vector<8x128xf32>
    %196 = math.exp %195 : vector<8x128xf32>
    %cst_95 = arith.constant 1.000000e+00 : f32
    %197 = vector.broadcast %cst_95 : f32 to vector<8x128xf32>
    %198 = arith.addf %197, %196 : vector<8x128xf32>
    %199 = arith.divf %197, %198 : vector<8x128xf32>
    %200 = math.tanh %190 : vector<8x128xf32>
    %201 = arith.mulf %199, %200 : vector<8x128xf32>
    %c4_i32 = arith.constant 4 : i32
    %c8_i32_96 = arith.constant 8 : i32
    %202 = arith.muli %c4_i32, %c8_i32_96 : i32
    %203 = tpu.assume_multiple %202, 8 : i32
    %204 = arith.index_cast %203 : i32 to index
    %c0_97 = arith.constant 0 : index
    %205 = vector.load %arg11[%204, %c0_97] : memref<64x512xf32, #tpu.memory_space<vmem>>, vector<8x512xf32>
    %206 = vector.extract_strided_slice %205 {offsets = [0, 0], sizes = [8, 128], strides = [1, 1]} : vector<8x512xf32> to vector<8x128xf32>
    %c0_98 = arith.constant 0 : index
    %c0_99 = arith.constant 0 : index
    %207 = vector.load %arg4[%c0_98, %c0_99] : memref<128x512xf32, #tpu.memory_space<vmem>>, vector<128x128xf32>
    %cst_100 = arith.constant dense<0.000000e+00> : vector<8x128xf32>
    %208 = tpu.matmul %201, %207, %cst_100 {dimension_numbers = #tpu.dot_dimension_numbers<[1], [0], [0], [1], [0, 0, 1, 1], [], []>} : vector<8x128xf32>, vector<128x128xf32>, vector<8x128xf32> -> vector<8x128xf32>
    %209 = arith.addf %206, %208 : vector<8x128xf32>
    %210 = arith.negf %209 : vector<8x128xf32>
    %211 = math.exp %210 : vector<8x128xf32>
    %cst_101 = arith.constant 1.000000e+00 : f32
    %212 = vector.broadcast %cst_101 : f32 to vector<8x128xf32>
    %213 = arith.addf %212, %211 : vector<8x128xf32>
    %214 = arith.divf %212, %213 : vector<8x128xf32>
    %215 = vector.extract_strided_slice %205 {offsets = [0, 128], sizes = [8, 128], strides = [1, 1]} : vector<8x512xf32> to vector<8x128xf32>
    %c0_102 = arith.constant 0 : index
    %c128_103 = arith.constant 128 : index
    %216 = vector.load %arg4[%c0_102, %c128_103] : memref<128x512xf32, #tpu.memory_space<vmem>>, vector<128x128xf32>
    %cst_104 = arith.constant dense<0.000000e+00> : vector<8x128xf32>
    %217 = tpu.matmul %201, %216, %cst_104 {dimension_numbers = #tpu.dot_dimension_numbers<[1], [0], [0], [1], [0, 0, 1, 1], [], []>} : vector<8x128xf32>, vector<128x128xf32>, vector<8x128xf32> -> vector<8x128xf32>
    %218 = arith.addf %215, %217 : vector<8x128xf32>
    %219 = arith.negf %218 : vector<8x128xf32>
    %220 = math.exp %219 : vector<8x128xf32>
    %cst_105 = arith.constant 1.000000e+00 : f32
    %221 = vector.broadcast %cst_105 : f32 to vector<8x128xf32>
    %222 = arith.addf %221, %220 : vector<8x128xf32>
    %223 = arith.divf %221, %222 : vector<8x128xf32>
    %224 = vector.extract_strided_slice %205 {offsets = [0, 256], sizes = [8, 128], strides = [1, 1]} : vector<8x512xf32> to vector<8x128xf32>
    %c0_106 = arith.constant 0 : index
    %c256_107 = arith.constant 256 : index
    %225 = vector.load %arg4[%c0_106, %c256_107] : memref<128x512xf32, #tpu.memory_space<vmem>>, vector<128x128xf32>
    %cst_108 = arith.constant dense<0.000000e+00> : vector<8x128xf32>
    %226 = tpu.matmul %201, %225, %cst_108 {dimension_numbers = #tpu.dot_dimension_numbers<[1], [0], [0], [1], [0, 0, 1, 1], [], []>} : vector<8x128xf32>, vector<128x128xf32>, vector<8x128xf32> -> vector<8x128xf32>
    %227 = arith.addf %224, %226 : vector<8x128xf32>
    %228 = math.tanh %227 : vector<8x128xf32>
    %229 = arith.mulf %223, %190 : vector<8x128xf32>
    %230 = arith.mulf %214, %228 : vector<8x128xf32>
    %231 = arith.addf %229, %230 : vector<8x128xf32>
    %232 = vector.extract_strided_slice %205 {offsets = [0, 384], sizes = [8, 128], strides = [1, 1]} : vector<8x512xf32> to vector<8x128xf32>
    %c0_109 = arith.constant 0 : index
    %c384_110 = arith.constant 384 : index
    %233 = vector.load %arg4[%c0_109, %c384_110] : memref<128x512xf32, #tpu.memory_space<vmem>>, vector<128x128xf32>
    %cst_111 = arith.constant dense<0.000000e+00> : vector<8x128xf32>
    %234 = tpu.matmul %201, %233, %cst_111 {dimension_numbers = #tpu.dot_dimension_numbers<[1], [0], [0], [1], [0, 0, 1, 1], [], []>} : vector<8x128xf32>, vector<128x128xf32>, vector<8x128xf32> -> vector<8x128xf32>
    %235 = arith.addf %232, %234 : vector<8x128xf32>
    %236 = arith.negf %235 : vector<8x128xf32>
    %237 = math.exp %236 : vector<8x128xf32>
    %cst_112 = arith.constant 1.000000e+00 : f32
    %238 = vector.broadcast %cst_112 : f32 to vector<8x128xf32>
    %239 = arith.addf %238, %237 : vector<8x128xf32>
    %240 = arith.divf %238, %239 : vector<8x128xf32>
    %241 = math.tanh %231 : vector<8x128xf32>
    %242 = arith.mulf %240, %241 : vector<8x128xf32>
    %c5_i32 = arith.constant 5 : i32
    %c8_i32_113 = arith.constant 8 : i32
    %243 = arith.muli %c5_i32, %c8_i32_113 : i32
    %244 = tpu.assume_multiple %243, 8 : i32
    %245 = arith.index_cast %244 : i32 to index
    %c0_114 = arith.constant 0 : index
    %246 = vector.load %arg11[%245, %c0_114] : memref<64x512xf32, #tpu.memory_space<vmem>>, vector<8x512xf32>
    %247 = vector.extract_strided_slice %246 {offsets = [0, 0], sizes = [8, 128], strides = [1, 1]} : vector<8x512xf32> to vector<8x128xf32>
    %c0_115 = arith.constant 0 : index
    %c0_116 = arith.constant 0 : index
    %248 = vector.load %arg4[%c0_115, %c0_116] : memref<128x512xf32, #tpu.memory_space<vmem>>, vector<128x128xf32>
    %cst_117 = arith.constant dense<0.000000e+00> : vector<8x128xf32>
    %249 = tpu.matmul %242, %248, %cst_117 {dimension_numbers = #tpu.dot_dimension_numbers<[1], [0], [0], [1], [0, 0, 1, 1], [], []>} : vector<8x128xf32>, vector<128x128xf32>, vector<8x128xf32> -> vector<8x128xf32>
    %250 = arith.addf %247, %249 : vector<8x128xf32>
    %251 = arith.negf %250 : vector<8x128xf32>
    %252 = math.exp %251 : vector<8x128xf32>
    %cst_118 = arith.constant 1.000000e+00 : f32
    %253 = vector.broadcast %cst_118 : f32 to vector<8x128xf32>
    %254 = arith.addf %253, %252 : vector<8x128xf32>
    %255 = arith.divf %253, %254 : vector<8x128xf32>
    %256 = vector.extract_strided_slice %246 {offsets = [0, 128], sizes = [8, 128], strides = [1, 1]} : vector<8x512xf32> to vector<8x128xf32>
    %c0_119 = arith.constant 0 : index
    %c128_120 = arith.constant 128 : index
    %257 = vector.load %arg4[%c0_119, %c128_120] : memref<128x512xf32, #tpu.memory_space<vmem>>, vector<128x128xf32>
    %cst_121 = arith.constant dense<0.000000e+00> : vector<8x128xf32>
    %258 = tpu.matmul %242, %257, %cst_121 {dimension_numbers = #tpu.dot_dimension_numbers<[1], [0], [0], [1], [0, 0, 1, 1], [], []>} : vector<8x128xf32>, vector<128x128xf32>, vector<8x128xf32> -> vector<8x128xf32>
    %259 = arith.addf %256, %258 : vector<8x128xf32>
    %260 = arith.negf %259 : vector<8x128xf32>
    %261 = math.exp %260 : vector<8x128xf32>
    %cst_122 = arith.constant 1.000000e+00 : f32
    %262 = vector.broadcast %cst_122 : f32 to vector<8x128xf32>
    %263 = arith.addf %262, %261 : vector<8x128xf32>
    %264 = arith.divf %262, %263 : vector<8x128xf32>
    %265 = vector.extract_strided_slice %246 {offsets = [0, 256], sizes = [8, 128], strides = [1, 1]} : vector<8x512xf32> to vector<8x128xf32>
    %c0_123 = arith.constant 0 : index
    %c256_124 = arith.constant 256 : index
    %266 = vector.load %arg4[%c0_123, %c256_124] : memref<128x512xf32, #tpu.memory_space<vmem>>, vector<128x128xf32>
    %cst_125 = arith.constant dense<0.000000e+00> : vector<8x128xf32>
    %267 = tpu.matmul %242, %266, %cst_125 {dimension_numbers = #tpu.dot_dimension_numbers<[1], [0], [0], [1], [0, 0, 1, 1], [], []>} : vector<8x128xf32>, vector<128x128xf32>, vector<8x128xf32> -> vector<8x128xf32>
    %268 = arith.addf %265, %267 : vector<8x128xf32>
    %269 = math.tanh %268 : vector<8x128xf32>
    %270 = arith.mulf %264, %231 : vector<8x128xf32>
    %271 = arith.mulf %255, %269 : vector<8x128xf32>
    %272 = arith.addf %270, %271 : vector<8x128xf32>
    %273 = vector.extract_strided_slice %246 {offsets = [0, 384], sizes = [8, 128], strides = [1, 1]} : vector<8x512xf32> to vector<8x128xf32>
    %c0_126 = arith.constant 0 : index
    %c384_127 = arith.constant 384 : index
    %274 = vector.load %arg4[%c0_126, %c384_127] : memref<128x512xf32, #tpu.memory_space<vmem>>, vector<128x128xf32>
    %cst_128 = arith.constant dense<0.000000e+00> : vector<8x128xf32>
    %275 = tpu.matmul %242, %274, %cst_128 {dimension_numbers = #tpu.dot_dimension_numbers<[1], [0], [0], [1], [0, 0, 1, 1], [], []>} : vector<8x128xf32>, vector<128x128xf32>, vector<8x128xf32> -> vector<8x128xf32>
    %276 = arith.addf %273, %275 : vector<8x128xf32>
    %277 = arith.negf %276 : vector<8x128xf32>
    %278 = math.exp %277 : vector<8x128xf32>
    %cst_129 = arith.constant 1.000000e+00 : f32
    %279 = vector.broadcast %cst_129 : f32 to vector<8x128xf32>
    %280 = arith.addf %279, %278 : vector<8x128xf32>
    %281 = arith.divf %279, %280 : vector<8x128xf32>
    %282 = math.tanh %272 : vector<8x128xf32>
    %283 = arith.mulf %281, %282 : vector<8x128xf32>
    %c6_i32 = arith.constant 6 : i32
    %c8_i32_130 = arith.constant 8 : i32
    %284 = arith.muli %c6_i32, %c8_i32_130 : i32
    %285 = tpu.assume_multiple %284, 8 : i32
    %286 = arith.index_cast %285 : i32 to index
    %c0_131 = arith.constant 0 : index
    %287 = vector.load %arg11[%286, %c0_131] : memref<64x512xf32, #tpu.memory_space<vmem>>, vector<8x512xf32>
    %288 = vector.extract_strided_slice %287 {offsets = [0, 0], sizes = [8, 128], strides = [1, 1]} : vector<8x512xf32> to vector<8x128xf32>
    %c0_132 = arith.constant 0 : index
    %c0_133 = arith.constant 0 : index
    %289 = vector.load %arg4[%c0_132, %c0_133] : memref<128x512xf32, #tpu.memory_space<vmem>>, vector<128x128xf32>
    %cst_134 = arith.constant dense<0.000000e+00> : vector<8x128xf32>
    %290 = tpu.matmul %283, %289, %cst_134 {dimension_numbers = #tpu.dot_dimension_numbers<[1], [0], [0], [1], [0, 0, 1, 1], [], []>} : vector<8x128xf32>, vector<128x128xf32>, vector<8x128xf32> -> vector<8x128xf32>
    %291 = arith.addf %288, %290 : vector<8x128xf32>
    %292 = arith.negf %291 : vector<8x128xf32>
    %293 = math.exp %292 : vector<8x128xf32>
    %cst_135 = arith.constant 1.000000e+00 : f32
    %294 = vector.broadcast %cst_135 : f32 to vector<8x128xf32>
    %295 = arith.addf %294, %293 : vector<8x128xf32>
    %296 = arith.divf %294, %295 : vector<8x128xf32>
    %297 = vector.extract_strided_slice %287 {offsets = [0, 128], sizes = [8, 128], strides = [1, 1]} : vector<8x512xf32> to vector<8x128xf32>
    %c0_136 = arith.constant 0 : index
    %c128_137 = arith.constant 128 : index
    %298 = vector.load %arg4[%c0_136, %c128_137] : memref<128x512xf32, #tpu.memory_space<vmem>>, vector<128x128xf32>
    %cst_138 = arith.constant dense<0.000000e+00> : vector<8x128xf32>
    %299 = tpu.matmul %283, %298, %cst_138 {dimension_numbers = #tpu.dot_dimension_numbers<[1], [0], [0], [1], [0, 0, 1, 1], [], []>} : vector<8x128xf32>, vector<128x128xf32>, vector<8x128xf32> -> vector<8x128xf32>
    %300 = arith.addf %297, %299 : vector<8x128xf32>
    %301 = arith.negf %300 : vector<8x128xf32>
    %302 = math.exp %301 : vector<8x128xf32>
    %cst_139 = arith.constant 1.000000e+00 : f32
    %303 = vector.broadcast %cst_139 : f32 to vector<8x128xf32>
    %304 = arith.addf %303, %302 : vector<8x128xf32>
    %305 = arith.divf %303, %304 : vector<8x128xf32>
    %306 = vector.extract_strided_slice %287 {offsets = [0, 256], sizes = [8, 128], strides = [1, 1]} : vector<8x512xf32> to vector<8x128xf32>
    %c0_140 = arith.constant 0 : index
    %c256_141 = arith.constant 256 : index
    %307 = vector.load %arg4[%c0_140, %c256_141] : memref<128x512xf32, #tpu.memory_space<vmem>>, vector<128x128xf32>
    %cst_142 = arith.constant dense<0.000000e+00> : vector<8x128xf32>
    %308 = tpu.matmul %283, %307, %cst_142 {dimension_numbers = #tpu.dot_dimension_numbers<[1], [0], [0], [1], [0, 0, 1, 1], [], []>} : vector<8x128xf32>, vector<128x128xf32>, vector<8x128xf32> -> vector<8x128xf32>
    %309 = arith.addf %306, %308 : vector<8x128xf32>
    %310 = math.tanh %309 : vector<8x128xf32>
    %311 = arith.mulf %305, %272 : vector<8x128xf32>
    %312 = arith.mulf %296, %310 : vector<8x128xf32>
    %313 = arith.addf %311, %312 : vector<8x128xf32>
    %314 = vector.extract_strided_slice %287 {offsets = [0, 384], sizes = [8, 128], strides = [1, 1]} : vector<8x512xf32> to vector<8x128xf32>
    %c0_143 = arith.constant 0 : index
    %c384_144 = arith.constant 384 : index
    %315 = vector.load %arg4[%c0_143, %c384_144] : memref<128x512xf32, #tpu.memory_space<vmem>>, vector<128x128xf32>
    %cst_145 = arith.constant dense<0.000000e+00> : vector<8x128xf32>
    %316 = tpu.matmul %283, %315, %cst_145 {dimension_numbers = #tpu.dot_dimension_numbers<[1], [0], [0], [1], [0, 0, 1, 1], [], []>} : vector<8x128xf32>, vector<128x128xf32>, vector<8x128xf32> -> vector<8x128xf32>
    %317 = arith.addf %314, %316 : vector<8x128xf32>
    %318 = arith.negf %317 : vector<8x128xf32>
    %319 = math.exp %318 : vector<8x128xf32>
    %cst_146 = arith.constant 1.000000e+00 : f32
    %320 = vector.broadcast %cst_146 : f32 to vector<8x128xf32>
    %321 = arith.addf %320, %319 : vector<8x128xf32>
    %322 = arith.divf %320, %321 : vector<8x128xf32>
    %323 = math.tanh %313 : vector<8x128xf32>
    %324 = arith.mulf %322, %323 : vector<8x128xf32>
    %c7_i32 = arith.constant 7 : i32
    %c8_i32_147 = arith.constant 8 : i32
    %325 = arith.muli %c7_i32, %c8_i32_147 : i32
    %326 = tpu.assume_multiple %325, 8 : i32
    %327 = arith.index_cast %326 : i32 to index
    %c0_148 = arith.constant 0 : index
    %328 = vector.load %arg11[%327, %c0_148] : memref<64x512xf32, #tpu.memory_space<vmem>>, vector<8x512xf32>
    %329 = vector.extract_strided_slice %328 {offsets = [0, 0], sizes = [8, 128], strides = [1, 1]} : vector<8x512xf32> to vector<8x128xf32>
    %c0_149 = arith.constant 0 : index
    %c0_150 = arith.constant 0 : index
    %330 = vector.load %arg4[%c0_149, %c0_150] : memref<128x512xf32, #tpu.memory_space<vmem>>, vector<128x128xf32>
    %cst_151 = arith.constant dense<0.000000e+00> : vector<8x128xf32>
    %331 = tpu.matmul %324, %330, %cst_151 {dimension_numbers = #tpu.dot_dimension_numbers<[1], [0], [0], [1], [0, 0, 1, 1], [], []>} : vector<8x128xf32>, vector<128x128xf32>, vector<8x128xf32> -> vector<8x128xf32>
    %332 = arith.addf %329, %331 : vector<8x128xf32>
    %333 = arith.negf %332 : vector<8x128xf32>
    %334 = math.exp %333 : vector<8x128xf32>
    %cst_152 = arith.constant 1.000000e+00 : f32
    %335 = vector.broadcast %cst_152 : f32 to vector<8x128xf32>
    %336 = arith.addf %335, %334 : vector<8x128xf32>
    %337 = arith.divf %335, %336 : vector<8x128xf32>
    %338 = vector.extract_strided_slice %328 {offsets = [0, 128], sizes = [8, 128], strides = [1, 1]} : vector<8x512xf32> to vector<8x128xf32>
    %c0_153 = arith.constant 0 : index
    %c128_154 = arith.constant 128 : index
    %339 = vector.load %arg4[%c0_153, %c128_154] : memref<128x512xf32, #tpu.memory_space<vmem>>, vector<128x128xf32>
    %cst_155 = arith.constant dense<0.000000e+00> : vector<8x128xf32>
    %340 = tpu.matmul %324, %339, %cst_155 {dimension_numbers = #tpu.dot_dimension_numbers<[1], [0], [0], [1], [0, 0, 1, 1], [], []>} : vector<8x128xf32>, vector<128x128xf32>, vector<8x128xf32> -> vector<8x128xf32>
    %341 = arith.addf %338, %340 : vector<8x128xf32>
    %342 = arith.negf %341 : vector<8x128xf32>
    %343 = math.exp %342 : vector<8x128xf32>
    %cst_156 = arith.constant 1.000000e+00 : f32
    %344 = vector.broadcast %cst_156 : f32 to vector<8x128xf32>
    %345 = arith.addf %344, %343 : vector<8x128xf32>
    %346 = arith.divf %344, %345 : vector<8x128xf32>
    %347 = vector.extract_strided_slice %328 {offsets = [0, 256], sizes = [8, 128], strides = [1, 1]} : vector<8x512xf32> to vector<8x128xf32>
    %c0_157 = arith.constant 0 : index
    %c256_158 = arith.constant 256 : index
    %348 = vector.load %arg4[%c0_157, %c256_158] : memref<128x512xf32, #tpu.memory_space<vmem>>, vector<128x128xf32>
    %cst_159 = arith.constant dense<0.000000e+00> : vector<8x128xf32>
    %349 = tpu.matmul %324, %348, %cst_159 {dimension_numbers = #tpu.dot_dimension_numbers<[1], [0], [0], [1], [0, 0, 1, 1], [], []>} : vector<8x128xf32>, vector<128x128xf32>, vector<8x128xf32> -> vector<8x128xf32>
    %350 = arith.addf %347, %349 : vector<8x128xf32>
    %351 = math.tanh %350 : vector<8x128xf32>
    %352 = arith.mulf %346, %313 : vector<8x128xf32>
    %353 = arith.mulf %337, %351 : vector<8x128xf32>
    %354 = arith.addf %352, %353 : vector<8x128xf32>
    %355 = vector.extract_strided_slice %328 {offsets = [0, 384], sizes = [8, 128], strides = [1, 1]} : vector<8x512xf32> to vector<8x128xf32>
    %c0_160 = arith.constant 0 : index
    %c384_161 = arith.constant 384 : index
    %356 = vector.load %arg4[%c0_160, %c384_161] : memref<128x512xf32, #tpu.memory_space<vmem>>, vector<128x128xf32>
    %cst_162 = arith.constant dense<0.000000e+00> : vector<8x128xf32>
    %357 = tpu.matmul %324, %356, %cst_162 {dimension_numbers = #tpu.dot_dimension_numbers<[1], [0], [0], [1], [0, 0, 1, 1], [], []>} : vector<8x128xf32>, vector<128x128xf32>, vector<8x128xf32> -> vector<8x128xf32>
    %358 = arith.addf %355, %357 : vector<8x128xf32>
    %359 = arith.negf %358 : vector<8x128xf32>
    %360 = math.exp %359 : vector<8x128xf32>
    %cst_163 = arith.constant 1.000000e+00 : f32
    %361 = vector.broadcast %cst_163 : f32 to vector<8x128xf32>
    %362 = arith.addf %361, %360 : vector<8x128xf32>
    %363 = arith.divf %361, %362 : vector<8x128xf32>
    %364 = math.tanh %354 : vector<8x128xf32>
    %365 = arith.mulf %363, %364 : vector<8x128xf32>
    %c8_i32_164 = arith.constant 8 : i32
    %c0_165 = arith.constant 0 : index
    %c0_166 = arith.constant 0 : index
    %366 = vector.load %arg9[%c0_165, %c0_166] : memref<8x128xf32, #tpu.memory_space<vmem>>, vector<8x128xf32>
    tpu.vector_store %arg9[%c0_165, %c0_166], %365 {strides = array<i32>} : memref<8x128xf32, #tpu.memory_space<vmem>>, vector<8x128xf32>,
    %c0_167 = arith.constant 0 : index
    %c0_168 = arith.constant 0 : index
    %367 = vector.load %arg10[%c0_167, %c0_168] : memref<8x128xf32, #tpu.memory_space<vmem>>, vector<8x128xf32>
    tpu.vector_store %arg10[%c0_167, %c0_168], %354 {strides = array<i32>} : memref<8x128xf32, #tpu.memory_space<vmem>>, vector<8x128xf32>,
    %c0_i32_169 = arith.constant 0 : i32
    %368 = arith.cmpi eq, %arg1, %c0_i32_169 : i32
    %369 = arith.extui %368 : i1 to i32
    %c0_i32_170 = arith.constant 0 : i32
    %370 = arith.cmpi ne, %369, %c0_i32_170 : i32
    scf.if %370 {
      %c0_171 = arith.constant 0 : index
      %c0_172 = arith.constant 0 : index
      %371 = vector.load %arg6[%c0_171, %c0_172] : memref<128x128xf32, #tpu.memory_space<vmem>>, vector<128x128xf32>
      %cst_173 = arith.constant dense<0.000000e+00> : vector<8x128xf32>
      %372 = tpu.matmul %365, %371, %cst_173 {dimension_numbers = #tpu.dot_dimension_numbers<[1], [0], [0], [1], [0, 0, 1, 1], [], []>} : vector<8x128xf32>, vector<128x128xf32>, vector<8x128xf32> -> vector<8x128xf32>
      %c0_174 = arith.constant 0 : index
      %c0_175 = arith.constant 0 : index
      %373 = vector.load %arg7[%c0_174, %c0_175] : memref<1x128xf32, #tpu.memory_space<vmem>>, vector<1x128xf32>
      %374 = vector.broadcast %373 : vector<1x128xf32> to vector<8x128xf32>
      %375 = arith.addf %372, %374 : vector<8x128xf32>
      %c0_176 = arith.constant 0 : index
      %c0_177 = arith.constant 0 : index
      %376 = vector.load %arg8[%c0_176, %c0_177] : memref<8x128xf32, #tpu.memory_space<vmem>>, vector<8x128xf32>
      tpu.vector_store %arg8[%c0_176, %c0_177], %375 {strides = array<i32>} : memref<8x128xf32, #tpu.memory_space<vmem>>, vector<8x128xf32>,
    } else {
    }
    return
  }
  func.func @transform_0(%arg0: i32, %arg1: i32) -> (i32, i32, i32) {
    %c0_i32 = arith.constant 0 : i32
    %c0_i32_0 = arith.constant 0 : i32
    return %arg1, %arg0, %c0_i32 : i32, i32, i32
  }
  func.func @transform_1(%arg0: i32, %arg1: i32) -> (i32, i32) {
    %c0_i32 = arith.constant 0 : i32
    %c0_i32_0 = arith.constant 0 : i32
    %c0_i32_1 = arith.constant 0 : i32
    return %c0_i32, %c0_i32_0 : i32, i32
  }
  func.func @transform_2(%arg0: i32, %arg1: i32) -> (i32, i32) {
    %c0_i32 = arith.constant 0 : i32
    %c0_i32_0 = arith.constant 0 : i32
    %c0_i32_1 = arith.constant 0 : i32
    return %c0_i32, %c0_i32_0 : i32, i32
  }
  func.func @transform_3(%arg0: i32, %arg1: i32) -> (i32, i32) {
    %c0_i32 = arith.constant 0 : i32
    %c0_i32_0 = arith.constant 0 : i32
    %c0_i32_1 = arith.constant 0 : i32
    return %c0_i32, %c0_i32_0 : i32, i32
  }
  func.func @transform_4(%arg0: i32, %arg1: i32) -> (i32, i32) {
    %c0_i32 = arith.constant 0 : i32
    %c0_i32_0 = arith.constant 0 : i32
    %c0_i32_1 = arith.constant 0 : i32
    return %c0_i32, %c0_i32_0 : i32, i32
  }
  func.func @transform_5(%arg0: i32, %arg1: i32) -> (i32, i32) {
    %c0_i32 = arith.constant 0 : i32
    %c0_i32_0 = arith.constant 0 : i32
    %c0_i32_1 = arith.constant 0 : i32
    return %c0_i32, %c0_i32_0 : i32, i32
  }
  func.func @transform_6(%arg0: i32, %arg1: i32) -> (i32, i32) {
    %c0_i32 = arith.constant 0 : i32
    %c0_i32_0 = arith.constant 0 : i32
    return %arg0, %c0_i32 : i32, i32
  }
}

module attributes {stable_mosaic.version = 11 : i64} {
  func.func @kernel(%arg0: i32, %arg1: i32, %arg2: memref<8x8x128xf32, #tpu.memory_space<vmem>>, %arg3: memref<128x512xf32, #tpu.memory_space<vmem>>, %arg4: memref<128x512xf32, #tpu.memory_space<vmem>>, %arg5: memref<1x512xf32, #tpu.memory_space<vmem>>, %arg6: memref<128x128xf32, #tpu.memory_space<vmem>>, %arg7: memref<1x128xf32, #tpu.memory_space<vmem>>, %arg8: memref<8x128xf32, #tpu.memory_space<vmem>>, %arg9: memref<8x128xf32, #tpu.memory_space<vmem>>, %arg10: memref<8x128xf32, #tpu.memory_space<vmem>>, %arg11: memref<64x512xf32, #tpu.memory_space<vmem>>) attributes {dimension_semantics = [#tpu.dimension_semantics<parallel>, #tpu.dimension_semantics<arbitrary>], iteration_bounds = array<i64: 1, 1>, scalar_prefetch = 0 : i64, scratch_operands = 3 : i64, tpu.core_type = #tpu.core_type<tc>, window_params = [{transform_indices = @transform_0, window_bounds = array<i64: 8, 8, 128>}, {pipeline_mode = #tpu.pipeline_mode<synchronous>, transform_indices = @transform_1, window_bounds = array<i64: 128, 512>}, {pipeline_mode = #tpu.pipeline_mode<synchronous>, transform_indices = @transform_2, window_bounds = array<i64: 128, 512>}, {pipeline_mode = #tpu.pipeline_mode<synchronous>, transform_indices = @transform_3, window_bounds = array<i64: 1, 512>}, {pipeline_mode = #tpu.pipeline_mode<synchronous>, transform_indices = @transform_4, window_bounds = array<i64: 128, 128>}, {pipeline_mode = #tpu.pipeline_mode<synchronous>, transform_indices = @transform_5, window_bounds = array<i64: 1, 128>}, {transform_indices = @transform_6, window_bounds = array<i64: 8, 128>}]} {
    %c0_i32 = arith.constant 0 : i32
    %0 = arith.cmpi eq, %arg1, %c0_i32 : i32
    %1 = arith.extui %0 : i1 to i32
    %c0_i32_0 = arith.constant 0 : i32
    %2 = arith.cmpi ne, %1, %c0_i32_0 : i32
    scf.if %2 {
      %cst_171 = arith.constant 0.000000e+00 : f32
      %371 = vector.broadcast %cst_171 : f32 to vector<8x128xf32>
      %c0_172 = arith.constant 0 : index
      %c0_173 = arith.constant 0 : index
      %372 = vector.load %arg9[%c0_172, %c0_173] : memref<8x128xf32, #tpu.memory_space<vmem>>, vector<8x128xf32>
      tpu.vector_store %arg9[%c0_172, %c0_173], %371 {strides = array<i32>} : memref<8x128xf32, #tpu.memory_space<vmem>>, vector<8x128xf32>,
      %cst_174 = arith.constant 0.000000e+00 : f32
      %373 = vector.broadcast %cst_174 : f32 to vector<8x128xf32>
      %c0_175 = arith.constant 0 : index
      %c0_176 = arith.constant 0 : index
      %374 = vector.load %arg10[%c0_175, %c0_176] : memref<8x128xf32, #tpu.memory_space<vmem>>, vector<8x128xf32>
      tpu.vector_store %arg10[%c0_175, %c0_176], %373 {strides = array<i32>} : memref<8x128xf32, #tpu.memory_space<vmem>>, vector<8x128xf32>,
    } else {
    }
    %c0 = arith.constant 0 : index
    %c0_1 = arith.constant 0 : index
    %c0_2 = arith.constant 0 : index
    %3 = vector.load %arg2[%c0, %c0_1, %c0_2] : memref<8x8x128xf32, #tpu.memory_space<vmem>>, vector<8x8x128xf32>
    %4 = vector.extract_strided_slice %3 {offsets = [0, 0, 0], sizes = [2, 8, 128], strides = [1, 1, 1]} : vector<8x8x128xf32> to vector<2x8x128xf32>
    %5 = vector.shape_cast %4 : vector<2x8x128xf32> to vector<16x128xf32>
    %c0_3 = arith.constant 0 : index
    %c0_4 = arith.constant 0 : index
    %6 = vector.load %arg3[%c0_3, %c0_4] : memref<128x512xf32, #tpu.memory_space<vmem>>, vector<128x512xf32>
    %cst = arith.constant dense<0.000000e+00> : vector<16x512xf32>
    %7 = tpu.matmul %5, %6, %cst {dimension_numbers = #tpu.dot_dimension_numbers<[1], [0], [0], [1], [0, 0, 1, 1], [], []>} : vector<16x128xf32>, vector<128x512xf32>, vector<16x512xf32> -> vector<16x512xf32>
    %c0_5 = arith.constant 0 : index
    %c0_6 = arith.constant 0 : index
    %8 = vector.load %arg5[%c0_5, %c0_6] : memref<1x512xf32, #tpu.memory_space<vmem>>, vector<1x512xf32>
    %9 = vector.broadcast %8 : vector<1x512xf32> to vector<16x512xf32>
    %10 = arith.addf %7, %9 : vector<16x512xf32>
    %c0_7 = arith.constant 0 : index
    %c0_8 = arith.constant 0 : index
    %11 = vector.load %arg11[%c0_7, %c0_8] : memref<64x512xf32, #tpu.memory_space<vmem>>, vector<16x512xf32>
    tpu.vector_store %arg11[%c0_7, %c0_8], %10 {strides = array<i32>} : memref<64x512xf32, #tpu.memory_space<vmem>>, vector<16x512xf32>,
    %12 = vector.extract_strided_slice %3 {offsets = [2, 0, 0], sizes = [2, 8, 128], strides = [1, 1, 1]} : vector<8x8x128xf32> to vector<2x8x128xf32>
    %13 = vector.shape_cast %12 : vector<2x8x128xf32> to vector<16x128xf32>
    %c0_9 = arith.constant 0 : index
    %c0_10 = arith.constant 0 : index
    %14 = vector.load %arg3[%c0_9, %c0_10] : memref<128x512xf32, #tpu.memory_space<vmem>>, vector<128x512xf32>
    %cst_11 = arith.constant dense<0.000000e+00> : vector<16x512xf32>
    %15 = tpu.matmul %13, %14, %cst_11 {dimension_numbers = #tpu.dot_dimension_numbers<[1], [0], [0], [1], [0, 0, 1, 1], [], []>} : vector<16x128xf32>, vector<128x512xf32>, vector<16x512xf32> -> vector<16x512xf32>
    %c0_12 = arith.constant 0 : index
    %c0_13 = arith.constant 0 : index
    %16 = vector.load %arg5[%c0_12, %c0_13] : memref<1x512xf32, #tpu.memory_space<vmem>>, vector<1x512xf32>
    %17 = vector.broadcast %16 : vector<1x512xf32> to vector<16x512xf32>
    %18 = arith.addf %15, %17 : vector<16x512xf32>
    %c16 = arith.constant 16 : index
    %c0_14 = arith.constant 0 : index
    %19 = vector.load %arg11[%c16, %c0_14] : memref<64x512xf32, #tpu.memory_space<vmem>>, vector<16x512xf32>
    tpu.vector_store %arg11[%c16, %c0_14], %18 {strides = array<i32>} : memref<64x512xf32, #tpu.memory_space<vmem>>, vector<16x512xf32>,
    %20 = vector.extract_strided_slice %3 {offsets = [4, 0, 0], sizes = [2, 8, 128], strides = [1, 1, 1]} : vector<8x8x128xf32> to vector<2x8x128xf32>
    %21 = vector.shape_cast %20 : vector<2x8x128xf32> to vector<16x128xf32>
    %c0_15 = arith.constant 0 : index
    %c0_16 = arith.constant 0 : index
    %22 = vector.load %arg3[%c0_15, %c0_16] : memref<128x512xf32, #tpu.memory_space<vmem>>, vector<128x512xf32>
    %cst_17 = arith.constant dense<0.000000e+00> : vector<16x512xf32>
    %23 = tpu.matmul %21, %22, %cst_17 {dimension_numbers = #tpu.dot_dimension_numbers<[1], [0], [0], [1], [0, 0, 1, 1], [], []>} : vector<16x128xf32>, vector<128x512xf32>, vector<16x512xf32> -> vector<16x512xf32>
    %c0_18 = arith.constant 0 : index
    %c0_19 = arith.constant 0 : index
    %24 = vector.load %arg5[%c0_18, %c0_19] : memref<1x512xf32, #tpu.memory_space<vmem>>, vector<1x512xf32>
    %25 = vector.broadcast %24 : vector<1x512xf32> to vector<16x512xf32>
    %26 = arith.addf %23, %25 : vector<16x512xf32>
    %c32 = arith.constant 32 : index
    %c0_20 = arith.constant 0 : index
    %27 = vector.load %arg11[%c32, %c0_20] : memref<64x512xf32, #tpu.memory_space<vmem>>, vector<16x512xf32>
    tpu.vector_store %arg11[%c32, %c0_20], %26 {strides = array<i32>} : memref<64x512xf32, #tpu.memory_space<vmem>>, vector<16x512xf32>,
    %28 = vector.extract_strided_slice %3 {offsets = [6, 0, 0], sizes = [2, 8, 128], strides = [1, 1, 1]} : vector<8x8x128xf32> to vector<2x8x128xf32>
    %29 = vector.shape_cast %28 : vector<2x8x128xf32> to vector<16x128xf32>
    %c0_21 = arith.constant 0 : index
    %c0_22 = arith.constant 0 : index
    %30 = vector.load %arg3[%c0_21, %c0_22] : memref<128x512xf32, #tpu.memory_space<vmem>>, vector<128x512xf32>
    %cst_23 = arith.constant dense<0.000000e+00> : vector<16x512xf32>
    %31 = tpu.matmul %29, %30, %cst_23 {dimension_numbers = #tpu.dot_dimension_numbers<[1], [0], [0], [1], [0, 0, 1, 1], [], []>} : vector<16x128xf32>, vector<128x512xf32>, vector<16x512xf32> -> vector<16x512xf32>
    %c0_24 = arith.constant 0 : index
    %c0_25 = arith.constant 0 : index
    %32 = vector.load %arg5[%c0_24, %c0_25] : memref<1x512xf32, #tpu.memory_space<vmem>>, vector<1x512xf32>
    %33 = vector.broadcast %32 : vector<1x512xf32> to vector<16x512xf32>
    %34 = arith.addf %31, %33 : vector<16x512xf32>
    %c48 = arith.constant 48 : index
    %c0_26 = arith.constant 0 : index
    %35 = vector.load %arg11[%c48, %c0_26] : memref<64x512xf32, #tpu.memory_space<vmem>>, vector<16x512xf32>
    tpu.vector_store %arg11[%c48, %c0_26], %34 {strides = array<i32>} : memref<64x512xf32, #tpu.memory_space<vmem>>, vector<16x512xf32>,
    %c0_27 = arith.constant 0 : index
    %c0_28 = arith.constant 0 : index
    %36 = vector.load %arg9[%c0_27, %c0_28] : memref<8x128xf32, #tpu.memory_space<vmem>>, vector<8x128xf32>
    %c0_29 = arith.constant 0 : index
    %c0_30 = arith.constant 0 : index
    %37 = vector.load %arg10[%c0_29, %c0_30] : memref<8x128xf32, #tpu.memory_space<vmem>>, vector<8x128xf32>
    %c0_i32_31 = arith.constant 0 : i32
    %c8_i32 = arith.constant 8 : i32
    %38 = arith.muli %c0_i32_31, %c8_i32 : i32
    %39 = tpu.assume_multiple %38, 8 : i32
    %40 = arith.index_cast %39 : i32 to index
    %c0_32 = arith.constant 0 : index
    %41 = vector.load %arg11[%40, %c0_32] : memref<64x512xf32, #tpu.memory_space<vmem>>, vector<8x512xf32>
    %42 = vector.extract_strided_slice %41 {offsets = [0, 0], sizes = [8, 128], strides = [1, 1]} : vector<8x512xf32> to vector<8x128xf32>
    %c0_33 = arith.constant 0 : index
    %c0_34 = arith.constant 0 : index
    %43 = vector.load %arg4[%c0_33, %c0_34] : memref<128x512xf32, #tpu.memory_space<vmem>>, vector<128x128xf32>
    %cst_35 = arith.constant dense<0.000000e+00> : vector<8x128xf32>
    %44 = tpu.matmul %36, %43, %cst_35 {dimension_numbers = #tpu.dot_dimension_numbers<[1], [0], [0], [1], [0, 0, 1, 1], [], []>} : vector<8x128xf32>, vector<128x128xf32>, vector<8x128xf32> -> vector<8x128xf32>
    %45 = arith.addf %42, %44 : vector<8x128xf32>
    %46 = arith.negf %45 : vector<8x128xf32>
    %47 = math.exp %46 : vector<8x128xf32>
    %cst_36 = arith.constant 1.000000e+00 : f32
    %48 = vector.broadcast %cst_36 : f32 to vector<8x128xf32>
    %49 = arith.addf %48, %47 : vector<8x128xf32>
    %50 = arith.divf %48, %49 : vector<8x128xf32>
    %51 = vector.extract_strided_slice %41 {offsets = [0, 128], sizes = [8, 128], strides = [1, 1]} : vector<8x512xf32> to vector<8x128xf32>
    %c0_37 = arith.constant 0 : index
    %c128 = arith.constant 128 : index
    %52 = vector.load %arg4[%c0_37, %c128] : memref<128x512xf32, #tpu.memory_space<vmem>>, vector<128x128xf32>
    %cst_38 = arith.constant dense<0.000000e+00> : vector<8x128xf32>
    %53 = tpu.matmul %36, %52, %cst_38 {dimension_numbers = #tpu.dot_dimension_numbers<[1], [0], [0], [1], [0, 0, 1, 1], [], []>} : vector<8x128xf32>, vector<128x128xf32>, vector<8x128xf32> -> vector<8x128xf32>
    %54 = arith.addf %51, %53 : vector<8x128xf32>
    %55 = arith.negf %54 : vector<8x128xf32>
    %56 = math.exp %55 : vector<8x128xf32>
    %cst_39 = arith.constant 1.000000e+00 : f32
    %57 = vector.broadcast %cst_39 : f32 to vector<8x128xf32>
    %58 = arith.addf %57, %56 : vector<8x128xf32>
    %59 = arith.divf %57, %58 : vector<8x128xf32>
    %60 = vector.extract_strided_slice %41 {offsets = [0, 256], sizes = [8, 128], strides = [1, 1]} : vector<8x512xf32> to vector<8x128xf32>
    %c0_40 = arith.constant 0 : index
    %c256 = arith.constant 256 : index
    %61 = vector.load %arg4[%c0_40, %c256] : memref<128x512xf32, #tpu.memory_space<vmem>>, vector<128x128xf32>
    %cst_41 = arith.constant dense<0.000000e+00> : vector<8x128xf32>
    %62 = tpu.matmul %36, %61, %cst_41 {dimension_numbers = #tpu.dot_dimension_numbers<[1], [0], [0], [1], [0, 0, 1, 1], [], []>} : vector<8x128xf32>, vector<128x128xf32>, vector<8x128xf32> -> vector<8x128xf32>
    %63 = arith.addf %60, %62 : vector<8x128xf32>
    %64 = math.tanh %63 : vector<8x128xf32>
    %65 = arith.mulf %59, %37 : vector<8x128xf32>
    %66 = arith.mulf %50, %64 : vector<8x128xf32>
    %67 = arith.addf %65, %66 : vector<8x128xf32>
    %68 = vector.extract_strided_slice %41 {offsets = [0, 384], sizes = [8, 128], strides = [1, 1]} : vector<8x512xf32> to vector<8x128xf32>
    %c0_42 = arith.constant 0 : index
    %c384 = arith.constant 384 : index
    %69 = vector.load %arg4[%c0_42, %c384] : memref<128x512xf32, #tpu.memory_space<vmem>>, vector<128x128xf32>
    %cst_43 = arith.constant dense<0.000000e+00> : vector<8x128xf32>
    %70 = tpu.matmul %36, %69, %cst_43 {dimension_numbers = #tpu.dot_dimension_numbers<[1], [0], [0], [1], [0, 0, 1, 1], [], []>} : vector<8x128xf32>, vector<128x128xf32>, vector<8x128xf32> -> vector<8x128xf32>
    %71 = arith.addf %68, %70 : vector<8x128xf32>
    %72 = arith.negf %71 : vector<8x128xf32>
    %73 = math.exp %72 : vector<8x128xf32>
    %cst_44 = arith.constant 1.000000e+00 : f32
    %74 = vector.broadcast %cst_44 : f32 to vector<8x128xf32>
    %75 = arith.addf %74, %73 : vector<8x128xf32>
    %76 = arith.divf %74, %75 : vector<8x128xf32>
    %77 = math.tanh %67 : vector<8x128xf32>
    %78 = arith.mulf %76, %77 : vector<8x128xf32>
    %c1_i32 = arith.constant 1 : i32
    %c8_i32_45 = arith.constant 8 : i32
    %79 = arith.muli %c1_i32, %c8_i32_45 : i32
    %80 = tpu.assume_multiple %79, 8 : i32
    %81 = arith.index_cast %80 : i32 to index
    %c0_46 = arith.constant 0 : index
    %82 = vector.load %arg11[%81, %c0_46] : memref<64x512xf32, #tpu.memory_space<vmem>>, vector<8x512xf32>
    %83 = vector.extract_strided_slice %82 {offsets = [0, 0], sizes = [8, 128], strides = [1, 1]} : vector<8x512xf32> to vector<8x128xf32>
    %c0_47 = arith.constant 0 : index
    %c0_48 = arith.constant 0 : index
    %84 = vector.load %arg4[%c0_47, %c0_48] : memref<128x512xf32, #tpu.memory_space<vmem>>, vector<128x128xf32>
    %cst_49 = arith.constant dense<0.000000e+00> : vector<8x128xf32>
    %85 = tpu.matmul %78, %84, %cst_49 {dimension_numbers = #tpu.dot_dimension_numbers<[1], [0], [0], [1], [0, 0, 1, 1], [], []>} : vector<8x128xf32>, vector<128x128xf32>, vector<8x128xf32> -> vector<8x128xf32>
    %86 = arith.addf %83, %85 : vector<8x128xf32>
    %87 = arith.negf %86 : vector<8x128xf32>
    %88 = math.exp %87 : vector<8x128xf32>
    %cst_50 = arith.constant 1.000000e+00 : f32
    %89 = vector.broadcast %cst_50 : f32 to vector<8x128xf32>
    %90 = arith.addf %89, %88 : vector<8x128xf32>
    %91 = arith.divf %89, %90 : vector<8x128xf32>
    %92 = vector.extract_strided_slice %82 {offsets = [0, 128], sizes = [8, 128], strides = [1, 1]} : vector<8x512xf32> to vector<8x128xf32>
    %c0_51 = arith.constant 0 : index
    %c128_52 = arith.constant 128 : index
    %93 = vector.load %arg4[%c0_51, %c128_52] : memref<128x512xf32, #tpu.memory_space<vmem>>, vector<128x128xf32>
    %cst_53 = arith.constant dense<0.000000e+00> : vector<8x128xf32>
    %94 = tpu.matmul %78, %93, %cst_53 {dimension_numbers = #tpu.dot_dimension_numbers<[1], [0], [0], [1], [0, 0, 1, 1], [], []>} : vector<8x128xf32>, vector<128x128xf32>, vector<8x128xf32> -> vector<8x128xf32>
    %95 = arith.addf %92, %94 : vector<8x128xf32>
    %96 = arith.negf %95 : vector<8x128xf32>
    %97 = math.exp %96 : vector<8x128xf32>
    %cst_54 = arith.constant 1.000000e+00 : f32
    %98 = vector.broadcast %cst_54 : f32 to vector<8x128xf32>
    %99 = arith.addf %98, %97 : vector<8x128xf32>
    %100 = arith.divf %98, %99 : vector<8x128xf32>
    %101 = vector.extract_strided_slice %82 {offsets = [0, 256], sizes = [8, 128], strides = [1, 1]} : vector<8x512xf32> to vector<8x128xf32>
    %c0_55 = arith.constant 0 : index
    %c256_56 = arith.constant 256 : index
    %102 = vector.load %arg4[%c0_55, %c256_56] : memref<128x512xf32, #tpu.memory_space<vmem>>, vector<128x128xf32>
    %cst_57 = arith.constant dense<0.000000e+00> : vector<8x128xf32>
    %103 = tpu.matmul %78, %102, %cst_57 {dimension_numbers = #tpu.dot_dimension_numbers<[1], [0], [0], [1], [0, 0, 1, 1], [], []>} : vector<8x128xf32>, vector<128x128xf32>, vector<8x128xf32> -> vector<8x128xf32>
    %104 = arith.addf %101, %103 : vector<8x128xf32>
    %105 = math.tanh %104 : vector<8x128xf32>
    %106 = arith.mulf %100, %67 : vector<8x128xf32>
    %107 = arith.mulf %91, %105 : vector<8x128xf32>
    %108 = arith.addf %106, %107 : vector<8x128xf32>
    %109 = vector.extract_strided_slice %82 {offsets = [0, 384], sizes = [8, 128], strides = [1, 1]} : vector<8x512xf32> to vector<8x128xf32>
    %c0_58 = arith.constant 0 : index
    %c384_59 = arith.constant 384 : index
    %110 = vector.load %arg4[%c0_58, %c384_59] : memref<128x512xf32, #tpu.memory_space<vmem>>, vector<128x128xf32>
    %cst_60 = arith.constant dense<0.000000e+00> : vector<8x128xf32>
    %111 = tpu.matmul %78, %110, %cst_60 {dimension_numbers = #tpu.dot_dimension_numbers<[1], [0], [0], [1], [0, 0, 1, 1], [], []>} : vector<8x128xf32>, vector<128x128xf32>, vector<8x128xf32> -> vector<8x128xf32>
    %112 = arith.addf %109, %111 : vector<8x128xf32>
    %113 = arith.negf %112 : vector<8x128xf32>
    %114 = math.exp %113 : vector<8x128xf32>
    %cst_61 = arith.constant 1.000000e+00 : f32
    %115 = vector.broadcast %cst_61 : f32 to vector<8x128xf32>
    %116 = arith.addf %115, %114 : vector<8x128xf32>
    %117 = arith.divf %115, %116 : vector<8x128xf32>
    %118 = math.tanh %108 : vector<8x128xf32>
    %119 = arith.mulf %117, %118 : vector<8x128xf32>
    %c2_i32 = arith.constant 2 : i32
    %c8_i32_62 = arith.constant 8 : i32
    %120 = arith.muli %c2_i32, %c8_i32_62 : i32
    %121 = tpu.assume_multiple %120, 8 : i32
    %122 = arith.index_cast %121 : i32 to index
    %c0_63 = arith.constant 0 : index
    %123 = vector.load %arg11[%122, %c0_63] : memref<64x512xf32, #tpu.memory_space<vmem>>, vector<8x512xf32>
    %124 = vector.extract_strided_slice %123 {offsets = [0, 0], sizes = [8, 128], strides = [1, 1]} : vector<8x512xf32> to vector<8x128xf32>
    %c0_64 = arith.constant 0 : index
    %c0_65 = arith.constant 0 : index
    %125 = vector.load %arg4[%c0_64, %c0_65] : memref<128x512xf32, #tpu.memory_space<vmem>>, vector<128x128xf32>
    %cst_66 = arith.constant dense<0.000000e+00> : vector<8x128xf32>
    %126 = tpu.matmul %119, %125, %cst_66 {dimension_numbers = #tpu.dot_dimension_numbers<[1], [0], [0], [1], [0, 0, 1, 1], [], []>} : vector<8x128xf32>, vector<128x128xf32>, vector<8x128xf32> -> vector<8x128xf32>
    %127 = arith.addf %124, %126 : vector<8x128xf32>
    %128 = arith.negf %127 : vector<8x128xf32>
    %129 = math.exp %128 : vector<8x128xf32>
    %cst_67 = arith.constant 1.000000e+00 : f32
    %130 = vector.broadcast %cst_67 : f32 to vector<8x128xf32>
    %131 = arith.addf %130, %129 : vector<8x128xf32>
    %132 = arith.divf %130, %131 : vector<8x128xf32>
    %133 = vector.extract_strided_slice %123 {offsets = [0, 128], sizes = [8, 128], strides = [1, 1]} : vector<8x512xf32> to vector<8x128xf32>
    %c0_68 = arith.constant 0 : index
    %c128_69 = arith.constant 128 : index
    %134 = vector.load %arg4[%c0_68, %c128_69] : memref<128x512xf32, #tpu.memory_space<vmem>>, vector<128x128xf32>
    %cst_70 = arith.constant dense<0.000000e+00> : vector<8x128xf32>
    %135 = tpu.matmul %119, %134, %cst_70 {dimension_numbers = #tpu.dot_dimension_numbers<[1], [0], [0], [1], [0, 0, 1, 1], [], []>} : vector<8x128xf32>, vector<128x128xf32>, vector<8x128xf32> -> vector<8x128xf32>
    %136 = arith.addf %133, %135 : vector<8x128xf32>
    %137 = arith.negf %136 : vector<8x128xf32>
    %138 = math.exp %137 : vector<8x128xf32>
    %cst_71 = arith.constant 1.000000e+00 : f32
    %139 = vector.broadcast %cst_71 : f32 to vector<8x128xf32>
    %140 = arith.addf %139, %138 : vector<8x128xf32>
    %141 = arith.divf %139, %140 : vector<8x128xf32>
    %142 = vector.extract_strided_slice %123 {offsets = [0, 256], sizes = [8, 128], strides = [1, 1]} : vector<8x512xf32> to vector<8x128xf32>
    %c0_72 = arith.constant 0 : index
    %c256_73 = arith.constant 256 : index
    %143 = vector.load %arg4[%c0_72, %c256_73] : memref<128x512xf32, #tpu.memory_space<vmem>>, vector<128x128xf32>
    %cst_74 = arith.constant dense<0.000000e+00> : vector<8x128xf32>
    %144 = tpu.matmul %119, %143, %cst_74 {dimension_numbers = #tpu.dot_dimension_numbers<[1], [0], [0], [1], [0, 0, 1, 1], [], []>} : vector<8x128xf32>, vector<128x128xf32>, vector<8x128xf32> -> vector<8x128xf32>
    %145 = arith.addf %142, %144 : vector<8x128xf32>
    %146 = math.tanh %145 : vector<8x128xf32>
    %147 = arith.mulf %141, %108 : vector<8x128xf32>
    %148 = arith.mulf %132, %146 : vector<8x128xf32>
    %149 = arith.addf %147, %148 : vector<8x128xf32>
    %150 = vector.extract_strided_slice %123 {offsets = [0, 384], sizes = [8, 128], strides = [1, 1]} : vector<8x512xf32> to vector<8x128xf32>
    %c0_75 = arith.constant 0 : index
    %c384_76 = arith.constant 384 : index
    %151 = vector.load %arg4[%c0_75, %c384_76] : memref<128x512xf32, #tpu.memory_space<vmem>>, vector<128x128xf32>
    %cst_77 = arith.constant dense<0.000000e+00> : vector<8x128xf32>
    %152 = tpu.matmul %119, %151, %cst_77 {dimension_numbers = #tpu.dot_dimension_numbers<[1], [0], [0], [1], [0, 0, 1, 1], [], []>} : vector<8x128xf32>, vector<128x128xf32>, vector<8x128xf32> -> vector<8x128xf32>
    %153 = arith.addf %150, %152 : vector<8x128xf32>
    %154 = arith.negf %153 : vector<8x128xf32>
    %155 = math.exp %154 : vector<8x128xf32>
    %cst_78 = arith.constant 1.000000e+00 : f32
    %156 = vector.broadcast %cst_78 : f32 to vector<8x128xf32>
    %157 = arith.addf %156, %155 : vector<8x128xf32>
    %158 = arith.divf %156, %157 : vector<8x128xf32>
    %159 = math.tanh %149 : vector<8x128xf32>
    %160 = arith.mulf %158, %159 : vector<8x128xf32>
    %c3_i32 = arith.constant 3 : i32
    %c8_i32_79 = arith.constant 8 : i32
    %161 = arith.muli %c3_i32, %c8_i32_79 : i32
    %162 = tpu.assume_multiple %161, 8 : i32
    %163 = arith.index_cast %162 : i32 to index
    %c0_80 = arith.constant 0 : index
    %164 = vector.load %arg11[%163, %c0_80] : memref<64x512xf32, #tpu.memory_space<vmem>>, vector<8x512xf32>
    %165 = vector.extract_strided_slice %164 {offsets = [0, 0], sizes = [8, 128], strides = [1, 1]} : vector<8x512xf32> to vector<8x128xf32>
    %c0_81 = arith.constant 0 : index
    %c0_82 = arith.constant 0 : index
    %166 = vector.load %arg4[%c0_81, %c0_82] : memref<128x512xf32, #tpu.memory_space<vmem>>, vector<128x128xf32>
    %cst_83 = arith.constant dense<0.000000e+00> : vector<8x128xf32>
    %167 = tpu.matmul %160, %166, %cst_83 {dimension_numbers = #tpu.dot_dimension_numbers<[1], [0], [0], [1], [0, 0, 1, 1], [], []>} : vector<8x128xf32>, vector<128x128xf32>, vector<8x128xf32> -> vector<8x128xf32>
    %168 = arith.addf %165, %167 : vector<8x128xf32>
    %169 = arith.negf %168 : vector<8x128xf32>
    %170 = math.exp %169 : vector<8x128xf32>
    %cst_84 = arith.constant 1.000000e+00 : f32
    %171 = vector.broadcast %cst_84 : f32 to vector<8x128xf32>
    %172 = arith.addf %171, %170 : vector<8x128xf32>
    %173 = arith.divf %171, %172 : vector<8x128xf32>
    %174 = vector.extract_strided_slice %164 {offsets = [0, 128], sizes = [8, 128], strides = [1, 1]} : vector<8x512xf32> to vector<8x128xf32>
    %c0_85 = arith.constant 0 : index
    %c128_86 = arith.constant 128 : index
    %175 = vector.load %arg4[%c0_85, %c128_86] : memref<128x512xf32, #tpu.memory_space<vmem>>, vector<128x128xf32>
    %cst_87 = arith.constant dense<0.000000e+00> : vector<8x128xf32>
    %176 = tpu.matmul %160, %175, %cst_87 {dimension_numbers = #tpu.dot_dimension_numbers<[1], [0], [0], [1], [0, 0, 1, 1], [], []>} : vector<8x128xf32>, vector<128x128xf32>, vector<8x128xf32> -> vector<8x128xf32>
    %177 = arith.addf %174, %176 : vector<8x128xf32>
    %178 = arith.negf %177 : vector<8x128xf32>
    %179 = math.exp %178 : vector<8x128xf32>
    %cst_88 = arith.constant 1.000000e+00 : f32
    %180 = vector.broadcast %cst_88 : f32 to vector<8x128xf32>
    %181 = arith.addf %180, %179 : vector<8x128xf32>
    %182 = arith.divf %180, %181 : vector<8x128xf32>
    %183 = vector.extract_strided_slice %164 {offsets = [0, 256], sizes = [8, 128], strides = [1, 1]} : vector<8x512xf32> to vector<8x128xf32>
    %c0_89 = arith.constant 0 : index
    %c256_90 = arith.constant 256 : index
    %184 = vector.load %arg4[%c0_89, %c256_90] : memref<128x512xf32, #tpu.memory_space<vmem>>, vector<128x128xf32>
    %cst_91 = arith.constant dense<0.000000e+00> : vector<8x128xf32>
    %185 = tpu.matmul %160, %184, %cst_91 {dimension_numbers = #tpu.dot_dimension_numbers<[1], [0], [0], [1], [0, 0, 1, 1], [], []>} : vector<8x128xf32>, vector<128x128xf32>, vector<8x128xf32> -> vector<8x128xf32>
    %186 = arith.addf %183, %185 : vector<8x128xf32>
    %187 = math.tanh %186 : vector<8x128xf32>
    %188 = arith.mulf %182, %149 : vector<8x128xf32>
    %189 = arith.mulf %173, %187 : vector<8x128xf32>
    %190 = arith.addf %188, %189 : vector<8x128xf32>
    %191 = vector.extract_strided_slice %164 {offsets = [0, 384], sizes = [8, 128], strides = [1, 1]} : vector<8x512xf32> to vector<8x128xf32>
    %c0_92 = arith.constant 0 : index
    %c384_93 = arith.constant 384 : index
    %192 = vector.load %arg4[%c0_92, %c384_93] : memref<128x512xf32, #tpu.memory_space<vmem>>, vector<128x128xf32>
    %cst_94 = arith.constant dense<0.000000e+00> : vector<8x128xf32>
    %193 = tpu.matmul %160, %192, %cst_94 {dimension_numbers = #tpu.dot_dimension_numbers<[1], [0], [0], [1], [0, 0, 1, 1], [], []>} : vector<8x128xf32>, vector<128x128xf32>, vector<8x128xf32> -> vector<8x128xf32>
    %194 = arith.addf %191, %193 : vector<8x128xf32>
    %195 = arith.negf %194 : vector<8x128xf32>
    %196 = math.exp %195 : vector<8x128xf32>
    %cst_95 = arith.constant 1.000000e+00 : f32
    %197 = vector.broadcast %cst_95 : f32 to vector<8x128xf32>
    %198 = arith.addf %197, %196 : vector<8x128xf32>
    %199 = arith.divf %197, %198 : vector<8x128xf32>
    %200 = math.tanh %190 : vector<8x128xf32>
    %201 = arith.mulf %199, %200 : vector<8x128xf32>
    %c4_i32 = arith.constant 4 : i32
    %c8_i32_96 = arith.constant 8 : i32
    %202 = arith.muli %c4_i32, %c8_i32_96 : i32
    %203 = tpu.assume_multiple %202, 8 : i32
    %204 = arith.index_cast %203 : i32 to index
    %c0_97 = arith.constant 0 : index
    %205 = vector.load %arg11[%204, %c0_97] : memref<64x512xf32, #tpu.memory_space<vmem>>, vector<8x512xf32>
    %206 = vector.extract_strided_slice %205 {offsets = [0, 0], sizes = [8, 128], strides = [1, 1]} : vector<8x512xf32> to vector<8x128xf32>
    %c0_98 = arith.constant 0 : index
    %c0_99 = arith.constant 0 : index
    %207 = vector.load %arg4[%c0_98, %c0_99] : memref<128x512xf32, #tpu.memory_space<vmem>>, vector<128x128xf32>
    %cst_100 = arith.constant dense<0.000000e+00> : vector<8x128xf32>
    %208 = tpu.matmul %201, %207, %cst_100 {dimension_numbers = #tpu.dot_dimension_numbers<[1], [0], [0], [1], [0, 0, 1, 1], [], []>} : vector<8x128xf32>, vector<128x128xf32>, vector<8x128xf32> -> vector<8x128xf32>
    %209 = arith.addf %206, %208 : vector<8x128xf32>
    %210 = arith.negf %209 : vector<8x128xf32>
    %211 = math.exp %210 : vector<8x128xf32>
    %cst_101 = arith.constant 1.000000e+00 : f32
    %212 = vector.broadcast %cst_101 : f32 to vector<8x128xf32>
    %213 = arith.addf %212, %211 : vector<8x128xf32>
    %214 = arith.divf %212, %213 : vector<8x128xf32>
    %215 = vector.extract_strided_slice %205 {offsets = [0, 128], sizes = [8, 128], strides = [1, 1]} : vector<8x512xf32> to vector<8x128xf32>
    %c0_102 = arith.constant 0 : index
    %c128_103 = arith.constant 128 : index
    %216 = vector.load %arg4[%c0_102, %c128_103] : memref<128x512xf32, #tpu.memory_space<vmem>>, vector<128x128xf32>
    %cst_104 = arith.constant dense<0.000000e+00> : vector<8x128xf32>
    %217 = tpu.matmul %201, %216, %cst_104 {dimension_numbers = #tpu.dot_dimension_numbers<[1], [0], [0], [1], [0, 0, 1, 1], [], []>} : vector<8x128xf32>, vector<128x128xf32>, vector<8x128xf32> -> vector<8x128xf32>
    %218 = arith.addf %215, %217 : vector<8x128xf32>
    %219 = arith.negf %218 : vector<8x128xf32>
    %220 = math.exp %219 : vector<8x128xf32>
    %cst_105 = arith.constant 1.000000e+00 : f32
    %221 = vector.broadcast %cst_105 : f32 to vector<8x128xf32>
    %222 = arith.addf %221, %220 : vector<8x128xf32>
    %223 = arith.divf %221, %222 : vector<8x128xf32>
    %224 = vector.extract_strided_slice %205 {offsets = [0, 256], sizes = [8, 128], strides = [1, 1]} : vector<8x512xf32> to vector<8x128xf32>
    %c0_106 = arith.constant 0 : index
    %c256_107 = arith.constant 256 : index
    %225 = vector.load %arg4[%c0_106, %c256_107] : memref<128x512xf32, #tpu.memory_space<vmem>>, vector<128x128xf32>
    %cst_108 = arith.constant dense<0.000000e+00> : vector<8x128xf32>
    %226 = tpu.matmul %201, %225, %cst_108 {dimension_numbers = #tpu.dot_dimension_numbers<[1], [0], [0], [1], [0, 0, 1, 1], [], []>} : vector<8x128xf32>, vector<128x128xf32>, vector<8x128xf32> -> vector<8x128xf32>
    %227 = arith.addf %224, %226 : vector<8x128xf32>
    %228 = math.tanh %227 : vector<8x128xf32>
    %229 = arith.mulf %223, %190 : vector<8x128xf32>
    %230 = arith.mulf %214, %228 : vector<8x128xf32>
    %231 = arith.addf %229, %230 : vector<8x128xf32>
    %232 = vector.extract_strided_slice %205 {offsets = [0, 384], sizes = [8, 128], strides = [1, 1]} : vector<8x512xf32> to vector<8x128xf32>
    %c0_109 = arith.constant 0 : index
    %c384_110 = arith.constant 384 : index
    %233 = vector.load %arg4[%c0_109, %c384_110] : memref<128x512xf32, #tpu.memory_space<vmem>>, vector<128x128xf32>
    %cst_111 = arith.constant dense<0.000000e+00> : vector<8x128xf32>
    %234 = tpu.matmul %201, %233, %cst_111 {dimension_numbers = #tpu.dot_dimension_numbers<[1], [0], [0], [1], [0, 0, 1, 1], [], []>} : vector<8x128xf32>, vector<128x128xf32>, vector<8x128xf32> -> vector<8x128xf32>
    %235 = arith.addf %232, %234 : vector<8x128xf32>
    %236 = arith.negf %235 : vector<8x128xf32>
    %237 = math.exp %236 : vector<8x128xf32>
    %cst_112 = arith.constant 1.000000e+00 : f32
    %238 = vector.broadcast %cst_112 : f32 to vector<8x128xf32>
    %239 = arith.addf %238, %237 : vector<8x128xf32>
    %240 = arith.divf %238, %239 : vector<8x128xf32>
    %241 = math.tanh %231 : vector<8x128xf32>
    %242 = arith.mulf %240, %241 : vector<8x128xf32>
    %c5_i32 = arith.constant 5 : i32
    %c8_i32_113 = arith.constant 8 : i32
    %243 = arith.muli %c5_i32, %c8_i32_113 : i32
    %244 = tpu.assume_multiple %243, 8 : i32
    %245 = arith.index_cast %244 : i32 to index
    %c0_114 = arith.constant 0 : index
    %246 = vector.load %arg11[%245, %c0_114] : memref<64x512xf32, #tpu.memory_space<vmem>>, vector<8x512xf32>
    %247 = vector.extract_strided_slice %246 {offsets = [0, 0], sizes = [8, 128], strides = [1, 1]} : vector<8x512xf32> to vector<8x128xf32>
    %c0_115 = arith.constant 0 : index
    %c0_116 = arith.constant 0 : index
    %248 = vector.load %arg4[%c0_115, %c0_116] : memref<128x512xf32, #tpu.memory_space<vmem>>, vector<128x128xf32>
    %cst_117 = arith.constant dense<0.000000e+00> : vector<8x128xf32>
    %249 = tpu.matmul %242, %248, %cst_117 {dimension_numbers = #tpu.dot_dimension_numbers<[1], [0], [0], [1], [0, 0, 1, 1], [], []>} : vector<8x128xf32>, vector<128x128xf32>, vector<8x128xf32> -> vector<8x128xf32>
    %250 = arith.addf %247, %249 : vector<8x128xf32>
    %251 = arith.negf %250 : vector<8x128xf32>
    %252 = math.exp %251 : vector<8x128xf32>
    %cst_118 = arith.constant 1.000000e+00 : f32
    %253 = vector.broadcast %cst_118 : f32 to vector<8x128xf32>
    %254 = arith.addf %253, %252 : vector<8x128xf32>
    %255 = arith.divf %253, %254 : vector<8x128xf32>
    %256 = vector.extract_strided_slice %246 {offsets = [0, 128], sizes = [8, 128], strides = [1, 1]} : vector<8x512xf32> to vector<8x128xf32>
    %c0_119 = arith.constant 0 : index
    %c128_120 = arith.constant 128 : index
    %257 = vector.load %arg4[%c0_119, %c128_120] : memref<128x512xf32, #tpu.memory_space<vmem>>, vector<128x128xf32>
    %cst_121 = arith.constant dense<0.000000e+00> : vector<8x128xf32>
    %258 = tpu.matmul %242, %257, %cst_121 {dimension_numbers = #tpu.dot_dimension_numbers<[1], [0], [0], [1], [0, 0, 1, 1], [], []>} : vector<8x128xf32>, vector<128x128xf32>, vector<8x128xf32> -> vector<8x128xf32>
    %259 = arith.addf %256, %258 : vector<8x128xf32>
    %260 = arith.negf %259 : vector<8x128xf32>
    %261 = math.exp %260 : vector<8x128xf32>
    %cst_122 = arith.constant 1.000000e+00 : f32
    %262 = vector.broadcast %cst_122 : f32 to vector<8x128xf32>
    %263 = arith.addf %262, %261 : vector<8x128xf32>
    %264 = arith.divf %262, %263 : vector<8x128xf32>
    %265 = vector.extract_strided_slice %246 {offsets = [0, 256], sizes = [8, 128], strides = [1, 1]} : vector<8x512xf32> to vector<8x128xf32>
    %c0_123 = arith.constant 0 : index
    %c256_124 = arith.constant 256 : index
    %266 = vector.load %arg4[%c0_123, %c256_124] : memref<128x512xf32, #tpu.memory_space<vmem>>, vector<128x128xf32>
    %cst_125 = arith.constant dense<0.000000e+00> : vector<8x128xf32>
    %267 = tpu.matmul %242, %266, %cst_125 {dimension_numbers = #tpu.dot_dimension_numbers<[1], [0], [0], [1], [0, 0, 1, 1], [], []>} : vector<8x128xf32>, vector<128x128xf32>, vector<8x128xf32> -> vector<8x128xf32>
    %268 = arith.addf %265, %267 : vector<8x128xf32>
    %269 = math.tanh %268 : vector<8x128xf32>
    %270 = arith.mulf %264, %231 : vector<8x128xf32>
    %271 = arith.mulf %255, %269 : vector<8x128xf32>
    %272 = arith.addf %270, %271 : vector<8x128xf32>
    %273 = vector.extract_strided_slice %246 {offsets = [0, 384], sizes = [8, 128], strides = [1, 1]} : vector<8x512xf32> to vector<8x128xf32>
    %c0_126 = arith.constant 0 : index
    %c384_127 = arith.constant 384 : index
    %274 = vector.load %arg4[%c0_126, %c384_127] : memref<128x512xf32, #tpu.memory_space<vmem>>, vector<128x128xf32>
    %cst_128 = arith.constant dense<0.000000e+00> : vector<8x128xf32>
    %275 = tpu.matmul %242, %274, %cst_128 {dimension_numbers = #tpu.dot_dimension_numbers<[1], [0], [0], [1], [0, 0, 1, 1], [], []>} : vector<8x128xf32>, vector<128x128xf32>, vector<8x128xf32> -> vector<8x128xf32>
    %276 = arith.addf %273, %275 : vector<8x128xf32>
    %277 = arith.negf %276 : vector<8x128xf32>
    %278 = math.exp %277 : vector<8x128xf32>
    %cst_129 = arith.constant 1.000000e+00 : f32
    %279 = vector.broadcast %cst_129 : f32 to vector<8x128xf32>
    %280 = arith.addf %279, %278 : vector<8x128xf32>
    %281 = arith.divf %279, %280 : vector<8x128xf32>
    %282 = math.tanh %272 : vector<8x128xf32>
    %283 = arith.mulf %281, %282 : vector<8x128xf32>
    %c6_i32 = arith.constant 6 : i32
    %c8_i32_130 = arith.constant 8 : i32
    %284 = arith.muli %c6_i32, %c8_i32_130 : i32
    %285 = tpu.assume_multiple %284, 8 : i32
    %286 = arith.index_cast %285 : i32 to index
    %c0_131 = arith.constant 0 : index
    %287 = vector.load %arg11[%286, %c0_131] : memref<64x512xf32, #tpu.memory_space<vmem>>, vector<8x512xf32>
    %288 = vector.extract_strided_slice %287 {offsets = [0, 0], sizes = [8, 128], strides = [1, 1]} : vector<8x512xf32> to vector<8x128xf32>
    %c0_132 = arith.constant 0 : index
    %c0_133 = arith.constant 0 : index
    %289 = vector.load %arg4[%c0_132, %c0_133] : memref<128x512xf32, #tpu.memory_space<vmem>>, vector<128x128xf32>
    %cst_134 = arith.constant dense<0.000000e+00> : vector<8x128xf32>
    %290 = tpu.matmul %283, %289, %cst_134 {dimension_numbers = #tpu.dot_dimension_numbers<[1], [0], [0], [1], [0, 0, 1, 1], [], []>} : vector<8x128xf32>, vector<128x128xf32>, vector<8x128xf32> -> vector<8x128xf32>
    %291 = arith.addf %288, %290 : vector<8x128xf32>
    %292 = arith.negf %291 : vector<8x128xf32>
    %293 = math.exp %292 : vector<8x128xf32>
    %cst_135 = arith.constant 1.000000e+00 : f32
    %294 = vector.broadcast %cst_135 : f32 to vector<8x128xf32>
    %295 = arith.addf %294, %293 : vector<8x128xf32>
    %296 = arith.divf %294, %295 : vector<8x128xf32>
    %297 = vector.extract_strided_slice %287 {offsets = [0, 128], sizes = [8, 128], strides = [1, 1]} : vector<8x512xf32> to vector<8x128xf32>
    %c0_136 = arith.constant 0 : index
    %c128_137 = arith.constant 128 : index
    %298 = vector.load %arg4[%c0_136, %c128_137] : memref<128x512xf32, #tpu.memory_space<vmem>>, vector<128x128xf32>
    %cst_138 = arith.constant dense<0.000000e+00> : vector<8x128xf32>
    %299 = tpu.matmul %283, %298, %cst_138 {dimension_numbers = #tpu.dot_dimension_numbers<[1], [0], [0], [1], [0, 0, 1, 1], [], []>} : vector<8x128xf32>, vector<128x128xf32>, vector<8x128xf32> -> vector<8x128xf32>
    %300 = arith.addf %297, %299 : vector<8x128xf32>
    %301 = arith.negf %300 : vector<8x128xf32>
    %302 = math.exp %301 : vector<8x128xf32>
    %cst_139 = arith.constant 1.000000e+00 : f32
    %303 = vector.broadcast %cst_139 : f32 to vector<8x128xf32>
    %304 = arith.addf %303, %302 : vector<8x128xf32>
    %305 = arith.divf %303, %304 : vector<8x128xf32>
    %306 = vector.extract_strided_slice %287 {offsets = [0, 256], sizes = [8, 128], strides = [1, 1]} : vector<8x512xf32> to vector<8x128xf32>
    %c0_140 = arith.constant 0 : index
    %c256_141 = arith.constant 256 : index
    %307 = vector.load %arg4[%c0_140, %c256_141] : memref<128x512xf32, #tpu.memory_space<vmem>>, vector<128x128xf32>
    %cst_142 = arith.constant dense<0.000000e+00> : vector<8x128xf32>
    %308 = tpu.matmul %283, %307, %cst_142 {dimension_numbers = #tpu.dot_dimension_numbers<[1], [0], [0], [1], [0, 0, 1, 1], [], []>} : vector<8x128xf32>, vector<128x128xf32>, vector<8x128xf32> -> vector<8x128xf32>
    %309 = arith.addf %306, %308 : vector<8x128xf32>
    %310 = math.tanh %309 : vector<8x128xf32>
    %311 = arith.mulf %305, %272 : vector<8x128xf32>
    %312 = arith.mulf %296, %310 : vector<8x128xf32>
    %313 = arith.addf %311, %312 : vector<8x128xf32>
    %314 = vector.extract_strided_slice %287 {offsets = [0, 384], sizes = [8, 128], strides = [1, 1]} : vector<8x512xf32> to vector<8x128xf32>
    %c0_143 = arith.constant 0 : index
    %c384_144 = arith.constant 384 : index
    %315 = vector.load %arg4[%c0_143, %c384_144] : memref<128x512xf32, #tpu.memory_space<vmem>>, vector<128x128xf32>
    %cst_145 = arith.constant dense<0.000000e+00> : vector<8x128xf32>
    %316 = tpu.matmul %283, %315, %cst_145 {dimension_numbers = #tpu.dot_dimension_numbers<[1], [0], [0], [1], [0, 0, 1, 1], [], []>} : vector<8x128xf32>, vector<128x128xf32>, vector<8x128xf32> -> vector<8x128xf32>
    %317 = arith.addf %314, %316 : vector<8x128xf32>
    %318 = arith.negf %317 : vector<8x128xf32>
    %319 = math.exp %318 : vector<8x128xf32>
    %cst_146 = arith.constant 1.000000e+00 : f32
    %320 = vector.broadcast %cst_146 : f32 to vector<8x128xf32>
    %321 = arith.addf %320, %319 : vector<8x128xf32>
    %322 = arith.divf %320, %321 : vector<8x128xf32>
    %323 = math.tanh %313 : vector<8x128xf32>
    %324 = arith.mulf %322, %323 : vector<8x128xf32>
    %c7_i32 = arith.constant 7 : i32
    %c8_i32_147 = arith.constant 8 : i32
    %325 = arith.muli %c7_i32, %c8_i32_147 : i32
    %326 = tpu.assume_multiple %325, 8 : i32
    %327 = arith.index_cast %326 : i32 to index
    %c0_148 = arith.constant 0 : index
    %328 = vector.load %arg11[%327, %c0_148] : memref<64x512xf32, #tpu.memory_space<vmem>>, vector<8x512xf32>
    %329 = vector.extract_strided_slice %328 {offsets = [0, 0], sizes = [8, 128], strides = [1, 1]} : vector<8x512xf32> to vector<8x128xf32>
    %c0_149 = arith.constant 0 : index
    %c0_150 = arith.constant 0 : index
    %330 = vector.load %arg4[%c0_149, %c0_150] : memref<128x512xf32, #tpu.memory_space<vmem>>, vector<128x128xf32>
    %cst_151 = arith.constant dense<0.000000e+00> : vector<8x128xf32>
    %331 = tpu.matmul %324, %330, %cst_151 {dimension_numbers = #tpu.dot_dimension_numbers<[1], [0], [0], [1], [0, 0, 1, 1], [], []>} : vector<8x128xf32>, vector<128x128xf32>, vector<8x128xf32> -> vector<8x128xf32>
    %332 = arith.addf %329, %331 : vector<8x128xf32>
    %333 = arith.negf %332 : vector<8x128xf32>
    %334 = math.exp %333 : vector<8x128xf32>
    %cst_152 = arith.constant 1.000000e+00 : f32
    %335 = vector.broadcast %cst_152 : f32 to vector<8x128xf32>
    %336 = arith.addf %335, %334 : vector<8x128xf32>
    %337 = arith.divf %335, %336 : vector<8x128xf32>
    %338 = vector.extract_strided_slice %328 {offsets = [0, 128], sizes = [8, 128], strides = [1, 1]} : vector<8x512xf32> to vector<8x128xf32>
    %c0_153 = arith.constant 0 : index
    %c128_154 = arith.constant 128 : index
    %339 = vector.load %arg4[%c0_153, %c128_154] : memref<128x512xf32, #tpu.memory_space<vmem>>, vector<128x128xf32>
    %cst_155 = arith.constant dense<0.000000e+00> : vector<8x128xf32>
    %340 = tpu.matmul %324, %339, %cst_155 {dimension_numbers = #tpu.dot_dimension_numbers<[1], [0], [0], [1], [0, 0, 1, 1], [], []>} : vector<8x128xf32>, vector<128x128xf32>, vector<8x128xf32> -> vector<8x128xf32>
    %341 = arith.addf %338, %340 : vector<8x128xf32>
    %342 = arith.negf %341 : vector<8x128xf32>
    %343 = math.exp %342 : vector<8x128xf32>
    %cst_156 = arith.constant 1.000000e+00 : f32
    %344 = vector.broadcast %cst_156 : f32 to vector<8x128xf32>
    %345 = arith.addf %344, %343 : vector<8x128xf32>
    %346 = arith.divf %344, %345 : vector<8x128xf32>
    %347 = vector.extract_strided_slice %328 {offsets = [0, 256], sizes = [8, 128], strides = [1, 1]} : vector<8x512xf32> to vector<8x128xf32>
    %c0_157 = arith.constant 0 : index
    %c256_158 = arith.constant 256 : index
    %348 = vector.load %arg4[%c0_157, %c256_158] : memref<128x512xf32, #tpu.memory_space<vmem>>, vector<128x128xf32>
    %cst_159 = arith.constant dense<0.000000e+00> : vector<8x128xf32>
    %349 = tpu.matmul %324, %348, %cst_159 {dimension_numbers = #tpu.dot_dimension_numbers<[1], [0], [0], [1], [0, 0, 1, 1], [], []>} : vector<8x128xf32>, vector<128x128xf32>, vector<8x128xf32> -> vector<8x128xf32>
    %350 = arith.addf %347, %349 : vector<8x128xf32>
    %351 = math.tanh %350 : vector<8x128xf32>
    %352 = arith.mulf %346, %313 : vector<8x128xf32>
    %353 = arith.mulf %337, %351 : vector<8x128xf32>
    %354 = arith.addf %352, %353 : vector<8x128xf32>
    %355 = vector.extract_strided_slice %328 {offsets = [0, 384], sizes = [8, 128], strides = [1, 1]} : vector<8x512xf32> to vector<8x128xf32>
    %c0_160 = arith.constant 0 : index
    %c384_161 = arith.constant 384 : index
    %356 = vector.load %arg4[%c0_160, %c384_161] : memref<128x512xf32, #tpu.memory_space<vmem>>, vector<128x128xf32>
    %cst_162 = arith.constant dense<0.000000e+00> : vector<8x128xf32>
    %357 = tpu.matmul %324, %356, %cst_162 {dimension_numbers = #tpu.dot_dimension_numbers<[1], [0], [0], [1], [0, 0, 1, 1], [], []>} : vector<8x128xf32>, vector<128x128xf32>, vector<8x128xf32> -> vector<8x128xf32>
    %358 = arith.addf %355, %357 : vector<8x128xf32>
    %359 = arith.negf %358 : vector<8x128xf32>
    %360 = math.exp %359 : vector<8x128xf32>
    %cst_163 = arith.constant 1.000000e+00 : f32
    %361 = vector.broadcast %cst_163 : f32 to vector<8x128xf32>
    %362 = arith.addf %361, %360 : vector<8x128xf32>
    %363 = arith.divf %361, %362 : vector<8x128xf32>
    %364 = math.tanh %354 : vector<8x128xf32>
    %365 = arith.mulf %363, %364 : vector<8x128xf32>
    %c8_i32_164 = arith.constant 8 : i32
    %c0_165 = arith.constant 0 : index
    %c0_166 = arith.constant 0 : index
    %366 = vector.load %arg9[%c0_165, %c0_166] : memref<8x128xf32, #tpu.memory_space<vmem>>, vector<8x128xf32>
    tpu.vector_store %arg9[%c0_165, %c0_166], %365 {strides = array<i32>} : memref<8x128xf32, #tpu.memory_space<vmem>>, vector<8x128xf32>,
    %c0_167 = arith.constant 0 : index
    %c0_168 = arith.constant 0 : index
    %367 = vector.load %arg10[%c0_167, %c0_168] : memref<8x128xf32, #tpu.memory_space<vmem>>, vector<8x128xf32>
    tpu.vector_store %arg10[%c0_167, %c0_168], %354 {strides = array<i32>} : memref<8x128xf32, #tpu.memory_space<vmem>>, vector<8x128xf32>,
    %c0_i32_169 = arith.constant 0 : i32
    %368 = arith.cmpi eq, %arg1, %c0_i32_169 : i32
    %369 = arith.extui %368 : i1 to i32
    %c0_i32_170 = arith.constant 0 : i32
    %370 = arith.cmpi ne, %369, %c0_i32_170 : i32
    scf.if %370 {
      %c0_171 = arith.constant 0 : index
      %c0_172 = arith.constant 0 : index
      %371 = vector.load %arg6[%c0_171, %c0_172] : memref<128x128xf32, #tpu.memory_space<vmem>>, vector<128x128xf32>
      %cst_173 = arith.constant dense<0.000000e+00> : vector<8x128xf32>
      %372 = tpu.matmul %365, %371, %cst_173 {dimension_numbers = #tpu.dot_dimension_numbers<[1], [0], [0], [1], [0, 0, 1, 1], [], []>} : vector<8x128xf32>, vector<128x128xf32>, vector<8x128xf32> -> vector<8x128xf32>
      %c0_174 = arith.constant 0 : index
      %c0_175 = arith.constant 0 : index
      %373 = vector.load %arg7[%c0_174, %c0_175] : memref<1x128xf32, #tpu.memory_space<vmem>>, vector<1x128xf32>
      %374 = vector.broadcast %373 : vector<1x128xf32> to vector<8x128xf32>
      %375 = arith.addf %372, %374 : vector<8x128xf32>
      %c0_176 = arith.constant 0 : index
      %c0_177 = arith.constant 0 : index
      %376 = vector.load %arg8[%c0_176, %c0_177] : memref<8x128xf32, #tpu.memory_space<vmem>>, vector<8x128xf32>
      tpu.vector_store %arg8[%c0_176, %c0_177], %375 {strides = array<i32>} : memref<8x128xf32, #tpu.memory_space<vmem>>, vector<8x128xf32>,
    } else {
    }
    return
  }
  func.func @transform_0(%arg0: i32, %arg1: i32) -> (i32, i32, i32) {
    %c0_i32 = arith.constant 0 : i32
    %c0_i32_0 = arith.constant 0 : i32
    return %arg1, %arg0, %c0_i32 : i32, i32, i32
  }
  func.func @transform_1(%arg0: i32, %arg1: i32) -> (i32, i32) {
    %c0_i32 = arith.constant 0 : i32
    %c0_i32_0 = arith.constant 0 : i32
    %c0_i32_1 = arith.constant 0 : i32
    return %c0_i32, %c0_i32_0 : i32, i32
  }
  func.func @transform_2(%arg0: i32, %arg1: i32) -> (i32, i32) {
    %c0_i32 = arith.constant 0 : i32
    %c0_i32_0 = arith.constant 0 : i32
    %c0_i32_1 = arith.constant 0 : i32
    return %c0_i32, %c0_i32_0 : i32, i32
  }
  func.func @transform_3(%arg0: i32, %arg1: i32) -> (i32, i32) {
    %c0_i32 = arith.constant 0 : i32
    %c0_i32_0 = arith.constant 0 : i32
    %c0_i32_1 = arith.constant 0 : i32
    return %c0_i32, %c0_i32_0 : i32, i32
  }
  func.func @transform_4(%arg0: i32, %arg1: i32) -> (i32, i32) {
    %c0_i32 = arith.constant 0 : i32
    %c0_i32_0 = arith.constant 0 : i32
    %c0_i32_1 = arith.constant 0 : i32
    return %c0_i32, %c0_i32_0 : i32, i32
  }
  func.func @transform_5(%arg0: i32, %arg1: i32) -> (i32, i32) {
    %c0_i32 = arith.constant 0 : i32
    %c0_i32_0 = arith.constant 0 : i32
    %c0_i32_1 = arith.constant 0 : i32
    return %c0_i32, %c0_i32_0 : i32, i32
  }
  func.func @transform_6(%arg0: i32, %arg1: i32) -> (i32, i32) {
    %c0_i32 = arith.constant 0 : i32
    %c0_i32_0 = arith.constant 0 : i32
    return %arg0, %c0_i32 : i32, i32
  }
}

</mosaic_0001>

<llo_original>
// kernel: tpu_custom_call.1
$region0: #{tpu_custom_call.1}
  #allocation0 [shape = 'u32[]', space=smem, size = 0x4, offset = 0x4, fixed_abs, tag = 'smem constant byte address 0x4 - core index']
  #allocation1 [shape = 'u32[72,128]{1,0:T(1,128)}', space=vmem, size = 0x9000, scoped, tag = 'internal scratch']
  #allocation2 [shape = 'f32[8,128]{1,0:T(8,128)}', space=vmem, size = 0x1000, scoped, tag = 'scratch operand']
  #allocation3 [shape = 'f32[8,128]{1,0:T(8,128)}', space=vmem, size = 0x1000, scoped, tag = 'scratch operand']
  #allocation4 [shape = 'f32[64,512]{1,0:T(8,128)}', space=vmem, size = 0x20000, scoped, tag = 'scratch operand']
  %s0 = inlined_call_operand.hbm [shape: f32[8,8,128], index: 0, kind: input, shape index: {}]
  %s1 = inlined_call_operand.hbm [shape: f32[128,512], index: 1, kind: input, shape index: {}]
  %s2 = inlined_call_operand.hbm [shape: f32[128,512], index: 2, kind: input, shape index: {}]
  %s3 = inlined_call_operand.hbm [shape: f32[1,512], index: 3, kind: input, shape index: {}]
  %s4 = inlined_call_operand.hbm [shape: f32[128,128], index: 4, kind: input, shape index: {}]
  %s5 = inlined_call_operand.vmem [shape: f32[1,128], index: 5, kind: input, shape index: {}]
  %s6 = inlined_call_operand.hbm [shape: f32[8,128], index: 6, kind: output, shape index: {}]
  %s7 = sld [smem:[#allocation0]]
  $region62: #{tpu_custom_call.1} parent=0
    _
  %s9 = ssub.s32 1, %s7
  %s10 = scalar_select 0, %s9, %s7
  $region1: #{tpu_custom_call.1} parent=0
    #allocation5 [shape = 'u8[32768]{0}', space=vmem, size = 0x8000, scoped, tag = 'input window, operand 0, single buffered']
    #allocation6 [shape = 's32[1]{0}', space=sflag, size = 0x4, scoped, tag = 'scoped memory for tpu_custom_call.1']
    #allocation7 [shape = 's32[1]{0}', space=sflag, size = 0x4, scoped, tag = 'scoped memory for tpu_custom_call.1']
    #allocation8 [shape = 'u8[262144]{0}', space=vmem, size = 0x40000, scoped, tag = 'input window, operand 1, single buffered']
    #allocation9 [shape = 's32[1]{0}', space=sflag, size = 0x4, scoped, tag = 'scoped memory for tpu_custom_call.1']
    #allocation10 [shape = 'u8[262144]{0}', space=vmem, size = 0x40000, scoped, tag = 'input window, operand 2, single buffered']
    #allocation11 [shape = 'u8[2048]{0}', space=vmem, size = 0x800, scoped, tag = 'input window, operand 3, single buffered']
    #allocation12 [shape = 's32[1]{0}', space=sflag, size = 0x4, scoped, tag = 'scoped memory for tpu_custom_call.1']
    #allocation13 [shape = 'u8[65536]{0}', space=vmem, size = 0x10000, scoped, tag = 'input window, operand 4, single buffered']
    #allocation14 [shape = 'u8[4096]{0}', space=vmem, size = 0x1000, scoped, tag = 'output window, operand 0, single buffered']
    %11 = vsyncpa [#allocation6], 0
    %12 = vsyncpa [#allocation9], 0
    %13 = vsyncpa [#allocation12], 0
    %14 = vsyncpa [#allocation7], 0
    // Predicated region
    $region2: #{tpu_custom_call.1} parent=1 // pred_check
      _
    $region3: #{tpu_custom_call.1} parent=1 // pred_check_branch
      %16 = sbr.rel (0) target = $region5
    $region4: #{tpu_custom_call.1} parent=1 // pred_region
      %18 = vsyncadd [#allocation6], 0
      %s19 = sshll.u32 %s0, 4
      %s20 = int_to_ptr.hbm [resolvable:$true] %s19
      %s21 = sshll.u32 [#allocation5], 4
      %s22 = int_to_ptr.vmem [resolvable:$true] %s21
      %27 = dma.hbm_to_vmem [thread:$0]  %s20, 1024, %s22, [#allocation6], 128, 128, 8
    $region5: #{tpu_custom_call.1} parent=1 // pred_fallthru
      _
    // Predicated region
    $region6: #{tpu_custom_call.1} parent=1 // pred_check
      _
    $region7: #{tpu_custom_call.1} parent=1 // pred_check_branch
      %29 = sbr.rel (0) target = $region9
    $region8: #{tpu_custom_call.1} parent=1 // pred_region
      %31 = vsyncadd [#allocation9], 0
      %s32 = sshll.u32 %s1, 4
      %s33 = int_to_ptr.hbm [resolvable:$true] %s32
      %s34 = sshll.u32 [#allocation8], 4
      %s35 = int_to_ptr.vmem [resolvable:$true] %s34
      %40 = dma.hbm_to_vmem [thread:$0]  %s33, 8192, %s35, [#allocation9], 512, 512, 32
    $region9: #{tpu_custom_call.1} parent=1 // pred_fallthru
      _
    // Predicated region
    $region10: #{tpu_custom_call.1} parent=1 // pred_check
      _
    $region11: #{tpu_custom_call.1} parent=1 // pred_check_branch
      %42 = sbr.rel (0) target = $region13
    $region12: #{tpu_custom_call.1} parent=1 // pred_region
      %44 = vsyncadd [#allocation9], 0
      %s45 = sshll.u32 %s2, 4
      %s46 = int_to_ptr.hbm [resolvable:$true] %s45
      %s47 = sshll.u32 [#allocation10], 4
      %s48 = int_to_ptr.vmem [resolvable:$true] %s47
      %53 = dma.hbm_to_vmem [thread:$0]  %s46, 8192, %s48, [#allocation9], 512, 512, 32
    $region13: #{tpu_custom_call.1} parent=1 // pred_fallthru
      _
    // Predicated region
    $region14: #{tpu_custom_call.1} parent=1 // pred_check
      _
    $region15: #{tpu_custom_call.1} parent=1 // pred_check_branch
      %55 = sbr.rel (0) target = $region17
    $region16: #{tpu_custom_call.1} parent=1 // pred_region
      %57 = vsyncadd [#allocation12], 0
      %s59 = sshll.u32 %s3, 4
      %s60 = int_to_ptr.hbm [resolvable:$true] %s59
      %s61 = sshll.u32 [#allocation11], 4
      %s62 = int_to_ptr.vmem [resolvable:$true] %s61
      %64 = dma.hbm_to_vmem [thread:$0]  %s60, 64, %s62, [#allocation12]
    $region17: #{tpu_custom_call.1} parent=1 // pred_fallthru
      _
    // Predicated region
    $region18: #{tpu_custom_call.1} parent=1 // pred_check
      _
    $region19: #{tpu_custom_call.1} parent=1 // pred_check_branch
      %66 = sbr.rel (0) target = $region21
    $region20: #{tpu_custom_call.1} parent=1 // pred_region
      %68 = vsyncadd [#allocation12], 0
      %s69 = sshll.u32 %s4, 4
      %s70 = int_to_ptr.hbm [resolvable:$true] %s69
      %s71 = sshll.u32 [#allocation13], 4
      %s72 = int_to_ptr.vmem [resolvable:$true] %s71
      %77 = dma.hbm_to_vmem [thread:$0]  %s70, 2048, %s72, [#allocation12], 128, 128, 8
    $region21: #{tpu_custom_call.1} parent=1 // pred_fallthru
      _
    // Predicated region
    $region22: #{tpu_custom_call.1} parent=1 // pred_check
      _
    $region23: #{tpu_custom_call.1} parent=1 // pred_check_branch
      %79 = sbr.rel (0) target = $region25
    $region24: #{tpu_custom_call.1} parent=1 // pred_region
      _
    $region25: #{tpu_custom_call.1} parent=1 // pred_fallthru
      _
    // Predicated region
    $region26: #{tpu_custom_call.1} parent=1 // pred_check
      _
    $region27: #{tpu_custom_call.1} parent=1 // pred_check_branch
      %81 = sbr.rel (0) target = $region29
    $region28: #{tpu_custom_call.1} parent=1 // pred_region
      %83 = dma.done [#allocation6], 1024
    $region29: #{tpu_custom_call.1} parent=1 // pred_fallthru
      _
    // Predicated region
    $region30: #{tpu_custom_call.1} parent=1 // pred_check
      _
    $region31: #{tpu_custom_call.1} parent=1 // pred_check_branch
      %85 = sbr.rel (0) target = $region33
    $region32: #{tpu_custom_call.1} parent=1 // pred_region
      %87 = dma.done [#allocation9], 8192
    $region33: #{tpu_custom_call.1} parent=1 // pred_fallthru
      _
    // Predicated region
    $region34: #{tpu_custom_call.1} parent=1 // pred_check
      _
    $region35: #{tpu_custom_call.1} parent=1 // pred_check_branch
      %89 = sbr.rel (0) target = $region37
    $region36: #{tpu_custom_call.1} parent=1 // pred_region
      %91 = dma.done [#allocation9], 8192
    $region37: #{tpu_custom_call.1} parent=1 // pred_fallthru
      _
    // Predicated region
    $region38: #{tpu_custom_call.1} parent=1 // pred_check
      _
    $region39: #{tpu_custom_call.1} parent=1 // pred_check_branch
      %93 = sbr.rel (0) target = $region41
    $region40: #{tpu_custom_call.1} parent=1 // pred_region
      %95 = dma.done [#allocation12], 64
    $region41: #{tpu_custom_call.1} parent=1 // pred_fallthru
      _
    // Predicated region
    $region42: #{tpu_custom_call.1} parent=1 // pred_check
      _
    $region43: #{tpu_custom_call.1} parent=1 // pred_check_branch
      %97 = sbr.rel (0) target = $region45
    $region44: #{tpu_custom_call.1} parent=1 // pred_region
      %99 = dma.done [#allocation12], 2048
    $region45: #{tpu_custom_call.1} parent=1 // pred_fallthru
      _
    %p100 = scmp.eq.s32.totalorder 0, 0
    // Predicated region
    $region46: #{tpu_custom_call.1} parent=1 // pred_check
      %p101 = pneg %p100
    $region47: #{tpu_custom_call.1} parent=1 // pred_check_branch
      %103 = sbr.rel (%p101) target = $region49
    $region48: #{tpu_custom_call.1} parent=1 // pred_region
      %104 = vst [vmem:[#allocation2] sm:$0xff] 0.0
      %105 = vst [vmem:[#allocation3] sm:$0xff] 0.0
    $region49: #{tpu_custom_call.1} parent=1 // pred_fallthru
      _
    %v106 = vld [vmem:[#allocation5] sm:$0xff]
    %v107 = vld [vmem:[#allocation5 + $0x8] sm:$0xff]
    %v108 = vld [vmem:[#allocation5 + $0x10] sm:$0xff]
    %v109 = vld [vmem:[#allocation5 + $0x18] sm:$0xff]
    %v110 = vld [vmem:[#allocation5 + $0x20] sm:$0xff]
    %v111 = vld [vmem:[#allocation5 + $0x28] sm:$0xff]
    %v112 = vld [vmem:[#allocation5 + $0x30] sm:$0xff]
    %v113 = vld [vmem:[#allocation5 + $0x38] sm:$0xff]
    %v114 = vld [vmem:[#allocation8] sm:$0xff]
    %v115 = vld [vmem:[#allocation8 + $0x8] sm:$0xff]
    %v116 = vld [vmem:[#allocation8 + $0x10] sm:$0xff]
    %v117 = vld [vmem:[#allocation8 + $0x18] sm:$0xff]
    %v118 = vld [vmem:[#allocation8 + $0x20] sm:$0xff]
    %v119 = vld [vmem:[#allocation8 + $0x28] sm:$0xff]
    %v120 = vld [vmem:[#allocation8 + $0x30] sm:$0xff]
    %v121 = vld [vmem:[#allocation8 + $0x38] sm:$0xff]
    %v122 = vld [vmem:[#allocation8 + $0x40] sm:$0xff]
    %v123 = vld [vmem:[#allocation8 + $0x48] sm:$0xff]
    %v124 = vld [vmem:[#allocation8 + $0x50] sm:$0xff]
    %v125 = vld [vmem:[#allocation8 + $0x58] sm:$0xff]
    %v126 = vld [vmem:[#allocation8 + $0x60] sm:$0xff]
    %v127 = vld [vmem:[#allocation8 + $0x68] sm:$0xff]
    %v128 = vld [vmem:[#allocation8 + $0x70] sm:$0xff]
    %v129 = vld [vmem:[#allocation8 + $0x78] sm:$0xff]
    %v130 = vld [vmem:[#allocation8 + $0x80] sm:$0xff]
    %v131 = vld [vmem:[#allocation8 + $0x88] sm:$0xff]
    %v132 = vld [vmem:[#allocation8 + $0x90] sm:$0xff]
    %v133 = vld [vmem:[#allocation8 + $0x98] sm:$0xff]
    %v134 = vld [vmem:[#allocation8 + $0xa0] sm:$0xff]
    %v135 = vld [vmem:[#allocation8 + $0xa8] sm:$0xff]
    %v136 = vld [vmem:[#allocation8 + $0xb0] sm:$0xff]
    %v137 = vld [vmem:[#allocation8 + $0xb8] sm:$0xff]
    %v138 = vld [vmem:[#allocation8 + $0xc0] sm:$0xff]
    %v139 = vld [vmem:[#allocation8 + $0xc8] sm:$0xff]
    %v140 = vld [vmem:[#allocation8 + $0xd0] sm:$0xff]
    %v141 = vld [vmem:[#allocation8 + $0xd8] sm:$0xff]
    %v142 = vld [vmem:[#allocation8 + $0xe0] sm:$0xff]
    %v143 = vld [vmem:[#allocation8 + $0xe8] sm:$0xff]
    %v144 = vld [vmem:[#allocation8 + $0xf0] sm:$0xff]
    %v145 = vld [vmem:[#allocation8 + $0xf8] sm:$0xff]
    %v146 = vld [vmem:[#allocation8 + $0x100] sm:$0xff]
    %v147 = vld [vmem:[#allocation8 + $0x108] sm:$0xff]
    %v148 = vld [vmem:[#allocation8 + $0x110] sm:$0xff]
    %v149 = vld [vmem:[#allocation8 + $0x118] sm:$0xff]
    %v150 = vld [vmem:[#allocation8 + $0x120] sm:$0xff]
    %v151 = vld [vmem:[#allocation8 + $0x128] sm:$0xff]
    %v152 = vld [vmem:[#allocation8 + $0x130] sm:$0xff]
    %v153 = vld [vmem:[#allocation8 + $0x138] sm:$0xff]
    %v154 = vld [vmem:[#allocation8 + $0x140] sm:$0xff]
    %v155 = vld [vmem:[#allocation8 + $0x148] sm:$0xff]
    %v156 = vld [vmem:[#allocation8 + $0x150] sm:$0xff]
    %v157 = vld [vmem:[#allocation8 + $0x158] sm:$0xff]
    %v158 = vld [vmem:[#allocation8 + $0x160] sm:$0xff]
    %v159 = vld [vmem:[#allocation8 + $0x168] sm:$0xff]
    %v160 = vld [vmem:[#allocation8 + $0x170] sm:$0xff]
    %v161 = vld [vmem:[#allocation8 + $0x178] sm:$0xff]
    %v162 = vld [vmem:[#allocation8 + $0x180] sm:$0xff]
    %v163 = vld [vmem:[#allocation8 + $0x188] sm:$0xff]
    %v164 = vld [vmem:[#allocation8 + $0x190] sm:$0xff]
    %v165 = vld [vmem:[#allocation8 + $0x198] sm:$0xff]
    %v166 = vld [vmem:[#allocation8 + $0x1a0] sm:$0xff]
    %v167 = vld [vmem:[#allocation8 + $0x1a8] sm:$0xff]
    %v168 = vld [vmem:[#allocation8 + $0x1b0] sm:$0xff]
    %v169 = vld [vmem:[#allocation8 + $0x1b8] sm:$0xff]
    %v170 = vld [vmem:[#allocation8 + $0x1c0] sm:$0xff]
    %v171 = vld [vmem:[#allocation8 + $0x1c8] sm:$0xff]
    %v172 = vld [vmem:[#allocation8 + $0x1d0] sm:$0xff]
    %v173 = vld [vmem:[#allocation8 + $0x1d8] sm:$0xff]
    %v174 = vld [vmem:[#allocation8 + $0x1e0] sm:$0xff]
    %v175 = vld [vmem:[#allocation8 + $0x1e8] sm:$0xff]
    %v176 = vld [vmem:[#allocation8 + $0x1f0] sm:$0xff]
    %v177 = vld [vmem:[#allocation8 + $0x1f8] sm:$0xff]
    %v178 = vld [vmem:[#allocation11] sm:$0xf]
    %v180 = vperm.slane %v178, 0
    %v181 = vperm.slane %v178, 1
    %v182 = vperm.slane %v178, 2
    %v183 = vperm.slane %v178, 3
    %188 = vmatpush.msra.mxu0 %v174
    %189 = vmatpush.msra.mxu0 %v170
    %190 = vmatpush.msra.mxu0 %v166
    %191 = vmatpush.msra.mxu0 %v162
    %192 = vmatpush.msra.mxu0 %v158
    %193 = vmatpush.msra.mxu0 %v154
    %194 = vmatpush.msra.mxu0 %v150
    %195 = vmatpush.msra.mxu0 %v146
    %196 = vmatpush.msra.mxu0 %v142
    %197 = vmatpush.msra.mxu0 %v138
    %198 = vmatpush.msra.mxu0 %v134
    %199 = vmatpush.msra.mxu0 %v130
    %200 = vmatpush.msra.mxu0 %v126
    %201 = vmatpush.msra.mxu0 %v122
    %202 = vmatpush.msra.mxu0 %v118
    %203 = vmatpush.msra.mxu0 %v114
    %204 = vmatmul.f32.gmra.mxu0 %v106
    %v205 = vpop.f32.mrf.mxu0
    %v206 = vadd.f32 %v180, %v205
    %207 = vmatmul.f32.gmra.mxu0 %v107
    %v208 = vpop.f32.mrf.mxu0
    %v209 = vadd.f32 %v180, %v208
    %210 = vdwg.mxu0
    %211 = vmatpush.msra.mxu0 %v175
    %212 = vmatpush.msra.mxu0 %v171
    %213 = vmatpush.msra.mxu0 %v167
    %214 = vmatpush.msra.mxu0 %v163
    %215 = vmatpush.msra.mxu0 %v159
    %216 = vmatpush.msra.mxu0 %v155
    %217 = vmatpush.msra.mxu0 %v151
    %218 = vmatpush.msra.mxu0 %v147
    %219 = vmatpush.msra.mxu0 %v143
    %220 = vmatpush.msra.mxu0 %v139
    %221 = vmatpush.msra.mxu0 %v135
    %222 = vmatpush.msra.mxu0 %v131
    %223 = vmatpush.msra.mxu0 %v127
    %224 = vmatpush.msra.mxu0 %v123
    %225 = vmatpush.msra.mxu0 %v119
    %226 = vmatpush.msra.mxu0 %v115
    %227 = vmatmul.f32.gmra.mxu0 %v106
    %v228 = vpop.f32.mrf.mxu0
    %v229 = vadd.f32 %v181, %v228
    %230 = vmatmul.f32.gmra.mxu0 %v107
    %v231 = vpop.f32.mrf.mxu0
    %v232 = vadd.f32 %v181, %v231
    %233 = vdwg.mxu0
    %234 = vmatpush.msra.mxu0 %v176
    %235 = vmatpush.msra.mxu0 %v172
    %236 = vmatpush.msra.mxu0 %v168
    %237 = vmatpush.msra.mxu0 %v164
    %238 = vmatpush.msra.mxu0 %v160
    %239 = vmatpush.msra.mxu0 %v156
    %240 = vmatpush.msra.mxu0 %v152
    %241 = vmatpush.msra.mxu0 %v148
    %242 = vmatpush.msra.mxu0 %v144
    %243 = vmatpush.msra.mxu0 %v140
    %244 = vmatpush.msra.mxu0 %v136
    %245 = vmatpush.msra.mxu0 %v132
    %246 = vmatpush.msra.mxu0 %v128
    %247 = vmatpush.msra.mxu0 %v124
    %248 = vmatpush.msra.mxu0 %v120
    %249 = vmatpush.msra.mxu0 %v116
    %250 = vmatmul.f32.gmra.mxu0 %v106
    %v251 = vpop.f32.mrf.mxu0
    %v252 = vadd.f32 %v182, %v251
    %253 = vmatmul.f32.gmra.mxu0 %v107
    %v254 = vpop.f32.mrf.mxu0
    %v255 = vadd.f32 %v182, %v254
    %256 = vdwg.mxu0
    %257 = vmatpush.msra.mxu0 %v177
    %258 = vmatpush.msra.mxu0 %v173
    %259 = vmatpush.msra.mxu0 %v169
    %260 = vmatpush.msra.mxu0 %v165
    %261 = vmatpush.msra.mxu0 %v161
    %262 = vmatpush.msra.mxu0 %v157
    %263 = vmatpush.msra.mxu0 %v153
    %264 = vmatpush.msra.mxu0 %v149
    %265 = vmatpush.msra.mxu0 %v145
    %266 = vmatpush.msra.mxu0 %v141
    %267 = vmatpush.msra.mxu0 %v137
    %268 = vmatpush.msra.mxu0 %v133
    %269 = vmatpush.msra.mxu0 %v129
    %270 = vmatpush.msra.mxu0 %v125
    %271 = vmatpush.msra.mxu0 %v121
    %272 = vmatpush.msra.mxu0 %v117
    %273 = vmatmul.f32.gmra.mxu0 %v106
    %v274 = vpop.f32.mrf.mxu0
    %v275 = vadd.f32 %v183, %v274
    %276 = vmatmul.f32.gmra.mxu0 %v107
    %v277 = vpop.f32.mrf.mxu0
    %v278 = vadd.f32 %v183, %v277
    %279 = vdwg.mxu0
    %280 = vst [vmem:[#allocation4] sm:$0xff] %v206
    %281 = vst [vmem:[#allocation4 + $0x8] sm:$0xff] %v229
    %282 = vst [vmem:[#allocation4 + $0x10] sm:$0xff] %v252
    %283 = vst [vmem:[#allocation4 + $0x18] sm:$0xff] %v275
    %284 = vst [vmem:[#allocation4 + $0x20] sm:$0xff] %v209
    %285 = vst [vmem:[#allocation4 + $0x28] sm:$0xff] %v232
    %286 = vst [vmem:[#allocation4 + $0x30] sm:$0xff] %v255
    %287 = vst [vmem:[#allocation4 + $0x38] sm:$0xff] %v278
    %v288 = vld [vmem:[#allocation8] sm:$0xff]
    %v289 = vld [vmem:[#allocation8 + $0x8] sm:$0xff]
    %v290 = vld [vmem:[#allocation8 + $0x10] sm:$0xff]
    %v291 = vld [vmem:[#allocation8 + $0x18] sm:$0xff]
    %v292 = vld [vmem:[#allocation8 + $0x20] sm:$0xff]
    %v293 = vld [vmem:[#allocation8 + $0x28] sm:$0xff]
    %v294 = vld [vmem:[#allocation8 + $0x30] sm:$0xff]
    %v295 = vld [vmem:[#allocation8 + $0x38] sm:$0xff]
    %v296 = vld [vmem:[#allocation8 + $0x40] sm:$0xff]
    %v297 = vld [vmem:[#allocation8 + $0x48] sm:$0xff]
    %v298 = vld [vmem:[#allocation8 + $0x50] sm:$0xff]
    %v299 = vld [vmem:[#allocation8 + $0x58] sm:$0xff]
    %v300 = vld [vmem:[#allocation8 + $0x60] sm:$0xff]
    %v301 = vld [vmem:[#allocation8 + $0x68] sm:$0xff]
    %v302 = vld [vmem:[#allocation8 + $0x70] sm:$0xff]
    %v303 = vld [vmem:[#allocation8 + $0x78] sm:$0xff]
    %v304 = vld [vmem:[#allocation8 + $0x80] sm:$0xff]
    %v305 = vld [vmem:[#allocation8 + $0x88] sm:$0xff]
    %v306 = vld [vmem:[#allocation8 + $0x90] sm:$0xff]
    %v307 = vld [vmem:[#allocation8 + $0x98] sm:$0xff]
    %v308 = vld [vmem:[#allocation8 + $0xa0] sm:$0xff]
    %v309 = vld [vmem:[#allocation8 + $0xa8] sm:$0xff]
    %v310 = vld [vmem:[#allocation8 + $0xb0] sm:$0xff]
    %v311 = vld [vmem:[#allocation8 + $0xb8] sm:$0xff]
    %v312 = vld [vmem:[#allocation8 + $0xc0] sm:$0xff]
    %v313 = vld [vmem:[#allocation8 + $0xc8] sm:$0xff]
    %v314 = vld [vmem:[#allocation8 + $0xd0] sm:$0xff]
    %v315 = vld [vmem:[#allocation8 + $0xd8] sm:$0xff]
    %v316 = vld [vmem:[#allocation8 + $0xe0] sm:$0xff]
    %v317 = vld [vmem:[#allocation8 + $0xe8] sm:$0xff]
    %v318 = vld [vmem:[#allocation8 + $0xf0] sm:$0xff]
    %v319 = vld [vmem:[#allocation8 + $0xf8] sm:$0xff]
    %v320 = vld [vmem:[#allocation8 + $0x100] sm:$0xff]
    %v321 = vld [vmem:[#allocation8 + $0x108] sm:$0xff]
    %v322 = vld [vmem:[#allocation8 + $0x110] sm:$0xff]
    %v323 = vld [vmem:[#allocation8 + $0x118] sm:$0xff]
    %v324 = vld [vmem:[#allocation8 + $0x120] sm:$0xff]
    %v325 = vld [vmem:[#allocation8 + $0x128] sm:$0xff]
    %v326 = vld [vmem:[#allocation8 + $0x130] sm:$0xff]
    %v327 = vld [vmem:[#allocation8 + $0x138] sm:$0xff]
    %v328 = vld [vmem:[#allocation8 + $0x140] sm:$0xff]
    %v329 = vld [vmem:[#allocation8 + $0x148] sm:$0xff]
    %v330 = vld [vmem:[#allocation8 + $0x150] sm:$0xff]
    %v331 = vld [vmem:[#allocation8 + $0x158] sm:$0xff]
    %v332 = vld [vmem:[#allocation8 + $0x160] sm:$0xff]
    %v333 = vld [vmem:[#allocation8 + $0x168] sm:$0xff]
    %v334 = vld [vmem:[#allocation8 + $0x170] sm:$0xff]
    %v335 = vld [vmem:[#allocation8 + $0x178] sm:$0xff]
    %v336 = vld [vmem:[#allocation8 + $0x180] sm:$0xff]
    %v337 = vld [vmem:[#allocation8 + $0x188] sm:$0xff]
    %v338 = vld [vmem:[#allocation8 + $0x190] sm:$0xff]
    %v339 = vld [vmem:[#allocation8 + $0x198] sm:$0xff]
    %v340 = vld [vmem:[#allocation8 + $0x1a0] sm:$0xff]
    %v341 = vld [vmem:[#allocation8 + $0x1a8] sm:$0xff]
    %v342 = vld [vmem:[#allocation8 + $0x1b0] sm:$0xff]
    %v343 = vld [vmem:[#allocation8 + $0x1b8] sm:$0xff]
    %v344 = vld [vmem:[#allocation8 + $0x1c0] sm:$0xff]
    %v345 = vld [vmem:[#allocation8 + $0x1c8] sm:$0xff]
    %v346 = vld [vmem:[#allocation8 + $0x1d0] sm:$0xff]
    %v347 = vld [vmem:[#allocation8 + $0x1d8] sm:$0xff]
    %v348 = vld [vmem:[#allocation8 + $0x1e0] sm:$0xff]
    %v349 = vld [vmem:[#allocation8 + $0x1e8] sm:$0xff]
    %v350 = vld [vmem:[#allocation8 + $0x1f0] sm:$0xff]
    %v351 = vld [vmem:[#allocation8 + $0x1f8] sm:$0xff]
    %v352 = vld [vmem:[#allocation11] sm:$0xf]
    %v354 = vperm.slane %v352, 0
    %v355 = vperm.slane %v352, 1
    %v356 = vperm.slane %v352, 2
    %v357 = vperm.slane %v352, 3
    %362 = vmatpush.msra.mxu0 %v348
    %363 = vmatpush.msra.mxu0 %v344
    %364 = vmatpush.msra.mxu0 %v340
    %365 = vmatpush.msra.mxu0 %v336
    %366 = vmatpush.msra.mxu0 %v332
    %367 = vmatpush.msra.mxu0 %v328
    %368 = vmatpush.msra.mxu0 %v324
    %369 = vmatpush.msra.mxu0 %v320
    %370 = vmatpush.msra.mxu0 %v316
    %371 = vmatpush.msra.mxu0 %v312
    %372 = vmatpush.msra.mxu0 %v308
    %373 = vmatpush.msra.mxu0 %v304
    %374 = vmatpush.msra.mxu0 %v300
    %375 = vmatpush.msra.mxu0 %v296
    %376 = vmatpush.msra.mxu0 %v292
    %377 = vmatpush.msra.mxu0 %v288
    %378 = vmatmul.f32.gmra.mxu0 %v108
    %v379 = vpop.f32.mrf.mxu0
    %v380 = vadd.f32 %v354, %v379
    %381 = vmatmul.f32.gmra.mxu0 %v109
    %v382 = vpop.f32.mrf.mxu0
    %v383 = vadd.f32 %v354, %v382
    %384 = vdwg.mxu0
    %385 = vmatpush.msra.mxu0 %v349
    %386 = vmatpush.msra.mxu0 %v345
    %387 = vmatpush.msra.mxu0 %v341
    %388 = vmatpush.msra.mxu0 %v337
    %389 = vmatpush.msra.mxu0 %v333
    %390 = vmatpush.msra.mxu0 %v329
    %391 = vmatpush.msra.mxu0 %v325
    %392 = vmatpush.msra.mxu0 %v321
    %393 = vmatpush.msra.mxu0 %v317
    %394 = vmatpush.msra.mxu0 %v313
    %395 = vmatpush.msra.mxu0 %v309
    %396 = vmatpush.msra.mxu0 %v305
    %397 = vmatpush.msra.mxu0 %v301
    %398 = vmatpush.msra.mxu0 %v297
    %399 = vmatpush.msra.mxu0 %v293
    %400 = vmatpush.msra.mxu0 %v289
    %401 = vmatmul.f32.gmra.mxu0 %v108
    %v402 = vpop.f32.mrf.mxu0
    %v403 = vadd.f32 %v355, %v402
    %404 = vmatmul.f32.gmra.mxu0 %v109
    %v405 = vpop.f32.mrf.mxu0
    %v406 = vadd.f32 %v355, %v405
    %407 = vdwg.mxu0
    %408 = vmatpush.msra.mxu0 %v350
    %409 = vmatpush.msra.mxu0 %v346
    %410 = vmatpush.msra.mxu0 %v342
    %411 = vmatpush.msra.mxu0 %v338
    %412 = vmatpush.msra.mxu0 %v334
    %413 = vmatpush.msra.mxu0 %v330
    %414 = vmatpush.msra.mxu0 %v326
    %415 = vmatpush.msra.mxu0 %v322
    %416 = vmatpush.msra.mxu0 %v318
    %417 = vmatpush.msra.mxu0 %v314
    %418 = vmatpush.msra.mxu0 %v310
    %419 = vmatpush.msra.mxu0 %v306
    %420 = vmatpush.msra.mxu0 %v302
    %421 = vmatpush.msra.mxu0 %v298
    %422 = vmatpush.msra.mxu0 %v294
    %423 = vmatpush.msra.mxu0 %v290
    %424 = vmatmul.f32.gmra.mxu0 %v108
    %v425 = vpop.f32.mrf.mxu0
    %v426 = vadd.f32 %v356, %v425
    %427 = vmatmul.f32.gmra.mxu0 %v109
    %v428 = vpop.f32.mrf.mxu0
    %v429 = vadd.f32 %v356, %v428
    %430 = vdwg.mxu0
    %431 = vmatpush.msra.mxu0 %v351
    %432 = vmatpush.msra.mxu0 %v347
    %433 = vmatpush.msra.mxu0 %v343
    %434 = vmatpush.msra.mxu0 %v339
    %435 = vmatpush.msra.mxu0 %v335
    %436 = vmatpush.msra.mxu0 %v331
    %437 = vmatpush.msra.mxu0 %v327
    %438 = vmatpush.msra.mxu0 %v323
    %439 = vmatpush.msra.mxu0 %v319
    %440 = vmatpush.msra.mxu0 %v315
    %441 = vmatpush.msra.mxu0 %v311
    %442 = vmatpush.msra.mxu0 %v307
    %443 = vmatpush.msra.mxu0 %v303
    %444 = vmatpush.msra.mxu0 %v299
    %445 = vmatpush.msra.mxu0 %v295
    %446 = vmatpush.msra.mxu0 %v291
    %447 = vmatmul.f32.gmra.mxu0 %v108
    %v448 = vpop.f32.mrf.mxu0
    %v449 = vadd.f32 %v357, %v448
    %450 = vmatmul.f32.gmra.mxu0 %v109
    %v451 = vpop.f32.mrf.mxu0
    %v452 = vadd.f32 %v357, %v451
    %453 = vdwg.mxu0
    %454 = vst [vmem:[#allocation4 + $0x40] sm:$0xff] %v380
    %455 = vst [vmem:[#allocation4 + $0x48] sm:$0xff] %v403
    %456 = vst [vmem:[#allocation4 + $0x50] sm:$0xff] %v426
    %457 = vst [vmem:[#allocation4 + $0x58] sm:$0xff] %v449
    %458 = vst [vmem:[#allocation4 + $0x60] sm:$0xff] %v383
    %459 = vst [vmem:[#allocation4 + $0x68] sm:$0xff] %v406
    %460 = vst [vmem:[#allocation4 + $0x70] sm:$0xff] %v429
    %461 = vst [vmem:[#allocation4 + $0x78] sm:$0xff] %v452
    %v462 = vld [vmem:[#allocation8] sm:$0xff]
    %v463 = vld [vmem:[#allocation8 + $0x8] sm:$0xff]
    %v464 = vld [vmem:[#allocation8 + $0x10] sm:$0xff]
    %v465 = vld [vmem:[#allocation8 + $0x18] sm:$0xff]
    %v466 = vld [vmem:[#allocation8 + $0x20] sm:$0xff]
    %v467 = vld [vmem:[#allocation8 + $0x28] sm:$0xff]
    %v468 = vld [vmem:[#allocation8 + $0x30] sm:$0xff]
    %v469 = vld [vmem:[#allocation8 + $0x38] sm:$0xff]
    %v470 = vld [vmem:[#allocation8 + $0x40] sm:$0xff]
    %v471 = vld [vmem:[#allocation8 + $0x48] sm:$0xff]
    %v472 = vld [vmem:[#allocation8 + $0x50] sm:$0xff]
    %v473 = vld [vmem:[#allocation8 + $0x58] sm:$0xff]
    %v474 = vld [vmem:[#allocation8 + $0x60] sm:$0xff]
    %v475 = vld [vmem:[#allocation8 + $0x68] sm:$0xff]
    %v476 = vld [vmem:[#allocation8 + $0x70] sm:$0xff]
    %v477 = vld [vmem:[#allocation8 + $0x78] sm:$0xff]
    %v478 = vld [vmem:[#allocation8 + $0x80] sm:$0xff]
    %v479 = vld [vmem:[#allocation8 + $0x88] sm:$0xff]
    %v480 = vld [vmem:[#allocation8 + $0x90] sm:$0xff]
    %v481 = vld [vmem:[#allocation8 + $0x98] sm:$0xff]
    %v482 = vld [vmem:[#allocation8 + $0xa0] sm:$0xff]
    %v483 = vld [vmem:[#allocation8 + $0xa8] sm:$0xff]
    %v484 = vld [vmem:[#allocation8 + $0xb0] sm:$0xff]
    %v485 = vld [vmem:[#allocation8 + $0xb8] sm:$0xff]
    %v486 = vld [vmem:[#allocation8 + $0xc0] sm:$0xff]
    %v487 = vld [vmem:[#allocation8 + $0xc8] sm:$0xff]
    %v488 = vld [vmem:[#allocation8 + $0xd0] sm:$0xff]
    %v489 = vld [vmem:[#allocation8 + $0xd8] sm:$0xff]
    %v490 = vld [vmem:[#allocation8 + $0xe0] sm:$0xff]
    %v491 = vld [vmem:[#allocation8 + $0xe8] sm:$0xff]
    %v492 = vld [vmem:[#allocation8 + $0xf0] sm:$0xff]
    %v493 = vld [vmem:[#allocation8 + $0xf8] sm:$0xff]
    %v494 = vld [vmem:[#allocation8 + $0x100] sm:$0xff]
    %v495 = vld [vmem:[#allocation8 + $0x108] sm:$0xff]
    %v496 = vld [vmem:[#allocation8 + $0x110] sm:$0xff]
    %v497 = vld [vmem:[#allocation8 + $0x118] sm:$0xff]
    %v498 = vld [vmem:[#allocation8 + $0x120] sm:$0xff]
    %v499 = vld [vmem:[#allocation8 + $0x128] sm:$0xff]
    %v500 = vld [vmem:[#allocation8 + $0x130] sm:$0xff]
    %v501 = vld [vmem:[#allocation8 + $0x138] sm:$0xff]
    %v502 = vld [vmem:[#allocation8 + $0x140] sm:$0xff]
    %v503 = vld [vmem:[#allocation8 + $0x148] sm:$0xff]
    %v504 = vld [vmem:[#allocation8 + $0x150] sm:$0xff]
    %v505 = vld [vmem:[#allocation8 + $0x158] sm:$0xff]
    %v506 = vld [vmem:[#allocation8 + $0x160] sm:$0xff]
    %v507 = vld [vmem:[#allocation8 + $0x168] sm:$0xff]
    %v508 = vld [vmem:[#allocation8 + $0x170] sm:$0xff]
    %v509 = vld [vmem:[#allocation8 + $0x178] sm:$0xff]
    %v510 = vld [vmem:[#allocation8 + $0x180] sm:$0xff]
    %v511 = vld [vmem:[#allocation8 + $0x188] sm:$0xff]
    %v512 = vld [vmem:[#allocation8 + $0x190] sm:$0xff]
    %v513 = vld [vmem:[#allocation8 + $0x198] sm:$0xff]
    %v514 = vld [vmem:[#allocation8 + $0x1a0] sm:$0xff]
    %v515 = vld [vmem:[#allocation8 + $0x1a8] sm:$0xff]
    %v516 = vld [vmem:[#allocation8 + $0x1b0] sm:$0xff]
    %v517 = vld [vmem:[#allocation8 + $0x1b8] sm:$0xff]
    %v518 = vld [vmem:[#allocation8 + $0x1c0] sm:$0xff]
    %v519 = vld [vmem:[#allocation8 + $0x1c8] sm:$0xff]
    %v520 = vld [vmem:[#allocation8 + $0x1d0] sm:$0xff]
    %v521 = vld [vmem:[#allocation8 + $0x1d8] sm:$0xff]
    %v522 = vld [vmem:[#allocation8 + $0x1e0] sm:$0xff]
    %v523 = vld [vmem:[#allocation8 + $0x1e8] sm:$0xff]
    %v524 = vld [vmem:[#allocation8 + $0x1f0] sm:$0xff]
    %v525 = vld [vmem:[#allocation8 + $0x1f8] sm:$0xff]
    %v526 = vld [vmem:[#allocation11] sm:$0xf]
    %v528 = vperm.slane %v526, 0
    %v529 = vperm.slane %v526, 1
    %v530 = vperm.slane %v526, 2
    %v531 = vperm.slane %v526, 3
    %536 = vmatpush.msra.mxu0 %v522
    %537 = vmatpush.msra.mxu0 %v518
    %538 = vmatpush.msra.mxu0 %v514
    %539 = vmatpush.msra.mxu0 %v510
    %540 = vmatpush.msra.mxu0 %v506
    %541 = vmatpush.msra.mxu0 %v502
    %542 = vmatpush.msra.mxu0 %v498
    %543 = vmatpush.msra.mxu0 %v494
    %544 = vmatpush.msra.mxu0 %v490
    %545 = vmatpush.msra.mxu0 %v486
    %546 = vmatpush.msra.mxu0 %v482
    %547 = vmatpush.msra.mxu0 %v478
    %548 = vmatpush.msra.mxu0 %v474
    %549 = vmatpush.msra.mxu0 %v470
    %550 = vmatpush.msra.mxu0 %v466
    %551 = vmatpush.msra.mxu0 %v462
    %552 = vmatmul.f32.gmra.mxu0 %v110
    %v553 = vpop.f32.mrf.mxu0
    %v554 = vadd.f32 %v528, %v553
    %555 = vmatmul.f32.gmra.mxu0 %v111
    %v556 = vpop.f32.mrf.mxu0
    %v557 = vadd.f32 %v528, %v556
    %558 = vdwg.mxu0
    %559 = vmatpush.msra.mxu0 %v523
    %560 = vmatpush.msra.mxu0 %v519
    %561 = vmatpush.msra.mxu0 %v515
    %562 = vmatpush.msra.mxu0 %v511
    %563 = vmatpush.msra.mxu0 %v507
    %564 = vmatpush.msra.mxu0 %v503
    %565 = vmatpush.msra.mxu0 %v499
    %566 = vmatpush.msra.mxu0 %v495
    %567 = vmatpush.msra.mxu0 %v491
    %568 = vmatpush.msra.mxu0 %v487
    %569 = vmatpush.msra.mxu0 %v483
    %570 = vmatpush.msra.mxu0 %v479
    %571 = vmatpush.msra.mxu0 %v475
    %572 = vmatpush.msra.mxu0 %v471
    %573 = vmatpush.msra.mxu0 %v467
    %574 = vmatpush.msra.mxu0 %v463
    %575 = vmatmul.f32.gmra.mxu0 %v110
    %v576 = vpop.f32.mrf.mxu0
    %v577 = vadd.f32 %v529, %v576
    %578 = vmatmul.f32.gmra.mxu0 %v111
    %v579 = vpop.f32.mrf.mxu0
    %v580 = vadd.f32 %v529, %v579
    %581 = vdwg.mxu0
    %582 = vmatpush.msra.mxu0 %v524
    %583 = vmatpush.msra.mxu0 %v520
    %584 = vmatpush.msra.mxu0 %v516
    %585 = vmatpush.msra.mxu0 %v512
    %586 = vmatpush.msra.mxu0 %v508
    %587 = vmatpush.msra.mxu0 %v504
    %588 = vmatpush.msra.mxu0 %v500
    %589 = vmatpush.msra.mxu0 %v496
    %590 = vmatpush.msra.mxu0 %v492
    %591 = vmatpush.msra.mxu0 %v488
    %592 = vmatpush.msra.mxu0 %v484
    %593 = vmatpush.msra.mxu0 %v480
    %594 = vmatpush.msra.mxu0 %v476
    %595 = vmatpush.msra.mxu0 %v472
    %596 = vmatpush.msra.mxu0 %v468
    %597 = vmatpush.msra.mxu0 %v464
    %598 = vmatmul.f32.gmra.mxu0 %v110
    %v599 = vpop.f32.mrf.mxu0
    %v600 = vadd.f32 %v530, %v599
    %601 = vmatmul.f32.gmra.mxu0 %v111
    %v602 = vpop.f32.mrf.mxu0
    %v603 = vadd.f32 %v530, %v602
    %604 = vdwg.mxu0
    %605 = vmatpush.msra.mxu0 %v525
    %606 = vmatpush.msra.mxu0 %v521
    %607 = vmatpush.msra.mxu0 %v517
    %608 = vmatpush.msra.mxu0 %v513
    %609 = vmatpush.msra.mxu0 %v509
    %610 = vmatpush.msra.mxu0 %v505
    %611 = vmatpush.msra.mxu0 %v501
    %612 = vmatpush.msra.mxu0 %v497
    %613 = vmatpush.msra.mxu0 %v493
    %614 = vmatpush.msra.mxu0 %v489
    %615 = vmatpush.msra.mxu0 %v485
    %616 = vmatpush.msra.mxu0 %v481
    %617 = vmatpush.msra.mxu0 %v477
    %618 = vmatpush.msra.mxu0 %v473
    %619 = vmatpush.msra.mxu0 %v469
    %620 = vmatpush.msra.mxu0 %v465
    %621 = vmatmul.f32.gmra.mxu0 %v110
    %v622 = vpop.f32.mrf.mxu0
    %v623 = vadd.f32 %v531, %v622
    %624 = vmatmul.f32.gmra.mxu0 %v111
    %v625 = vpop.f32.mrf.mxu0
    %v626 = vadd.f32 %v531, %v625
    %627 = vdwg.mxu0
    %628 = vst [vmem:[#allocation4 + $0x80] sm:$0xff] %v554
    %629 = vst [vmem:[#allocation4 + $0x88] sm:$0xff] %v577
    %630 = vst [vmem:[#allocation4 + $0x90] sm:$0xff] %v600
    %631 = vst [vmem:[#allocation4 + $0x98] sm:$0xff] %v623
    %632 = vst [vmem:[#allocation4 + $0xa0] sm:$0xff] %v557
    %633 = vst [vmem:[#allocation4 + $0xa8] sm:$0xff] %v580
    %634 = vst [vmem:[#allocation4 + $0xb0] sm:$0xff] %v603
    %635 = vst [vmem:[#allocation4 + $0xb8] sm:$0xff] %v626
    %v636 = vld [vmem:[#allocation8] sm:$0xff]
    %v637 = vld [vmem:[#allocation8 + $0x8] sm:$0xff]
    %v638 = vld [vmem:[#allocation8 + $0x10] sm:$0xff]
    %v639 = vld [vmem:[#allocation8 + $0x18] sm:$0xff]
    %v640 = vld [vmem:[#allocation8 + $0x20] sm:$0xff]
    %v641 = vld [vmem:[#allocation8 + $0x28] sm:$0xff]
    %v642 = vld [vmem:[#allocation8 + $0x30] sm:$0xff]
    %v643 = vld [vmem:[#allocation8 + $0x38] sm:$0xff]
    %v644 = vld [vmem:[#allocation8 + $0x40] sm:$0xff]
    %v645 = vld [vmem:[#allocation8 + $0x48] sm:$0xff]
    %v646 = vld [vmem:[#allocation8 + $0x50] sm:$0xff]
    %v647 = vld [vmem:[#allocation8 + $0x58] sm:$0xff]
    %v648 = vld [vmem:[#allocation8 + $0x60] sm:$0xff]
    %v649 = vld [vmem:[#allocation8 + $0x68] sm:$0xff]
    %v650 = vld [vmem:[#allocation8 + $0x70] sm:$0xff]
    %v651 = vld [vmem:[#allocation8 + $0x78] sm:$0xff]
    %v652 = vld [vmem:[#allocation8 + $0x80] sm:$0xff]
    %v653 = vld [vmem:[#allocation8 + $0x88] sm:$0xff]
    %v654 = vld [vmem:[#allocation8 + $0x90] sm:$0xff]
    %v655 = vld [vmem:[#allocation8 + $0x98] sm:$0xff]
    %v656 = vld [vmem:[#allocation8 + $0xa0] sm:$0xff]
    %v657 = vld [vmem:[#allocation8 + $0xa8] sm:$0xff]
    %v658 = vld [vmem:[#allocation8 + $0xb0] sm:$0xff]
    %v659 = vld [vmem:[#allocation8 + $0xb8] sm:$0xff]
    %v660 = vld [vmem:[#allocation8 + $0xc0] sm:$0xff]
    %v661 = vld [vmem:[#allocation8 + $0xc8] sm:$0xff]
    %v662 = vld [vmem:[#allocation8 + $0xd0] sm:$0xff]
    %v663 = vld [vmem:[#allocation8 + $0xd8] sm:$0xff]
    %v664 = vld [vmem:[#allocation8 + $0xe0] sm:$0xff]
    %v665 = vld [vmem:[#allocation8 + $0xe8] sm:$0xff]
    %v666 = vld [vmem:[#allocation8 + $0xf0] sm:$0xff]
    %v667 = vld [vmem:[#allocation8 + $0xf8] sm:$0xff]
    %v668 = vld [vmem:[#allocation8 + $0x100] sm:$0xff]
    %v669 = vld [vmem:[#allocation8 + $0x108] sm:$0xff]
    %v670 = vld [vmem:[#allocation8 + $0x110] sm:$0xff]
    %v671 = vld [vmem:[#allocation8 + $0x118] sm:$0xff]
    %v672 = vld [vmem:[#allocation8 + $0x120] sm:$0xff]
    %v673 = vld [vmem:[#allocation8 + $0x128] sm:$0xff]
    %v674 = vld [vmem:[#allocation8 + $0x130] sm:$0xff]
    %v675 = vld [vmem:[#allocation8 + $0x138] sm:$0xff]
    %v676 = vld [vmem:[#allocation8 + $0x140] sm:$0xff]
    %v677 = vld [vmem:[#allocation8 + $0x148] sm:$0xff]
    %v678 = vld [vmem:[#allocation8 + $0x150] sm:$0xff]
    %v679 = vld [vmem:[#allocation8 + $0x158] sm:$0xff]
    %v680 = vld [vmem:[#allocation8 + $0x160] sm:$0xff]
    %v681 = vld [vmem:[#allocation8 + $0x168] sm:$0xff]
    %v682 = vld [vmem:[#allocation8 + $0x170] sm:$0xff]
    %v683 = vld [vmem:[#allocation8 + $0x178] sm:$0xff]
    %v684 = vld [vmem:[#allocation8 + $0x180] sm:$0xff]
    %v685 = vld [vmem:[#allocation8 + $0x188] sm:$0xff]
    %v686 = vld [vmem:[#allocation8 + $0x190] sm:$0xff]
    %v687 = vld [vmem:[#allocation8 + $0x198] sm:$0xff]
    %v688 = vld [vmem:[#allocation8 + $0x1a0] sm:$0xff]
    %v689 = vld [vmem:[#allocation8 + $0x1a8] sm:$0xff]
    %v690 = vld [vmem:[#allocation8 + $0x1b0] sm:$0xff]
    %v691 = vld [vmem:[#allocation8 + $0x1b8] sm:$0xff]
    %v692 = vld [vmem:[#allocation8 + $0x1c0] sm:$0xff]
    %v693 = vld [vmem:[#allocation8 + $0x1c8] sm:$0xff]
    %v694 = vld [vmem:[#allocation8 + $0x1d0] sm:$0xff]
    %v695 = vld [vmem:[#allocation8 + $0x1d8] sm:$0xff]
    %v696 = vld [vmem:[#allocation8 + $0x1e0] sm:$0xff]
    %v697 = vld [vmem:[#allocation8 + $0x1e8] sm:$0xff]
    %v698 = vld [vmem:[#allocation8 + $0x1f0] sm:$0xff]
    %v699 = vld [vmem:[#allocation8 + $0x1f8] sm:$0xff]
    %v700 = vld [vmem:[#allocation11] sm:$0xf]
    %v702 = vperm.slane %v700, 0
    %v703 = vperm.slane %v700, 1
    %v704 = vperm.slane %v700, 2
    %v705 = vperm.slane %v700, 3
    %710 = vmatpush.msra.mxu0 %v696
    %711 = vmatpush.msra.mxu0 %v692
    %712 = vmatpush.msra.mxu0 %v688
    %713 = vmatpush.msra.mxu0 %v684
    %714 = vmatpush.msra.mxu0 %v680
    %715 = vmatpush.msra.mxu0 %v676
    %716 = vmatpush.msra.mxu0 %v672
    %717 = vmatpush.msra.mxu0 %v668
    %718 = vmatpush.msra.mxu0 %v664
    %719 = vmatpush.msra.mxu0 %v660
    %720 = vmatpush.msra.mxu0 %v656
    %721 = vmatpush.msra.mxu0 %v652
    %722 = vmatpush.msra.mxu0 %v648
    %723 = vmatpush.msra.mxu0 %v644
    %724 = vmatpush.msra.mxu0 %v640
    %725 = vmatpush.msra.mxu0 %v636
    %726 = vmatmul.f32.gmra.mxu0 %v112
    %v727 = vpop.f32.mrf.mxu0
    %v728 = vadd.f32 %v702, %v727
    %729 = vmatmul.f32.gmra.mxu0 %v113
    %v730 = vpop.f32.mrf.mxu0
    %v731 = vadd.f32 %v702, %v730
    %732 = vdwg.mxu0
    %733 = vmatpush.msra.mxu0 %v697
    %734 = vmatpush.msra.mxu0 %v693
    %735 = vmatpush.msra.mxu0 %v689
    %736 = vmatpush.msra.mxu0 %v685
    %737 = vmatpush.msra.mxu0 %v681
    %738 = vmatpush.msra.mxu0 %v677
    %739 = vmatpush.msra.mxu0 %v673
    %740 = vmatpush.msra.mxu0 %v669
    %741 = vmatpush.msra.mxu0 %v665
    %742 = vmatpush.msra.mxu0 %v661
    %743 = vmatpush.msra.mxu0 %v657
    %744 = vmatpush.msra.mxu0 %v653
    %745 = vmatpush.msra.mxu0 %v649
    %746 = vmatpush.msra.mxu0 %v645
    %747 = vmatpush.msra.mxu0 %v641
    %748 = vmatpush.msra.mxu0 %v637
    %749 = vmatmul.f32.gmra.mxu0 %v112
    %v750 = vpop.f32.mrf.mxu0
    %v751 = vadd.f32 %v703, %v750
    %752 = vmatmul.f32.gmra.mxu0 %v113
    %v753 = vpop.f32.mrf.mxu0
    %v754 = vadd.f32 %v703, %v753
    %755 = vdwg.mxu0
    %756 = vmatpush.msra.mxu0 %v698
    %757 = vmatpush.msra.mxu0 %v694
    %758 = vmatpush.msra.mxu0 %v690
    %759 = vmatpush.msra.mxu0 %v686
    %760 = vmatpush.msra.mxu0 %v682
    %761 = vmatpush.msra.mxu0 %v678
    %762 = vmatpush.msra.mxu0 %v674
    %763 = vmatpush.msra.mxu0 %v670
    %764 = vmatpush.msra.mxu0 %v666
    %765 = vmatpush.msra.mxu0 %v662
    %766 = vmatpush.msra.mxu0 %v658
    %767 = vmatpush.msra.mxu0 %v654
    %768 = vmatpush.msra.mxu0 %v650
    %769 = vmatpush.msra.mxu0 %v646
    %770 = vmatpush.msra.mxu0 %v642
    %771 = vmatpush.msra.mxu0 %v638
    %772 = vmatmul.f32.gmra.mxu0 %v112
    %v773 = vpop.f32.mrf.mxu0
    %v774 = vadd.f32 %v704, %v773
    %775 = vmatmul.f32.gmra.mxu0 %v113
    %v776 = vpop.f32.mrf.mxu0
    %v777 = vadd.f32 %v704, %v776
    %778 = vdwg.mxu0
    %779 = vmatpush.msra.mxu0 %v699
    %780 = vmatpush.msra.mxu0 %v695
    %781 = vmatpush.msra.mxu0 %v691
    %782 = vmatpush.msra.mxu0 %v687
    %783 = vmatpush.msra.mxu0 %v683
    %784 = vmatpush.msra.mxu0 %v679
    %785 = vmatpush.msra.mxu0 %v675
    %786 = vmatpush.msra.mxu0 %v671
    %787 = vmatpush.msra.mxu0 %v667
    %788 = vmatpush.msra.mxu0 %v663
    %789 = vmatpush.msra.mxu0 %v659
    %790 = vmatpush.msra.mxu0 %v655
    %791 = vmatpush.msra.mxu0 %v651
    %792 = vmatpush.msra.mxu0 %v647
    %793 = vmatpush.msra.mxu0 %v643
    %794 = vmatpush.msra.mxu0 %v639
    %795 = vmatmul.f32.gmra.mxu0 %v112
    %v796 = vpop.f32.mrf.mxu0
    %v797 = vadd.f32 %v705, %v796
    %798 = vmatmul.f32.gmra.mxu0 %v113
    %v799 = vpop.f32.mrf.mxu0
    %v800 = vadd.f32 %v705, %v799
    %801 = vdwg.mxu0
    %802 = vst [vmem:[#allocation4 + $0xc0] sm:$0xff] %v728
    %803 = vst [vmem:[#allocation4 + $0xc8] sm:$0xff] %v751
    %804 = vst [vmem:[#allocation4 + $0xd0] sm:$0xff] %v774
    %805 = vst [vmem:[#allocation4 + $0xd8] sm:$0xff] %v797
    %806 = vst [vmem:[#allocation4 + $0xe0] sm:$0xff] %v731
    %807 = vst [vmem:[#allocation4 + $0xe8] sm:$0xff] %v754
    %808 = vst [vmem:[#allocation4 + $0xf0] sm:$0xff] %v777
    %809 = vst [vmem:[#allocation4 + $0xf8] sm:$0xff] %v800
    %v810 = vld [vmem:[#allocation2] sm:$0xff]
    %v811 = vld [vmem:[#allocation3] sm:$0xff]
    %s812 = smul.u32 0, 4
    %s813 = smul.addr %s812, 8
    %s814 = scalar_lea.vmem [#allocation4], %s813
    %v815 = vld [vmem:[%s814] sm:$0xff]
    %v816 = vld [vmem:[%s814 + $0x8] sm:$0xff]
    %v817 = vld [vmem:[%s814 + $0x10] sm:$0xff]
    %v818 = vld [vmem:[%s814 + $0x18] sm:$0xff]
    %v819 = vld [vmem:[#allocation10] sm:$0xff]
    %v820 = vld [vmem:[#allocation10 + $0x20] sm:$0xff]
    %v821 = vld [vmem:[#allocation10 + $0x40] sm:$0xff]
    %v822 = vld [vmem:[#allocation10 + $0x60] sm:$0xff]
    %v823 = vld [vmem:[#allocation10 + $0x80] sm:$0xff]
    %v824 = vld [vmem:[#allocation10 + $0xa0] sm:$0xff]
    %v825 = vld [vmem:[#allocation10 + $0xc0] sm:$0xff]
    %v826 = vld [vmem:[#allocation10 + $0xe0] sm:$0xff]
    %v827 = vld [vmem:[#allocation10 + $0x100] sm:$0xff]
    %v828 = vld [vmem:[#allocation10 + $0x120] sm:$0xff]
    %v829 = vld [vmem:[#allocation10 + $0x140] sm:$0xff]
    %v830 = vld [vmem:[#allocation10 + $0x160] sm:$0xff]
    %v831 = vld [vmem:[#allocation10 + $0x180] sm:$0xff]
    %v832 = vld [vmem:[#allocation10 + $0x1a0] sm:$0xff]
    %v833 = vld [vmem:[#allocation10 + $0x1c0] sm:$0xff]
    %v834 = vld [vmem:[#allocation10 + $0x1e0] sm:$0xff]
    %835 = vmatpush.msra.mxu0 %v834
    %836 = vmatpush.msra.mxu0 %v833
    %837 = vmatpush.msra.mxu0 %v832
    %838 = vmatpush.msra.mxu0 %v831
    %839 = vmatpush.msra.mxu0 %v830
    %840 = vmatpush.msra.mxu0 %v829
    %841 = vmatpush.msra.mxu0 %v828
    %842 = vmatpush.msra.mxu0 %v827
    %843 = vmatpush.msra.mxu0 %v826
    %844 = vmatpush.msra.mxu0 %v825
    %845 = vmatpush.msra.mxu0 %v824
    %846 = vmatpush.msra.mxu0 %v823
    %847 = vmatpush.msra.mxu0 %v822
    %848 = vmatpush.msra.mxu0 %v821
    %849 = vmatpush.msra.mxu0 %v820
    %850 = vmatpush.msra.mxu0 %v819
    %851 = vmatmul.f32.gmra.mxu0 %v810
    %v852 = vpop.f32.mrf.mxu0
    %v853 = vadd.f32 0.0, %v852
    %854 = vdwg.mxu0
    %v855 = vadd.f32 %v815, %v853
    %v856 = vxor.u32 %v855, 2147483648
    %v857 = vmul.f32 %v856, 1.442695
    %v858 = vpow.pop %v857
    %v859 = vadd.f32 %v858, 1.0
    %v860 = vrcp.pop %v859
    %v861 = vmul.f32 %v859, %v860
    %v862 = vsub.f32 1.0, %v861
    %v863 = vmul.f32 %v860, %v862
    %v864 = vadd.f32 %v860, %v863
    %vm865 = vweird.f32 %v859
    %vm866 = vweird.f32 %v860
    %vm867 = vmor %vm865, %vm866
    %v868 = vsel %vm867, %v860, %v864
    %v869 = vand.u32 2147483647, %v859
    %vm870 = vcmp.eq.f32.partialorder %v869, 8.507059e+37
    %v871 = vand.u32 %v859, 2147483648
    %v872 = vor.u32 1.1754944e-38, %v871
    %v873 = vsel %vm870, %v872, %v868
    %v874 = vmul.f32 1.0, %v873
    %v875 = vld [vmem:[#allocation10 + $0x8] sm:$0xff]
    %v876 = vld [vmem:[#allocation10 + $0x28] sm:$0xff]
    %v877 = vld [vmem:[#allocation10 + $0x48] sm:$0xff]
    %v878 = vld [vmem:[#allocation10 + $0x68] sm:$0xff]
    %v879 = vld [vmem:[#allocation10 + $0x88] sm:$0xff]
    %v880 = vld [vmem:[#allocation10 + $0xa8] sm:$0xff]
    %v881 = vld [vmem:[#allocation10 + $0xc8] sm:$0xff]
    %v882 = vld [vmem:[#allocation10 + $0xe8] sm:$0xff]
    %v883 = vld [vmem:[#allocation10 + $0x108] sm:$0xff]
    %v884 = vld [vmem:[#allocation10 + $0x128] sm:$0xff]
    %v885 = vld [vmem:[#allocation10 + $0x148] sm:$0xff]
    %v886 = vld [vmem:[#allocation10 + $0x168] sm:$0xff]
    %v887 = vld [vmem:[#allocation10 + $0x188] sm:$0xff]
    %v888 = vld [vmem:[#allocation10 + $0x1a8] sm:$0xff]
    %v889 = vld [vmem:[#allocation10 + $0x1c8] sm:$0xff]
    %v890 = vld [vmem:[#allocation10 + $0x1e8] sm:$0xff]
    %891 = vmatpush.msra.mxu0 %v890
    %892 = vmatpush.msra.mxu0 %v889
    %893 = vmatpush.msra.mxu0 %v888
    %894 = vmatpush.msra.mxu0 %v887
    %895 = vmatpush.msra.mxu0 %v886
    %896 = vmatpush.msra.mxu0 %v885
    %897 = vmatpush.msra.mxu0 %v884
    %898 = vmatpush.msra.mxu0 %v883
    %899 = vmatpush.msra.mxu0 %v882
    %900 = vmatpush.msra.mxu0 %v881
    %901 = vmatpush.msra.mxu0 %v880
    %902 = vmatpush.msra.mxu0 %v879
    %903 = vmatpush.msra.mxu0 %v878
    %904 = vmatpush.msra.mxu0 %v877
    %905 = vmatpush.msra.mxu0 %v876
    %906 = vmatpush.msra.mxu0 %v875
    %907 = vmatmul.f32.gmra.mxu0 %v810
    %v908 = vpop.f32.mrf.mxu0
    %v909 = vadd.f32 0.0, %v908
    %910 = vdwg.mxu0
    %v911 = vadd.f32 %v816, %v909
    %v912 = vxor.u32 %v911, 2147483648
    %v913 = vmul.f32 %v912, 1.442695
    %v914 = vpow.pop %v913
    %v915 = vadd.f32 %v914, 1.0
    %v916 = vrcp.pop %v915
    %v917 = vmul.f32 %v915, %v916
    %v918 = vsub.f32 1.0, %v917
    %v919 = vmul.f32 %v916, %v918
    %v920 = vadd.f32 %v916, %v919
    %vm921 = vweird.f32 %v915
    %vm922 = vweird.f32 %v916
    %vm923 = vmor %vm921, %vm922
    %v924 = vsel %vm923, %v916, %v920
    %v925 = vand.u32 2147483647, %v915
    %vm926 = vcmp.eq.f32.partialorder %v925, 8.507059e+37
    %v927 = vand.u32 %v915, 2147483648
    %v928 = vor.u32 1.1754944e-38, %v927
    %v929 = vsel %vm926, %v928, %v924
    %v930 = vmul.f32 1.0, %v929
    %v931 = vld [vmem:[#allocation10 + $0x10] sm:$0xff]
    %v932 = vld [vmem:[#allocation10 + $0x30] sm:$0xff]
    %v933 = vld [vmem:[#allocation10 + $0x50] sm:$0xff]
    %v934 = vld [vmem:[#allocation10 + $0x70] sm:$0xff]
    %v935 = vld [vmem:[#allocation10 + $0x90] sm:$0xff]
    %v936 = vld [vmem:[#allocation10 + $0xb0] sm:$0xff]
    %v937 = vld [vmem:[#allocation10 + $0xd0] sm:$0xff]
    %v938 = vld [vmem:[#allocation10 + $0xf0] sm:$0xff]
    %v939 = vld [vmem:[#allocation10 + $0x110] sm:$0xff]
    %v940 = vld [vmem:[#allocation10 + $0x130] sm:$0xff]
    %v941 = vld [vmem:[#allocation10 + $0x150] sm:$0xff]
    %v942 = vld [vmem:[#allocation10 + $0x170] sm:$0xff]
    %v943 = vld [vmem:[#allocation10 + $0x190] sm:$0xff]
    %v944 = vld [vmem:[#allocation10 + $0x1b0] sm:$0xff]
    %v945 = vld [vmem:[#allocation10 + $0x1d0] sm:$0xff]
    %v946 = vld [vmem:[#allocation10 + $0x1f0] sm:$0xff]
    %947 = vmatpush.msra.mxu0 %v946
    %948 = vmatpush.msra.mxu0 %v945
    %949 = vmatpush.msra.mxu0 %v944
    %950 = vmatpush.msra.mxu0 %v943
    %951 = vmatpush.msra.mxu0 %v942
    %952 = vmatpush.msra.mxu0 %v941
    %953 = vmatpush.msra.mxu0 %v940
    %954 = vmatpush.msra.mxu0 %v939
    %955 = vmatpush.msra.mxu0 %v938
    %956 = vmatpush.msra.mxu0 %v937
    %957 = vmatpush.msra.mxu0 %v936
    %958 = vmatpush.msra.mxu0 %v935
    %959 = vmatpush.msra.mxu0 %v934
    %960 = vmatpush.msra.mxu0 %v933
    %961 = vmatpush.msra.mxu0 %v932
    %962 = vmatpush.msra.mxu0 %v931
    %963 = vmatmul.f32.gmra.mxu0 %v810
    %v964 = vpop.f32.mrf.mxu0
    %v965 = vadd.f32 0.0, %v964
    %966 = vdwg.mxu0
    %v967 = vadd.f32 %v817, %v965
    %v968 = vtanh.pop %v967
    %v969 = vmul.f32 %v930, %v811
    %v970 = vmul.f32 %v874, %v968
    %v971 = vadd.f32 %v969, %v970
    %v972 = vld [vmem:[#allocation10 + $0x18] sm:$0xff]
    %v973 = vld [vmem:[#allocation10 + $0x38] sm:$0xff]
    %v974 = vld [vmem:[#allocation10 + $0x58] sm:$0xff]
    %v975 = vld [vmem:[#allocation10 + $0x78] sm:$0xff]
    %v976 = vld [vmem:[#allocation10 + $0x98] sm:$0xff]
    %v977 = vld [vmem:[#allocation10 + $0xb8] sm:$0xff]
    %v978 = vld [vmem:[#allocation10 + $0xd8] sm:$0xff]
    %v979 = vld [vmem:[#allocation10 + $0xf8] sm:$0xff]
    %v980 = vld [vmem:[#allocation10 + $0x118] sm:$0xff]
    %v981 = vld [vmem:[#allocation10 + $0x138] sm:$0xff]
    %v982 = vld [vmem:[#allocation10 + $0x158] sm:$0xff]
    %v983 = vld [vmem:[#allocation10 + $0x178] sm:$0xff]
    %v984 = vld [vmem:[#allocation10 + $0x198] sm:$0xff]
    %v985 = vld [vmem:[#allocation10 + $0x1b8] sm:$0xff]
    %v986 = vld [vmem:[#allocation10 + $0x1d8] sm:$0xff]
    %v987 = vld [vmem:[#allocation10 + $0x1f8] sm:$0xff]
    %988 = vmatpush.msra.mxu0 %v987
    %989 = vmatpush.msra.mxu0 %v986
    %990 = vmatpush.msra.mxu0 %v985
    %991 = vmatpush.msra.mxu0 %v984
    %992 = vmatpush.msra.mxu0 %v983
    %993 = vmatpush.msra.mxu0 %v982
    %994 = vmatpush.msra.mxu0 %v981
    %995 = vmatpush.msra.mxu0 %v980
    %996 = vmatpush.msra.mxu0 %v979
    %997 = vmatpush.msra.mxu0 %v978
    %998 = vmatpush.msra.mxu0 %v977
    %999 = vmatpush.msra.mxu0 %v976
    %1000 = vmatpush.msra.mxu0 %v975
    %1001 = vmatpush.msra.mxu0 %v974
    %1002 = vmatpush.msra.mxu0 %v973
    %1003 = vmatpush.msra.mxu0 %v972
    %1004 = vmatmul.f32.gmra.mxu0 %v810
    %v1005 = vpop.f32.mrf.mxu0
    %v1006 = vadd.f32 0.0, %v1005
    %1007 = vdwg.mxu0
    %v1008 = vadd.f32 %v818, %v1006
    %v1009 = vxor.u32 %v1008, 2147483648
    %v1010 = vmul.f32 %v1009, 1.442695
    %v1011 = vpow.pop %v1010
    %v1012 = vadd.f32 %v1011, 1.0
    %v1013 = vrcp.pop %v1012
    %v1014 = vmul.f32 %v1012, %v1013
    %v1015 = vsub.f32 1.0, %v1014
    %v1016 = vmul.f32 %v1013, %v1015
    %v1017 = vadd.f32 %v1013, %v1016
    %vm1018 = vweird.f32 %v1012
    %vm1019 = vweird.f32 %v1013
    %vm1020 = vmor %vm1018, %vm1019
    %v1021 = vsel %vm1020, %v1013, %v1017
    %v1022 = vand.u32 2147483647, %v1012
    %vm1023 = vcmp.eq.f32.partialorder %v1022, 8.507059e+37
    %v1024 = vand.u32 %v1012, 2147483648
    %v1025 = vor.u32 1.1754944e-38, %v1024
    %v1026 = vsel %vm1023, %v1025, %v1021
    %v1027 = vmul.f32 1.0, %v1026
    %v1028 = vtanh.pop %v971
    %v1029 = vmul.f32 %v1027, %v1028
    %s1030 = smul.u32 1, 4
    %s1031 = smul.addr %s1030, 8
    %s1032 = scalar_lea.vmem [#allocation4], %s1031
    %v1033 = vld [vmem:[%s1032] sm:$0xff]
    %v1034 = vld [vmem:[%s1032 + $0x8] sm:$0xff]
    %v1035 = vld [vmem:[%s1032 + $0x10] sm:$0xff]
    %v1036 = vld [vmem:[%s1032 + $0x18] sm:$0xff]
    %1037 = vmatpush.msra.mxu0 %v834
    %1038 = vmatpush.msra.mxu0 %v833
    %1039 = vmatpush.msra.mxu0 %v832
    %1040 = vmatpush.msra.mxu0 %v831
    %1041 = vmatpush.msra.mxu0 %v830
    %1042 = vmatpush.msra.mxu0 %v829
    %1043 = vmatpush.msra.mxu0 %v828
    %1044 = vmatpush.msra.mxu0 %v827
    %1045 = vmatpush.msra.mxu0 %v826
    %1046 = vmatpush.msra.mxu0 %v825
    %1047 = vmatpush.msra.mxu0 %v824
    %1048 = vmatpush.msra.mxu0 %v823
    %1049 = vmatpush.msra.mxu0 %v822
    %1050 = vmatpush.msra.mxu0 %v821
    %1051 = vmatpush.msra.mxu0 %v820
    %1052 = vmatpush.msra.mxu0 %v819
    %1053 = vmatmul.f32.gmra.mxu0 %v1029
    %v1054 = vpop.f32.mrf.mxu0
    %v1055 = vadd.f32 0.0, %v1054
    %1056 = vdwg.mxu0
    %v1057 = vadd.f32 %v1033, %v1055
    %v1058 = vxor.u32 %v1057, 2147483648
    %v1059 = vmul.f32 %v1058, 1.442695
    %v1060 = vpow.pop %v1059
    %v1061 = vadd.f32 %v1060, 1.0
    %v1062 = vrcp.pop %v1061
    %v1063 = vmul.f32 %v1061, %v1062
    %v1064 = vsub.f32 1.0, %v1063
    %v1065 = vmul.f32 %v1062, %v1064
    %v1066 = vadd.f32 %v1062, %v1065
    %vm1067 = vweird.f32 %v1061
    %vm1068 = vweird.f32 %v1062
    %vm1069 = vmor %vm1067, %vm1068
    %v1070 = vsel %vm1069, %v1062, %v1066
    %v1071 = vand.u32 2147483647, %v1061
    %vm1072 = vcmp.eq.f32.partialorder %v1071, 8.507059e+37
    %v1073 = vand.u32 %v1061, 2147483648
    %v1074 = vor.u32 1.1754944e-38, %v1073
    %v1075 = vsel %vm1072, %v1074, %v1070
    %v1076 = vmul.f32 1.0, %v1075
    %1077 = vmatpush.msra.mxu0 %v890
    %1078 = vmatpush.msra.mxu0 %v889
    %1079 = vmatpush.msra.mxu0 %v888
    %1080 = vmatpush.msra.mxu0 %v887
    %1081 = vmatpush.msra.mxu0 %v886
    %1082 = vmatpush.msra.mxu0 %v885
    %1083 = vmatpush.msra.mxu0 %v884
    %1084 = vmatpush.msra.mxu0 %v883
    %1085 = vmatpush.msra.mxu0 %v882
    %1086 = vmatpush.msra.mxu0 %v881
    %1087 = vmatpush.msra.mxu0 %v880
    %1088 = vmatpush.msra.mxu0 %v879
    %1089 = vmatpush.msra.mxu0 %v878
    %1090 = vmatpush.msra.mxu0 %v877
    %1091 = vmatpush.msra.mxu0 %v876
    %1092 = vmatpush.msra.mxu0 %v875
    %1093 = vmatmul.f32.gmra.mxu0 %v1029
    %v1094 = vpop.f32.mrf.mxu0
    %v1095 = vadd.f32 0.0, %v1094
    %1096 = vdwg.mxu0
    %v1097 = vadd.f32 %v1034, %v1095
    %v1098 = vxor.u32 %v1097, 2147483648
    %v1099 = vmul.f32 %v1098, 1.442695
    %v1100 = vpow.pop %v1099
    %v1101 = vadd.f32 %v1100, 1.0
    %v1102 = vrcp.pop %v1101
    %v1103 = vmul.f32 %v1101, %v1102
    %v1104 = vsub.f32 1.0, %v1103
    %v1105 = vmul.f32 %v1102, %v1104
    %v1106 = vadd.f32 %v1102, %v1105
    %vm1107 = vweird.f32 %v1101
    %vm1108 = vweird.f32 %v1102
    %vm1109 = vmor %vm1107, %vm1108
    %v1110 = vsel %vm1109, %v1102, %v1106
    %v1111 = vand.u32 2147483647, %v1101
    %vm1112 = vcmp.eq.f32.partialorder %v1111, 8.507059e+37
    %v1113 = vand.u32 %v1101, 2147483648
    %v1114 = vor.u32 1.1754944e-38, %v1113
    %v1115 = vsel %vm1112, %v1114, %v1110
    %v1116 = vmul.f32 1.0, %v1115
    %1117 = vmatpush.msra.mxu0 %v946
    %1118 = vmatpush.msra.mxu0 %v945
    %1119 = vmatpush.msra.mxu0 %v944
    %1120 = vmatpush.msra.mxu0 %v943
    %1121 = vmatpush.msra.mxu0 %v942
    %1122 = vmatpush.msra.mxu0 %v941
    %1123 = vmatpush.msra.mxu0 %v940
    %1124 = vmatpush.msra.mxu0 %v939
    %1125 = vmatpush.msra.mxu0 %v938
    %1126 = vmatpush.msra.mxu0 %v937
    %1127 = vmatpush.msra.mxu0 %v936
    %1128 = vmatpush.msra.mxu0 %v935
    %1129 = vmatpush.msra.mxu0 %v934
    %1130 = vmatpush.msra.mxu0 %v933
    %1131 = vmatpush.msra.mxu0 %v932
    %1132 = vmatpush.msra.mxu0 %v931
    %1133 = vmatmul.f32.gmra.mxu0 %v1029
    %v1134 = vpop.f32.mrf.mxu0
    %v1135 = vadd.f32 0.0, %v1134
    %1136 = vdwg.mxu0
    %v1137 = vadd.f32 %v1035, %v1135
    %v1138 = vtanh.pop %v1137
    %v1139 = vmul.f32 %v1116, %v971
    %v1140 = vmul.f32 %v1076, %v1138
    %v1141 = vadd.f32 %v1139, %v1140
    %1142 = vmatpush.msra.mxu0 %v987
    %1143 = vmatpush.msra.mxu0 %v986
    %1144 = vmatpush.msra.mxu0 %v985
    %1145 = vmatpush.msra.mxu0 %v984
    %1146 = vmatpush.msra.mxu0 %v983
    %1147 = vmatpush.msra.mxu0 %v982
    %1148 = vmatpush.msra.mxu0 %v981
    %1149 = vmatpush.msra.mxu0 %v980
    %1150 = vmatpush.msra.mxu0 %v979
    %1151 = vmatpush.msra.mxu0 %v978
    %1152 = vmatpush.msra.mxu0 %v977
    %1153 = vmatpush.msra.mxu0 %v976
    %1154 = vmatpush.msra.mxu0 %v975
    %1155 = vmatpush.msra.mxu0 %v974
    %1156 = vmatpush.msra.mxu0 %v973
    %1157 = vmatpush.msra.mxu0 %v972
    %1158 = vmatmul.f32.gmra.mxu0 %v1029
    %v1159 = vpop.f32.mrf.mxu0
    %v1160 = vadd.f32 0.0, %v1159
    %1161 = vdwg.mxu0
    %v1162 = vadd.f32 %v1036, %v1160
    %v1163 = vxor.u32 %v1162, 2147483648
    %v1164 = vmul.f32 %v1163, 1.442695
    %v1165 = vpow.pop %v1164
    %v1166 = vadd.f32 %v1165, 1.0
    %v1167 = vrcp.pop %v1166
    %v1168 = vmul.f32 %v1166, %v1167
    %v1169 = vsub.f32 1.0, %v1168
    %v1170 = vmul.f32 %v1167, %v1169
    %v1171 = vadd.f32 %v1167, %v1170
    %vm1172 = vweird.f32 %v1166
    %vm1173 = vweird.f32 %v1167
    %vm1174 = vmor %vm1172, %vm1173
    %v1175 = vsel %vm1174, %v1167, %v1171
    %v1176 = vand.u32 2147483647, %v1166
    %vm1177 = vcmp.eq.f32.partialorder %v1176, 8.507059e+37
    %v1178 = vand.u32 %v1166, 2147483648
    %v1179 = vor.u32 1.1754944e-38, %v1178
    %v1180 = vsel %vm1177, %v1179, %v1175
    %v1181 = vmul.f32 1.0, %v1180
    %v1182 = vtanh.pop %v1141
    %v1183 = vmul.f32 %v1181, %v1182
    %s1184 = smul.u32 2, 4
    %s1185 = smul.addr %s1184, 8
    %s1186 = scalar_lea.vmem [#allocation4], %s1185
    %v1187 = vld [vmem:[%s1186] sm:$0xff]
    %v1188 = vld [vmem:[%s1186 + $0x8] sm:$0xff]
    %v1189 = vld [vmem:[%s1186 + $0x10] sm:$0xff]
    %v1190 = vld [vmem:[%s1186 + $0x18] sm:$0xff]
    %1191 = vmatpush.msra.mxu0 %v834
    %1192 = vmatpush.msra.mxu0 %v833
    %1193 = vmatpush.msra.mxu0 %v832
    %1194 = vmatpush.msra.mxu0 %v831
    %1195 = vmatpush.msra.mxu0 %v830
    %1196 = vmatpush.msra.mxu0 %v829
    %1197 = vmatpush.msra.mxu0 %v828
    %1198 = vmatpush.msra.mxu0 %v827
    %1199 = vmatpush.msra.mxu0 %v826
    %1200 = vmatpush.msra.mxu0 %v825
    %1201 = vmatpush.msra.mxu0 %v824
    %1202 = vmatpush.msra.mxu0 %v823
    %1203 = vmatpush.msra.mxu0 %v822
    %1204 = vmatpush.msra.mxu0 %v821
    %1205 = vmatpush.msra.mxu0 %v820
    %1206 = vmatpush.msra.mxu0 %v819
    %1207 = vmatmul.f32.gmra.mxu0 %v1183
    %v1208 = vpop.f32.mrf.mxu0
    %v1209 = vadd.f32 0.0, %v1208
    %1210 = vdwg.mxu0
    %v1211 = vadd.f32 %v1187, %v1209
    %v1212 = vxor.u32 %v1211, 2147483648
    %v1213 = vmul.f32 %v1212, 1.442695
    %v1214 = vpow.pop %v1213
    %v1215 = vadd.f32 %v1214, 1.0
    %v1216 = vrcp.pop %v1215
    %v1217 = vmul.f32 %v1215, %v1216
    %v1218 = vsub.f32 1.0, %v1217
    %v1219 = vmul.f32 %v1216, %v1218
    %v1220 = vadd.f32 %v1216, %v1219
    %vm1221 = vweird.f32 %v1215
    %vm1222 = vweird.f32 %v1216
    %vm1223 = vmor %vm1221, %vm1222
    %v1224 = vsel %vm1223, %v1216, %v1220
    %v1225 = vand.u32 2147483647, %v1215
    %vm1226 = vcmp.eq.f32.partialorder %v1225, 8.507059e+37
    %v1227 = vand.u32 %v1215, 2147483648
    %v1228 = vor.u32 1.1754944e-38, %v1227
    %v1229 = vsel %vm1226, %v1228, %v1224
    %v1230 = vmul.f32 1.0, %v1229
    %1231 = vmatpush.msra.mxu0 %v890
    %1232 = vmatpush.msra.mxu0 %v889
    %1233 = vmatpush.msra.mxu0 %v888
    %1234 = vmatpush.msra.mxu0 %v887
    %1235 = vmatpush.msra.mxu0 %v886
    %1236 = vmatpush.msra.mxu0 %v885
    %1237 = vmatpush.msra.mxu0 %v884
    %1238 = vmatpush.msra.mxu0 %v883
    %1239 = vmatpush.msra.mxu0 %v882
    %1240 = vmatpush.msra.mxu0 %v881
    %1241 = vmatpush.msra.mxu0 %v880
    %1242 = vmatpush.msra.mxu0 %v879
    %1243 = vmatpush.msra.mxu0 %v878
    %1244 = vmatpush.msra.mxu0 %v877
    %1245 = vmatpush.msra.mxu0 %v876
    %1246 = vmatpush.msra.mxu0 %v875
    %1247 = vmatmul.f32.gmra.mxu0 %v1183
    %v1248 = vpop.f32.mrf.mxu0
    %v1249 = vadd.f32 0.0, %v1248
    %1250 = vdwg.mxu0
    %v1251 = vadd.f32 %v1188, %v1249
    %v1252 = vxor.u32 %v1251, 2147483648
    %v1253 = vmul.f32 %v1252, 1.442695
    %v1254 = vpow.pop %v1253
    %v1255 = vadd.f32 %v1254, 1.0
    %v1256 = vrcp.pop %v1255
    %v1257 = vmul.f32 %v1255, %v1256
    %v1258 = vsub.f32 1.0, %v1257
    %v1259 = vmul.f32 %v1256, %v1258
    %v1260 = vadd.f32 %v1256, %v1259
    %vm1261 = vweird.f32 %v1255
    %vm1262 = vweird.f32 %v1256
    %vm1263 = vmor %vm1261, %vm1262
    %v1264 = vsel %vm1263, %v1256, %v1260
    %v1265 = vand.u32 2147483647, %v1255
    %vm1266 = vcmp.eq.f32.partialorder %v1265, 8.507059e+37
    %v1267 = vand.u32 %v1255, 2147483648
    %v1268 = vor.u32 1.1754944e-38, %v1267
    %v1269 = vsel %vm1266, %v1268, %v1264
    %v1270 = vmul.f32 1.0, %v1269
    %1271 = vmatpush.msra.mxu0 %v946
    %1272 = vmatpush.msra.mxu0 %v945
    %1273 = vmatpush.msra.mxu0 %v944
    %1274 = vmatpush.msra.mxu0 %v943
    %1275 = vmatpush.msra.mxu0 %v942
    %1276 = vmatpush.msra.mxu0 %v941
    %1277 = vmatpush.msra.mxu0 %v940
    %1278 = vmatpush.msra.mxu0 %v939
    %1279 = vmatpush.msra.mxu0 %v938
    %1280 = vmatpush.msra.mxu0 %v937
    %1281 = vmatpush.msra.mxu0 %v936
    %1282 = vmatpush.msra.mxu0 %v935
    %1283 = vmatpush.msra.mxu0 %v934
    %1284 = vmatpush.msra.mxu0 %v933
    %1285 = vmatpush.msra.mxu0 %v932
    %1286 = vmatpush.msra.mxu0 %v931
    %1287 = vmatmul.f32.gmra.mxu0 %v1183
    %v1288 = vpop.f32.mrf.mxu0
    %v1289 = vadd.f32 0.0, %v1288
    %1290 = vdwg.mxu0
    %v1291 = vadd.f32 %v1189, %v1289
    %v1292 = vtanh.pop %v1291
    %v1293 = vmul.f32 %v1270, %v1141
    %v1294 = vmul.f32 %v1230, %v1292
    %v1295 = vadd.f32 %v1293, %v1294
    %1296 = vmatpush.msra.mxu0 %v987
    %1297 = vmatpush.msra.mxu0 %v986
    %1298 = vmatpush.msra.mxu0 %v985
    %1299 = vmatpush.msra.mxu0 %v984
    %1300 = vmatpush.msra.mxu0 %v983
    %1301 = vmatpush.msra.mxu0 %v982
    %1302 = vmatpush.msra.mxu0 %v981
    %1303 = vmatpush.msra.mxu0 %v980
    %1304 = vmatpush.msra.mxu0 %v979
    %1305 = vmatpush.msra.mxu0 %v978
    %1306 = vmatpush.msra.mxu0 %v977
    %1307 = vmatpush.msra.mxu0 %v976
    %1308 = vmatpush.msra.mxu0 %v975
    %1309 = vmatpush.msra.mxu0 %v974
    %1310 = vmatpush.msra.mxu0 %v973
    %1311 = vmatpush.msra.mxu0 %v972
    %1312 = vmatmul.f32.gmra.mxu0 %v1183
    %v1313 = vpop.f32.mrf.mxu0
    %v1314 = vadd.f32 0.0, %v1313
    %1315 = vdwg.mxu0
    %v1316 = vadd.f32 %v1190, %v1314
    %v1317 = vxor.u32 %v1316, 2147483648
    %v1318 = vmul.f32 %v1317, 1.442695
    %v1319 = vpow.pop %v1318
    %v1320 = vadd.f32 %v1319, 1.0
    %v1321 = vrcp.pop %v1320
    %v1322 = vmul.f32 %v1320, %v1321
    %v1323 = vsub.f32 1.0, %v1322
    %v1324 = vmul.f32 %v1321, %v1323
    %v1325 = vadd.f32 %v1321, %v1324
    %vm1326 = vweird.f32 %v1320
    %vm1327 = vweird.f32 %v1321
    %vm1328 = vmor %vm1326, %vm1327
    %v1329 = vsel %vm1328, %v1321, %v1325
    %v1330 = vand.u32 2147483647, %v1320
    %vm1331 = vcmp.eq.f32.partialorder %v1330, 8.507059e+37
    %v1332 = vand.u32 %v1320, 2147483648
    %v1333 = vor.u32 1.1754944e-38, %v1332
    %v1334 = vsel %vm1331, %v1333, %v1329
    %v1335 = vmul.f32 1.0, %v1334
    %v1336 = vtanh.pop %v1295
    %v1337 = vmul.f32 %v1335, %v1336
    %s1338 = smul.u32 3, 4
    %s1339 = smul.addr %s1338, 8
    %s1340 = scalar_lea.vmem [#allocation4], %s1339
    %v1341 = vld [vmem:[%s1340] sm:$0xff]
    %v1342 = vld [vmem:[%s1340 + $0x8] sm:$0xff]
    %v1343 = vld [vmem:[%s1340 + $0x10] sm:$0xff]
    %v1344 = vld [vmem:[%s1340 + $0x18] sm:$0xff]
    %1345 = vmatpush.msra.mxu0 %v834
    %1346 = vmatpush.msra.mxu0 %v833
    %1347 = vmatpush.msra.mxu0 %v832
    %1348 = vmatpush.msra.mxu0 %v831
    %1349 = vmatpush.msra.mxu0 %v830
    %1350 = vmatpush.msra.mxu0 %v829
    %1351 = vmatpush.msra.mxu0 %v828
    %1352 = vmatpush.msra.mxu0 %v827
    %1353 = vmatpush.msra.mxu0 %v826
    %1354 = vmatpush.msra.mxu0 %v825
    %1355 = vmatpush.msra.mxu0 %v824
    %1356 = vmatpush.msra.mxu0 %v823
    %1357 = vmatpush.msra.mxu0 %v822
    %1358 = vmatpush.msra.mxu0 %v821
    %1359 = vmatpush.msra.mxu0 %v820
    %1360 = vmatpush.msra.mxu0 %v819
    %1361 = vmatmul.f32.gmra.mxu0 %v1337
    %v1362 = vpop.f32.mrf.mxu0
    %v1363 = vadd.f32 0.0, %v1362
    %1364 = vdwg.mxu0
    %v1365 = vadd.f32 %v1341, %v1363
    %v1366 = vxor.u32 %v1365, 2147483648
    %v1367 = vmul.f32 %v1366, 1.442695
    %v1368 = vpow.pop %v1367
    %v1369 = vadd.f32 %v1368, 1.0
    %v1370 = vrcp.pop %v1369
    %v1371 = vmul.f32 %v1369, %v1370
    %v1372 = vsub.f32 1.0, %v1371
    %v1373 = vmul.f32 %v1370, %v1372
    %v1374 = vadd.f32 %v1370, %v1373
    %vm1375 = vweird.f32 %v1369
    %vm1376 = vweird.f32 %v1370
    %vm1377 = vmor %vm1375, %vm1376
    %v1378 = vsel %vm1377, %v1370, %v1374
    %v1379 = vand.u32 2147483647, %v1369
    %vm1380 = vcmp.eq.f32.partialorder %v1379, 8.507059e+37
    %v1381 = vand.u32 %v1369, 2147483648
    %v1382 = vor.u32 1.1754944e-38, %v1381
    %v1383 = vsel %vm1380, %v1382, %v1378
    %v1384 = vmul.f32 1.0, %v1383
    %1385 = vmatpush.msra.mxu0 %v890
    %1386 = vmatpush.msra.mxu0 %v889
    %1387 = vmatpush.msra.mxu0 %v888
    %1388 = vmatpush.msra.mxu0 %v887
    %1389 = vmatpush.msra.mxu0 %v886
    %1390 = vmatpush.msra.mxu0 %v885
    %1391 = vmatpush.msra.mxu0 %v884
    %1392 = vmatpush.msra.mxu0 %v883
    %1393 = vmatpush.msra.mxu0 %v882
    %1394 = vmatpush.msra.mxu0 %v881
    %1395 = vmatpush.msra.mxu0 %v880
    %1396 = vmatpush.msra.mxu0 %v879
    %1397 = vmatpush.msra.mxu0 %v878
    %1398 = vmatpush.msra.mxu0 %v877
    %1399 = vmatpush.msra.mxu0 %v876
    %1400 = vmatpush.msra.mxu0 %v875
    %1401 = vmatmul.f32.gmra.mxu0 %v1337
    %v1402 = vpop.f32.mrf.mxu0
    %v1403 = vadd.f32 0.0, %v1402
    %1404 = vdwg.mxu0
    %v1405 = vadd.f32 %v1342, %v1403
    %v1406 = vxor.u32 %v1405, 2147483648
    %v1407 = vmul.f32 %v1406, 1.442695
    %v1408 = vpow.pop %v1407
    %v1409 = vadd.f32 %v1408, 1.0
    %v1410 = vrcp.pop %v1409
    %v1411 = vmul.f32 %v1409, %v1410
    %v1412 = vsub.f32 1.0, %v1411
    %v1413 = vmul.f32 %v1410, %v1412
    %v1414 = vadd.f32 %v1410, %v1413
    %vm1415 = vweird.f32 %v1409
    %vm1416 = vweird.f32 %v1410
    %vm1417 = vmor %vm1415, %vm1416
    %v1418 = vsel %vm1417, %v1410, %v1414
    %v1419 = vand.u32 2147483647, %v1409
    %vm1420 = vcmp.eq.f32.partialorder %v1419, 8.507059e+37
    %v1421 = vand.u32 %v1409, 2147483648
    %v1422 = vor.u32 1.1754944e-38, %v1421
    %v1423 = vsel %vm1420, %v1422, %v1418
    %v1424 = vmul.f32 1.0, %v1423
    %1425 = vmatpush.msra.mxu0 %v946
    %1426 = vmatpush.msra.mxu0 %v945
    %1427 = vmatpush.msra.mxu0 %v944
    %1428 = vmatpush.msra.mxu0 %v943
    %1429 = vmatpush.msra.mxu0 %v942
    %1430 = vmatpush.msra.mxu0 %v941
    %1431 = vmatpush.msra.mxu0 %v940
    %1432 = vmatpush.msra.mxu0 %v939
    %1433 = vmatpush.msra.mxu0 %v938
    %1434 = vmatpush.msra.mxu0 %v937
    %1435 = vmatpush.msra.mxu0 %v936
    %1436 = vmatpush.msra.mxu0 %v935
    %1437 = vmatpush.msra.mxu0 %v934
    %1438 = vmatpush.msra.mxu0 %v933
    %1439 = vmatpush.msra.mxu0 %v932
    %1440 = vmatpush.msra.mxu0 %v931
    %1441 = vmatmul.f32.gmra.mxu0 %v1337
    %v1442 = vpop.f32.mrf.mxu0
    %v1443 = vadd.f32 0.0, %v1442
    %1444 = vdwg.mxu0
    %v1445 = vadd.f32 %v1343, %v1443
    %v1446 = vtanh.pop %v1445
    %v1447 = vmul.f32 %v1424, %v1295
    %v1448 = vmul.f32 %v1384, %v1446
    %v1449 = vadd.f32 %v1447, %v1448
    %1450 = vmatpush.msra.mxu0 %v987
    %1451 = vmatpush.msra.mxu0 %v986
    %1452 = vmatpush.msra.mxu0 %v985
    %1453 = vmatpush.msra.mxu0 %v984
    %1454 = vmatpush.msra.mxu0 %v983
    %1455 = vmatpush.msra.mxu0 %v982
    %1456 = vmatpush.msra.mxu0 %v981
    %1457 = vmatpush.msra.mxu0 %v980
    %1458 = vmatpush.msra.mxu0 %v979
    %1459 = vmatpush.msra.mxu0 %v978
    %1460 = vmatpush.msra.mxu0 %v977
    %1461 = vmatpush.msra.mxu0 %v976
    %1462 = vmatpush.msra.mxu0 %v975
    %1463 = vmatpush.msra.mxu0 %v974
    %1464 = vmatpush.msra.mxu0 %v973
    %1465 = vmatpush.msra.mxu0 %v972
    %1466 = vmatmul.f32.gmra.mxu0 %v1337
    %v1467 = vpop.f32.mrf.mxu0
    %v1468 = vadd.f32 0.0, %v1467
    %1469 = vdwg.mxu0
    %v1470 = vadd.f32 %v1344, %v1468
    %v1471 = vxor.u32 %v1470, 2147483648
    %v1472 = vmul.f32 %v1471, 1.442695
    %v1473 = vpow.pop %v1472
    %v1474 = vadd.f32 %v1473, 1.0
    %v1475 = vrcp.pop %v1474
    %v1476 = vmul.f32 %v1474, %v1475
    %v1477 = vsub.f32 1.0, %v1476
    %v1478 = vmul.f32 %v1475, %v1477
    %v1479 = vadd.f32 %v1475, %v1478
    %vm1480 = vweird.f32 %v1474
    %vm1481 = vweird.f32 %v1475
    %vm1482 = vmor %vm1480, %vm1481
    %v1483 = vsel %vm1482, %v1475, %v1479
    %v1484 = vand.u32 2147483647, %v1474
    %vm1485 = vcmp.eq.f32.partialorder %v1484, 8.507059e+37
    %v1486 = vand.u32 %v1474, 2147483648
    %v1487 = vor.u32 1.1754944e-38, %v1486
    %v1488 = vsel %vm1485, %v1487, %v1483
    %v1489 = vmul.f32 1.0, %v1488
    %v1490 = vtanh.pop %v1449
    %v1491 = vmul.f32 %v1489, %v1490
    %s1492 = smul.u32 4, 4
    %s1493 = smul.addr %s1492, 8
    %s1494 = scalar_lea.vmem [#allocation4], %s1493
    %v1495 = vld [vmem:[%s1494] sm:$0xff]
    %v1496 = vld [vmem:[%s1494 + $0x8] sm:$0xff]
    %v1497 = vld [vmem:[%s1494 + $0x10] sm:$0xff]
    %v1498 = vld [vmem:[%s1494 + $0x18] sm:$0xff]
    %1499 = vmatpush.msra.mxu0 %v834
    %1500 = vmatpush.msra.mxu0 %v833
    %1501 = vmatpush.msra.mxu0 %v832
    %1502 = vmatpush.msra.mxu0 %v831
    %1503 = vmatpush.msra.mxu0 %v830
    %1504 = vmatpush.msra.mxu0 %v829
    %1505 = vmatpush.msra.mxu0 %v828
    %1506 = vmatpush.msra.mxu0 %v827
    %1507 = vmatpush.msra.mxu0 %v826
    %1508 = vmatpush.msra.mxu0 %v825
    %1509 = vmatpush.msra.mxu0 %v824
    %1510 = vmatpush.msra.mxu0 %v823
    %1511 = vmatpush.msra.mxu0 %v822
    %1512 = vmatpush.msra.mxu0 %v821
    %1513 = vmatpush.msra.mxu0 %v820
    %1514 = vmatpush.msra.mxu0 %v819
    %1515 = vmatmul.f32.gmra.mxu0 %v1491
    %v1516 = vpop.f32.mrf.mxu0
    %v1517 = vadd.f32 0.0, %v1516
    %1518 = vdwg.mxu0
    %v1519 = vadd.f32 %v1495, %v1517
    %v1520 = vxor.u32 %v1519, 2147483648
    %v1521 = vmul.f32 %v1520, 1.442695
    %v1522 = vpow.pop %v1521
    %v1523 = vadd.f32 %v1522, 1.0
    %v1524 = vrcp.pop %v1523
    %v1525 = vmul.f32 %v1523, %v1524
    %v1526 = vsub.f32 1.0, %v1525
    %v1527 = vmul.f32 %v1524, %v1526
    %v1528 = vadd.f32 %v1524, %v1527
    %vm1529 = vweird.f32 %v1523
    %vm1530 = vweird.f32 %v1524
    %vm1531 = vmor %vm1529, %vm1530
    %v1532 = vsel %vm1531, %v1524, %v1528
    %v1533 = vand.u32 2147483647, %v1523
    %vm1534 = vcmp.eq.f32.partialorder %v1533, 8.507059e+37
    %v1535 = vand.u32 %v1523, 2147483648
    %v1536 = vor.u32 1.1754944e-38, %v1535
    %v1537 = vsel %vm1534, %v1536, %v1532
    %v1538 = vmul.f32 1.0, %v1537
    %1539 = vmatpush.msra.mxu0 %v890
    %1540 = vmatpush.msra.mxu0 %v889
    %1541 = vmatpush.msra.mxu0 %v888
    %1542 = vmatpush.msra.mxu0 %v887
    %1543 = vmatpush.msra.mxu0 %v886
    %1544 = vmatpush.msra.mxu0 %v885
    %1545 = vmatpush.msra.mxu0 %v884
    %1546 = vmatpush.msra.mxu0 %v883
    %1547 = vmatpush.msra.mxu0 %v882
    %1548 = vmatpush.msra.mxu0 %v881
    %1549 = vmatpush.msra.mxu0 %v880
    %1550 = vmatpush.msra.mxu0 %v879
    %1551 = vmatpush.msra.mxu0 %v878
    %1552 = vmatpush.msra.mxu0 %v877
    %1553 = vmatpush.msra.mxu0 %v876
    %1554 = vmatpush.msra.mxu0 %v875
    %1555 = vmatmul.f32.gmra.mxu0 %v1491
    %v1556 = vpop.f32.mrf.mxu0
    %v1557 = vadd.f32 0.0, %v1556
    %1558 = vdwg.mxu0
    %v1559 = vadd.f32 %v1496, %v1557
    %v1560 = vxor.u32 %v1559, 2147483648
    %v1561 = vmul.f32 %v1560, 1.442695
    %v1562 = vpow.pop %v1561
    %v1563 = vadd.f32 %v1562, 1.0
    %v1564 = vrcp.pop %v1563
    %v1565 = vmul.f32 %v1563, %v1564
    %v1566 = vsub.f32 1.0, %v1565
    %v1567 = vmul.f32 %v1564, %v1566
    %v1568 = vadd.f32 %v1564, %v1567
    %vm1569 = vweird.f32 %v1563
    %vm1570 = vweird.f32 %v1564
    %vm1571 = vmor %vm1569, %vm1570
    %v1572 = vsel %vm1571, %v1564, %v1568
    %v1573 = vand.u32 2147483647, %v1563
    %vm1574 = vcmp.eq.f32.partialorder %v1573, 8.507059e+37
    %v1575 = vand.u32 %v1563, 2147483648
    %v1576 = vor.u32 1.1754944e-38, %v1575
    %v1577 = vsel %vm1574, %v1576, %v1572
    %v1578 = vmul.f32 1.0, %v1577
    %1579 = vmatpush.msra.mxu0 %v946
    %1580 = vmatpush.msra.mxu0 %v945
    %1581 = vmatpush.msra.mxu0 %v944
    %1582 = vmatpush.msra.mxu0 %v943
    %1583 = vmatpush.msra.mxu0 %v942
    %1584 = vmatpush.msra.mxu0 %v941
    %1585 = vmatpush.msra.mxu0 %v940
    %1586 = vmatpush.msra.mxu0 %v939
    %1587 = vmatpush.msra.mxu0 %v938
    %1588 = vmatpush.msra.mxu0 %v937
    %1589 = vmatpush.msra.mxu0 %v936
    %1590 = vmatpush.msra.mxu0 %v935
    %1591 = vmatpush.msra.mxu0 %v934
    %1592 = vmatpush.msra.mxu0 %v933
    %1593 = vmatpush.msra.mxu0 %v932
    %1594 = vmatpush.msra.mxu0 %v931
    %1595 = vmatmul.f32.gmra.mxu0 %v1491
    %v1596 = vpop.f32.mrf.mxu0
    %v1597 = vadd.f32 0.0, %v1596
    %1598 = vdwg.mxu0
    %v1599 = vadd.f32 %v1497, %v1597
    %v1600 = vtanh.pop %v1599
    %v1601 = vmul.f32 %v1578, %v1449
    %v1602 = vmul.f32 %v1538, %v1600
    %v1603 = vadd.f32 %v1601, %v1602
    %1604 = vmatpush.msra.mxu0 %v987
    %1605 = vmatpush.msra.mxu0 %v986
    %1606 = vmatpush.msra.mxu0 %v985
    %1607 = vmatpush.msra.mxu0 %v984
    %1608 = vmatpush.msra.mxu0 %v983
    %1609 = vmatpush.msra.mxu0 %v982
    %1610 = vmatpush.msra.mxu0 %v981
    %1611 = vmatpush.msra.mxu0 %v980
    %1612 = vmatpush.msra.mxu0 %v979
    %1613 = vmatpush.msra.mxu0 %v978
    %1614 = vmatpush.msra.mxu0 %v977
    %1615 = vmatpush.msra.mxu0 %v976
    %1616 = vmatpush.msra.mxu0 %v975
    %1617 = vmatpush.msra.mxu0 %v974
    %1618 = vmatpush.msra.mxu0 %v973
    %1619 = vmatpush.msra.mxu0 %v972
    %1620 = vmatmul.f32.gmra.mxu0 %v1491
    %v1621 = vpop.f32.mrf.mxu0
    %v1622 = vadd.f32 0.0, %v1621
    %1623 = vdwg.mxu0
    %v1624 = vadd.f32 %v1498, %v1622
    %v1625 = vxor.u32 %v1624, 2147483648
    %v1626 = vmul.f32 %v1625, 1.442695
    %v1627 = vpow.pop %v1626
    %v1628 = vadd.f32 %v1627, 1.0
    %v1629 = vrcp.pop %v1628
    %v1630 = vmul.f32 %v1628, %v1629
    %v1631 = vsub.f32 1.0, %v1630
    %v1632 = vmul.f32 %v1629, %v1631
    %v1633 = vadd.f32 %v1629, %v1632
    %vm1634 = vweird.f32 %v1628
    %vm1635 = vweird.f32 %v1629
    %vm1636 = vmor %vm1634, %vm1635
    %v1637 = vsel %vm1636, %v1629, %v1633
    %v1638 = vand.u32 2147483647, %v1628
    %vm1639 = vcmp.eq.f32.partialorder %v1638, 8.507059e+37
    %v1640 = vand.u32 %v1628, 2147483648
    %v1641 = vor.u32 1.1754944e-38, %v1640
    %v1642 = vsel %vm1639, %v1641, %v1637
    %v1643 = vmul.f32 1.0, %v1642
    %v1644 = vtanh.pop %v1603
    %v1645 = vmul.f32 %v1643, %v1644
    %s1646 = smul.u32 5, 4
    %s1647 = smul.addr %s1646, 8
    %s1648 = scalar_lea.vmem [#allocation4], %s1647
    %v1649 = vld [vmem:[%s1648] sm:$0xff]
    %v1650 = vld [vmem:[%s1648 + $0x8] sm:$0xff]
    %v1651 = vld [vmem:[%s1648 + $0x10] sm:$0xff]
    %v1652 = vld [vmem:[%s1648 + $0x18] sm:$0xff]
    %1653 = vmatpush.msra.mxu0 %v834
    %1654 = vmatpush.msra.mxu0 %v833
    %1655 = vmatpush.msra.mxu0 %v832
    %1656 = vmatpush.msra.mxu0 %v831
    %1657 = vmatpush.msra.mxu0 %v830
    %1658 = vmatpush.msra.mxu0 %v829
    %1659 = vmatpush.msra.mxu0 %v828
    %1660 = vmatpush.msra.mxu0 %v827
    %1661 = vmatpush.msra.mxu0 %v826
    %1662 = vmatpush.msra.mxu0 %v825
    %1663 = vmatpush.msra.mxu0 %v824
    %1664 = vmatpush.msra.mxu0 %v823
    %1665 = vmatpush.msra.mxu0 %v822
    %1666 = vmatpush.msra.mxu0 %v821
    %1667 = vmatpush.msra.mxu0 %v820
    %1668 = vmatpush.msra.mxu0 %v819
    %1669 = vmatmul.f32.gmra.mxu0 %v1645
    %v1670 = vpop.f32.mrf.mxu0
    %v1671 = vadd.f32 0.0, %v1670
    %1672 = vdwg.mxu0
    %v1673 = vadd.f32 %v1649, %v1671
    %v1674 = vxor.u32 %v1673, 2147483648
    %v1675 = vmul.f32 %v1674, 1.442695
    %v1676 = vpow.pop %v1675
    %v1677 = vadd.f32 %v1676, 1.0
    %v1678 = vrcp.pop %v1677
    %v1679 = vmul.f32 %v1677, %v1678
    %v1680 = vsub.f32 1.0, %v1679
    %v1681 = vmul.f32 %v1678, %v1680
    %v1682 = vadd.f32 %v1678, %v1681
    %vm1683 = vweird.f32 %v1677
    %vm1684 = vweird.f32 %v1678
    %vm1685 = vmor %vm1683, %vm1684
    %v1686 = vsel %vm1685, %v1678, %v1682
    %v1687 = vand.u32 2147483647, %v1677
    %vm1688 = vcmp.eq.f32.partialorder %v1687, 8.507059e+37
    %v1689 = vand.u32 %v1677, 2147483648
    %v1690 = vor.u32 1.1754944e-38, %v1689
    %v1691 = vsel %vm1688, %v1690, %v1686
    %v1692 = vmul.f32 1.0, %v1691
    %1693 = vmatpush.msra.mxu0 %v890
    %1694 = vmatpush.msra.mxu0 %v889
    %1695 = vmatpush.msra.mxu0 %v888
    %1696 = vmatpush.msra.mxu0 %v887
    %1697 = vmatpush.msra.mxu0 %v886
    %1698 = vmatpush.msra.mxu0 %v885
    %1699 = vmatpush.msra.mxu0 %v884
    %1700 = vmatpush.msra.mxu0 %v883
    %1701 = vmatpush.msra.mxu0 %v882
    %1702 = vmatpush.msra.mxu0 %v881
    %1703 = vmatpush.msra.mxu0 %v880
    %1704 = vmatpush.msra.mxu0 %v879
    %1705 = vmatpush.msra.mxu0 %v878
    %1706 = vmatpush.msra.mxu0 %v877
    %1707 = vmatpush.msra.mxu0 %v876
    %1708 = vmatpush.msra.mxu0 %v875
    %1709 = vmatmul.f32.gmra.mxu0 %v1645
    %v1710 = vpop.f32.mrf.mxu0
    %v1711 = vadd.f32 0.0, %v1710
    %1712 = vdwg.mxu0
    %v1713 = vadd.f32 %v1650, %v1711
    %v1714 = vxor.u32 %v1713, 2147483648
    %v1715 = vmul.f32 %v1714, 1.442695
    %v1716 = vpow.pop %v1715
    %v1717 = vadd.f32 %v1716, 1.0
    %v1718 = vrcp.pop %v1717
    %v1719 = vmul.f32 %v1717, %v1718
    %v1720 = vsub.f32 1.0, %v1719
    %v1721 = vmul.f32 %v1718, %v1720
    %v1722 = vadd.f32 %v1718, %v1721
    %vm1723 = vweird.f32 %v1717
    %vm1724 = vweird.f32 %v1718
    %vm1725 = vmor %vm1723, %vm1724
    %v1726 = vsel %vm1725, %v1718, %v1722
    %v1727 = vand.u32 2147483647, %v1717
    %vm1728 = vcmp.eq.f32.partialorder %v1727, 8.507059e+37
    %v1729 = vand.u32 %v1717, 2147483648
    %v1730 = vor.u32 1.1754944e-38, %v1729
    %v1731 = vsel %vm1728, %v1730, %v1726
    %v1732 = vmul.f32 1.0, %v1731
    %1733 = vmatpush.msra.mxu0 %v946
    %1734 = vmatpush.msra.mxu0 %v945
    %1735 = vmatpush.msra.mxu0 %v944
    %1736 = vmatpush.msra.mxu0 %v943
    %1737 = vmatpush.msra.mxu0 %v942
    %1738 = vmatpush.msra.mxu0 %v941
    %1739 = vmatpush.msra.mxu0 %v940
    %1740 = vmatpush.msra.mxu0 %v939
    %1741 = vmatpush.msra.mxu0 %v938
    %1742 = vmatpush.msra.mxu0 %v937
    %1743 = vmatpush.msra.mxu0 %v936
    %1744 = vmatpush.msra.mxu0 %v935
    %1745 = vmatpush.msra.mxu0 %v934
    %1746 = vmatpush.msra.mxu0 %v933
    %1747 = vmatpush.msra.mxu0 %v932
    %1748 = vmatpush.msra.mxu0 %v931
    %1749 = vmatmul.f32.gmra.mxu0 %v1645
    %v1750 = vpop.f32.mrf.mxu0
    %v1751 = vadd.f32 0.0, %v1750
    %1752 = vdwg.mxu0
    %v1753 = vadd.f32 %v1651, %v1751
    %v1754 = vtanh.pop %v1753
    %v1755 = vmul.f32 %v1732, %v1603
    %v1756 = vmul.f32 %v1692, %v1754
    %v1757 = vadd.f32 %v1755, %v1756
    %1758 = vmatpush.msra.mxu0 %v987
    %1759 = vmatpush.msra.mxu0 %v986
    %1760 = vmatpush.msra.mxu0 %v985
    %1761 = vmatpush.msra.mxu0 %v984
    %1762 = vmatpush.msra.mxu0 %v983
    %1763 = vmatpush.msra.mxu0 %v982
    %1764 = vmatpush.msra.mxu0 %v981
    %1765 = vmatpush.msra.mxu0 %v980
    %1766 = vmatpush.msra.mxu0 %v979
    %1767 = vmatpush.msra.mxu0 %v978
    %1768 = vmatpush.msra.mxu0 %v977
    %1769 = vmatpush.msra.mxu0 %v976
    %1770 = vmatpush.msra.mxu0 %v975
    %1771 = vmatpush.msra.mxu0 %v974
    %1772 = vmatpush.msra.mxu0 %v973
    %1773 = vmatpush.msra.mxu0 %v972
    %1774 = vmatmul.f32.gmra.mxu0 %v1645
    %v1775 = vpop.f32.mrf.mxu0
    %v1776 = vadd.f32 0.0, %v1775
    %1777 = vdwg.mxu0
    %v1778 = vadd.f32 %v1652, %v1776
    %v1779 = vxor.u32 %v1778, 2147483648
    %v1780 = vmul.f32 %v1779, 1.442695
    %v1781 = vpow.pop %v1780
    %v1782 = vadd.f32 %v1781, 1.0
    %v1783 = vrcp.pop %v1782
    %v1784 = vmul.f32 %v1782, %v1783
    %v1785 = vsub.f32 1.0, %v1784
    %v1786 = vmul.f32 %v1783, %v1785
    %v1787 = vadd.f32 %v1783, %v1786
    %vm1788 = vweird.f32 %v1782
    %vm1789 = vweird.f32 %v1783
    %vm1790 = vmor %vm1788, %vm1789
    %v1791 = vsel %vm1790, %v1783, %v1787
    %v1792 = vand.u32 2147483647, %v1782
    %vm1793 = vcmp.eq.f32.partialorder %v1792, 8.507059e+37
    %v1794 = vand.u32 %v1782, 2147483648
    %v1795 = vor.u32 1.1754944e-38, %v1794
    %v1796 = vsel %vm1793, %v1795, %v1791
    %v1797 = vmul.f32 1.0, %v1796
    %v1798 = vtanh.pop %v1757
    %v1799 = vmul.f32 %v1797, %v1798
    %s1800 = smul.u32 6, 4
    %s1801 = smul.addr %s1800, 8
    %s1802 = scalar_lea.vmem [#allocation4], %s1801
    %v1803 = vld [vmem:[%s1802] sm:$0xff]
    %v1804 = vld [vmem:[%s1802 + $0x8] sm:$0xff]
    %v1805 = vld [vmem:[%s1802 + $0x10] sm:$0xff]
    %v1806 = vld [vmem:[%s1802 + $0x18] sm:$0xff]
    %1807 = vmatpush.msra.mxu0 %v834
    %1808 = vmatpush.msra.mxu0 %v833
    %1809 = vmatpush.msra.mxu0 %v832
    %1810 = vmatpush.msra.mxu0 %v831
    %1811 = vmatpush.msra.mxu0 %v830
    %1812 = vmatpush.msra.mxu0 %v829
    %1813 = vmatpush.msra.mxu0 %v828
    %1814 = vmatpush.msra.mxu0 %v827
    %1815 = vmatpush.msra.mxu0 %v826
    %1816 = vmatpush.msra.mxu0 %v825
    %1817 = vmatpush.msra.mxu0 %v824
    %1818 = vmatpush.msra.mxu0 %v823
    %1819 = vmatpush.msra.mxu0 %v822
    %1820 = vmatpush.msra.mxu0 %v821
    %1821 = vmatpush.msra.mxu0 %v820
    %1822 = vmatpush.msra.mxu0 %v819
    %1823 = vmatmul.f32.gmra.mxu0 %v1799
    %v1824 = vpop.f32.mrf.mxu0
    %v1825 = vadd.f32 0.0, %v1824
    %1826 = vdwg.mxu0
    %v1827 = vadd.f32 %v1803, %v1825
    %v1828 = vxor.u32 %v1827, 2147483648
    %v1829 = vmul.f32 %v1828, 1.442695
    %v1830 = vpow.pop %v1829
    %v1831 = vadd.f32 %v1830, 1.0
    %v1832 = vrcp.pop %v1831
    %v1833 = vmul.f32 %v1831, %v1832
    %v1834 = vsub.f32 1.0, %v1833
    %v1835 = vmul.f32 %v1832, %v1834
    %v1836 = vadd.f32 %v1832, %v1835
    %vm1837 = vweird.f32 %v1831
    %vm1838 = vweird.f32 %v1832
    %vm1839 = vmor %vm1837, %vm1838
    %v1840 = vsel %vm1839, %v1832, %v1836
    %v1841 = vand.u32 2147483647, %v1831
    %vm1842 = vcmp.eq.f32.partialorder %v1841, 8.507059e+37
    %v1843 = vand.u32 %v1831, 2147483648
    %v1844 = vor.u32 1.1754944e-38, %v1843
    %v1845 = vsel %vm1842, %v1844, %v1840
    %v1846 = vmul.f32 1.0, %v1845
    %1847 = vmatpush.msra.mxu0 %v890
    %1848 = vmatpush.msra.mxu0 %v889
    %1849 = vmatpush.msra.mxu0 %v888
    %1850 = vmatpush.msra.mxu0 %v887
    %1851 = vmatpush.msra.mxu0 %v886
    %1852 = vmatpush.msra.mxu0 %v885
    %1853 = vmatpush.msra.mxu0 %v884
    %1854 = vmatpush.msra.mxu0 %v883
    %1855 = vmatpush.msra.mxu0 %v882
    %1856 = vmatpush.msra.mxu0 %v881
    %1857 = vmatpush.msra.mxu0 %v880
    %1858 = vmatpush.msra.mxu0 %v879
    %1859 = vmatpush.msra.mxu0 %v878
    %1860 = vmatpush.msra.mxu0 %v877
    %1861 = vmatpush.msra.mxu0 %v876
    %1862 = vmatpush.msra.mxu0 %v875
    %1863 = vmatmul.f32.gmra.mxu0 %v1799
    %v1864 = vpop.f32.mrf.mxu0
    %v1865 = vadd.f32 0.0, %v1864
    %1866 = vdwg.mxu0
    %v1867 = vadd.f32 %v1804, %v1865
    %v1868 = vxor.u32 %v1867, 2147483648
    %v1869 = vmul.f32 %v1868, 1.442695
    %v1870 = vpow.pop %v1869
    %v1871 = vadd.f32 %v1870, 1.0
    %v1872 = vrcp.pop %v1871
    %v1873 = vmul.f32 %v1871, %v1872
    %v1874 = vsub.f32 1.0, %v1873
    %v1875 = vmul.f32 %v1872, %v1874
    %v1876 = vadd.f32 %v1872, %v1875
    %vm1877 = vweird.f32 %v1871
    %vm1878 = vweird.f32 %v1872
    %vm1879 = vmor %vm1877, %vm1878
    %v1880 = vsel %vm1879, %v1872, %v1876
    %v1881 = vand.u32 2147483647, %v1871
    %vm1882 = vcmp.eq.f32.partialorder %v1881, 8.507059e+37
    %v1883 = vand.u32 %v1871, 2147483648
    %v1884 = vor.u32 1.1754944e-38, %v1883
    %v1885 = vsel %vm1882, %v1884, %v1880
    %v1886 = vmul.f32 1.0, %v1885
    %1887 = vmatpush.msra.mxu0 %v946
    %1888 = vmatpush.msra.mxu0 %v945
    %1889 = vmatpush.msra.mxu0 %v944
    %1890 = vmatpush.msra.mxu0 %v943
    %1891 = vmatpush.msra.mxu0 %v942
    %1892 = vmatpush.msra.mxu0 %v941
    %1893 = vmatpush.msra.mxu0 %v940
    %1894 = vmatpush.msra.mxu0 %v939
    %1895 = vmatpush.msra.mxu0 %v938
    %1896 = vmatpush.msra.mxu0 %v937
    %1897 = vmatpush.msra.mxu0 %v936
    %1898 = vmatpush.msra.mxu0 %v935
    %1899 = vmatpush.msra.mxu0 %v934
    %1900 = vmatpush.msra.mxu0 %v933
    %1901 = vmatpush.msra.mxu0 %v932
    %1902 = vmatpush.msra.mxu0 %v931
    %1903 = vmatmul.f32.gmra.mxu0 %v1799
    %v1904 = vpop.f32.mrf.mxu0
    %v1905 = vadd.f32 0.0, %v1904
    %1906 = vdwg.mxu0
    %v1907 = vadd.f32 %v1805, %v1905
    %v1908 = vtanh.pop %v1907
    %v1909 = vmul.f32 %v1886, %v1757
    %v1910 = vmul.f32 %v1846, %v1908
    %v1911 = vadd.f32 %v1909, %v1910
    %1912 = vmatpush.msra.mxu0 %v987
    %1913 = vmatpush.msra.mxu0 %v986
    %1914 = vmatpush.msra.mxu0 %v985
    %1915 = vmatpush.msra.mxu0 %v984
    %1916 = vmatpush.msra.mxu0 %v983
    %1917 = vmatpush.msra.mxu0 %v982
    %1918 = vmatpush.msra.mxu0 %v981
    %1919 = vmatpush.msra.mxu0 %v980
    %1920 = vmatpush.msra.mxu0 %v979
    %1921 = vmatpush.msra.mxu0 %v978
    %1922 = vmatpush.msra.mxu0 %v977
    %1923 = vmatpush.msra.mxu0 %v976
    %1924 = vmatpush.msra.mxu0 %v975
    %1925 = vmatpush.msra.mxu0 %v974
    %1926 = vmatpush.msra.mxu0 %v973
    %1927 = vmatpush.msra.mxu0 %v972
    %1928 = vmatmul.f32.gmra.mxu0 %v1799
    %v1929 = vpop.f32.mrf.mxu0
    %v1930 = vadd.f32 0.0, %v1929
    %1931 = vdwg.mxu0
    %v1932 = vadd.f32 %v1806, %v1930
    %v1933 = vxor.u32 %v1932, 2147483648
    %v1934 = vmul.f32 %v1933, 1.442695
    %v1935 = vpow.pop %v1934
    %v1936 = vadd.f32 %v1935, 1.0
    %v1937 = vrcp.pop %v1936
    %v1938 = vmul.f32 %v1936, %v1937
    %v1939 = vsub.f32 1.0, %v1938
    %v1940 = vmul.f32 %v1937, %v1939
    %v1941 = vadd.f32 %v1937, %v1940
    %vm1942 = vweird.f32 %v1936
    %vm1943 = vweird.f32 %v1937
    %vm1944 = vmor %vm1942, %vm1943
    %v1945 = vsel %vm1944, %v1937, %v1941
    %v1946 = vand.u32 2147483647, %v1936
    %vm1947 = vcmp.eq.f32.partialorder %v1946, 8.507059e+37
    %v1948 = vand.u32 %v1936, 2147483648
    %v1949 = vor.u32 1.1754944e-38, %v1948
    %v1950 = vsel %vm1947, %v1949, %v1945
    %v1951 = vmul.f32 1.0, %v1950
    %v1952 = vtanh.pop %v1911
    %v1953 = vmul.f32 %v1951, %v1952
    %s1954 = smul.u32 7, 4
    %s1955 = smul.addr %s1954, 8
    %s1956 = scalar_lea.vmem [#allocation4], %s1955
    %v1957 = vld [vmem:[%s1956] sm:$0xff]
    %v1958 = vld [vmem:[%s1956 + $0x8] sm:$0xff]
    %v1959 = vld [vmem:[%s1956 + $0x10] sm:$0xff]
    %v1960 = vld [vmem:[%s1956 + $0x18] sm:$0xff]
    %1961 = vmatpush.msra.mxu0 %v834
    %1962 = vmatpush.msra.mxu0 %v833
    %1963 = vmatpush.msra.mxu0 %v832
    %1964 = vmatpush.msra.mxu0 %v831
    %1965 = vmatpush.msra.mxu0 %v830
    %1966 = vmatpush.msra.mxu0 %v829
    %1967 = vmatpush.msra.mxu0 %v828
    %1968 = vmatpush.msra.mxu0 %v827
    %1969 = vmatpush.msra.mxu0 %v826
    %1970 = vmatpush.msra.mxu0 %v825
    %1971 = vmatpush.msra.mxu0 %v824
    %1972 = vmatpush.msra.mxu0 %v823
    %1973 = vmatpush.msra.mxu0 %v822
    %1974 = vmatpush.msra.mxu0 %v821
    %1975 = vmatpush.msra.mxu0 %v820
    %1976 = vmatpush.msra.mxu0 %v819
    %1977 = vmatmul.f32.gmra.mxu0 %v1953
    %v1978 = vpop.f32.mrf.mxu0
    %v1979 = vadd.f32 0.0, %v1978
    %1980 = vdwg.mxu0
    %v1981 = vadd.f32 %v1957, %v1979
    %v1982 = vxor.u32 %v1981, 2147483648
    %v1983 = vmul.f32 %v1982, 1.442695
    %v1984 = vpow.pop %v1983
    %v1985 = vadd.f32 %v1984, 1.0
    %v1986 = vrcp.pop %v1985
    %v1987 = vmul.f32 %v1985, %v1986
    %v1988 = vsub.f32 1.0, %v1987
    %v1989 = vmul.f32 %v1986, %v1988
    %v1990 = vadd.f32 %v1986, %v1989
    %vm1991 = vweird.f32 %v1985
    %vm1992 = vweird.f32 %v1986
    %vm1993 = vmor %vm1991, %vm1992
    %v1994 = vsel %vm1993, %v1986, %v1990
    %v1995 = vand.u32 2147483647, %v1985
    %vm1996 = vcmp.eq.f32.partialorder %v1995, 8.507059e+37
    %v1997 = vand.u32 %v1985, 2147483648
    %v1998 = vor.u32 1.1754944e-38, %v1997
    %v1999 = vsel %vm1996, %v1998, %v1994
    %v2000 = vmul.f32 1.0, %v1999
    %2001 = vmatpush.msra.mxu0 %v890
    %2002 = vmatpush.msra.mxu0 %v889
    %2003 = vmatpush.msra.mxu0 %v888
    %2004 = vmatpush.msra.mxu0 %v887
    %2005 = vmatpush.msra.mxu0 %v886
    %2006 = vmatpush.msra.mxu0 %v885
    %2007 = vmatpush.msra.mxu0 %v884
    %2008 = vmatpush.msra.mxu0 %v883
    %2009 = vmatpush.msra.mxu0 %v882
    %2010 = vmatpush.msra.mxu0 %v881
    %2011 = vmatpush.msra.mxu0 %v880
    %2012 = vmatpush.msra.mxu0 %v879
    %2013 = vmatpush.msra.mxu0 %v878
    %2014 = vmatpush.msra.mxu0 %v877
    %2015 = vmatpush.msra.mxu0 %v876
    %2016 = vmatpush.msra.mxu0 %v875
    %2017 = vmatmul.f32.gmra.mxu0 %v1953
    %v2018 = vpop.f32.mrf.mxu0
    %v2019 = vadd.f32 0.0, %v2018
    %2020 = vdwg.mxu0
    %v2021 = vadd.f32 %v1958, %v2019
    %v2022 = vxor.u32 %v2021, 2147483648
    %v2023 = vmul.f32 %v2022, 1.442695
    %v2024 = vpow.pop %v2023
    %v2025 = vadd.f32 %v2024, 1.0
    %v2026 = vrcp.pop %v2025
    %v2027 = vmul.f32 %v2025, %v2026
    %v2028 = vsub.f32 1.0, %v2027
    %v2029 = vmul.f32 %v2026, %v2028
    %v2030 = vadd.f32 %v2026, %v2029
    %vm2031 = vweird.f32 %v2025
    %vm2032 = vweird.f32 %v2026
    %vm2033 = vmor %vm2031, %vm2032
    %v2034 = vsel %vm2033, %v2026, %v2030
    %v2035 = vand.u32 2147483647, %v2025
    %vm2036 = vcmp.eq.f32.partialorder %v2035, 8.507059e+37
    %v2037 = vand.u32 %v2025, 2147483648
    %v2038 = vor.u32 1.1754944e-38, %v2037
    %v2039 = vsel %vm2036, %v2038, %v2034
    %v2040 = vmul.f32 1.0, %v2039
    %2041 = vmatpush.msra.mxu0 %v946
    %2042 = vmatpush.msra.mxu0 %v945
    %2043 = vmatpush.msra.mxu0 %v944
    %2044 = vmatpush.msra.mxu0 %v943
    %2045 = vmatpush.msra.mxu0 %v942
    %2046 = vmatpush.msra.mxu0 %v941
    %2047 = vmatpush.msra.mxu0 %v940
    %2048 = vmatpush.msra.mxu0 %v939
    %2049 = vmatpush.msra.mxu0 %v938
    %2050 = vmatpush.msra.mxu0 %v937
    %2051 = vmatpush.msra.mxu0 %v936
    %2052 = vmatpush.msra.mxu0 %v935
    %2053 = vmatpush.msra.mxu0 %v934
    %2054 = vmatpush.msra.mxu0 %v933
    %2055 = vmatpush.msra.mxu0 %v932
    %2056 = vmatpush.msra.mxu0 %v931
    %2057 = vmatmul.f32.gmra.mxu0 %v1953
    %v2058 = vpop.f32.mrf.mxu0
    %v2059 = vadd.f32 0.0, %v2058
    %2060 = vdwg.mxu0
    %v2061 = vadd.f32 %v1959, %v2059
    %v2062 = vtanh.pop %v2061
    %v2063 = vmul.f32 %v2040, %v1911
    %v2064 = vmul.f32 %v2000, %v2062
    %v2065 = vadd.f32 %v2063, %v2064
    %2066 = vmatpush.msra.mxu0 %v987
    %2067 = vmatpush.msra.mxu0 %v986
    %2068 = vmatpush.msra.mxu0 %v985
    %2069 = vmatpush.msra.mxu0 %v984
    %2070 = vmatpush.msra.mxu0 %v983
    %2071 = vmatpush.msra.mxu0 %v982
    %2072 = vmatpush.msra.mxu0 %v981
    %2073 = vmatpush.msra.mxu0 %v980
    %2074 = vmatpush.msra.mxu0 %v979
    %2075 = vmatpush.msra.mxu0 %v978
    %2076 = vmatpush.msra.mxu0 %v977
    %2077 = vmatpush.msra.mxu0 %v976
    %2078 = vmatpush.msra.mxu0 %v975
    %2079 = vmatpush.msra.mxu0 %v974
    %2080 = vmatpush.msra.mxu0 %v973
    %2081 = vmatpush.msra.mxu0 %v972
    %2082 = vmatmul.f32.gmra.mxu0 %v1953
    %v2083 = vpop.f32.mrf.mxu0
    %v2084 = vadd.f32 0.0, %v2083
    %2085 = vdwg.mxu0
    %v2086 = vadd.f32 %v1960, %v2084
    %v2087 = vxor.u32 %v2086, 2147483648
    %v2088 = vmul.f32 %v2087, 1.442695
    %v2089 = vpow.pop %v2088
    %v2090 = vadd.f32 %v2089, 1.0
    %v2091 = vrcp.pop %v2090
    %v2092 = vmul.f32 %v2090, %v2091
    %v2093 = vsub.f32 1.0, %v2092
    %v2094 = vmul.f32 %v2091, %v2093
    %v2095 = vadd.f32 %v2091, %v2094
    %vm2096 = vweird.f32 %v2090
    %vm2097 = vweird.f32 %v2091
    %vm2098 = vmor %vm2096, %vm2097
    %v2099 = vsel %vm2098, %v2091, %v2095
    %v2100 = vand.u32 2147483647, %v2090
    %vm2101 = vcmp.eq.f32.partialorder %v2100, 8.507059e+37
    %v2102 = vand.u32 %v2090, 2147483648
    %v2103 = vor.u32 1.1754944e-38, %v2102
    %v2104 = vsel %vm2101, %v2103, %v2099
    %v2105 = vmul.f32 1.0, %v2104
    %v2106 = vtanh.pop %v2065
    %v2107 = vmul.f32 %v2105, %v2106
    %2108 = vst [vmem:[#allocation2] sm:$0xff] %v2107
    %2109 = vst [vmem:[#allocation3] sm:$0xff] %v2065
    // Predicated region
    $region50: #{tpu_custom_call.1} parent=1 // pred_check
      %p2110 = pneg %p100
    $region51: #{tpu_custom_call.1} parent=1 // pred_check_branch
      %2112 = sbr.rel (%p2110) target = $region53
    $region52: #{tpu_custom_call.1} parent=1 // pred_region
      %v2113 = vld [vmem:[#allocation13] sm:$0xff]
      %v2114 = vld [vmem:[#allocation13 + $0x8] sm:$0xff]
      %v2115 = vld [vmem:[#allocation13 + $0x10] sm:$0xff]
      %v2116 = vld [vmem:[#allocation13 + $0x18] sm:$0xff]
      %v2117 = vld [vmem:[#allocation13 + $0x20] sm:$0xff]
      %v2118 = vld [vmem:[#allocation13 + $0x28] sm:$0xff]
      %v2119 = vld [vmem:[#allocation13 + $0x30] sm:$0xff]
      %v2120 = vld [vmem:[#allocation13 + $0x38] sm:$0xff]
      %v2121 = vld [vmem:[#allocation13 + $0x40] sm:$0xff]
      %v2122 = vld [vmem:[#allocation13 + $0x48] sm:$0xff]
      %v2123 = vld [vmem:[#allocation13 + $0x50] sm:$0xff]
      %v2124 = vld [vmem:[#allocation13 + $0x58] sm:$0xff]
      %v2125 = vld [vmem:[#allocation13 + $0x60] sm:$0xff]
      %v2126 = vld [vmem:[#allocation13 + $0x68] sm:$0xff]
      %v2127 = vld [vmem:[#allocation13 + $0x70] sm:$0xff]
      %v2128 = vld [vmem:[#allocation13 + $0x78] sm:$0xff]
      %v2129 = vld [vmem:[%s5] sm:$0x1]
      %v2131 = vperm.slane %v2129, 0
      %2133 = vmatpush.msra.mxu0 %v2128
      %2134 = vmatpush.msra.mxu0 %v2127
      %2135 = vmatpush.msra.mxu0 %v2126
      %2136 = vmatpush.msra.mxu0 %v2125
      %2137 = vmatpush.msra.mxu0 %v2124
      %2138 = vmatpush.msra.mxu0 %v2123
      %2139 = vmatpush.msra.mxu0 %v2122
      %2140 = vmatpush.msra.mxu0 %v2121
      %2141 = vmatpush.msra.mxu0 %v2120
      %2142 = vmatpush.msra.mxu0 %v2119
      %2143 = vmatpush.msra.mxu0 %v2118
      %2144 = vmatpush.msra.mxu0 %v2117
      %2145 = vmatpush.msra.mxu0 %v2116
      %2146 = vmatpush.msra.mxu0 %v2115
      %2147 = vmatpush.msra.mxu0 %v2114
      %2148 = vmatpush.msra.mxu0 %v2113
      %2149 = vmatmul.f32.gmra.mxu0 %v2107
      %v2150 = vpop.f32.mrf.mxu0
      %v2151 = vadd.f32 %v2131, %v2150
      %2152 = vdwg.mxu0
      %2153 = vst [vmem:[#allocation14] sm:$0xff] %v2151
    $region53: #{tpu_custom_call.1} parent=1 // pred_fallthru
      _
    // Predicated region
    $region54: #{tpu_custom_call.1} parent=1 // pred_check
      _
    $region55: #{tpu_custom_call.1} parent=1 // pred_check_branch
      %2155 = sbr.rel (0) target = $region57
    $region56: #{tpu_custom_call.1} parent=1 // pred_region
      %2157 = vsyncadd [#allocation7], 0
      %s2159 = sshll.u32 [#allocation14], 4
      %s2160 = int_to_ptr.vmem [resolvable:$true] %s2159
      %s2161 = sshll.u32 %s6, 4
      %s2162 = int_to_ptr.hbm [resolvable:$true] %s2161
      %2164 = dma.vmem_to_hbm [thread:$0]  %s2160, 128, %s2162, [#allocation7]
    $region57: #{tpu_custom_call.1} parent=1 // pred_fallthru
      _
    // Predicated region
    $region58: #{tpu_custom_call.1} parent=1 // pred_check
      _
    $region59: #{tpu_custom_call.1} parent=1 // pred_check_branch
      %2166 = sbr.rel (0) target = $region61
    $region60: #{tpu_custom_call.1} parent=1 // pred_region
      %2168 = dma.done [#allocation7], 128
    $region61: #{tpu_custom_call.1} parent=1 // pred_fallthru
      _
    %2169 = vsyncpa [#allocation6], 1
    %2170 = vsyncpa [#allocation9], 1
    %2171 = vsyncpa [#allocation12], 1
    %2172 = vsyncpa [#allocation7], 1

// kernel: tpu_custom_call.1
$region0: #{tpu_custom_call.1}
  #allocation0 [shape = 'u32[]', space=smem, size = 0x4, offset = 0x4, fixed_abs, tag = 'smem constant byte address 0x4 - core index']
  #allocation1 [shape = 'u32[72,128]{1,0:T(1,128)}', space=vmem, size = 0x9000, scoped, tag = 'internal scratch']
  #allocation2 [shape = 'f32[8,128]{1,0:T(8,128)}', space=vmem, size = 0x1000, scoped, tag = 'scratch operand']
  #allocation3 [shape = 'f32[8,128]{1,0:T(8,128)}', space=vmem, size = 0x1000, scoped, tag = 'scratch operand']
  #allocation4 [shape = 'f32[64,512]{1,0:T(8,128)}', space=vmem, size = 0x20000, scoped, tag = 'scratch operand']
  %s0 = inlined_call_operand.hbm [shape: f32[8,8,128], index: 0, kind: input, shape index: {}]
  %s1 = inlined_call_operand.hbm [shape: f32[128,512], index: 1, kind: input, shape index: {}]
  %s2 = inlined_call_operand.hbm [shape: f32[128,512], index: 2, kind: input, shape index: {}]
  %s3 = inlined_call_operand.hbm [shape: f32[1,512], index: 3, kind: input, shape index: {}]
  %s4 = inlined_call_operand.hbm [shape: f32[128,128], index: 4, kind: input, shape index: {}]
  %s5 = inlined_call_operand.vmem [shape: f32[1,128], index: 5, kind: input, shape index: {}]
  %s6 = inlined_call_operand.hbm [shape: f32[8,128], index: 6, kind: output, shape index: {}]
  %s7 = sld [smem:[#allocation0]]
  $region62: #{tpu_custom_call.1} parent=0
    _
  %s9 = ssub.s32 1, %s7
  %s10 = scalar_select 0, %s9, %s7
  $region1: #{tpu_custom_call.1} parent=0
    #allocation5 [shape = 'u8[32768]{0}', space=vmem, size = 0x8000, scoped, tag = 'input window, operand 0, single buffered']
    #allocation6 [shape = 's32[1]{0}', space=sflag, size = 0x4, scoped, tag = 'scoped memory for tpu_custom_call.1']
    #allocation7 [shape = 's32[1]{0}', space=sflag, size = 0x4, scoped, tag = 'scoped memory for tpu_custom_call.1']
    #allocation8 [shape = 'u8[262144]{0}', space=vmem, size = 0x40000, scoped, tag = 'input window, operand 1, single buffered']
    #allocation9 [shape = 's32[1]{0}', space=sflag, size = 0x4, scoped, tag = 'scoped memory for tpu_custom_call.1']
    #allocation10 [shape = 'u8[262144]{0}', space=vmem, size = 0x40000, scoped, tag = 'input window, operand 2, single buffered']
    #allocation11 [shape = 'u8[2048]{0}', space=vmem, size = 0x800, scoped, tag = 'input window, operand 3, single buffered']
    #allocation12 [shape = 's32[1]{0}', space=sflag, size = 0x4, scoped, tag = 'scoped memory for tpu_custom_call.1']
    #allocation13 [shape = 'u8[65536]{0}', space=vmem, size = 0x10000, scoped, tag = 'input window, operand 4, single buffered']
    #allocation14 [shape = 'u8[4096]{0}', space=vmem, size = 0x1000, scoped, tag = 'output window, operand 0, single buffered']
    %11 = vsyncpa [#allocation6], 0
    %12 = vsyncpa [#allocation9], 0
    %13 = vsyncpa [#allocation12], 0
    %14 = vsyncpa [#allocation7], 0
    // Predicated region
    $region2: #{tpu_custom_call.1} parent=1 // pred_check
      _
    $region3: #{tpu_custom_call.1} parent=1 // pred_check_branch
      %16 = sbr.rel (0) target = $region5
    $region4: #{tpu_custom_call.1} parent=1 // pred_region
      %18 = vsyncadd [#allocation6], 0
      %s19 = sshll.u32 %s0, 4
      %s20 = int_to_ptr.hbm [resolvable:$true] %s19
      %s21 = sshll.u32 [#allocation5], 4
      %s22 = int_to_ptr.vmem [resolvable:$true] %s21
      %27 = dma.hbm_to_vmem [thread:$0]  %s20, 1024, %s22, [#allocation6], 128, 128, 8
    $region5: #{tpu_custom_call.1} parent=1 // pred_fallthru
      _
    // Predicated region
    $region6: #{tpu_custom_call.1} parent=1 // pred_check
      _
    $region7: #{tpu_custom_call.1} parent=1 // pred_check_branch
      %29 = sbr.rel (0) target = $region9
    $region8: #{tpu_custom_call.1} parent=1 // pred_region
      %31 = vsyncadd [#allocation9], 0
      %s32 = sshll.u32 %s1, 4
      %s33 = int_to_ptr.hbm [resolvable:$true] %s32
      %s34 = sshll.u32 [#allocation8], 4
      %s35 = int_to_ptr.vmem [resolvable:$true] %s34
      %40 = dma.hbm_to_vmem [thread:$0]  %s33, 8192, %s35, [#allocation9], 512, 512, 32
    $region9: #{tpu_custom_call.1} parent=1 // pred_fallthru
      _
    // Predicated region
    $region10: #{tpu_custom_call.1} parent=1 // pred_check
      _
    $region11: #{tpu_custom_call.1} parent=1 // pred_check_branch
      %42 = sbr.rel (0) target = $region13
    $region12: #{tpu_custom_call.1} parent=1 // pred_region
      %44 = vsyncadd [#allocation9], 0
      %s45 = sshll.u32 %s2, 4
      %s46 = int_to_ptr.hbm [resolvable:$true] %s45
      %s47 = sshll.u32 [#allocation10], 4
      %s48 = int_to_ptr.vmem [resolvable:$true] %s47
      %53 = dma.hbm_to_vmem [thread:$0]  %s46, 8192, %s48, [#allocation9], 512, 512, 32
    $region13: #{tpu_custom_call.1} parent=1 // pred_fallthru
      _
    // Predicated region
    $region14: #{tpu_custom_call.1} parent=1 // pred_check
      _
    $region15: #{tpu_custom_call.1} parent=1 // pred_check_branch
      %55 = sbr.rel (0) target = $region17
    $region16: #{tpu_custom_call.1} parent=1 // pred_region
      %57 = vsyncadd [#allocation12], 0
      %s59 = sshll.u32 %s3, 4
      %s60 = int_to_ptr.hbm [resolvable:$true] %s59
      %s61 = sshll.u32 [#allocation11], 4
      %s62 = int_to_ptr.vmem [resolvable:$true] %s61
      %64 = dma.hbm_to_vmem [thread:$0]  %s60, 64, %s62, [#allocation12]
    $region17: #{tpu_custom_call.1} parent=1 // pred_fallthru
      _
    // Predicated region
    $region18: #{tpu_custom_call.1} parent=1 // pred_check
      _
    $region19: #{tpu_custom_call.1} parent=1 // pred_check_branch
      %66 = sbr.rel (0) target = $region21
    $region20: #{tpu_custom_call.1} parent=1 // pred_region
      %68 = vsyncadd [#allocation12], 0
      %s69 = sshll.u32 %s4, 4
      %s70 = int_to_ptr.hbm [resolvable:$true] %s69
      %s71 = sshll.u32 [#allocation13], 4
      %s72 = int_to_ptr.vmem [resolvable:$true] %s71
      %77 = dma.hbm_to_vmem [thread:$0]  %s70, 2048, %s72, [#allocation12], 128, 128, 8
    $region21: #{tpu_custom_call.1} parent=1 // pred_fallthru
      _
    // Predicated region
    $region22: #{tpu_custom_call.1} parent=1 // pred_check
      _
    $region23: #{tpu_custom_call.1} parent=1 // pred_check_branch
      %79 = sbr.rel (0) target = $region25
    $region24: #{tpu_custom_call.1} parent=1 // pred_region
      _
    $region25: #{tpu_custom_call.1} parent=1 // pred_fallthru
      _
    // Predicated region
    $region26: #{tpu_custom_call.1} parent=1 // pred_check
      _
    $region27: #{tpu_custom_call.1} parent=1 // pred_check_branch
      %81 = sbr.rel (0) target = $region29
    $region28: #{tpu_custom_call.1} parent=1 // pred_region
      %83 = dma.done [#allocation6], 1024
    $region29: #{tpu_custom_call.1} parent=1 // pred_fallthru
      _
    // Predicated region
    $region30: #{tpu_custom_call.1} parent=1 // pred_check
      _
    $region31: #{tpu_custom_call.1} parent=1 // pred_check_branch
      %85 = sbr.rel (0) target = $region33
    $region32: #{tpu_custom_call.1} parent=1 // pred_region
      %87 = dma.done [#allocation9], 8192
    $region33: #{tpu_custom_call.1} parent=1 // pred_fallthru
      _
    // Predicated region
    $region34: #{tpu_custom_call.1} parent=1 // pred_check
      _
    $region35: #{tpu_custom_call.1} parent=1 // pred_check_branch
      %89 = sbr.rel (0) target = $region37
    $region36: #{tpu_custom_call.1} parent=1 // pred_region
      %91 = dma.done [#allocation9], 8192
    $region37: #{tpu_custom_call.1} parent=1 // pred_fallthru
      _
    // Predicated region
    $region38: #{tpu_custom_call.1} parent=1 // pred_check
      _
    $region39: #{tpu_custom_call.1} parent=1 // pred_check_branch
      %93 = sbr.rel (0) target = $region41
    $region40: #{tpu_custom_call.1} parent=1 // pred_region
      %95 = dma.done [#allocation12], 64
    $region41: #{tpu_custom_call.1} parent=1 // pred_fallthru
      _
    // Predicated region
    $region42: #{tpu_custom_call.1} parent=1 // pred_check
      _
    $region43: #{tpu_custom_call.1} parent=1 // pred_check_branch
      %97 = sbr.rel (0) target = $region45
    $region44: #{tpu_custom_call.1} parent=1 // pred_region
      %99 = dma.done [#allocation12], 2048
    $region45: #{tpu_custom_call.1} parent=1 // pred_fallthru
      _
    %p100 = scmp.eq.s32.totalorder 0, 0
    // Predicated region
    $region46: #{tpu_custom_call.1} parent=1 // pred_check
      %p101 = pneg %p100
    $region47: #{tpu_custom_call.1} parent=1 // pred_check_branch
      %103 = sbr.rel (%p101) target = $region49
    $region48: #{tpu_custom_call.1} parent=1 // pred_region
      %104 = vst [vmem:[#allocation2] sm:$0xff] 0.0
      %105 = vst [vmem:[#allocation3] sm:$0xff] 0.0
    $region49: #{tpu_custom_call.1} parent=1 // pred_fallthru
      _
    %v106 = vld [vmem:[#allocation5] sm:$0xff]
    %v107 = vld [vmem:[#allocation5 + $0x8] sm:$0xff]
    %v108 = vld [vmem:[#allocation5 + $0x10] sm:$0xff]
    %v109 = vld [vmem:[#allocation5 + $0x18] sm:$0xff]
    %v110 = vld [vmem:[#allocation5 + $0x20] sm:$0xff]
    %v111 = vld [vmem:[#allocation5 + $0x28] sm:$0xff]
    %v112 = vld [vmem:[#allocation5 + $0x30] sm:$0xff]
    %v113 = vld [vmem:[#allocation5 + $0x38] sm:$0xff]
    %v114 = vld [vmem:[#allocation8] sm:$0xff]
    %v115 = vld [vmem:[#allocation8 + $0x8] sm:$0xff]
    %v116 = vld [vmem:[#allocation8 + $0x10] sm:$0xff]
    %v117 = vld [vmem:[#allocation8 + $0x18] sm:$0xff]
    %v118 = vld [vmem:[#allocation8 + $0x20] sm:$0xff]
    %v119 = vld [vmem:[#allocation8 + $0x28] sm:$0xff]
    %v120 = vld [vmem:[#allocation8 + $0x30] sm:$0xff]
    %v121 = vld [vmem:[#allocation8 + $0x38] sm:$0xff]
    %v122 = vld [vmem:[#allocation8 + $0x40] sm:$0xff]
    %v123 = vld [vmem:[#allocation8 + $0x48] sm:$0xff]
    %v124 = vld [vmem:[#allocation8 + $0x50] sm:$0xff]
    %v125 = vld [vmem:[#allocation8 + $0x58] sm:$0xff]
    %v126 = vld [vmem:[#allocation8 + $0x60] sm:$0xff]
    %v127 = vld [vmem:[#allocation8 + $0x68] sm:$0xff]
    %v128 = vld [vmem:[#allocation8 + $0x70] sm:$0xff]
    %v129 = vld [vmem:[#allocation8 + $0x78] sm:$0xff]
    %v130 = vld [vmem:[#allocation8 + $0x80] sm:$0xff]
    %v131 = vld [vmem:[#allocation8 + $0x88] sm:$0xff]
    %v132 = vld [vmem:[#allocation8 + $0x90] sm:$0xff]
    %v133 = vld [vmem:[#allocation8 + $0x98] sm:$0xff]
    %v134 = vld [vmem:[#allocation8 + $0xa0] sm:$0xff]
    %v135 = vld [vmem:[#allocation8 + $0xa8] sm:$0xff]
    %v136 = vld [vmem:[#allocation8 + $0xb0] sm:$0xff]
    %v137 = vld [vmem:[#allocation8 + $0xb8] sm:$0xff]
    %v138 = vld [vmem:[#allocation8 + $0xc0] sm:$0xff]
    %v139 = vld [vmem:[#allocation8 + $0xc8] sm:$0xff]
    %v140 = vld [vmem:[#allocation8 + $0xd0] sm:$0xff]
    %v141 = vld [vmem:[#allocation8 + $0xd8] sm:$0xff]
    %v142 = vld [vmem:[#allocation8 + $0xe0] sm:$0xff]
    %v143 = vld [vmem:[#allocation8 + $0xe8] sm:$0xff]
    %v144 = vld [vmem:[#allocation8 + $0xf0] sm:$0xff]
    %v145 = vld [vmem:[#allocation8 + $0xf8] sm:$0xff]
    %v146 = vld [vmem:[#allocation8 + $0x100] sm:$0xff]
    %v147 = vld [vmem:[#allocation8 + $0x108] sm:$0xff]
    %v148 = vld [vmem:[#allocation8 + $0x110] sm:$0xff]
    %v149 = vld [vmem:[#allocation8 + $0x118] sm:$0xff]
    %v150 = vld [vmem:[#allocation8 + $0x120] sm:$0xff]
    %v151 = vld [vmem:[#allocation8 + $0x128] sm:$0xff]
    %v152 = vld [vmem:[#allocation8 + $0x130] sm:$0xff]
    %v153 = vld [vmem:[#allocation8 + $0x138] sm:$0xff]
    %v154 = vld [vmem:[#allocation8 + $0x140] sm:$0xff]
    %v155 = vld [vmem:[#allocation8 + $0x148] sm:$0xff]
    %v156 = vld [vmem:[#allocation8 + $0x150] sm:$0xff]
    %v157 = vld [vmem:[#allocation8 + $0x158] sm:$0xff]
    %v158 = vld [vmem:[#allocation8 + $0x160] sm:$0xff]
    %v159 = vld [vmem:[#allocation8 + $0x168] sm:$0xff]
    %v160 = vld [vmem:[#allocation8 + $0x170] sm:$0xff]
    %v161 = vld [vmem:[#allocation8 + $0x178] sm:$0xff]
    %v162 = vld [vmem:[#allocation8 + $0x180] sm:$0xff]
    %v163 = vld [vmem:[#allocation8 + $0x188] sm:$0xff]
    %v164 = vld [vmem:[#allocation8 + $0x190] sm:$0xff]
    %v165 = vld [vmem:[#allocation8 + $0x198] sm:$0xff]
    %v166 = vld [vmem:[#allocation8 + $0x1a0] sm:$0xff]
    %v167 = vld [vmem:[#allocation8 + $0x1a8] sm:$0xff]
    %v168 = vld [vmem:[#allocation8 + $0x1b0] sm:$0xff]
    %v169 = vld [vmem:[#allocation8 + $0x1b8] sm:$0xff]
    %v170 = vld [vmem:[#allocation8 + $0x1c0] sm:$0xff]
    %v171 = vld [vmem:[#allocation8 + $0x1c8] sm:$0xff]
    %v172 = vld [vmem:[#allocation8 + $0x1d0] sm:$0xff]
    %v173 = vld [vmem:[#allocation8 + $0x1d8] sm:$0xff]
    %v174 = vld [vmem:[#allocation8 + $0x1e0] sm:$0xff]
    %v175 = vld [vmem:[#allocation8 + $0x1e8] sm:$0xff]
    %v176 = vld [vmem:[#allocation8 + $0x1f0] sm:$0xff]
    %v177 = vld [vmem:[#allocation8 + $0x1f8] sm:$0xff]
    %v178 = vld [vmem:[#allocation11] sm:$0xf]
    %v180 = vperm.slane %v178, 0
    %v181 = vperm.slane %v178, 1
    %v182 = vperm.slane %v178, 2
    %v183 = vperm.slane %v178, 3
    %188 = vmatpush.msra.mxu0 %v174
    %189 = vmatpush.msra.mxu0 %v170
    %190 = vmatpush.msra.mxu0 %v166
    %191 = vmatpush.msra.mxu0 %v162
    %192 = vmatpush.msra.mxu0 %v158
    %193 = vmatpush.msra.mxu0 %v154
    %194 = vmatpush.msra.mxu0 %v150
    %195 = vmatpush.msra.mxu0 %v146
    %196 = vmatpush.msra.mxu0 %v142
    %197 = vmatpush.msra.mxu0 %v138
    %198 = vmatpush.msra.mxu0 %v134
    %199 = vmatpush.msra.mxu0 %v130
    %200 = vmatpush.msra.mxu0 %v126
    %201 = vmatpush.msra.mxu0 %v122
    %202 = vmatpush.msra.mxu0 %v118
    %203 = vmatpush.msra.mxu0 %v114
    %204 = vmatmul.f32.gmra.mxu0 %v106
    %v205 = vpop.f32.mrf.mxu0
    %v206 = vadd.f32 %v180, %v205
    %207 = vmatmul.f32.gmra.mxu0 %v107
    %v208 = vpop.f32.mrf.mxu0
    %v209 = vadd.f32 %v180, %v208
    %210 = vdwg.mxu0
    %211 = vmatpush.msra.mxu0 %v175
    %212 = vmatpush.msra.mxu0 %v171
    %213 = vmatpush.msra.mxu0 %v167
    %214 = vmatpush.msra.mxu0 %v163
    %215 = vmatpush.msra.mxu0 %v159
    %216 = vmatpush.msra.mxu0 %v155
    %217 = vmatpush.msra.mxu0 %v151
    %218 = vmatpush.msra.mxu0 %v147
    %219 = vmatpush.msra.mxu0 %v143
    %220 = vmatpush.msra.mxu0 %v139
    %221 = vmatpush.msra.mxu0 %v135
    %222 = vmatpush.msra.mxu0 %v131
    %223 = vmatpush.msra.mxu0 %v127
    %224 = vmatpush.msra.mxu0 %v123
    %225 = vmatpush.msra.mxu0 %v119
    %226 = vmatpush.msra.mxu0 %v115
    %227 = vmatmul.f32.gmra.mxu0 %v106
    %v228 = vpop.f32.mrf.mxu0
    %v229 = vadd.f32 %v181, %v228
    %230 = vmatmul.f32.gmra.mxu0 %v107
    %v231 = vpop.f32.mrf.mxu0
    %v232 = vadd.f32 %v181, %v231
    %233 = vdwg.mxu0
    %234 = vmatpush.msra.mxu0 %v176
    %235 = vmatpush.msra.mxu0 %v172
    %236 = vmatpush.msra.mxu0 %v168
    %237 = vmatpush.msra.mxu0 %v164
    %238 = vmatpush.msra.mxu0 %v160
    %239 = vmatpush.msra.mxu0 %v156
    %240 = vmatpush.msra.mxu0 %v152
    %241 = vmatpush.msra.mxu0 %v148
    %242 = vmatpush.msra.mxu0 %v144
    %243 = vmatpush.msra.mxu0 %v140
    %244 = vmatpush.msra.mxu0 %v136
    %245 = vmatpush.msra.mxu0 %v132
    %246 = vmatpush.msra.mxu0 %v128
    %247 = vmatpush.msra.mxu0 %v124
    %248 = vmatpush.msra.mxu0 %v120
    %249 = vmatpush.msra.mxu0 %v116
    %250 = vmatmul.f32.gmra.mxu0 %v106
    %v251 = vpop.f32.mrf.mxu0
    %v252 = vadd.f32 %v182, %v251
    %253 = vmatmul.f32.gmra.mxu0 %v107
    %v254 = vpop.f32.mrf.mxu0
    %v255 = vadd.f32 %v182, %v254
    %256 = vdwg.mxu0
    %257 = vmatpush.msra.mxu0 %v177
    %258 = vmatpush.msra.mxu0 %v173
    %259 = vmatpush.msra.mxu0 %v169
    %260 = vmatpush.msra.mxu0 %v165
    %261 = vmatpush.msra.mxu0 %v161
    %262 = vmatpush.msra.mxu0 %v157
    %263 = vmatpush.msra.mxu0 %v153
    %264 = vmatpush.msra.mxu0 %v149
    %265 = vmatpush.msra.mxu0 %v145
    %266 = vmatpush.msra.mxu0 %v141
    %267 = vmatpush.msra.mxu0 %v137
    %268 = vmatpush.msra.mxu0 %v133
    %269 = vmatpush.msra.mxu0 %v129
    %270 = vmatpush.msra.mxu0 %v125
    %271 = vmatpush.msra.mxu0 %v121
    %272 = vmatpush.msra.mxu0 %v117
    %273 = vmatmul.f32.gmra.mxu0 %v106
    %v274 = vpop.f32.mrf.mxu0
    %v275 = vadd.f32 %v183, %v274
    %276 = vmatmul.f32.gmra.mxu0 %v107
    %v277 = vpop.f32.mrf.mxu0
    %v278 = vadd.f32 %v183, %v277
    %279 = vdwg.mxu0
    %280 = vst [vmem:[#allocation4] sm:$0xff] %v206
    %281 = vst [vmem:[#allocation4 + $0x8] sm:$0xff] %v229
    %282 = vst [vmem:[#allocation4 + $0x10] sm:$0xff] %v252
    %283 = vst [vmem:[#allocation4 + $0x18] sm:$0xff] %v275
    %284 = vst [vmem:[#allocation4 + $0x20] sm:$0xff] %v209
    %285 = vst [vmem:[#allocation4 + $0x28] sm:$0xff] %v232
    %286 = vst [vmem:[#allocation4 + $0x30] sm:$0xff] %v255
    %287 = vst [vmem:[#allocation4 + $0x38] sm:$0xff] %v278
    %v288 = vld [vmem:[#allocation8] sm:$0xff]
    %v289 = vld [vmem:[#allocation8 + $0x8] sm:$0xff]
    %v290 = vld [vmem:[#allocation8 + $0x10] sm:$0xff]
    %v291 = vld [vmem:[#allocation8 + $0x18] sm:$0xff]
    %v292 = vld [vmem:[#allocation8 + $0x20] sm:$0xff]
    %v293 = vld [vmem:[#allocation8 + $0x28] sm:$0xff]
    %v294 = vld [vmem:[#allocation8 + $0x30] sm:$0xff]
    %v295 = vld [vmem:[#allocation8 + $0x38] sm:$0xff]
    %v296 = vld [vmem:[#allocation8 + $0x40] sm:$0xff]
    %v297 = vld [vmem:[#allocation8 + $0x48] sm:$0xff]
    %v298 = vld [vmem:[#allocation8 + $0x50] sm:$0xff]
    %v299 = vld [vmem:[#allocation8 + $0x58] sm:$0xff]
    %v300 = vld [vmem:[#allocation8 + $0x60] sm:$0xff]
    %v301 = vld [vmem:[#allocation8 + $0x68] sm:$0xff]
    %v302 = vld [vmem:[#allocation8 + $0x70] sm:$0xff]
    %v303 = vld [vmem:[#allocation8 + $0x78] sm:$0xff]
    %v304 = vld [vmem:[#allocation8 + $0x80] sm:$0xff]
    %v305 = vld [vmem:[#allocation8 + $0x88] sm:$0xff]
    %v306 = vld [vmem:[#allocation8 + $0x90] sm:$0xff]
    %v307 = vld [vmem:[#allocation8 + $0x98] sm:$0xff]
    %v308 = vld [vmem:[#allocation8 + $0xa0] sm:$0xff]
    %v309 = vld [vmem:[#allocation8 + $0xa8] sm:$0xff]
    %v310 = vld [vmem:[#allocation8 + $0xb0] sm:$0xff]
    %v311 = vld [vmem:[#allocation8 + $0xb8] sm:$0xff]
    %v312 = vld [vmem:[#allocation8 + $0xc0] sm:$0xff]
    %v313 = vld [vmem:[#allocation8 + $0xc8] sm:$0xff]
    %v314 = vld [vmem:[#allocation8 + $0xd0] sm:$0xff]
    %v315 = vld [vmem:[#allocation8 + $0xd8] sm:$0xff]
    %v316 = vld [vmem:[#allocation8 + $0xe0] sm:$0xff]
    %v317 = vld [vmem:[#allocation8 + $0xe8] sm:$0xff]
    %v318 = vld [vmem:[#allocation8 + $0xf0] sm:$0xff]
    %v319 = vld [vmem:[#allocation8 + $0xf8] sm:$0xff]
    %v320 = vld [vmem:[#allocation8 + $0x100] sm:$0xff]
    %v321 = vld [vmem:[#allocation8 + $0x108] sm:$0xff]
    %v322 = vld [vmem:[#allocation8 + $0x110] sm:$0xff]
    %v323 = vld [vmem:[#allocation8 + $0x118] sm:$0xff]
    %v324 = vld [vmem:[#allocation8 + $0x120] sm:$0xff]
    %v325 = vld [vmem:[#allocation8 + $0x128] sm:$0xff]
    %v326 = vld [vmem:[#allocation8 + $0x130] sm:$0xff]
    %v327 = vld [vmem:[#allocation8 + $0x138] sm:$0xff]
    %v328 = vld [vmem:[#allocation8 + $0x140] sm:$0xff]
    %v329 = vld [vmem:[#allocation8 + $0x148] sm:$0xff]
    %v330 = vld [vmem:[#allocation8 + $0x150] sm:$0xff]
    %v331 = vld [vmem:[#allocation8 + $0x158] sm:$0xff]
    %v332 = vld [vmem:[#allocation8 + $0x160] sm:$0xff]
    %v333 = vld [vmem:[#allocation8 + $0x168] sm:$0xff]
    %v334 = vld [vmem:[#allocation8 + $0x170] sm:$0xff]
    %v335 = vld [vmem:[#allocation8 + $0x178] sm:$0xff]
    %v336 = vld [vmem:[#allocation8 + $0x180] sm:$0xff]
    %v337 = vld [vmem:[#allocation8 + $0x188] sm:$0xff]
    %v338 = vld [vmem:[#allocation8 + $0x190] sm:$0xff]
    %v339 = vld [vmem:[#allocation8 + $0x198] sm:$0xff]
    %v340 = vld [vmem:[#allocation8 + $0x1a0] sm:$0xff]
    %v341 = vld [vmem:[#allocation8 + $0x1a8] sm:$0xff]
    %v342 = vld [vmem:[#allocation8 + $0x1b0] sm:$0xff]
    %v343 = vld [vmem:[#allocation8 + $0x1b8] sm:$0xff]
    %v344 = vld [vmem:[#allocation8 + $0x1c0] sm:$0xff]
    %v345 = vld [vmem:[#allocation8 + $0x1c8] sm:$0xff]
    %v346 = vld [vmem:[#allocation8 + $0x1d0] sm:$0xff]
    %v347 = vld [vmem:[#allocation8 + $0x1d8] sm:$0xff]
    %v348 = vld [vmem:[#allocation8 + $0x1e0] sm:$0xff]
    %v349 = vld [vmem:[#allocation8 + $0x1e8] sm:$0xff]
    %v350 = vld [vmem:[#allocation8 + $0x1f0] sm:$0xff]
    %v351 = vld [vmem:[#allocation8 + $0x1f8] sm:$0xff]
    %v352 = vld [vmem:[#allocation11] sm:$0xf]
    %v354 = vperm.slane %v352, 0
    %v355 = vperm.slane %v352, 1
    %v356 = vperm.slane %v352, 2
    %v357 = vperm.slane %v352, 3
    %362 = vmatpush.msra.mxu0 %v348
    %363 = vmatpush.msra.mxu0 %v344
    %364 = vmatpush.msra.mxu0 %v340
    %365 = vmatpush.msra.mxu0 %v336
    %366 = vmatpush.msra.mxu0 %v332
    %367 = vmatpush.msra.mxu0 %v328
    %368 = vmatpush.msra.mxu0 %v324
    %369 = vmatpush.msra.mxu0 %v320
    %370 = vmatpush.msra.mxu0 %v316
    %371 = vmatpush.msra.mxu0 %v312
    %372 = vmatpush.msra.mxu0 %v308
    %373 = vmatpush.msra.mxu0 %v304
    %374 = vmatpush.msra.mxu0 %v300
    %375 = vmatpush.msra.mxu0 %v296
    %376 = vmatpush.msra.mxu0 %v292
    %377 = vmatpush.msra.mxu0 %v288
    %378 = vmatmul.f32.gmra.mxu0 %v108
    %v379 = vpop.f32.mrf.mxu0
    %v380 = vadd.f32 %v354, %v379
    %381 = vmatmul.f32.gmra.mxu0 %v109
    %v382 = vpop.f32.mrf.mxu0
    %v383 = vadd.f32 %v354, %v382
    %384 = vdwg.mxu0
    %385 = vmatpush.msra.mxu0 %v349
    %386 = vmatpush.msra.mxu0 %v345
    %387 = vmatpush.msra.mxu0 %v341
    %388 = vmatpush.msra.mxu0 %v337
    %389 = vmatpush.msra.mxu0 %v333
    %390 = vmatpush.msra.mxu0 %v329
    %391 = vmatpush.msra.mxu0 %v325
    %392 = vmatpush.msra.mxu0 %v321
    %393 = vmatpush.msra.mxu0 %v317
    %394 = vmatpush.msra.mxu0 %v313
    %395 = vmatpush.msra.mxu0 %v309
    %396 = vmatpush.msra.mxu0 %v305
    %397 = vmatpush.msra.mxu0 %v301
    %398 = vmatpush.msra.mxu0 %v297
    %399 = vmatpush.msra.mxu0 %v293
    %400 = vmatpush.msra.mxu0 %v289
    %401 = vmatmul.f32.gmra.mxu0 %v108
    %v402 = vpop.f32.mrf.mxu0
    %v403 = vadd.f32 %v355, %v402
    %404 = vmatmul.f32.gmra.mxu0 %v109
    %v405 = vpop.f32.mrf.mxu0
    %v406 = vadd.f32 %v355, %v405
    %407 = vdwg.mxu0
    %408 = vmatpush.msra.mxu0 %v350
    %409 = vmatpush.msra.mxu0 %v346
    %410 = vmatpush.msra.mxu0 %v342
    %411 = vmatpush.msra.mxu0 %v338
    %412 = vmatpush.msra.mxu0 %v334
    %413 = vmatpush.msra.mxu0 %v330
    %414 = vmatpush.msra.mxu0 %v326
    %415 = vmatpush.msra.mxu0 %v322
    %416 = vmatpush.msra.mxu0 %v318
    %417 = vmatpush.msra.mxu0 %v314
    %418 = vmatpush.msra.mxu0 %v310
    %419 = vmatpush.msra.mxu0 %v306
    %420 = vmatpush.msra.mxu0 %v302
    %421 = vmatpush.msra.mxu0 %v298
    %422 = vmatpush.msra.mxu0 %v294
    %423 = vmatpush.msra.mxu0 %v290
    %424 = vmatmul.f32.gmra.mxu0 %v108
    %v425 = vpop.f32.mrf.mxu0
    %v426 = vadd.f32 %v356, %v425
    %427 = vmatmul.f32.gmra.mxu0 %v109
    %v428 = vpop.f32.mrf.mxu0
    %v429 = vadd.f32 %v356, %v428
    %430 = vdwg.mxu0
    %431 = vmatpush.msra.mxu0 %v351
    %432 = vmatpush.msra.mxu0 %v347
    %433 = vmatpush.msra.mxu0 %v343
    %434 = vmatpush.msra.mxu0 %v339
    %435 = vmatpush.msra.mxu0 %v335
    %436 = vmatpush.msra.mxu0 %v331
    %437 = vmatpush.msra.mxu0 %v327
    %438 = vmatpush.msra.mxu0 %v323
    %439 = vmatpush.msra.mxu0 %v319
    %440 = vmatpush.msra.mxu0 %v315
    %441 = vmatpush.msra.mxu0 %v311
    %442 = vmatpush.msra.mxu0 %v307
    %443 = vmatpush.msra.mxu0 %v303
    %444 = vmatpush.msra.mxu0 %v299
    %445 = vmatpush.msra.mxu0 %v295
    %446 = vmatpush.msra.mxu0 %v291
    %447 = vmatmul.f32.gmra.mxu0 %v108
    %v448 = vpop.f32.mrf.mxu0
    %v449 = vadd.f32 %v357, %v448
    %450 = vmatmul.f32.gmra.mxu0 %v109
    %v451 = vpop.f32.mrf.mxu0
    %v452 = vadd.f32 %v357, %v451
    %453 = vdwg.mxu0
    %454 = vst [vmem:[#allocation4 + $0x40] sm:$0xff] %v380
    %455 = vst [vmem:[#allocation4 + $0x48] sm:$0xff] %v403
    %456 = vst [vmem:[#allocation4 + $0x50] sm:$0xff] %v426
    %457 = vst [vmem:[#allocation4 + $0x58] sm:$0xff] %v449
    %458 = vst [vmem:[#allocation4 + $0x60] sm:$0xff] %v383
    %459 = vst [vmem:[#allocation4 + $0x68] sm:$0xff] %v406
    %460 = vst [vmem:[#allocation4 + $0x70] sm:$0xff] %v429
    %461 = vst [vmem:[#allocation4 + $0x78] sm:$0xff] %v452
    %v462 = vld [vmem:[#allocation8] sm:$0xff]
    %v463 = vld [vmem:[#allocation8 + $0x8] sm:$0xff]
    %v464 = vld [vmem:[#allocation8 + $0x10] sm:$0xff]
    %v465 = vld [vmem:[#allocation8 + $0x18] sm:$0xff]
    %v466 = vld [vmem:[#allocation8 + $0x20] sm:$0xff]
    %v467 = vld [vmem:[#allocation8 + $0x28] sm:$0xff]
    %v468 = vld [vmem:[#allocation8 + $0x30] sm:$0xff]
    %v469 = vld [vmem:[#allocation8 + $0x38] sm:$0xff]
    %v470 = vld [vmem:[#allocation8 + $0x40] sm:$0xff]
    %v471 = vld [vmem:[#allocation8 + $0x48] sm:$0xff]
    %v472 = vld [vmem:[#allocation8 + $0x50] sm:$0xff]
    %v473 = vld [vmem:[#allocation8 + $0x58] sm:$0xff]
    %v474 = vld [vmem:[#allocation8 + $0x60] sm:$0xff]
    %v475 = vld [vmem:[#allocation8 + $0x68] sm:$0xff]
    %v476 = vld [vmem:[#allocation8 + $0x70] sm:$0xff]
    %v477 = vld [vmem:[#allocation8 + $0x78] sm:$0xff]
    %v478 = vld [vmem:[#allocation8 + $0x80] sm:$0xff]
    %v479 = vld [vmem:[#allocation8 + $0x88] sm:$0xff]
    %v480 = vld [vmem:[#allocation8 + $0x90] sm:$0xff]
    %v481 = vld [vmem:[#allocation8 + $0x98] sm:$0xff]
    %v482 = vld [vmem:[#allocation8 + $0xa0] sm:$0xff]
    %v483 = vld [vmem:[#allocation8 + $0xa8] sm:$0xff]
    %v484 = vld [vmem:[#allocation8 + $0xb0] sm:$0xff]
    %v485 = vld [vmem:[#allocation8 + $0xb8] sm:$0xff]
    %v486 = vld [vmem:[#allocation8 + $0xc0] sm:$0xff]
    %v487 = vld [vmem:[#allocation8 + $0xc8] sm:$0xff]
    %v488 = vld [vmem:[#allocation8 + $0xd0] sm:$0xff]
    %v489 = vld [vmem:[#allocation8 + $0xd8] sm:$0xff]
    %v490 = vld [vmem:[#allocation8 + $0xe0] sm:$0xff]
    %v491 = vld [vmem:[#allocation8 + $0xe8] sm:$0xff]
    %v492 = vld [vmem:[#allocation8 + $0xf0] sm:$0xff]
    %v493 = vld [vmem:[#allocation8 + $0xf8] sm:$0xff]
    %v494 = vld [vmem:[#allocation8 + $0x100] sm:$0xff]
    %v495 = vld [vmem:[#allocation8 + $0x108] sm:$0xff]
    %v496 = vld [vmem:[#allocation8 + $0x110] sm:$0xff]
    %v497 = vld [vmem:[#allocation8 + $0x118] sm:$0xff]
    %v498 = vld [vmem:[#allocation8 + $0x120] sm:$0xff]
    %v499 = vld [vmem:[#allocation8 + $0x128] sm:$0xff]
    %v500 = vld [vmem:[#allocation8 + $0x130] sm:$0xff]
    %v501 = vld [vmem:[#allocation8 + $0x138] sm:$0xff]
    %v502 = vld [vmem:[#allocation8 + $0x140] sm:$0xff]
    %v503 = vld [vmem:[#allocation8 + $0x148] sm:$0xff]
    %v504 = vld [vmem:[#allocation8 + $0x150] sm:$0xff]
    %v505 = vld [vmem:[#allocation8 + $0x158] sm:$0xff]
    %v506 = vld [vmem:[#allocation8 + $0x160] sm:$0xff]
    %v507 = vld [vmem:[#allocation8 + $0x168] sm:$0xff]
    %v508 = vld [vmem:[#allocation8 + $0x170] sm:$0xff]
    %v509 = vld [vmem:[#allocation8 + $0x178] sm:$0xff]
    %v510 = vld [vmem:[#allocation8 + $0x180] sm:$0xff]
    %v511 = vld [vmem:[#allocation8 + $0x188] sm:$0xff]
    %v512 = vld [vmem:[#allocation8 + $0x190] sm:$0xff]
    %v513 = vld [vmem:[#allocation8 + $0x198] sm:$0xff]
    %v514 = vld [vmem:[#allocation8 + $0x1a0] sm:$0xff]
    %v515 = vld [vmem:[#allocation8 + $0x1a8] sm:$0xff]
    %v516 = vld [vmem:[#allocation8 + $0x1b0] sm:$0xff]
    %v517 = vld [vmem:[#allocation8 + $0x1b8] sm:$0xff]
    %v518 = vld [vmem:[#allocation8 + $0x1c0] sm:$0xff]
    %v519 = vld [vmem:[#allocation8 + $0x1c8] sm:$0xff]
    %v520 = vld [vmem:[#allocation8 + $0x1d0] sm:$0xff]
    %v521 = vld [vmem:[#allocation8 + $0x1d8] sm:$0xff]
    %v522 = vld [vmem:[#allocation8 + $0x1e0] sm:$0xff]
    %v523 = vld [vmem:[#allocation8 + $0x1e8] sm:$0xff]
    %v524 = vld [vmem:[#allocation8 + $0x1f0] sm:$0xff]
    %v525 = vld [vmem:[#allocation8 + $0x1f8] sm:$0xff]
    %v526 = vld [vmem:[#allocation11] sm:$0xf]
    %v528 = vperm.slane %v526, 0
    %v529 = vperm.slane %v526, 1
    %v530 = vperm.slane %v526, 2
    %v531 = vperm.slane %v526, 3
    %536 = vmatpush.msra.mxu0 %v522
    %537 = vmatpush.msra.mxu0 %v518
    %538 = vmatpush.msra.mxu0 %v514
    %539 = vmatpush.msra.mxu0 %v510
    %540 = vmatpush.msra.mxu0 %v506
    %541 = vmatpush.msra.mxu0 %v502
    %542 = vmatpush.msra.mxu0 %v498
    %543 = vmatpush.msra.mxu0 %v494
    %544 = vmatpush.msra.mxu0 %v490
    %545 = vmatpush.msra.mxu0 %v486
    %546 = vmatpush.msra.mxu0 %v482
    %547 = vmatpush.msra.mxu0 %v478
    %548 = vmatpush.msra.mxu0 %v474
    %549 = vmatpush.msra.mxu0 %v470
    %550 = vmatpush.msra.mxu0 %v466
    %551 = vmatpush.msra.mxu0 %v462
    %552 = vmatmul.f32.gmra.mxu0 %v110
    %v553 = vpop.f32.mrf.mxu0
    %v554 = vadd.f32 %v528, %v553
    %555 = vmatmul.f32.gmra.mxu0 %v111
    %v556 = vpop.f32.mrf.mxu0
    %v557 = vadd.f32 %v528, %v556
    %558 = vdwg.mxu0
    %559 = vmatpush.msra.mxu0 %v523
    %560 = vmatpush.msra.mxu0 %v519
    %561 = vmatpush.msra.mxu0 %v515
    %562 = vmatpush.msra.mxu0 %v511
    %563 = vmatpush.msra.mxu0 %v507
    %564 = vmatpush.msra.mxu0 %v503
    %565 = vmatpush.msra.mxu0 %v499
    %566 = vmatpush.msra.mxu0 %v495
    %567 = vmatpush.msra.mxu0 %v491
    %568 = vmatpush.msra.mxu0 %v487
    %569 = vmatpush.msra.mxu0 %v483
    %570 = vmatpush.msra.mxu0 %v479
    %571 = vmatpush.msra.mxu0 %v475
    %572 = vmatpush.msra.mxu0 %v471
    %573 = vmatpush.msra.mxu0 %v467
    %574 = vmatpush.msra.mxu0 %v463
    %575 = vmatmul.f32.gmra.mxu0 %v110
    %v576 = vpop.f32.mrf.mxu0
    %v577 = vadd.f32 %v529, %v576
    %578 = vmatmul.f32.gmra.mxu0 %v111
    %v579 = vpop.f32.mrf.mxu0
    %v580 = vadd.f32 %v529, %v579
    %581 = vdwg.mxu0
    %582 = vmatpush.msra.mxu0 %v524
    %583 = vmatpush.msra.mxu0 %v520
    %584 = vmatpush.msra.mxu0 %v516
    %585 = vmatpush.msra.mxu0 %v512
    %586 = vmatpush.msra.mxu0 %v508
    %587 = vmatpush.msra.mxu0 %v504
    %588 = vmatpush.msra.mxu0 %v500
    %589 = vmatpush.msra.mxu0 %v496
    %590 = vmatpush.msra.mxu0 %v492
    %591 = vmatpush.msra.mxu0 %v488
    %592 = vmatpush.msra.mxu0 %v484
    %593 = vmatpush.msra.mxu0 %v480
    %594 = vmatpush.msra.mxu0 %v476
    %595 = vmatpush.msra.mxu0 %v472
    %596 = vmatpush.msra.mxu0 %v468
    %597 = vmatpush.msra.mxu0 %v464
    %598 = vmatmul.f32.gmra.mxu0 %v110
    %v599 = vpop.f32.mrf.mxu0
    %v600 = vadd.f32 %v530, %v599
    %601 = vmatmul.f32.gmra.mxu0 %v111
    %v602 = vpop.f32.mrf.mxu0
    %v603 = vadd.f32 %v530, %v602
    %604 = vdwg.mxu0
    %605 = vmatpush.msra.mxu0 %v525
    %606 = vmatpush.msra.mxu0 %v521
    %607 = vmatpush.msra.mxu0 %v517
    %608 = vmatpush.msra.mxu0 %v513
    %609 = vmatpush.msra.mxu0 %v509
    %610 = vmatpush.msra.mxu0 %v505
    %611 = vmatpush.msra.mxu0 %v501
    %612 = vmatpush.msra.mxu0 %v497
    %613 = vmatpush.msra.mxu0 %v493
    %614 = vmatpush.msra.mxu0 %v489
    %615 = vmatpush.msra.mxu0 %v485
    %616 = vmatpush.msra.mxu0 %v481
    %617 = vmatpush.msra.mxu0 %v477
    %618 = vmatpush.msra.mxu0 %v473
    %619 = vmatpush.msra.mxu0 %v469
    %620 = vmatpush.msra.mxu0 %v465
    %621 = vmatmul.f32.gmra.mxu0 %v110
    %v622 = vpop.f32.mrf.mxu0
    %v623 = vadd.f32 %v531, %v622
    %624 = vmatmul.f32.gmra.mxu0 %v111
    %v625 = vpop.f32.mrf.mxu0
    %v626 = vadd.f32 %v531, %v625
    %627 = vdwg.mxu0
    %628 = vst [vmem:[#allocation4 + $0x80] sm:$0xff] %v554
    %629 = vst [vmem:[#allocation4 + $0x88] sm:$0xff] %v577
    %630 = vst [vmem:[#allocation4 + $0x90] sm:$0xff] %v600
    %631 = vst [vmem:[#allocation4 + $0x98] sm:$0xff] %v623
    %632 = vst [vmem:[#allocation4 + $0xa0] sm:$0xff] %v557
    %633 = vst [vmem:[#allocation4 + $0xa8] sm:$0xff] %v580
    %634 = vst [vmem:[#allocation4 + $0xb0] sm:$0xff] %v603
    %635 = vst [vmem:[#allocation4 + $0xb8] sm:$0xff] %v626
    %v636 = vld [vmem:[#allocation8] sm:$0xff]
    %v637 = vld [vmem:[#allocation8 + $0x8] sm:$0xff]
    %v638 = vld [vmem:[#allocation8 + $0x10] sm:$0xff]
    %v639 = vld [vmem:[#allocation8 + $0x18] sm:$0xff]
    %v640 = vld [vmem:[#allocation8 + $0x20] sm:$0xff]
    %v641 = vld [vmem:[#allocation8 + $0x28] sm:$0xff]
    %v642 = vld [vmem:[#allocation8 + $0x30] sm:$0xff]
    %v643 = vld [vmem:[#allocation8 + $0x38] sm:$0xff]
    %v644 = vld [vmem:[#allocation8 + $0x40] sm:$0xff]
    %v645 = vld [vmem:[#allocation8 + $0x48] sm:$0xff]
    %v646 = vld [vmem:[#allocation8 + $0x50] sm:$0xff]
    %v647 = vld [vmem:[#allocation8 + $0x58] sm:$0xff]
    %v648 = vld [vmem:[#allocation8 + $0x60] sm:$0xff]
    %v649 = vld [vmem:[#allocation8 + $0x68] sm:$0xff]
    %v650 = vld [vmem:[#allocation8 + $0x70] sm:$0xff]
    %v651 = vld [vmem:[#allocation8 + $0x78] sm:$0xff]
    %v652 = vld [vmem:[#allocation8 + $0x80] sm:$0xff]
    %v653 = vld [vmem:[#allocation8 + $0x88] sm:$0xff]
    %v654 = vld [vmem:[#allocation8 + $0x90] sm:$0xff]
    %v655 = vld [vmem:[#allocation8 + $0x98] sm:$0xff]
    %v656 = vld [vmem:[#allocation8 + $0xa0] sm:$0xff]
    %v657 = vld [vmem:[#allocation8 + $0xa8] sm:$0xff]
    %v658 = vld [vmem:[#allocation8 + $0xb0] sm:$0xff]
    %v659 = vld [vmem:[#allocation8 + $0xb8] sm:$0xff]
    %v660 = vld [vmem:[#allocation8 + $0xc0] sm:$0xff]
    %v661 = vld [vmem:[#allocation8 + $0xc8] sm:$0xff]
    %v662 = vld [vmem:[#allocation8 + $0xd0] sm:$0xff]
    %v663 = vld [vmem:[#allocation8 + $0xd8] sm:$0xff]
    %v664 = vld [vmem:[#allocation8 + $0xe0] sm:$0xff]
    %v665 = vld [vmem:[#allocation8 + $0xe8] sm:$0xff]
    %v666 = vld [vmem:[#allocation8 + $0xf0] sm:$0xff]
    %v667 = vld [vmem:[#allocation8 + $0xf8] sm:$0xff]
    %v668 = vld [vmem:[#allocation8 + $0x100] sm:$0xff]
    %v669 = vld [vmem:[#allocation8 + $0x108] sm:$0xff]
    %v670 = vld [vmem:[#allocation8 + $0x110] sm:$0xff]
    %v671 = vld [vmem:[#allocation8 + $0x118] sm:$0xff]
    %v672 = vld [vmem:[#allocation8 + $0x120] sm:$0xff]
    %v673 = vld [vmem:[#allocation8 + $0x128] sm:$0xff]
    %v674 = vld [vmem:[#allocation8 + $0x130] sm:$0xff]
    %v675 = vld [vmem:[#allocation8 + $0x138] sm:$0xff]
    %v676 = vld [vmem:[#allocation8 + $0x140] sm:$0xff]
    %v677 = vld [vmem:[#allocation8 + $0x148] sm:$0xff]
    %v678 = vld [vmem:[#allocation8 + $0x150] sm:$0xff]
    %v679 = vld [vmem:[#allocation8 + $0x158] sm:$0xff]
    %v680 = vld [vmem:[#allocation8 + $0x160] sm:$0xff]
    %v681 = vld [vmem:[#allocation8 + $0x168] sm:$0xff]
    %v682 = vld [vmem:[#allocation8 + $0x170] sm:$0xff]
    %v683 = vld [vmem:[#allocation8 + $0x178] sm:$0xff]
    %v684 = vld [vmem:[#allocation8 + $0x180] sm:$0xff]
    %v685 = vld [vmem:[#allocation8 + $0x188] sm:$0xff]
    %v686 = vld [vmem:[#allocation8 + $0x190] sm:$0xff]
    %v687 = vld [vmem:[#allocation8 + $0x198] sm:$0xff]
    %v688 = vld [vmem:[#allocation8 + $0x1a0] sm:$0xff]
    %v689 = vld [vmem:[#allocation8 + $0x1a8] sm:$0xff]
    %v690 = vld [vmem:[#allocation8 + $0x1b0] sm:$0xff]
    %v691 = vld [vmem:[#allocation8 + $0x1b8] sm:$0xff]
    %v692 = vld [vmem:[#allocation8 + $0x1c0] sm:$0xff]
    %v693 = vld [vmem:[#allocation8 + $0x1c8] sm:$0xff]
    %v694 = vld [vmem:[#allocation8 + $0x1d0] sm:$0xff]
    %v695 = vld [vmem:[#allocation8 + $0x1d8] sm:$0xff]
    %v696 = vld [vmem:[#allocation8 + $0x1e0] sm:$0xff]
    %v697 = vld [vmem:[#allocation8 + $0x1e8] sm:$0xff]
    %v698 = vld [vmem:[#allocation8 + $0x1f0] sm:$0xff]
    %v699 = vld [vmem:[#allocation8 + $0x1f8] sm:$0xff]
    %v700 = vld [vmem:[#allocation11] sm:$0xf]
    %v702 = vperm.slane %v700, 0
    %v703 = vperm.slane %v700, 1
    %v704 = vperm.slane %v700, 2
    %v705 = vperm.slane %v700, 3
    %710 = vmatpush.msra.mxu0 %v696
    %711 = vmatpush.msra.mxu0 %v692
    %712 = vmatpush.msra.mxu0 %v688
    %713 = vmatpush.msra.mxu0 %v684
    %714 = vmatpush.msra.mxu0 %v680
    %715 = vmatpush.msra.mxu0 %v676
    %716 = vmatpush.msra.mxu0 %v672
    %717 = vmatpush.msra.mxu0 %v668
    %718 = vmatpush.msra.mxu0 %v664
    %719 = vmatpush.msra.mxu0 %v660
    %720 = vmatpush.msra.mxu0 %v656
    %721 = vmatpush.msra.mxu0 %v652
    %722 = vmatpush.msra.mxu0 %v648
    %723 = vmatpush.msra.mxu0 %v644
    %724 = vmatpush.msra.mxu0 %v640
    %725 = vmatpush.msra.mxu0 %v636
    %726 = vmatmul.f32.gmra.mxu0 %v112
    %v727 = vpop.f32.mrf.mxu0
    %v728 = vadd.f32 %v702, %v727
    %729 = vmatmul.f32.gmra.mxu0 %v113
    %v730 = vpop.f32.mrf.mxu0
    %v731 = vadd.f32 %v702, %v730
    %732 = vdwg.mxu0
    %733 = vmatpush.msra.mxu0 %v697
    %734 = vmatpush.msra.mxu0 %v693
    %735 = vmatpush.msra.mxu0 %v689
    %736 = vmatpush.msra.mxu0 %v685
    %737 = vmatpush.msra.mxu0 %v681
    %738 = vmatpush.msra.mxu0 %v677
    %739 = vmatpush.msra.mxu0 %v673
    %740 = vmatpush.msra.mxu0 %v669
    %741 = vmatpush.msra.mxu0 %v665
    %742 = vmatpush.msra.mxu0 %v661
    %743 = vmatpush.msra.mxu0 %v657
    %744 = vmatpush.msra.mxu0 %v653
    %745 = vmatpush.msra.mxu0 %v649
    %746 = vmatpush.msra.mxu0 %v645
    %747 = vmatpush.msra.mxu0 %v641
    %748 = vmatpush.msra.mxu0 %v637
    %749 = vmatmul.f32.gmra.mxu0 %v112
    %v750 = vpop.f32.mrf.mxu0
    %v751 = vadd.f32 %v703, %v750
    %752 = vmatmul.f32.gmra.mxu0 %v113
    %v753 = vpop.f32.mrf.mxu0
    %v754 = vadd.f32 %v703, %v753
    %755 = vdwg.mxu0
    %756 = vmatpush.msra.mxu0 %v698
    %757 = vmatpush.msra.mxu0 %v694
    %758 = vmatpush.msra.mxu0 %v690
    %759 = vmatpush.msra.mxu0 %v686
    %760 = vmatpush.msra.mxu0 %v682
    %761 = vmatpush.msra.mxu0 %v678
    %762 = vmatpush.msra.mxu0 %v674
    %763 = vmatpush.msra.mxu0 %v670
    %764 = vmatpush.msra.mxu0 %v666
    %765 = vmatpush.msra.mxu0 %v662
    %766 = vmatpush.msra.mxu0 %v658
    %767 = vmatpush.msra.mxu0 %v654
    %768 = vmatpush.msra.mxu0 %v650
    %769 = vmatpush.msra.mxu0 %v646
    %770 = vmatpush.msra.mxu0 %v642
    %771 = vmatpush.msra.mxu0 %v638
    %772 = vmatmul.f32.gmra.mxu0 %v112
    %v773 = vpop.f32.mrf.mxu0
    %v774 = vadd.f32 %v704, %v773
    %775 = vmatmul.f32.gmra.mxu0 %v113
    %v776 = vpop.f32.mrf.mxu0
    %v777 = vadd.f32 %v704, %v776
    %778 = vdwg.mxu0
    %779 = vmatpush.msra.mxu0 %v699
    %780 = vmatpush.msra.mxu0 %v695
    %781 = vmatpush.msra.mxu0 %v691
    %782 = vmatpush.msra.mxu0 %v687
    %783 = vmatpush.msra.mxu0 %v683
    %784 = vmatpush.msra.mxu0 %v679
    %785 = vmatpush.msra.mxu0 %v675
    %786 = vmatpush.msra.mxu0 %v671
    %787 = vmatpush.msra.mxu0 %v667
    %788 = vmatpush.msra.mxu0 %v663
    %789 = vmatpush.msra.mxu0 %v659
    %790 = vmatpush.msra.mxu0 %v655
    %791 = vmatpush.msra.mxu0 %v651
    %792 = vmatpush.msra.mxu0 %v647
    %793 = vmatpush.msra.mxu0 %v643
    %794 = vmatpush.msra.mxu0 %v639
    %795 = vmatmul.f32.gmra.mxu0 %v112
    %v796 = vpop.f32.mrf.mxu0
    %v797 = vadd.f32 %v705, %v796
    %798 = vmatmul.f32.gmra.mxu0 %v113
    %v799 = vpop.f32.mrf.mxu0
    %v800 = vadd.f32 %v705, %v799
    %801 = vdwg.mxu0
    %802 = vst [vmem:[#allocation4 + $0xc0] sm:$0xff] %v728
    %803 = vst [vmem:[#allocation4 + $0xc8] sm:$0xff] %v751
    %804 = vst [vmem:[#allocation4 + $0xd0] sm:$0xff] %v774
    %805 = vst [vmem:[#allocation4 + $0xd8] sm:$0xff] %v797
    %806 = vst [vmem:[#allocation4 + $0xe0] sm:$0xff] %v731
    %807 = vst [vmem:[#allocation4 + $0xe8] sm:$0xff] %v754
    %808 = vst [vmem:[#allocation4 + $0xf0] sm:$0xff] %v777
    %809 = vst [vmem:[#allocation4 + $0xf8] sm:$0xff] %v800
    %v810 = vld [vmem:[#allocation2] sm:$0xff]
    %v811 = vld [vmem:[#allocation3] sm:$0xff]
    %s812 = smul.u32 0, 4
    %s813 = smul.addr %s812, 8
    %s814 = scalar_lea.vmem [#allocation4], %s813
    %v815 = vld [vmem:[%s814] sm:$0xff]
    %v816 = vld [vmem:[%s814 + $0x8] sm:$0xff]
    %v817 = vld [vmem:[%s814 + $0x10] sm:$0xff]
    %v818 = vld [vmem:[%s814 + $0x18] sm:$0xff]
    %v819 = vld [vmem:[#allocation10] sm:$0xff]
    %v820 = vld [vmem:[#allocation10 + $0x20] sm:$0xff]
    %v821 = vld [vmem:[#allocation10 + $0x40] sm:$0xff]
    %v822 = vld [vmem:[#allocation10 + $0x60] sm:$0xff]
    %v823 = vld [vmem:[#allocation10 + $0x80] sm:$0xff]
    %v824 = vld [vmem:[#allocation10 + $0xa0] sm:$0xff]
    %v825 = vld [vmem:[#allocation10 + $0xc0] sm:$0xff]
    %v826 = vld [vmem:[#allocation10 + $0xe0] sm:$0xff]
    %v827 = vld [vmem:[#allocation10 + $0x100] sm:$0xff]
    %v828 = vld [vmem:[#allocation10 + $0x120] sm:$0xff]
    %v829 = vld [vmem:[#allocation10 + $0x140] sm:$0xff]
    %v830 = vld [vmem:[#allocation10 + $0x160] sm:$0xff]
    %v831 = vld [vmem:[#allocation10 + $0x180] sm:$0xff]
    %v832 = vld [vmem:[#allocation10 + $0x1a0] sm:$0xff]
    %v833 = vld [vmem:[#allocation10 + $0x1c0] sm:$0xff]
    %v834 = vld [vmem:[#allocation10 + $0x1e0] sm:$0xff]
    %835 = vmatpush.msra.mxu0 %v834
    %836 = vmatpush.msra.mxu0 %v833
    %837 = vmatpush.msra.mxu0 %v832
    %838 = vmatpush.msra.mxu0 %v831
    %839 = vmatpush.msra.mxu0 %v830
    %840 = vmatpush.msra.mxu0 %v829
    %841 = vmatpush.msra.mxu0 %v828
    %842 = vmatpush.msra.mxu0 %v827
    %843 = vmatpush.msra.mxu0 %v826
    %844 = vmatpush.msra.mxu0 %v825
    %845 = vmatpush.msra.mxu0 %v824
    %846 = vmatpush.msra.mxu0 %v823
    %847 = vmatpush.msra.mxu0 %v822
    %848 = vmatpush.msra.mxu0 %v821
    %849 = vmatpush.msra.mxu0 %v820
    %850 = vmatpush.msra.mxu0 %v819
    %851 = vmatmul.f32.gmra.mxu0 %v810
    %v852 = vpop.f32.mrf.mxu0
    %v853 = vadd.f32 0.0, %v852
    %854 = vdwg.mxu0
    %v855 = vadd.f32 %v815, %v853
    %v856 = vxor.u32 %v855, 2147483648
    %v857 = vmul.f32 %v856, 1.442695
    %v858 = vpow.pop %v857
    %v859 = vadd.f32 %v858, 1.0
    %v860 = vrcp.pop %v859
    %v861 = vmul.f32 %v859, %v860
    %v862 = vsub.f32 1.0, %v861
    %v863 = vmul.f32 %v860, %v862
    %v864 = vadd.f32 %v860, %v863
    %vm865 = vweird.f32 %v859
    %vm866 = vweird.f32 %v860
    %vm867 = vmor %vm865, %vm866
    %v868 = vsel %vm867, %v860, %v864
    %v869 = vand.u32 2147483647, %v859
    %vm870 = vcmp.eq.f32.partialorder %v869, 8.507059e+37
    %v871 = vand.u32 %v859, 2147483648
    %v872 = vor.u32 1.1754944e-38, %v871
    %v873 = vsel %vm870, %v872, %v868
    %v874 = vmul.f32 1.0, %v873
    %v875 = vld [vmem:[#allocation10 + $0x8] sm:$0xff]
    %v876 = vld [vmem:[#allocation10 + $0x28] sm:$0xff]
    %v877 = vld [vmem:[#allocation10 + $0x48] sm:$0xff]
    %v878 = vld [vmem:[#allocation10 + $0x68] sm:$0xff]
    %v879 = vld [vmem:[#allocation10 + $0x88] sm:$0xff]
    %v880 = vld [vmem:[#allocation10 + $0xa8] sm:$0xff]
    %v881 = vld [vmem:[#allocation10 + $0xc8] sm:$0xff]
    %v882 = vld [vmem:[#allocation10 + $0xe8] sm:$0xff]
    %v883 = vld [vmem:[#allocation10 + $0x108] sm:$0xff]
    %v884 = vld [vmem:[#allocation10 + $0x128] sm:$0xff]
    %v885 = vld [vmem:[#allocation10 + $0x148] sm:$0xff]
    %v886 = vld [vmem:[#allocation10 + $0x168] sm:$0xff]
    %v887 = vld [vmem:[#allocation10 + $0x188] sm:$0xff]
    %v888 = vld [vmem:[#allocation10 + $0x1a8] sm:$0xff]
    %v889 = vld [vmem:[#allocation10 + $0x1c8] sm:$0xff]
    %v890 = vld [vmem:[#allocation10 + $0x1e8] sm:$0xff]
    %891 = vmatpush.msra.mxu0 %v890
    %892 = vmatpush.msra.mxu0 %v889
    %893 = vmatpush.msra.mxu0 %v888
    %894 = vmatpush.msra.mxu0 %v887
    %895 = vmatpush.msra.mxu0 %v886
    %896 = vmatpush.msra.mxu0 %v885
    %897 = vmatpush.msra.mxu0 %v884
    %898 = vmatpush.msra.mxu0 %v883
    %899 = vmatpush.msra.mxu0 %v882
    %900 = vmatpush.msra.mxu0 %v881
    %901 = vmatpush.msra.mxu0 %v880
    %902 = vmatpush.msra.mxu0 %v879
    %903 = vmatpush.msra.mxu0 %v878
    %904 = vmatpush.msra.mxu0 %v877
    %905 = vmatpush.msra.mxu0 %v876
    %906 = vmatpush.msra.mxu0 %v875
    %907 = vmatmul.f32.gmra.mxu0 %v810
    %v908 = vpop.f32.mrf.mxu0
    %v909 = vadd.f32 0.0, %v908
    %910 = vdwg.mxu0
    %v911 = vadd.f32 %v816, %v909
    %v912 = vxor.u32 %v911, 2147483648
    %v913 = vmul.f32 %v912, 1.442695
    %v914 = vpow.pop %v913
    %v915 = vadd.f32 %v914, 1.0
    %v916 = vrcp.pop %v915
    %v917 = vmul.f32 %v915, %v916
    %v918 = vsub.f32 1.0, %v917
    %v919 = vmul.f32 %v916, %v918
    %v920 = vadd.f32 %v916, %v919
    %vm921 = vweird.f32 %v915
    %vm922 = vweird.f32 %v916
    %vm923 = vmor %vm921, %vm922
    %v924 = vsel %vm923, %v916, %v920
    %v925 = vand.u32 2147483647, %v915
    %vm926 = vcmp.eq.f32.partialorder %v925, 8.507059e+37
    %v927 = vand.u32 %v915, 2147483648
    %v928 = vor.u32 1.1754944e-38, %v927
    %v929 = vsel %vm926, %v928, %v924
    %v930 = vmul.f32 1.0, %v929
    %v931 = vld [vmem:[#allocation10 + $0x10] sm:$0xff]
    %v932 = vld [vmem:[#allocation10 + $0x30] sm:$0xff]
    %v933 = vld [vmem:[#allocation10 + $0x50] sm:$0xff]
    %v934 = vld [vmem:[#allocation10 + $0x70] sm:$0xff]
    %v935 = vld [vmem:[#allocation10 + $0x90] sm:$0xff]
    %v936 = vld [vmem:[#allocation10 + $0xb0] sm:$0xff]
    %v937 = vld [vmem:[#allocation10 + $0xd0] sm:$0xff]
    %v938 = vld [vmem:[#allocation10 + $0xf0] sm:$0xff]
    %v939 = vld [vmem:[#allocation10 + $0x110] sm:$0xff]
    %v940 = vld [vmem:[#allocation10 + $0x130] sm:$0xff]
    %v941 = vld [vmem:[#allocation10 + $0x150] sm:$0xff]
    %v942 = vld [vmem:[#allocation10 + $0x170] sm:$0xff]
    %v943 = vld [vmem:[#allocation10 + $0x190] sm:$0xff]
    %v944 = vld [vmem:[#allocation10 + $0x1b0] sm:$0xff]
    %v945 = vld [vmem:[#allocation10 + $0x1d0] sm:$0xff]
    %v946 = vld [vmem:[#allocation10 + $0x1f0] sm:$0xff]
    %947 = vmatpush.msra.mxu0 %v946
    %948 = vmatpush.msra.mxu0 %v945
    %949 = vmatpush.msra.mxu0 %v944
    %950 = vmatpush.msra.mxu0 %v943
    %951 = vmatpush.msra.mxu0 %v942
    %952 = vmatpush.msra.mxu0 %v941
    %953 = vmatpush.msra.mxu0 %v940
    %954 = vmatpush.msra.mxu0 %v939
    %955 = vmatpush.msra.mxu0 %v938
    %956 = vmatpush.msra.mxu0 %v937
    %957 = vmatpush.msra.mxu0 %v936
    %958 = vmatpush.msra.mxu0 %v935
    %959 = vmatpush.msra.mxu0 %v934
    %960 = vmatpush.msra.mxu0 %v933
    %961 = vmatpush.msra.mxu0 %v932
    %962 = vmatpush.msra.mxu0 %v931
    %963 = vmatmul.f32.gmra.mxu0 %v810
    %v964 = vpop.f32.mrf.mxu0
    %v965 = vadd.f32 0.0, %v964
    %966 = vdwg.mxu0
    %v967 = vadd.f32 %v817, %v965
    %v968 = vtanh.pop %v967
    %v969 = vmul.f32 %v930, %v811
    %v970 = vmul.f32 %v874, %v968
    %v971 = vadd.f32 %v969, %v970
    %v972 = vld [vmem:[#allocation10 + $0x18] sm:$0xff]
    %v973 = vld [vmem:[#allocation10 + $0x38] sm:$0xff]
    %v974 = vld [vmem:[#allocation10 + $0x58] sm:$0xff]
    %v975 = vld [vmem:[#allocation10 + $0x78] sm:$0xff]
    %v976 = vld [vmem:[#allocation10 + $0x98] sm:$0xff]
    %v977 = vld [vmem:[#allocation10 + $0xb8] sm:$0xff]
    %v978 = vld [vmem:[#allocation10 + $0xd8] sm:$0xff]
    %v979 = vld [vmem:[#allocation10 + $0xf8] sm:$0xff]
    %v980 = vld [vmem:[#allocation10 + $0x118] sm:$0xff]
    %v981 = vld [vmem:[#allocation10 + $0x138] sm:$0xff]
    %v982 = vld [vmem:[#allocation10 + $0x158] sm:$0xff]
    %v983 = vld [vmem:[#allocation10 + $0x178] sm:$0xff]
    %v984 = vld [vmem:[#allocation10 + $0x198] sm:$0xff]
    %v985 = vld [vmem:[#allocation10 + $0x1b8] sm:$0xff]
    %v986 = vld [vmem:[#allocation10 + $0x1d8] sm:$0xff]
    %v987 = vld [vmem:[#allocation10 + $0x1f8] sm:$0xff]
    %988 = vmatpush.msra.mxu0 %v987
    %989 = vmatpush.msra.mxu0 %v986
    %990 = vmatpush.msra.mxu0 %v985
    %991 = vmatpush.msra.mxu0 %v984
    %992 = vmatpush.msra.mxu0 %v983
    %993 = vmatpush.msra.mxu0 %v982
    %994 = vmatpush.msra.mxu0 %v981
    %995 = vmatpush.msra.mxu0 %v980
    %996 = vmatpush.msra.mxu0 %v979
    %997 = vmatpush.msra.mxu0 %v978
    %998 = vmatpush.msra.mxu0 %v977
    %999 = vmatpush.msra.mxu0 %v976
    %1000 = vmatpush.msra.mxu0 %v975
    %1001 = vmatpush.msra.mxu0 %v974
    %1002 = vmatpush.msra.mxu0 %v973
    %1003 = vmatpush.msra.mxu0 %v972
    %1004 = vmatmul.f32.gmra.mxu0 %v810
    %v1005 = vpop.f32.mrf.mxu0
    %v1006 = vadd.f32 0.0, %v1005
    %1007 = vdwg.mxu0
    %v1008 = vadd.f32 %v818, %v1006
    %v1009 = vxor.u32 %v1008, 2147483648
    %v1010 = vmul.f32 %v1009, 1.442695
    %v1011 = vpow.pop %v1010
    %v1012 = vadd.f32 %v1011, 1.0
    %v1013 = vrcp.pop %v1012
    %v1014 = vmul.f32 %v1012, %v1013
    %v1015 = vsub.f32 1.0, %v1014
    %v1016 = vmul.f32 %v1013, %v1015
    %v1017 = vadd.f32 %v1013, %v1016
    %vm1018 = vweird.f32 %v1012
    %vm1019 = vweird.f32 %v1013
    %vm1020 = vmor %vm1018, %vm1019
    %v1021 = vsel %vm1020, %v1013, %v1017
    %v1022 = vand.u32 2147483647, %v1012
    %vm1023 = vcmp.eq.f32.partialorder %v1022, 8.507059e+37
    %v1024 = vand.u32 %v1012, 2147483648
    %v1025 = vor.u32 1.1754944e-38, %v1024
    %v1026 = vsel %vm1023, %v1025, %v1021
    %v1027 = vmul.f32 1.0, %v1026
    %v1028 = vtanh.pop %v971
    %v1029 = vmul.f32 %v1027, %v1028
    %s1030 = smul.u32 1, 4
    %s1031 = smul.addr %s1030, 8
    %s1032 = scalar_lea.vmem [#allocation4], %s1031
    %v1033 = vld [vmem:[%s1032] sm:$0xff]
    %v1034 = vld [vmem:[%s1032 + $0x8] sm:$0xff]
    %v1035 = vld [vmem:[%s1032 + $0x10] sm:$0xff]
    %v1036 = vld [vmem:[%s1032 + $0x18] sm:$0xff]
    %1037 = vmatpush.msra.mxu0 %v834
    %1038 = vmatpush.msra.mxu0 %v833
    %1039 = vmatpush.msra.mxu0 %v832
    %1040 = vmatpush.msra.mxu0 %v831
    %1041 = vmatpush.msra.mxu0 %v830
    %1042 = vmatpush.msra.mxu0 %v829
    %1043 = vmatpush.msra.mxu0 %v828
    %1044 = vmatpush.msra.mxu0 %v827
    %1045 = vmatpush.msra.mxu0 %v826
    %1046 = vmatpush.msra.mxu0 %v825
    %1047 = vmatpush.msra.mxu0 %v824
    %1048 = vmatpush.msra.mxu0 %v823
    %1049 = vmatpush.msra.mxu0 %v822
    %1050 = vmatpush.msra.mxu0 %v821
    %1051 = vmatpush.msra.mxu0 %v820
    %1052 = vmatpush.msra.mxu0 %v819
    %1053 = vmatmul.f32.gmra.mxu0 %v1029
    %v1054 = vpop.f32.mrf.mxu0
    %v1055 = vadd.f32 0.0, %v1054
    %1056 = vdwg.mxu0
    %v1057 = vadd.f32 %v1033, %v1055
    %v1058 = vxor.u32 %v1057, 2147483648
    %v1059 = vmul.f32 %v1058, 1.442695
    %v1060 = vpow.pop %v1059
    %v1061 = vadd.f32 %v1060, 1.0
    %v1062 = vrcp.pop %v1061
    %v1063 = vmul.f32 %v1061, %v1062
    %v1064 = vsub.f32 1.0, %v1063
    %v1065 = vmul.f32 %v1062, %v1064
    %v1066 = vadd.f32 %v1062, %v1065
    %vm1067 = vweird.f32 %v1061
    %vm1068 = vweird.f32 %v1062
    %vm1069 = vmor %vm1067, %vm1068
    %v1070 = vsel %vm1069, %v1062, %v1066
    %v1071 = vand.u32 2147483647, %v1061
    %vm1072 = vcmp.eq.f32.partialorder %v1071, 8.507059e+37
    %v1073 = vand.u32 %v1061, 2147483648
    %v1074 = vor.u32 1.1754944e-38, %v1073
    %v1075 = vsel %vm1072, %v1074, %v1070
    %v1076 = vmul.f32 1.0, %v1075
    %1077 = vmatpush.msra.mxu0 %v890
    %1078 = vmatpush.msra.mxu0 %v889
    %1079 = vmatpush.msra.mxu0 %v888
    %1080 = vmatpush.msra.mxu0 %v887
    %1081 = vmatpush.msra.mxu0 %v886
    %1082 = vmatpush.msra.mxu0 %v885
    %1083 = vmatpush.msra.mxu0 %v884
    %1084 = vmatpush.msra.mxu0 %v883
    %1085 = vmatpush.msra.mxu0 %v882
    %1086 = vmatpush.msra.mxu0 %v881
    %1087 = vmatpush.msra.mxu0 %v880
    %1088 = vmatpush.msra.mxu0 %v879
    %1089 = vmatpush.msra.mxu0 %v878
    %1090 = vmatpush.msra.mxu0 %v877
    %1091 = vmatpush.msra.mxu0 %v876
    %1092 = vmatpush.msra.mxu0 %v875
    %1093 = vmatmul.f32.gmra.mxu0 %v1029
    %v1094 = vpop.f32.mrf.mxu0
    %v1095 = vadd.f32 0.0, %v1094
    %1096 = vdwg.mxu0
    %v1097 = vadd.f32 %v1034, %v1095
    %v1098 = vxor.u32 %v1097, 2147483648
    %v1099 = vmul.f32 %v1098, 1.442695
    %v1100 = vpow.pop %v1099
    %v1101 = vadd.f32 %v1100, 1.0
    %v1102 = vrcp.pop %v1101
    %v1103 = vmul.f32 %v1101, %v1102
    %v1104 = vsub.f32 1.0, %v1103
    %v1105 = vmul.f32 %v1102, %v1104
    %v1106 = vadd.f32 %v1102, %v1105
    %vm1107 = vweird.f32 %v1101
    %vm1108 = vweird.f32 %v1102
    %vm1109 = vmor %vm1107, %vm1108
    %v1110 = vsel %vm1109, %v1102, %v1106
    %v1111 = vand.u32 2147483647, %v1101
    %vm1112 = vcmp.eq.f32.partialorder %v1111, 8.507059e+37
    %v1113 = vand.u32 %v1101, 2147483648
    %v1114 = vor.u32 1.1754944e-38, %v1113
    %v1115 = vsel %vm1112, %v1114, %v1110
    %v1116 = vmul.f32 1.0, %v1115
    %1117 = vmatpush.msra.mxu0 %v946
    %1118 = vmatpush.msra.mxu0 %v945
    %1119 = vmatpush.msra.mxu0 %v944
    %1120 = vmatpush.msra.mxu0 %v943
    %1121 = vmatpush.msra.mxu0 %v942
    %1122 = vmatpush.msra.mxu0 %v941
    %1123 = vmatpush.msra.mxu0 %v940
    %1124 = vmatpush.msra.mxu0 %v939
    %1125 = vmatpush.msra.mxu0 %v938
    %1126 = vmatpush.msra.mxu0 %v937
    %1127 = vmatpush.msra.mxu0 %v936
    %1128 = vmatpush.msra.mxu0 %v935
    %1129 = vmatpush.msra.mxu0 %v934
    %1130 = vmatpush.msra.mxu0 %v933
    %1131 = vmatpush.msra.mxu0 %v932
    %1132 = vmatpush.msra.mxu0 %v931
    %1133 = vmatmul.f32.gmra.mxu0 %v1029
    %v1134 = vpop.f32.mrf.mxu0
    %v1135 = vadd.f32 0.0, %v1134
    %1136 = vdwg.mxu0
    %v1137 = vadd.f32 %v1035, %v1135
    %v1138 = vtanh.pop %v1137
    %v1139 = vmul.f32 %v1116, %v971
    %v1140 = vmul.f32 %v1076, %v1138
    %v1141 = vadd.f32 %v1139, %v1140
    %1142 = vmatpush.msra.mxu0 %v987
    %1143 = vmatpush.msra.mxu0 %v986
    %1144 = vmatpush.msra.mxu0 %v985
    %1145 = vmatpush.msra.mxu0 %v984
    %1146 = vmatpush.msra.mxu0 %v983
    %1147 = vmatpush.msra.mxu0 %v982
    %1148 = vmatpush.msra.mxu0 %v981
    %1149 = vmatpush.msra.mxu0 %v980
    %1150 = vmatpush.msra.mxu0 %v979
    %1151 = vmatpush.msra.mxu0 %v978
    %1152 = vmatpush.msra.mxu0 %v977
    %1153 = vmatpush.msra.mxu0 %v976
    %1154 = vmatpush.msra.mxu0 %v975
    %1155 = vmatpush.msra.mxu0 %v974
    %1156 = vmatpush.msra.mxu0 %v973
    %1157 = vmatpush.msra.mxu0 %v972
    %1158 = vmatmul.f32.gmra.mxu0 %v1029
    %v1159 = vpop.f32.mrf.mxu0
    %v1160 = vadd.f32 0.0, %v1159
    %1161 = vdwg.mxu0
    %v1162 = vadd.f32 %v1036, %v1160
    %v1163 = vxor.u32 %v1162, 2147483648
    %v1164 = vmul.f32 %v1163, 1.442695
    %v1165 = vpow.pop %v1164
    %v1166 = vadd.f32 %v1165, 1.0
    %v1167 = vrcp.pop %v1166
    %v1168 = vmul.f32 %v1166, %v1167
    %v1169 = vsub.f32 1.0, %v1168
    %v1170 = vmul.f32 %v1167, %v1169
    %v1171 = vadd.f32 %v1167, %v1170
    %vm1172 = vweird.f32 %v1166
    %vm1173 = vweird.f32 %v1167
    %vm1174 = vmor %vm1172, %vm1173
    %v1175 = vsel %vm1174, %v1167, %v1171
    %v1176 = vand.u32 2147483647, %v1166
    %vm1177 = vcmp.eq.f32.partialorder %v1176, 8.507059e+37
    %v1178 = vand.u32 %v1166, 2147483648
    %v1179 = vor.u32 1.1754944e-38, %v1178
    %v1180 = vsel %vm1177, %v1179, %v1175
    %v1181 = vmul.f32 1.0, %v1180
    %v1182 = vtanh.pop %v1141
    %v1183 = vmul.f32 %v1181, %v1182
    %s1184 = smul.u32 2, 4
    %s1185 = smul.addr %s1184, 8
    %s1186 = scalar_lea.vmem [#allocation4], %s1185
    %v1187 = vld [vmem:[%s1186] sm:$0xff]
    %v1188 = vld [vmem:[%s1186 + $0x8] sm:$0xff]
    %v1189 = vld [vmem:[%s1186 + $0x10] sm:$0xff]
    %v1190 = vld [vmem:[%s1186 + $0x18] sm:$0xff]
    %1191 = vmatpush.msra.mxu0 %v834
    %1192 = vmatpush.msra.mxu0 %v833
    %1193 = vmatpush.msra.mxu0 %v832
    %1194 = vmatpush.msra.mxu0 %v831
    %1195 = vmatpush.msra.mxu0 %v830
    %1196 = vmatpush.msra.mxu0 %v829
    %1197 = vmatpush.msra.mxu0 %v828
    %1198 = vmatpush.msra.mxu0 %v827
    %1199 = vmatpush.msra.mxu0 %v826
    %1200 = vmatpush.msra.mxu0 %v825
    %1201 = vmatpush.msra.mxu0 %v824
    %1202 = vmatpush.msra.mxu0 %v823
    %1203 = vmatpush.msra.mxu0 %v822
    %1204 = vmatpush.msra.mxu0 %v821
    %1205 = vmatpush.msra.mxu0 %v820
    %1206 = vmatpush.msra.mxu0 %v819
    %1207 = vmatmul.f32.gmra.mxu0 %v1183
    %v1208 = vpop.f32.mrf.mxu0
    %v1209 = vadd.f32 0.0, %v1208
    %1210 = vdwg.mxu0
    %v1211 = vadd.f32 %v1187, %v1209
    %v1212 = vxor.u32 %v1211, 2147483648
    %v1213 = vmul.f32 %v1212, 1.442695
    %v1214 = vpow.pop %v1213
    %v1215 = vadd.f32 %v1214, 1.0
    %v1216 = vrcp.pop %v1215
    %v1217 = vmul.f32 %v1215, %v1216
    %v1218 = vsub.f32 1.0, %v1217
    %v1219 = vmul.f32 %v1216, %v1218
    %v1220 = vadd.f32 %v1216, %v1219
    %vm1221 = vweird.f32 %v1215
    %vm1222 = vweird.f32 %v1216
    %vm1223 = vmor %vm1221, %vm1222
    %v1224 = vsel %vm1223, %v1216, %v1220
    %v1225 = vand.u32 2147483647, %v1215
    %vm1226 = vcmp.eq.f32.partialorder %v1225, 8.507059e+37
    %v1227 = vand.u32 %v1215, 2147483648
    %v1228 = vor.u32 1.1754944e-38, %v1227
    %v1229 = vsel %vm1226, %v1228, %v1224
    %v1230 = vmul.f32 1.0, %v1229
    %1231 = vmatpush.msra.mxu0 %v890
    %1232 = vmatpush.msra.mxu0 %v889
    %1233 = vmatpush.msra.mxu0 %v888
    %1234 = vmatpush.msra.mxu0 %v887
    %1235 = vmatpush.msra.mxu0 %v886
    %1236 = vmatpush.msra.mxu0 %v885
    %1237 = vmatpush.msra.mxu0 %v884
    %1238 = vmatpush.msra.mxu0 %v883
    %1239 = vmatpush.msra.mxu0 %v882
    %1240 = vmatpush.msra.mxu0 %v881
    %1241 = vmatpush.msra.mxu0 %v880
    %1242 = vmatpush.msra.mxu0 %v879
    %1243 = vmatpush.msra.mxu0 %v878
    %1244 = vmatpush.msra.mxu0 %v877
    %1245 = vmatpush.msra.mxu0 %v876
    %1246 = vmatpush.msra.mxu0 %v875
    %1247 = vmatmul.f32.gmra.mxu0 %v1183
    %v1248 = vpop.f32.mrf.mxu0
    %v1249 = vadd.f32 0.0, %v1248
    %1250 = vdwg.mxu0
    %v1251 = vadd.f32 %v1188, %v1249
    %v1252 = vxor.u32 %v1251, 2147483648
    %v1253 = vmul.f32 %v1252, 1.442695
    %v1254 = vpow.pop %v1253
    %v1255 = vadd.f32 %v1254, 1.0
    %v1256 = vrcp.pop %v1255
    %v1257 = vmul.f32 %v1255, %v1256
    %v1258 = vsub.f32 1.0, %v1257
    %v1259 = vmul.f32 %v1256, %v1258
    %v1260 = vadd.f32 %v1256, %v1259
    %vm1261 = vweird.f32 %v1255
    %vm1262 = vweird.f32 %v1256
    %vm1263 = vmor %vm1261, %vm1262
    %v1264 = vsel %vm1263, %v1256, %v1260
    %v1265 = vand.u32 2147483647, %v1255
    %vm1266 = vcmp.eq.f32.partialorder %v1265, 8.507059e+37
    %v1267 = vand.u32 %v1255, 2147483648
    %v1268 = vor.u32 1.1754944e-38, %v1267
    %v1269 = vsel %vm1266, %v1268, %v1264
    %v1270 = vmul.f32 1.0, %v1269
    %1271 = vmatpush.msra.mxu0 %v946
    %1272 = vmatpush.msra.mxu0 %v945
    %1273 = vmatpush.msra.mxu0 %v944
    %1274 = vmatpush.msra.mxu0 %v943
    %1275 = vmatpush.msra.mxu0 %v942
    %1276 = vmatpush.msra.mxu0 %v941
    %1277 = vmatpush.msra.mxu0 %v940
    %1278 = vmatpush.msra.mxu0 %v939
    %1279 = vmatpush.msra.mxu0 %v938
    %1280 = vmatpush.msra.mxu0 %v937
    %1281 = vmatpush.msra.mxu0 %v936
    %1282 = vmatpush.msra.mxu0 %v935
    %1283 = vmatpush.msra.mxu0 %v934
    %1284 = vmatpush.msra.mxu0 %v933
    %1285 = vmatpush.msra.mxu0 %v932
    %1286 = vmatpush.msra.mxu0 %v931
    %1287 = vmatmul.f32.gmra.mxu0 %v1183
    %v1288 = vpop.f32.mrf.mxu0
    %v1289 = vadd.f32 0.0, %v1288
    %1290 = vdwg.mxu0
    %v1291 = vadd.f32 %v1189, %v1289
    %v1292 = vtanh.pop %v1291
    %v1293 = vmul.f32 %v1270, %v1141
    %v1294 = vmul.f32 %v1230, %v1292
    %v1295 = vadd.f32 %v1293, %v1294
    %1296 = vmatpush.msra.mxu0 %v987
    %1297 = vmatpush.msra.mxu0 %v986
    %1298 = vmatpush.msra.mxu0 %v985
    %1299 = vmatpush.msra.mxu0 %v984
    %1300 = vmatpush.msra.mxu0 %v983
    %1301 = vmatpush.msra.mxu0 %v982
    %1302 = vmatpush.msra.mxu0 %v981
    %1303 = vmatpush.msra.mxu0 %v980
    %1304 = vmatpush.msra.mxu0 %v979
    %1305 = vmatpush.msra.mxu0 %v978
    %1306 = vmatpush.msra.mxu0 %v977
    %1307 = vmatpush.msra.mxu0 %v976
    %1308 = vmatpush.msra.mxu0 %v975
    %1309 = vmatpush.msra.mxu0 %v974
    %1310 = vmatpush.msra.mxu0 %v973
    %1311 = vmatpush.msra.mxu0 %v972
    %1312 = vmatmul.f32.gmra.mxu0 %v1183
    %v1313 = vpop.f32.mrf.mxu0
    %v1314 = vadd.f32 0.0, %v1313
    %1315 = vdwg.mxu0
    %v1316 = vadd.f32 %v1190, %v1314
    %v1317 = vxor.u32 %v1316, 2147483648
    %v1318 = vmul.f32 %v1317, 1.442695
    %v1319 = vpow.pop %v1318
    %v1320 = vadd.f32 %v1319, 1.0
    %v1321 = vrcp.pop %v1320
    %v1322 = vmul.f32 %v1320, %v1321
    %v1323 = vsub.f32 1.0, %v1322
    %v1324 = vmul.f32 %v1321, %v1323
    %v1325 = vadd.f32 %v1321, %v1324
    %vm1326 = vweird.f32 %v1320
    %vm1327 = vweird.f32 %v1321
    %vm1328 = vmor %vm1326, %vm1327
    %v1329 = vsel %vm1328, %v1321, %v1325
    %v1330 = vand.u32 2147483647, %v1320
    %vm1331 = vcmp.eq.f32.partialorder %v1330, 8.507059e+37
    %v1332 = vand.u32 %v1320, 2147483648
    %v1333 = vor.u32 1.1754944e-38, %v1332
    %v1334 = vsel %vm1331, %v1333, %v1329
    %v1335 = vmul.f32 1.0, %v1334
    %v1336 = vtanh.pop %v1295
    %v1337 = vmul.f32 %v1335, %v1336
    %s1338 = smul.u32 3, 4
    %s1339 = smul.addr %s1338, 8
    %s1340 = scalar_lea.vmem [#allocation4], %s1339
    %v1341 = vld [vmem:[%s1340] sm:$0xff]
    %v1342 = vld [vmem:[%s1340 + $0x8] sm:$0xff]
    %v1343 = vld [vmem:[%s1340 + $0x10] sm:$0xff]
    %v1344 = vld [vmem:[%s1340 + $0x18] sm:$0xff]
    %1345 = vmatpush.msra.mxu0 %v834
    %1346 = vmatpush.msra.mxu0 %v833
    %1347 = vmatpush.msra.mxu0 %v832
    %1348 = vmatpush.msra.mxu0 %v831
    %1349 = vmatpush.msra.mxu0 %v830
    %1350 = vmatpush.msra.mxu0 %v829
    %1351 = vmatpush.msra.mxu0 %v828
    %1352 = vmatpush.msra.mxu0 %v827
    %1353 = vmatpush.msra.mxu0 %v826
    %1354 = vmatpush.msra.mxu0 %v825
    %1355 = vmatpush.msra.mxu0 %v824
    %1356 = vmatpush.msra.mxu0 %v823
    %1357 = vmatpush.msra.mxu0 %v822
    %1358 = vmatpush.msra.mxu0 %v821
    %1359 = vmatpush.msra.mxu0 %v820
    %1360 = vmatpush.msra.mxu0 %v819
    %1361 = vmatmul.f32.gmra.mxu0 %v1337
    %v1362 = vpop.f32.mrf.mxu0
    %v1363 = vadd.f32 0.0, %v1362
    %1364 = vdwg.mxu0
    %v1365 = vadd.f32 %v1341, %v1363
    %v1366 = vxor.u32 %v1365, 2147483648
    %v1367 = vmul.f32 %v1366, 1.442695
    %v1368 = vpow.pop %v1367
    %v1369 = vadd.f32 %v1368, 1.0
    %v1370 = vrcp.pop %v1369
    %v1371 = vmul.f32 %v1369, %v1370
    %v1372 = vsub.f32 1.0, %v1371
    %v1373 = vmul.f32 %v1370, %v1372
    %v1374 = vadd.f32 %v1370, %v1373
    %vm1375 = vweird.f32 %v1369
    %vm1376 = vweird.f32 %v1370
    %vm1377 = vmor %vm1375, %vm1376
    %v1378 = vsel %vm1377, %v1370, %v1374
    %v1379 = vand.u32 2147483647, %v1369
    %vm1380 = vcmp.eq.f32.partialorder %v1379, 8.507059e+37
    %v1381 = vand.u32 %v1369, 2147483648
    %v1382 = vor.u32 1.1754944e-38, %v1381
    %v1383 = vsel %vm1380, %v1382, %v1378
    %v1384 = vmul.f32 1.0, %v1383
    %1385 = vmatpush.msra.mxu0 %v890
    %1386 = vmatpush.msra.mxu0 %v889
    %1387 = vmatpush.msra.mxu0 %v888
    %1388 = vmatpush.msra.mxu0 %v887
    %1389 = vmatpush.msra.mxu0 %v886
    %1390 = vmatpush.msra.mxu0 %v885
    %1391 = vmatpush.msra.mxu0 %v884
    %1392 = vmatpush.msra.mxu0 %v883
    %1393 = vmatpush.msra.mxu0 %v882
    %1394 = vmatpush.msra.mxu0 %v881
    %1395 = vmatpush.msra.mxu0 %v880
    %1396 = vmatpush.msra.mxu0 %v879
    %1397 = vmatpush.msra.mxu0 %v878
    %1398 = vmatpush.msra.mxu0 %v877
    %1399 = vmatpush.msra.mxu0 %v876
    %1400 = vmatpush.msra.mxu0 %v875
    %1401 = vmatmul.f32.gmra.mxu0 %v1337
    %v1402 = vpop.f32.mrf.mxu0
    %v1403 = vadd.f32 0.0, %v1402
    %1404 = vdwg.mxu0
    %v1405 = vadd.f32 %v1342, %v1403
    %v1406 = vxor.u32 %v1405, 2147483648
    %v1407 = vmul.f32 %v1406, 1.442695
    %v1408 = vpow.pop %v1407
    %v1409 = vadd.f32 %v1408, 1.0
    %v1410 = vrcp.pop %v1409
    %v1411 = vmul.f32 %v1409, %v1410
    %v1412 = vsub.f32 1.0, %v1411
    %v1413 = vmul.f32 %v1410, %v1412
    %v1414 = vadd.f32 %v1410, %v1413
    %vm1415 = vweird.f32 %v1409
    %vm1416 = vweird.f32 %v1410
    %vm1417 = vmor %vm1415, %vm1416
    %v1418 = vsel %vm1417, %v1410, %v1414
    %v1419 = vand.u32 2147483647, %v1409
    %vm1420 = vcmp.eq.f32.partialorder %v1419, 8.507059e+37
    %v1421 = vand.u32 %v1409, 2147483648
    %v1422 = vor.u32 1.1754944e-38, %v1421
    %v1423 = vsel %vm1420, %v1422, %v1418
    %v1424 = vmul.f32 1.0, %v1423
    %1425 = vmatpush.msra.mxu0 %v946
    %1426 = vmatpush.msra.mxu0 %v945
    %1427 = vmatpush.msra.mxu0 %v944
    %1428 = vmatpush.msra.mxu0 %v943
    %1429 = vmatpush.msra.mxu0 %v942
    %1430 = vmatpush.msra.mxu0 %v941
    %1431 = vmatpush.msra.mxu0 %v940
    %1432 = vmatpush.msra.mxu0 %v939
    %1433 = vmatpush.msra.mxu0 %v938
    %1434 = vmatpush.msra.mxu0 %v937
    %1435 = vmatpush.msra.mxu0 %v936
    %1436 = vmatpush.msra.mxu0 %v935
    %1437 = vmatpush.msra.mxu0 %v934
    %1438 = vmatpush.msra.mxu0 %v933
    %1439 = vmatpush.msra.mxu0 %v932
    %1440 = vmatpush.msra.mxu0 %v931
    %1441 = vmatmul.f32.gmra.mxu0 %v1337
    %v1442 = vpop.f32.mrf.mxu0
    %v1443 = vadd.f32 0.0, %v1442
    %1444 = vdwg.mxu0
    %v1445 = vadd.f32 %v1343, %v1443
    %v1446 = vtanh.pop %v1445
    %v1447 = vmul.f32 %v1424, %v1295
    %v1448 = vmul.f32 %v1384, %v1446
    %v1449 = vadd.f32 %v1447, %v1448
    %1450 = vmatpush.msra.mxu0 %v987
    %1451 = vmatpush.msra.mxu0 %v986
    %1452 = vmatpush.msra.mxu0 %v985
    %1453 = vmatpush.msra.mxu0 %v984
    %1454 = vmatpush.msra.mxu0 %v983
    %1455 = vmatpush.msra.mxu0 %v982
    %1456 = vmatpush.msra.mxu0 %v981
    %1457 = vmatpush.msra.mxu0 %v980
    %1458 = vmatpush.msra.mxu0 %v979
    %1459 = vmatpush.msra.mxu0 %v978
    %1460 = vmatpush.msra.mxu0 %v977
    %1461 = vmatpush.msra.mxu0 %v976
    %1462 = vmatpush.msra.mxu0 %v975
    %1463 = vmatpush.msra.mxu0 %v974
    %1464 = vmatpush.msra.mxu0 %v973
    %1465 = vmatpush.msra.mxu0 %v972
    %1466 = vmatmul.f32.gmra.mxu0 %v1337
    %v1467 = vpop.f32.mrf.mxu0
    %v1468 = vadd.f32 0.0, %v1467
    %1469 = vdwg.mxu0
    %v1470 = vadd.f32 %v1344, %v1468
    %v1471 = vxor.u32 %v1470, 2147483648
    %v1472 = vmul.f32 %v1471, 1.442695
    %v1473 = vpow.pop %v1472
    %v1474 = vadd.f32 %v1473, 1.0
    %v1475 = vrcp.pop %v1474
    %v1476 = vmul.f32 %v1474, %v1475
    %v1477 = vsub.f32 1.0, %v1476
    %v1478 = vmul.f32 %v1475, %v1477
    %v1479 = vadd.f32 %v1475, %v1478
    %vm1480 = vweird.f32 %v1474
    %vm1481 = vweird.f32 %v1475
    %vm1482 = vmor %vm1480, %vm1481
    %v1483 = vsel %vm1482, %v1475, %v1479
    %v1484 = vand.u32 2147483647, %v1474
    %vm1485 = vcmp.eq.f32.partialorder %v1484, 8.507059e+37
    %v1486 = vand.u32 %v1474, 2147483648
    %v1487 = vor.u32 1.1754944e-38, %v1486
    %v1488 = vsel %vm1485, %v1487, %v1483
    %v1489 = vmul.f32 1.0, %v1488
    %v1490 = vtanh.pop %v1449
    %v1491 = vmul.f32 %v1489, %v1490
    %s1492 = smul.u32 4, 4
    %s1493 = smul.addr %s1492, 8
    %s1494 = scalar_lea.vmem [#allocation4], %s1493
    %v1495 = vld [vmem:[%s1494] sm:$0xff]
    %v1496 = vld [vmem:[%s1494 + $0x8] sm:$0xff]
    %v1497 = vld [vmem:[%s1494 + $0x10] sm:$0xff]
    %v1498 = vld [vmem:[%s1494 + $0x18] sm:$0xff]
    %1499 = vmatpush.msra.mxu0 %v834
    %1500 = vmatpush.msra.mxu0 %v833
    %1501 = vmatpush.msra.mxu0 %v832
    %1502 = vmatpush.msra.mxu0 %v831
    %1503 = vmatpush.msra.mxu0 %v830
    %1504 = vmatpush.msra.mxu0 %v829
    %1505 = vmatpush.msra.mxu0 %v828
    %1506 = vmatpush.msra.mxu0 %v827
    %1507 = vmatpush.msra.mxu0 %v826
    %1508 = vmatpush.msra.mxu0 %v825
    %1509 = vmatpush.msra.mxu0 %v824
    %1510 = vmatpush.msra.mxu0 %v823
    %1511 = vmatpush.msra.mxu0 %v822
    %1512 = vmatpush.msra.mxu0 %v821
    %1513 = vmatpush.msra.mxu0 %v820
    %1514 = vmatpush.msra.mxu0 %v819
    %1515 = vmatmul.f32.gmra.mxu0 %v1491
    %v1516 = vpop.f32.mrf.mxu0
    %v1517 = vadd.f32 0.0, %v1516
    %1518 = vdwg.mxu0
    %v1519 = vadd.f32 %v1495, %v1517
    %v1520 = vxor.u32 %v1519, 2147483648
    %v1521 = vmul.f32 %v1520, 1.442695
    %v1522 = vpow.pop %v1521
    %v1523 = vadd.f32 %v1522, 1.0
    %v1524 = vrcp.pop %v1523
    %v1525 = vmul.f32 %v1523, %v1524
    %v1526 = vsub.f32 1.0, %v1525
    %v1527 = vmul.f32 %v1524, %v1526
    %v1528 = vadd.f32 %v1524, %v1527
    %vm1529 = vweird.f32 %v1523
    %vm1530 = vweird.f32 %v1524
    %vm1531 = vmor %vm1529, %vm1530
    %v1532 = vsel %vm1531, %v1524, %v1528
    %v1533 = vand.u32 2147483647, %v1523
    %vm1534 = vcmp.eq.f32.partialorder %v1533, 8.507059e+37
    %v1535 = vand.u32 %v1523, 2147483648
    %v1536 = vor.u32 1.1754944e-38, %v1535
    %v1537 = vsel %vm1534, %v1536, %v1532
    %v1538 = vmul.f32 1.0, %v1537
    %1539 = vmatpush.msra.mxu0 %v890
    %1540 = vmatpush.msra.mxu0 %v889
    %1541 = vmatpush.msra.mxu0 %v888
    %1542 = vmatpush.msra.mxu0 %v887
    %1543 = vmatpush.msra.mxu0 %v886
    %1544 = vmatpush.msra.mxu0 %v885
    %1545 = vmatpush.msra.mxu0 %v884
    %1546 = vmatpush.msra.mxu0 %v883
    %1547 = vmatpush.msra.mxu0 %v882
    %1548 = vmatpush.msra.mxu0 %v881
    %1549 = vmatpush.msra.mxu0 %v880
    %1550 = vmatpush.msra.mxu0 %v879
    %1551 = vmatpush.msra.mxu0 %v878
    %1552 = vmatpush.msra.mxu0 %v877
    %1553 = vmatpush.msra.mxu0 %v876
    %1554 = vmatpush.msra.mxu0 %v875
    %1555 = vmatmul.f32.gmra.mxu0 %v1491
    %v1556 = vpop.f32.mrf.mxu0
    %v1557 = vadd.f32 0.0, %v1556
    %1558 = vdwg.mxu0
    %v1559 = vadd.f32 %v1496, %v1557
    %v1560 = vxor.u32 %v1559, 2147483648
    %v1561 = vmul.f32 %v1560, 1.442695
    %v1562 = vpow.pop %v1561
    %v1563 = vadd.f32 %v1562, 1.0
    %v1564 = vrcp.pop %v1563
    %v1565 = vmul.f32 %v1563, %v1564
    %v1566 = vsub.f32 1.0, %v1565
    %v1567 = vmul.f32 %v1564, %v1566
    %v1568 = vadd.f32 %v1564, %v1567
    %vm1569 = vweird.f32 %v1563
    %vm1570 = vweird.f32 %v1564
    %vm1571 = vmor %vm1569, %vm1570
    %v1572 = vsel %vm1571, %v1564, %v1568
    %v1573 = vand.u32 2147483647, %v1563
    %vm1574 = vcmp.eq.f32.partialorder %v1573, 8.507059e+37
    %v1575 = vand.u32 %v1563, 2147483648
    %v1576 = vor.u32 1.1754944e-38, %v1575
    %v1577 = vsel %vm1574, %v1576, %v1572
    %v1578 = vmul.f32 1.0, %v1577
    %1579 = vmatpush.msra.mxu0 %v946
    %1580 = vmatpush.msra.mxu0 %v945
    %1581 = vmatpush.msra.mxu0 %v944
    %1582 = vmatpush.msra.mxu0 %v943
    %1583 = vmatpush.msra.mxu0 %v942
    %1584 = vmatpush.msra.mxu0 %v941
    %1585 = vmatpush.msra.mxu0 %v940
    %1586 = vmatpush.msra.mxu0 %v939
    %1587 = vmatpush.msra.mxu0 %v938
    %1588 = vmatpush.msra.mxu0 %v937
    %1589 = vmatpush.msra.mxu0 %v936
    %1590 = vmatpush.msra.mxu0 %v935
    %1591 = vmatpush.msra.mxu0 %v934
    %1592 = vmatpush.msra.mxu0 %v933
    %1593 = vmatpush.msra.mxu0 %v932
    %1594 = vmatpush.msra.mxu0 %v931
    %1595 = vmatmul.f32.gmra.mxu0 %v1491
    %v1596 = vpop.f32.mrf.mxu0
    %v1597 = vadd.f32 0.0, %v1596
    %1598 = vdwg.mxu0
    %v1599 = vadd.f32 %v1497, %v1597
    %v1600 = vtanh.pop %v1599
    %v1601 = vmul.f32 %v1578, %v1449
    %v1602 = vmul.f32 %v1538, %v1600
    %v1603 = vadd.f32 %v1601, %v1602
    %1604 = vmatpush.msra.mxu0 %v987
    %1605 = vmatpush.msra.mxu0 %v986
    %1606 = vmatpush.msra.mxu0 %v985
    %1607 = vmatpush.msra.mxu0 %v984
    %1608 = vmatpush.msra.mxu0 %v983
    %1609 = vmatpush.msra.mxu0 %v982
    %1610 = vmatpush.msra.mxu0 %v981
    %1611 = vmatpush.msra.mxu0 %v980
    %1612 = vmatpush.msra.mxu0 %v979
    %1613 = vmatpush.msra.mxu0 %v978
    %1614 = vmatpush.msra.mxu0 %v977
    %1615 = vmatpush.msra.mxu0 %v976
    %1616 = vmatpush.msra.mxu0 %v975
    %1617 = vmatpush.msra.mxu0 %v974
    %1618 = vmatpush.msra.mxu0 %v973
    %1619 = vmatpush.msra.mxu0 %v972
    %1620 = vmatmul.f32.gmra.mxu0 %v1491
    %v1621 = vpop.f32.mrf.mxu0
    %v1622 = vadd.f32 0.0, %v1621
    %1623 = vdwg.mxu0
    %v1624 = vadd.f32 %v1498, %v1622
    %v1625 = vxor.u32 %v1624, 2147483648
    %v1626 = vmul.f32 %v1625, 1.442695
    %v1627 = vpow.pop %v1626
    %v1628 = vadd.f32 %v1627, 1.0
    %v1629 = vrcp.pop %v1628
    %v1630 = vmul.f32 %v1628, %v1629
    %v1631 = vsub.f32 1.0, %v1630
    %v1632 = vmul.f32 %v1629, %v1631
    %v1633 = vadd.f32 %v1629, %v1632
    %vm1634 = vweird.f32 %v1628
    %vm1635 = vweird.f32 %v1629
    %vm1636 = vmor %vm1634, %vm1635
    %v1637 = vsel %vm1636, %v1629, %v1633
    %v1638 = vand.u32 2147483647, %v1628
    %vm1639 = vcmp.eq.f32.partialorder %v1638, 8.507059e+37
    %v1640 = vand.u32 %v1628, 2147483648
    %v1641 = vor.u32 1.1754944e-38, %v1640
    %v1642 = vsel %vm1639, %v1641, %v1637
    %v1643 = vmul.f32 1.0, %v1642
    %v1644 = vtanh.pop %v1603
    %v1645 = vmul.f32 %v1643, %v1644
    %s1646 = smul.u32 5, 4
    %s1647 = smul.addr %s1646, 8
    %s1648 = scalar_lea.vmem [#allocation4], %s1647
    %v1649 = vld [vmem:[%s1648] sm:$0xff]
    %v1650 = vld [vmem:[%s1648 + $0x8] sm:$0xff]
    %v1651 = vld [vmem:[%s1648 + $0x10] sm:$0xff]
    %v1652 = vld [vmem:[%s1648 + $0x18] sm:$0xff]
    %1653 = vmatpush.msra.mxu0 %v834
    %1654 = vmatpush.msra.mxu0 %v833
    %1655 = vmatpush.msra.mxu0 %v832
    %1656 = vmatpush.msra.mxu0 %v831
    %1657 = vmatpush.msra.mxu0 %v830
    %1658 = vmatpush.msra.mxu0 %v829
    %1659 = vmatpush.msra.mxu0 %v828
    %1660 = vmatpush.msra.mxu0 %v827
    %1661 = vmatpush.msra.mxu0 %v826
    %1662 = vmatpush.msra.mxu0 %v825
    %1663 = vmatpush.msra.mxu0 %v824
    %1664 = vmatpush.msra.mxu0 %v823
    %1665 = vmatpush.msra.mxu0 %v822
    %1666 = vmatpush.msra.mxu0 %v821
    %1667 = vmatpush.msra.mxu0 %v820
    %1668 = vmatpush.msra.mxu0 %v819
    %1669 = vmatmul.f32.gmra.mxu0 %v1645
    %v1670 = vpop.f32.mrf.mxu0
    %v1671 = vadd.f32 0.0, %v1670
    %1672 = vdwg.mxu0
    %v1673 = vadd.f32 %v1649, %v1671
    %v1674 = vxor.u32 %v1673, 2147483648
    %v1675 = vmul.f32 %v1674, 1.442695
    %v1676 = vpow.pop %v1675
    %v1677 = vadd.f32 %v1676, 1.0
    %v1678 = vrcp.pop %v1677
    %v1679 = vmul.f32 %v1677, %v1678
    %v1680 = vsub.f32 1.0, %v1679
    %v1681 = vmul.f32 %v1678, %v1680
    %v1682 = vadd.f32 %v1678, %v1681
    %vm1683 = vweird.f32 %v1677
    %vm1684 = vweird.f32 %v1678
    %vm1685 = vmor %vm1683, %vm1684
    %v1686 = vsel %vm1685, %v1678, %v1682
    %v1687 = vand.u32 2147483647, %v1677
    %vm1688 = vcmp.eq.f32.partialorder %v1687, 8.507059e+37
    %v1689 = vand.u32 %v1677, 2147483648
    %v1690 = vor.u32 1.1754944e-38, %v1689
    %v1691 = vsel %vm1688, %v1690, %v1686
    %v1692 = vmul.f32 1.0, %v1691
    %1693 = vmatpush.msra.mxu0 %v890
    %1694 = vmatpush.msra.mxu0 %v889
    %1695 = vmatpush.msra.mxu0 %v888
    %1696 = vmatpush.msra.mxu0 %v887
    %1697 = vmatpush.msra.mxu0 %v886
    %1698 = vmatpush.msra.mxu0 %v885
    %1699 = vmatpush.msra.mxu0 %v884
    %1700 = vmatpush.msra.mxu0 %v883
    %1701 = vmatpush.msra.mxu0 %v882
    %1702 = vmatpush.msra.mxu0 %v881
    %1703 = vmatpush.msra.mxu0 %v880
    %1704 = vmatpush.msra.mxu0 %v879
    %1705 = vmatpush.msra.mxu0 %v878
    %1706 = vmatpush.msra.mxu0 %v877
    %1707 = vmatpush.msra.mxu0 %v876
    %1708 = vmatpush.msra.mxu0 %v875
    %1709 = vmatmul.f32.gmra.mxu0 %v1645
    %v1710 = vpop.f32.mrf.mxu0
    %v1711 = vadd.f32 0.0, %v1710
    %1712 = vdwg.mxu0
    %v1713 = vadd.f32 %v1650, %v1711
    %v1714 = vxor.u32 %v1713, 2147483648
    %v1715 = vmul.f32 %v1714, 1.442695
    %v1716 = vpow.pop %v1715
    %v1717 = vadd.f32 %v1716, 1.0
    %v1718 = vrcp.pop %v1717
    %v1719 = vmul.f32 %v1717, %v1718
    %v1720 = vsub.f32 1.0, %v1719
    %v1721 = vmul.f32 %v1718, %v1720
    %v1722 = vadd.f32 %v1718, %v1721
    %vm1723 = vweird.f32 %v1717
    %vm1724 = vweird.f32 %v1718
    %vm1725 = vmor %vm1723, %vm1724
    %v1726 = vsel %vm1725, %v1718, %v1722
    %v1727 = vand.u32 2147483647, %v1717
    %vm1728 = vcmp.eq.f32.partialorder %v1727, 8.507059e+37
    %v1729 = vand.u32 %v1717, 2147483648
    %v1730 = vor.u32 1.1754944e-38, %v1729
    %v1731 = vsel %vm1728, %v1730, %v1726
    %v1732 = vmul.f32 1.0, %v1731
    %1733 = vmatpush.msra.mxu0 %v946
    %1734 = vmatpush.msra.mxu0 %v945
    %1735 = vmatpush.msra.mxu0 %v944
    %1736 = vmatpush.msra.mxu0 %v943
    %1737 = vmatpush.msra.mxu0 %v942
    %1738 = vmatpush.msra.mxu0 %v941
    %1739 = vmatpush.msra.mxu0 %v940
    %1740 = vmatpush.msra.mxu0 %v939
    %1741 = vmatpush.msra.mxu0 %v938
    %1742 = vmatpush.msra.mxu0 %v937
    %1743 = vmatpush.msra.mxu0 %v936
    %1744 = vmatpush.msra.mxu0 %v935
    %1745 = vmatpush.msra.mxu0 %v934
    %1746 = vmatpush.msra.mxu0 %v933
    %1747 = vmatpush.msra.mxu0 %v932
    %1748 = vmatpush.msra.mxu0 %v931
    %1749 = vmatmul.f32.gmra.mxu0 %v1645
    %v1750 = vpop.f32.mrf.mxu0
    %v1751 = vadd.f32 0.0, %v1750
    %1752 = vdwg.mxu0
    %v1753 = vadd.f32 %v1651, %v1751
    %v1754 = vtanh.pop %v1753
    %v1755 = vmul.f32 %v1732, %v1603
    %v1756 = vmul.f32 %v1692, %v1754
    %v1757 = vadd.f32 %v1755, %v1756
    %1758 = vmatpush.msra.mxu0 %v987
    %1759 = vmatpush.msra.mxu0 %v986
    %1760 = vmatpush.msra.mxu0 %v985
    %1761 = vmatpush.msra.mxu0 %v984
    %1762 = vmatpush.msra.mxu0 %v983
    %1763 = vmatpush.msra.mxu0 %v982
    %1764 = vmatpush.msra.mxu0 %v981
    %1765 = vmatpush.msra.mxu0 %v980
    %1766 = vmatpush.msra.mxu0 %v979
    %1767 = vmatpush.msra.mxu0 %v978
    %1768 = vmatpush.msra.mxu0 %v977
    %1769 = vmatpush.msra.mxu0 %v976
    %1770 = vmatpush.msra.mxu0 %v975
    %1771 = vmatpush.msra.mxu0 %v974
    %1772 = vmatpush.msra.mxu0 %v973
    %1773 = vmatpush.msra.mxu0 %v972
    %1774 = vmatmul.f32.gmra.mxu0 %v1645
    %v1775 = vpop.f32.mrf.mxu0
    %v1776 = vadd.f32 0.0, %v1775
    %1777 = vdwg.mxu0
    %v1778 = vadd.f32 %v1652, %v1776
    %v1779 = vxor.u32 %v1778, 2147483648
    %v1780 = vmul.f32 %v1779, 1.442695
    %v1781 = vpow.pop %v1780
    %v1782 = vadd.f32 %v1781, 1.0
    %v1783 = vrcp.pop %v1782
    %v1784 = vmul.f32 %v1782, %v1783
    %v1785 = vsub.f32 1.0, %v1784
    %v1786 = vmul.f32 %v1783, %v1785
    %v1787 = vadd.f32 %v1783, %v1786
    %vm1788 = vweird.f32 %v1782
    %vm1789 = vweird.f32 %v1783
    %vm1790 = vmor %vm1788, %vm1789
    %v1791 = vsel %vm1790, %v1783, %v1787
    %v1792 = vand.u32 2147483647, %v1782
    %vm1793 = vcmp.eq.f32.partialorder %v1792, 8.507059e+37
    %v1794 = vand.u32 %v1782, 2147483648
    %v1795 = vor.u32 1.1754944e-38, %v1794
    %v1796 = vsel %vm1793, %v1795, %v1791
    %v1797 = vmul.f32 1.0, %v1796
    %v1798 = vtanh.pop %v1757
    %v1799 = vmul.f32 %v1797, %v1798
    %s1800 = smul.u32 6, 4
    %s1801 = smul.addr %s1800, 8
    %s1802 = scalar_lea.vmem [#allocation4], %s1801
    %v1803 = vld [vmem:[%s1802] sm:$0xff]
    %v1804 = vld [vmem:[%s1802 + $0x8] sm:$0xff]
    %v1805 = vld [vmem:[%s1802 + $0x10] sm:$0xff]
    %v1806 = vld [vmem:[%s1802 + $0x18] sm:$0xff]
    %1807 = vmatpush.msra.mxu0 %v834
    %1808 = vmatpush.msra.mxu0 %v833
    %1809 = vmatpush.msra.mxu0 %v832
    %1810 = vmatpush.msra.mxu0 %v831
    %1811 = vmatpush.msra.mxu0 %v830
    %1812 = vmatpush.msra.mxu0 %v829
    %1813 = vmatpush.msra.mxu0 %v828
    %1814 = vmatpush.msra.mxu0 %v827
    %1815 = vmatpush.msra.mxu0 %v826
    %1816 = vmatpush.msra.mxu0 %v825
    %1817 = vmatpush.msra.mxu0 %v824
    %1818 = vmatpush.msra.mxu0 %v823
    %1819 = vmatpush.msra.mxu0 %v822
    %1820 = vmatpush.msra.mxu0 %v821
    %1821 = vmatpush.msra.mxu0 %v820
    %1822 = vmatpush.msra.mxu0 %v819
    %1823 = vmatmul.f32.gmra.mxu0 %v1799
    %v1824 = vpop.f32.mrf.mxu0
    %v1825 = vadd.f32 0.0, %v1824
    %1826 = vdwg.mxu0
    %v1827 = vadd.f32 %v1803, %v1825
    %v1828 = vxor.u32 %v1827, 2147483648
    %v1829 = vmul.f32 %v1828, 1.442695
    %v1830 = vpow.pop %v1829
    %v1831 = vadd.f32 %v1830, 1.0
    %v1832 = vrcp.pop %v1831
    %v1833 = vmul.f32 %v1831, %v1832
    %v1834 = vsub.f32 1.0, %v1833
    %v1835 = vmul.f32 %v1832, %v1834
    %v1836 = vadd.f32 %v1832, %v1835
    %vm1837 = vweird.f32 %v1831
    %vm1838 = vweird.f32 %v1832
    %vm1839 = vmor %vm1837, %vm1838
    %v1840 = vsel %vm1839, %v1832, %v1836
    %v1841 = vand.u32 2147483647, %v1831
    %vm1842 = vcmp.eq.f32.partialorder %v1841, 8.507059e+37
    %v1843 = vand.u32 %v1831, 2147483648
    %v1844 = vor.u32 1.1754944e-38, %v1843
    %v1845 = vsel %vm1842, %v1844, %v1840
    %v1846 = vmul.f32 1.0, %v1845
    %1847 = vmatpush.msra.mxu0 %v890
    %1848 = vmatpush.msra.mxu0 %v889
    %1849 = vmatpush.msra.mxu0 %v888
    %1850 = vmatpush.msra.mxu0 %v887
    %1851 = vmatpush.msra.mxu0 %v886
    %1852 = vmatpush.msra.mxu0 %v885
    %1853 = vmatpush.msra.mxu0 %v884
    %1854 = vmatpush.msra.mxu0 %v883
    %1855 = vmatpush.msra.mxu0 %v882
    %1856 = vmatpush.msra.mxu0 %v881
    %1857 = vmatpush.msra.mxu0 %v880
    %1858 = vmatpush.msra.mxu0 %v879
    %1859 = vmatpush.msra.mxu0 %v878
    %1860 = vmatpush.msra.mxu0 %v877
    %1861 = vmatpush.msra.mxu0 %v876
    %1862 = vmatpush.msra.mxu0 %v875
    %1863 = vmatmul.f32.gmra.mxu0 %v1799
    %v1864 = vpop.f32.mrf.mxu0
    %v1865 = vadd.f32 0.0, %v1864
    %1866 = vdwg.mxu0
    %v1867 = vadd.f32 %v1804, %v1865
    %v1868 = vxor.u32 %v1867, 2147483648
    %v1869 = vmul.f32 %v1868, 1.442695
    %v1870 = vpow.pop %v1869
    %v1871 = vadd.f32 %v1870, 1.0
    %v1872 = vrcp.pop %v1871
    %v1873 = vmul.f32 %v1871, %v1872
    %v1874 = vsub.f32 1.0, %v1873
    %v1875 = vmul.f32 %v1872, %v1874
    %v1876 = vadd.f32 %v1872, %v1875
    %vm1877 = vweird.f32 %v1871
    %vm1878 = vweird.f32 %v1872
    %vm1879 = vmor %vm1877, %vm1878
    %v1880 = vsel %vm1879, %v1872, %v1876
    %v1881 = vand.u32 2147483647, %v1871
    %vm1882 = vcmp.eq.f32.partialorder %v1881, 8.507059e+37
    %v1883 = vand.u32 %v1871, 2147483648
    %v1884 = vor.u32 1.1754944e-38, %v1883
    %v1885 = vsel %vm1882, %v1884, %v1880
    %v1886 = vmul.f32 1.0, %v1885
    %1887 = vmatpush.msra.mxu0 %v946
    %1888 = vmatpush.msra.mxu0 %v945
    %1889 = vmatpush.msra.mxu0 %v944
    %1890 = vmatpush.msra.mxu0 %v943
    %1891 = vmatpush.msra.mxu0 %v942
    %1892 = vmatpush.msra.mxu0 %v941
    %1893 = vmatpush.msra.mxu0 %v940
    %1894 = vmatpush.msra.mxu0 %v939
    %1895 = vmatpush.msra.mxu0 %v938
    %1896 = vmatpush.msra.mxu0 %v937
    %1897 = vmatpush.msra.mxu0 %v936
    %1898 = vmatpush.msra.mxu0 %v935
    %1899 = vmatpush.msra.mxu0 %v934
    %1900 = vmatpush.msra.mxu0 %v933
    %1901 = vmatpush.msra.mxu0 %v932
    %1902 = vmatpush.msra.mxu0 %v931
    %1903 = vmatmul.f32.gmra.mxu0 %v1799
    %v1904 = vpop.f32.mrf.mxu0
    %v1905 = vadd.f32 0.0, %v1904
    %1906 = vdwg.mxu0
    %v1907 = vadd.f32 %v1805, %v1905
    %v1908 = vtanh.pop %v1907
    %v1909 = vmul.f32 %v1886, %v1757
    %v1910 = vmul.f32 %v1846, %v1908
    %v1911 = vadd.f32 %v1909, %v1910
    %1912 = vmatpush.msra.mxu0 %v987
    %1913 = vmatpush.msra.mxu0 %v986
    %1914 = vmatpush.msra.mxu0 %v985
    %1915 = vmatpush.msra.mxu0 %v984
    %1916 = vmatpush.msra.mxu0 %v983
    %1917 = vmatpush.msra.mxu0 %v982
    %1918 = vmatpush.msra.mxu0 %v981
    %1919 = vmatpush.msra.mxu0 %v980
    %1920 = vmatpush.msra.mxu0 %v979
    %1921 = vmatpush.msra.mxu0 %v978
    %1922 = vmatpush.msra.mxu0 %v977
    %1923 = vmatpush.msra.mxu0 %v976
    %1924 = vmatpush.msra.mxu0 %v975
    %1925 = vmatpush.msra.mxu0 %v974
    %1926 = vmatpush.msra.mxu0 %v973
    %1927 = vmatpush.msra.mxu0 %v972
    %1928 = vmatmul.f32.gmra.mxu0 %v1799
    %v1929 = vpop.f32.mrf.mxu0
    %v1930 = vadd.f32 0.0, %v1929
    %1931 = vdwg.mxu0
    %v1932 = vadd.f32 %v1806, %v1930
    %v1933 = vxor.u32 %v1932, 2147483648
    %v1934 = vmul.f32 %v1933, 1.442695
    %v1935 = vpow.pop %v1934
    %v1936 = vadd.f32 %v1935, 1.0
    %v1937 = vrcp.pop %v1936
    %v1938 = vmul.f32 %v1936, %v1937
    %v1939 = vsub.f32 1.0, %v1938
    %v1940 = vmul.f32 %v1937, %v1939
    %v1941 = vadd.f32 %v1937, %v1940
    %vm1942 = vweird.f32 %v1936
    %vm1943 = vweird.f32 %v1937
    %vm1944 = vmor %vm1942, %vm1943
    %v1945 = vsel %vm1944, %v1937, %v1941
    %v1946 = vand.u32 2147483647, %v1936
    %vm1947 = vcmp.eq.f32.partialorder %v1946, 8.507059e+37
    %v1948 = vand.u32 %v1936, 2147483648
    %v1949 = vor.u32 1.1754944e-38, %v1948
    %v1950 = vsel %vm1947, %v1949, %v1945
    %v1951 = vmul.f32 1.0, %v1950
    %v1952 = vtanh.pop %v1911
    %v1953 = vmul.f32 %v1951, %v1952
    %s1954 = smul.u32 7, 4
    %s1955 = smul.addr %s1954, 8
    %s1956 = scalar_lea.vmem [#allocation4], %s1955
    %v1957 = vld [vmem:[%s1956] sm:$0xff]
    %v1958 = vld [vmem:[%s1956 + $0x8] sm:$0xff]
    %v1959 = vld [vmem:[%s1956 + $0x10] sm:$0xff]
    %v1960 = vld [vmem:[%s1956 + $0x18] sm:$0xff]
    %1961 = vmatpush.msra.mxu0 %v834
    %1962 = vmatpush.msra.mxu0 %v833
    %1963 = vmatpush.msra.mxu0 %v832
    %1964 = vmatpush.msra.mxu0 %v831
    %1965 = vmatpush.msra.mxu0 %v830
    %1966 = vmatpush.msra.mxu0 %v829
    %1967 = vmatpush.msra.mxu0 %v828
    %1968 = vmatpush.msra.mxu0 %v827
    %1969 = vmatpush.msra.mxu0 %v826
    %1970 = vmatpush.msra.mxu0 %v825
    %1971 = vmatpush.msra.mxu0 %v824
    %1972 = vmatpush.msra.mxu0 %v823
    %1973 = vmatpush.msra.mxu0 %v822
    %1974 = vmatpush.msra.mxu0 %v821
    %1975 = vmatpush.msra.mxu0 %v820
    %1976 = vmatpush.msra.mxu0 %v819
    %1977 = vmatmul.f32.gmra.mxu0 %v1953
    %v1978 = vpop.f32.mrf.mxu0
    %v1979 = vadd.f32 0.0, %v1978
    %1980 = vdwg.mxu0
    %v1981 = vadd.f32 %v1957, %v1979
    %v1982 = vxor.u32 %v1981, 2147483648
    %v1983 = vmul.f32 %v1982, 1.442695
    %v1984 = vpow.pop %v1983
    %v1985 = vadd.f32 %v1984, 1.0
    %v1986 = vrcp.pop %v1985
    %v1987 = vmul.f32 %v1985, %v1986
    %v1988 = vsub.f32 1.0, %v1987
    %v1989 = vmul.f32 %v1986, %v1988
    %v1990 = vadd.f32 %v1986, %v1989
    %vm1991 = vweird.f32 %v1985
    %vm1992 = vweird.f32 %v1986
    %vm1993 = vmor %vm1991, %vm1992
    %v1994 = vsel %vm1993, %v1986, %v1990
    %v1995 = vand.u32 2147483647, %v1985
    %vm1996 = vcmp.eq.f32.partialorder %v1995, 8.507059e+37
    %v1997 = vand.u32 %v1985, 2147483648
    %v1998 = vor.u32 1.1754944e-38, %v1997
    %v1999 = vsel %vm1996, %v1998, %v1994
    %v2000 = vmul.f32 1.0, %v1999
    %2001 = vmatpush.msra.mxu0 %v890
    %2002 = vmatpush.msra.mxu0 %v889
    %2003 = vmatpush.msra.mxu0 %v888
    %2004 = vmatpush.msra.mxu0 %v887
    %2005 = vmatpush.msra.mxu0 %v886
    %2006 = vmatpush.msra.mxu0 %v885
    %2007 = vmatpush.msra.mxu0 %v884
    %2008 = vmatpush.msra.mxu0 %v883
    %2009 = vmatpush.msra.mxu0 %v882
    %2010 = vmatpush.msra.mxu0 %v881
    %2011 = vmatpush.msra.mxu0 %v880
    %2012 = vmatpush.msra.mxu0 %v879
    %2013 = vmatpush.msra.mxu0 %v878
    %2014 = vmatpush.msra.mxu0 %v877
    %2015 = vmatpush.msra.mxu0 %v876
    %2016 = vmatpush.msra.mxu0 %v875
    %2017 = vmatmul.f32.gmra.mxu0 %v1953
    %v2018 = vpop.f32.mrf.mxu0
    %v2019 = vadd.f32 0.0, %v2018
    %2020 = vdwg.mxu0
    %v2021 = vadd.f32 %v1958, %v2019
    %v2022 = vxor.u32 %v2021, 2147483648
    %v2023 = vmul.f32 %v2022, 1.442695
    %v2024 = vpow.pop %v2023
    %v2025 = vadd.f32 %v2024, 1.0
    %v2026 = vrcp.pop %v2025
    %v2027 = vmul.f32 %v2025, %v2026
    %v2028 = vsub.f32 1.0, %v2027
    %v2029 = vmul.f32 %v2026, %v2028
    %v2030 = vadd.f32 %v2026, %v2029
    %vm2031 = vweird.f32 %v2025
    %vm2032 = vweird.f32 %v2026
    %vm2033 = vmor %vm2031, %vm2032
    %v2034 = vsel %vm2033, %v2026, %v2030
    %v2035 = vand.u32 2147483647, %v2025
    %vm2036 = vcmp.eq.f32.partialorder %v2035, 8.507059e+37
    %v2037 = vand.u32 %v2025, 2147483648
    %v2038 = vor.u32 1.1754944e-38, %v2037
    %v2039 = vsel %vm2036, %v2038, %v2034
    %v2040 = vmul.f32 1.0, %v2039
    %2041 = vmatpush.msra.mxu0 %v946
    %2042 = vmatpush.msra.mxu0 %v945
    %2043 = vmatpush.msra.mxu0 %v944
    %2044 = vmatpush.msra.mxu0 %v943
    %2045 = vmatpush.msra.mxu0 %v942
    %2046 = vmatpush.msra.mxu0 %v941
    %2047 = vmatpush.msra.mxu0 %v940
    %2048 = vmatpush.msra.mxu0 %v939
    %2049 = vmatpush.msra.mxu0 %v938
    %2050 = vmatpush.msra.mxu0 %v937
    %2051 = vmatpush.msra.mxu0 %v936
    %2052 = vmatpush.msra.mxu0 %v935
    %2053 = vmatpush.msra.mxu0 %v934
    %2054 = vmatpush.msra.mxu0 %v933
    %2055 = vmatpush.msra.mxu0 %v932
    %2056 = vmatpush.msra.mxu0 %v931
    %2057 = vmatmul.f32.gmra.mxu0 %v1953
    %v2058 = vpop.f32.mrf.mxu0
    %v2059 = vadd.f32 0.0, %v2058
    %2060 = vdwg.mxu0
    %v2061 = vadd.f32 %v1959, %v2059
    %v2062 = vtanh.pop %v2061
    %v2063 = vmul.f32 %v2040, %v1911
    %v2064 = vmul.f32 %v2000, %v2062
    %v2065 = vadd.f32 %v2063, %v2064
    %2066 = vmatpush.msra.mxu0 %v987
    %2067 = vmatpush.msra.mxu0 %v986
    %2068 = vmatpush.msra.mxu0 %v985
    %2069 = vmatpush.msra.mxu0 %v984
    %2070 = vmatpush.msra.mxu0 %v983
    %2071 = vmatpush.msra.mxu0 %v982
    %2072 = vmatpush.msra.mxu0 %v981
    %2073 = vmatpush.msra.mxu0 %v980
    %2074 = vmatpush.msra.mxu0 %v979
    %2075 = vmatpush.msra.mxu0 %v978
    %2076 = vmatpush.msra.mxu0 %v977
    %2077 = vmatpush.msra.mxu0 %v976
    %2078 = vmatpush.msra.mxu0 %v975
    %2079 = vmatpush.msra.mxu0 %v974
    %2080 = vmatpush.msra.mxu0 %v973
    %2081 = vmatpush.msra.mxu0 %v972
    %2082 = vmatmul.f32.gmra.mxu0 %v1953
    %v2083 = vpop.f32.mrf.mxu0
    %v2084 = vadd.f32 0.0, %v2083
    %2085 = vdwg.mxu0
    %v2086 = vadd.f32 %v1960, %v2084
    %v2087 = vxor.u32 %v2086, 2147483648
    %v2088 = vmul.f32 %v2087, 1.442695
    %v2089 = vpow.pop %v2088
    %v2090 = vadd.f32 %v2089, 1.0
    %v2091 = vrcp.pop %v2090
    %v2092 = vmul.f32 %v2090, %v2091
    %v2093 = vsub.f32 1.0, %v2092
    %v2094 = vmul.f32 %v2091, %v2093
    %v2095 = vadd.f32 %v2091, %v2094
    %vm2096 = vweird.f32 %v2090
    %vm2097 = vweird.f32 %v2091
    %vm2098 = vmor %vm2096, %vm2097
    %v2099 = vsel %vm2098, %v2091, %v2095
    %v2100 = vand.u32 2147483647, %v2090
    %vm2101 = vcmp.eq.f32.partialorder %v2100, 8.507059e+37
    %v2102 = vand.u32 %v2090, 2147483648
    %v2103 = vor.u32 1.1754944e-38, %v2102
    %v2104 = vsel %vm2101, %v2103, %v2099
    %v2105 = vmul.f32 1.0, %v2104
    %v2106 = vtanh.pop %v2065
    %v2107 = vmul.f32 %v2105, %v2106
    %2108 = vst [vmem:[#allocation2] sm:$0xff] %v2107
    %2109 = vst [vmem:[#allocation3] sm:$0xff] %v2065
    // Predicated region
    $region50: #{tpu_custom_call.1} parent=1 // pred_check
      %p2110 = pneg %p100
    $region51: #{tpu_custom_call.1} parent=1 // pred_check_branch
      %2112 = sbr.rel (%p2110) target = $region53
    $region52: #{tpu_custom_call.1} parent=1 // pred_region
      %v2113 = vld [vmem:[#allocation13] sm:$0xff]
      %v2114 = vld [vmem:[#allocation13 + $0x8] sm:$0xff]
      %v2115 = vld [vmem:[#allocation13 + $0x10] sm:$0xff]
      %v2116 = vld [vmem:[#allocation13 + $0x18] sm:$0xff]
      %v2117 = vld [vmem:[#allocation13 + $0x20] sm:$0xff]
      %v2118 = vld [vmem:[#allocation13 + $0x28] sm:$0xff]
      %v2119 = vld [vmem:[#allocation13 + $0x30] sm:$0xff]
      %v2120 = vld [vmem:[#allocation13 + $0x38] sm:$0xff]
      %v2121 = vld [vmem:[#allocation13 + $0x40] sm:$0xff]
      %v2122 = vld [vmem:[#allocation13 + $0x48] sm:$0xff]
      %v2123 = vld [vmem:[#allocation13 + $0x50] sm:$0xff]
      %v2124 = vld [vmem:[#allocation13 + $0x58] sm:$0xff]
      %v2125 = vld [vmem:[#allocation13 + $0x60] sm:$0xff]
      %v2126 = vld [vmem:[#allocation13 + $0x68] sm:$0xff]
      %v2127 = vld [vmem:[#allocation13 + $0x70] sm:$0xff]
      %v2128 = vld [vmem:[#allocation13 + $0x78] sm:$0xff]
      %v2129 = vld [vmem:[%s5] sm:$0x1]
      %v2131 = vperm.slane %v2129, 0
      %2133 = vmatpush.msra.mxu0 %v2128
      %2134 = vmatpush.msra.mxu0 %v2127
      %2135 = vmatpush.msra.mxu0 %v2126
      %2136 = vmatpush.msra.mxu0 %v2125
      %2137 = vmatpush.msra.mxu0 %v2124
      %2138 = vmatpush.msra.mxu0 %v2123
      %2139 = vmatpush.msra.mxu0 %v2122
      %2140 = vmatpush.msra.mxu0 %v2121
      %2141 = vmatpush.msra.mxu0 %v2120
      %2142 = vmatpush.msra.mxu0 %v2119
      %2143 = vmatpush.msra.mxu0 %v2118
      %2144 = vmatpush.msra.mxu0 %v2117
      %2145 = vmatpush.msra.mxu0 %v2116
      %2146 = vmatpush.msra.mxu0 %v2115
      %2147 = vmatpush.msra.mxu0 %v2114
      %2148 = vmatpush.msra.mxu0 %v2113
      %2149 = vmatmul.f32.gmra.mxu0 %v2107
      %v2150 = vpop.f32.mrf.mxu0
      %v2151 = vadd.f32 %v2131, %v2150
      %2152 = vdwg.mxu0
      %2153 = vst [vmem:[#allocation14] sm:$0xff] %v2151
    $region53: #{tpu_custom_call.1} parent=1 // pred_fallthru
      _
    // Predicated region
    $region54: #{tpu_custom_call.1} parent=1 // pred_check
      _
    $region55: #{tpu_custom_call.1} parent=1 // pred_check_branch
      %2155 = sbr.rel (0) target = $region57
    $region56: #{tpu_custom_call.1} parent=1 // pred_region
      %2157 = vsyncadd [#allocation7], 0
      %s2159 = sshll.u32 [#allocation14], 4
      %s2160 = int_to_ptr.vmem [resolvable:$true] %s2159
      %s2161 = sshll.u32 %s6, 4
      %s2162 = int_to_ptr.hbm [resolvable:$true] %s2161
      %2164 = dma.vmem_to_hbm [thread:$0]  %s2160, 128, %s2162, [#allocation7]
    $region57: #{tpu_custom_call.1} parent=1 // pred_fallthru
      _
    // Predicated region
    $region58: #{tpu_custom_call.1} parent=1 // pred_check
      _
    $region59: #{tpu_custom_call.1} parent=1 // pred_check_branch
      %2166 = sbr.rel (0) target = $region61
    $region60: #{tpu_custom_call.1} parent=1 // pred_region
      %2168 = dma.done [#allocation7], 128
    $region61: #{tpu_custom_call.1} parent=1 // pred_fallthru
      _
    %2169 = vsyncpa [#allocation6], 1
    %2170 = vsyncpa [#allocation9], 1
    %2171 = vsyncpa [#allocation12], 1
    %2172 = vsyncpa [#allocation7], 1

</llo_original>
